<compile_context>
chip_gen: v7x
topology: tpu7x:2x2x1
jax: 0.10.0
libtpu: 0.0.40
codegen_flags: <defaults>
</compile_context>

<pallas_src>
import functools
import math

import jax
import jax.numpy as jnp
from jax.experimental import pallas as pl
from jax.experimental.pallas import tpu as pltpu


# ----------------------------------------------------------------------------------
# helpers usable inside kernels
# ----------------------------------------------------------------------------------
def _sigmoid(x):
    return 1.0 / (1.0 + jnp.exp(-x))


def _softplus(x):
    xc = jnp.minimum(x, 20.0)
    return jnp.where(x > 20.0, x, jnp.log(1.0 + jnp.exp(xc)))


def _pick_tile(dim, target, granule):
    """Largest tile <= target that divides dim and is a multiple of granule.
    Falls back to the full dim (always a legal block shape).
    TODO(synk): replace fallback with pl.cdiv grid + masked last tile for odd dims."""
    if dim <= target:
        return dim
    t = (target // granule) * granule
    while t >= granule:
        if dim % t == 0:
            return t
        t -= granule
    return dim


def _to_bf16(x):
    return x if x.dtype == jnp.bfloat16 else x.astype(jnp.bfloat16)


# ----------------------------------------------------------------------------------
# Kernel 1: tiled y = x @ w + b   (bf16 operands on the MXU, f32 accumulation)
# ----------------------------------------------------------------------------------
def _matmul_bias_kernel_fast(x_ref, w_ref, b_ref, o_ref):
    # single K step: no accumulator scratch, no init/finalize branches
    o_ref[...] = (jnp.dot(x_ref[...], w_ref[...],
                          preferred_element_type=jnp.float32)
                  + b_ref[...]).astype(o_ref.dtype)


def _matmul_bias_kernel_kloop(x_ref, w_ref, b_ref, o_ref, acc_ref):
    @pl.when(pl.program_id(2) == 0)
    def _():
        acc_ref[...] = jnp.zeros_like(acc_ref)

    acc_ref[...] += jnp.dot(x_ref[...], w_ref[...],
                            preferred_element_type=jnp.float32)

    @pl.when(pl.program_id(2) == pl.num_programs(2) - 1)
    def _():
        o_ref[...] = (acc_ref[...] + b_ref[...]).astype(o_ref.dtype)


def matmul_bias(x, w, b=None, *, tm=256, tn=256, tk=512, out_dtype=jnp.float32):
    # x: (M, K), w: (K, N), b: (N,) or None  ->  (M, N) out_dtype
    M, K = x.shape
    K2, N = w.shape
    assert K == K2
    if b is None:
        b = jnp.zeros((N,), jnp.float32)
    tm = _pick_tile(M, tm, 8)
    tn = _pick_tile(N, tn, 128)
    tk = _pick_tile(K, tk, 128)
    xb = _to_bf16(x)
    wb = _to_bf16(w)
    bb = b.reshape(1, N).astype(jnp.float32)
    nk = K // tk

    if nk == 1:                                            # fast path (all calls here)
        return pl.pallas_call(
            _matmul_bias_kernel_fast,
            grid=(M // tm, N // tn),
            in_specs=[
                pl.BlockSpec((tm, K), lambda i, j: (i, 0)),
                pl.BlockSpec((K, tn), lambda i, j: (0, j)),
                pl.BlockSpec((1, tn), lambda i, j: (0, j)),
            ],
            out_specs=pl.BlockSpec((tm, tn), lambda i, j: (i, j)),
            out_shape=jax.ShapeDtypeStruct((M, N), out_dtype),
            compiler_params=pltpu.CompilerParams(
                dimension_semantics=("parallel", "parallel")),
        )(xb, wb, bb)

    return pl.pallas_call(
        _matmul_bias_kernel_kloop,
        grid=(M // tm, N // tn, nk),
        in_specs=[
            pl.BlockSpec((tm, tk), lambda i, j, k: (i, k)),
            pl.BlockSpec((tk, tn), lambda i, j, k: (k, j)),
            pl.BlockSpec((1, tn), lambda i, j, k: (0, j)),
        ],
        out_specs=pl.BlockSpec((tm, tn), lambda i, j, k: (i, j)),
        out_shape=jax.ShapeDtypeStruct((M, N), out_dtype),
        scratch_shapes=[pltpu.VMEM((tm, tn), jnp.float32)],
        compiler_params=pltpu.CompilerParams(
            dimension_semantics=("parallel", "parallel", "arbitrary")),
    )(xb, wb, bb)


# ----------------------------------------------------------------------------------
# Kernel 2: RMSNorm and fused residual-add + RMSNorm (row-tiled, pipelined).
# Normed output is emitted in bf16 by default (it only feeds matmuls).
# ----------------------------------------------------------------------------------
def _rmsnorm_kernel(h_ref, w_ref, y_ref, *, eps):
    h = h_ref[...]
    var = jnp.mean(h * h, axis=-1, keepdims=True)
    y_ref[...] = (h * jax.lax.rsqrt(var + eps) * w_ref[...]).astype(y_ref.dtype)


def rmsnorm(h2d, w, eps, *, out_dtype=jnp.bfloat16, tm=512):
    M, D = h2d.shape
    tm = _pick_tile(M, tm, 8)
    kernel = functools.partial(_rmsnorm_kernel, eps=eps)
    return pl.pallas_call(
        kernel,
        grid=(M // tm,),
        in_specs=[
            pl.BlockSpec((tm, D), lambda i: (i, 0)),
            pl.BlockSpec((1, D), lambda i: (0, 0)),
        ],
        out_specs=pl.BlockSpec((tm, D), lambda i: (i, 0)),
        out_shape=jax.ShapeDtypeStruct((M, D), out_dtype),
        compiler_params=pltpu.CompilerParams(dimension_semantics=("parallel",)),
    )(h2d.astype(jnp.float32), w.reshape(1, D).astype(jnp.float32))


def _add_rmsnorm_kernel(h_ref, r_ref, w_ref, y_ref, res_ref, *, eps):
    res = h_ref[...] + r_ref[...]                          # residual in f32
    var = jnp.mean(res * res, axis=-1, keepdims=True)
    y_ref[...] = (res * jax.lax.rsqrt(var + eps) * w_ref[...]).astype(y_ref.dtype)
    res_ref[...] = res


def add_rmsnorm(h2d, r2d, w, eps, *, out_dtype=jnp.bfloat16, tm=512):
    # -> (normed [out_dtype], new_residual [f32])
    M, D = h2d.shape
    tm = _pick_tile(M, tm, 8)
    kernel = functools.partial(_add_rmsnorm_kernel, eps=eps)
    return pl.pallas_call(
        kernel,
        grid=(M // tm,),
        in_specs=[
            pl.BlockSpec((tm, D), lambda i: (i, 0)),
            pl.BlockSpec((tm, D), lambda i: (i, 0)),
            pl.BlockSpec((1, D), lambda i: (0, 0)),
        ],
        out_specs=(
            pl.BlockSpec((tm, D), lambda i: (i, 0)),
            pl.BlockSpec((tm, D), lambda i: (i, 0)),
        ),
        out_shape=(
            jax.ShapeDtypeStruct((M, D), out_dtype),
            jax.ShapeDtypeStruct((M, D), jnp.float32),
        ),
        compiler_params=pltpu.CompilerParams(dimension_semantics=("parallel",)),
    )(h2d.astype(jnp.float32), r2d.astype(jnp.float32),
      w.reshape(1, D).astype(jnp.float32))


# ----------------------------------------------------------------------------------
# Kernel 3: depthwise causal conv1d (K taps) + SiLU.
# Reads the x half of the fused in_proj output via a column-offset BlockSpec.
# Taps are built with pltpu.roll (XLU sublane rotate) + boundary masks (no XLA pad).
# reverse=True computes flip(causal_conv(flip(x))) == anti-causal conv.
# ----------------------------------------------------------------------------------
def _dwconv_silu_kernel(x_ref, w_ref, b_ref, o_ref, *, K, reverse):
    x = x_ref[0]                                           # (L, Din) f32
    L = x.shape[0]
    row = jax.lax.broadcasted_iota(jnp.int32, x.shape, 0)
    acc = jnp.zeros(x.shape, jnp.float32)
    for k in range(K):                                     # static unroll (K = 4)
        s = K - 1 - k
        if s == 0:
            tap = x
        elif reverse:
            # y[l] += w[k] * x[l + s]; rows l >= L - s have no future sample -> 0
            tap = jnp.where(row < L - s, pltpu.roll(x, shift=L - s, axis=0), 0.0)
        else:
            # y[l] += w[k] * x[l - s]; rows l < s have no past sample -> 0
            tap = jnp.where(row >= s, pltpu.roll(x, shift=s, axis=0), 0.0)
        acc = acc + tap * w_ref[pl.ds(k, 1), :]
    acc = acc + b_ref[...]
    o_ref[0] = (acc * _sigmoid(acc)).astype(o_ref.dtype)   # SiLU, emitted in bf16


def dwconv_silu(xz3, w_kd, b, *, reverse=False):
    # xz3: (Bt, L, 2*Din) fused in_proj output; only columns [0, Din) are read.
    # TODO(synk): tile along L with a K-1 halo for production-length sequences.
    Bt, L, _ = xz3.shape
    K, Din = w_kd.shape
    kernel = functools.partial(_dwconv_silu_kernel, K=K, reverse=reverse)
    return pl.pallas_call(
        kernel,
        grid=(Bt,),
        in_specs=[
            pl.BlockSpec((1, L, Din), lambda b_: (b_, 0, 0)),    # x half of xz
            pl.BlockSpec((K, Din), lambda b_: (0, 0)),
            pl.BlockSpec((1, Din), lambda b_: (0, 0)),
        ],
        out_specs=pl.BlockSpec((1, L, Din), lambda b_: (b_, 0, 0)),
        out_shape=jax.ShapeDtypeStruct((Bt, L, Din), jnp.bfloat16),
        compiler_params=pltpu.CompilerParams(dimension_semantics=("parallel",)),
    )(xz3.astype(jnp.float32), w_kd.astype(jnp.float32),
      b.reshape(1, Din).astype(jnp.float32))


# ----------------------------------------------------------------------------------
# Kernel 4: Mamba selective scan, chunked along L (grid axis), state in VMEM scratch.
#   h[l] = exp(dt*A) * h[l-1] + dt*u*B[l];  y[l] = C[l]·h[l] + D*u[l];  y *= silu(z)
#   delta is read from columns [0, Din) of the fused projection output; z is read from
#   columns [Din, 2*Din) of the fused in_proj output (column-offset BlockSpecs).
#   reverse=True runs the recurrence from l=L-1 down to 0, writing y at the original
#   positions -> no XLA flips.
# ----------------------------------------------------------------------------------
def _selective_scan_kernel(u_ref, delta_ref, b_ref, c_ref, z_ref, at_ref, d_ref,
                           y_ref, h_scr, dA_scr, dBu_scr, *, reverse):
    CL = u_ref.shape[1]

    @pl.when(pl.program_id(1) == 0)                        # start of a new sequence
    def _():
        h_scr[...] = jnp.zeros_like(h_scr)

    u = u_ref[0].astype(jnp.float32)                       # (CL, Din)
    delta = _softplus(delta_ref[0])                        # (CL, Din)
    A_t = at_ref[...]                                      # (Nst, Din)

    # vectorized per-chunk precompute of transition / input tensors
    dA_scr[...] = jnp.exp(delta[:, None, :] * A_t[None, :, :])        # (CL,Nst,Din)
    dBu_scr[...] = (delta * u)[:, None, :] * b_ref[0]                 # (CL,Nst,Din)

    def step(j, h):
        l = (CL - 1 - j) if reverse else j                 # static branch on reverse
        h = dA_scr[l] * h + dBu_scr[l]                     # (Nst, Din), pure VPU
        dBu_scr[pl.ds(l, 1), :, :] = h[None, :, :]         # stash h[l] for readout
        return h

    # unrolled serial recurrence (gives the LLO scheduler room to overlap ld/st)
    h_scr[...] = jax.lax.fori_loop(0, CL, step, h_scr[...], unroll=8)

    # batched readout:  y[l, d] = sum_n C[l, n] * h_l[n, d]
    y = jnp.sum(c_ref[0] * dBu_scr[...], axis=1)           # (CL, Din)
    y = y + d_ref[...] * u                                 # D skip connection
    z = z_ref[0]
    y_ref[0] = y * (z * _sigmoid(z))                       # z-gating


def selective_scan(u, proj3, Bm, Cm, xz3, A_t, Dp, *, reverse=False, chunk=256):
    # u: (Bt, L, Din) bf16 (conv output); proj3: (Bt, L, Din+BCP) fused projection
    # (delta in cols [0, Din)); Bm, Cm: (Bt, L, Nst, 1); xz3: (Bt, L, 2*Din)
    # (z in cols [Din, 2*Din)); A_t: (Nst, Din); Dp: (Din,)
    Bt, L, Din = u.shape
    Nst = A_t.shape[0]
    CL = _pick_tile(L, chunk, 8)                           # chunk bounds VMEM scratch
    NC = L // CL

    def smap_u(b_, c_):                                    # u / delta / output
        return (b_, (NC - 1 - c_) if reverse else c_, 0)

    def smap_z(b_, c_):                                    # z half of xz3
        return (b_, (NC - 1 - c_) if reverse else c_, 1)

    def smap_bc(b_, c_):
        return (b_, (NC - 1 - c_) if reverse else c_, 0, 0)

    kernel = functools.partial(_selective_scan_kernel, reverse=reverse)
    # TODO(synk): batch several rows per grid step and (on v7x) keep dA scratch in bf16.
    return pl.pallas_call(
        kernel,
        grid=(Bt, NC),
        in_specs=[
            pl.BlockSpec((1, CL, Din), smap_u),                      # u
            pl.BlockSpec((1, CL, Din), smap_u),                      # delta (proj cols 0..Din)
            pl.BlockSpec((1, CL, Nst, 1), smap_bc),                  # B
            pl.BlockSpec((1, CL, Nst, 1), smap_bc),                  # C
            pl.BlockSpec((1, CL, Din), smap_z),                      # z (xz cols Din..2Din)
            pl.BlockSpec((Nst, Din), lambda b_, c_: (0, 0)),         # A^T
            pl.BlockSpec((1, Din), lambda b_, c_: (0, 0)),           # D
        ],
        out_specs=pl.BlockSpec((1, CL, Din), smap_u),
        out_shape=jax.ShapeDtypeStruct((Bt, L, Din), jnp.float32),
        scratch_shapes=[
            pltpu.VMEM((Nst, Din), jnp.float32),                     # carried SSM state
            pltpu.VMEM((CL, Nst, Din), jnp.float32),                 # dA chunk
            pltpu.VMEM((CL, Nst, Din), jnp.float32),                 # dB*u chunk / h store
        ],
        compiler_params=pltpu.CompilerParams(
            dimension_semantics=("parallel", "arbitrary")),
    )(u, proj3.astype(jnp.float32),
      Bm.astype(jnp.float32), Cm.astype(jnp.float32),
      xz3.astype(jnp.float32), A_t.astype(jnp.float32),
      Dp.reshape(1, Din).astype(jnp.float32))


# ----------------------------------------------------------------------------------
# Mamba mixer (bimamba=True: forward + reverse SSM branches, shared in/out proj)
# ----------------------------------------------------------------------------------
def _ssm_branch(xz3, p, reverse):
    Bt, L, twoDin = xz3.shape
    Din = twoDin // 2
    Nst = p["A_t"].shape[0]
    xc = dwconv_silu(xz3, p["conv_w_kd"], p["conv_b"], reverse=reverse)  # (Bt,L,Din) bf16
    # fused [delta | B | C | pad] projection: lane-dense output, single read of xc
    proj = matmul_bias(xc.reshape(Bt * L, Din), p["w_fused"], p["b_fused"])
    proj3 = proj.reshape(Bt, L, -1)
    Bm = proj3[..., Din:Din + Nst][..., None]              # tiny (Bt,L,Nst,1) relayouts
    Cm = proj3[..., Din + Nst:Din + 2 * Nst][..., None]
    return selective_scan(xc, proj3, Bm, Cm, xz3, p["A_t"], p["D"], reverse=reverse)


def mamba_mixer(h2d, p, Bt, L):
    # h2d: (Bt*L, E) bf16 normed hidden
    xz = matmul_bias(h2d, p["in_proj_w"])                  # (Bt*L, 2*Din) f32
    twoDin = xz.shape[1]
    xz3 = xz.reshape(Bt, L, twoDin)                        # no x/z slicing in XLA
    y_f = _ssm_branch(xz3, p["fwd"], reverse=False)
    y_b = _ssm_branch(xz3, p["bwd"], reverse=True)         # flips folded into kernels
    # TODO(synk): on v7x run the two directions on separate TensorCores.
    y = (y_f + y_b).reshape(Bt * L, twoDin // 2)
    return matmul_bias(y, p["out_proj_w"])                 # (Bt*L, E) f32


# ----------------------------------------------------------------------------------
# VisionMamba forward (patch embed -> pos embeds -> stacked Blocks -> final RMSNorm)
# ----------------------------------------------------------------------------------
def vision_mamba_forward(x, params, cfg):
    # x layout: NCTHW = (B, C_in, T, H, W)
    B, Cin, Tin, Him, Wim = x.shape
    p_, kt, E = cfg["patch"], cfg["kernel_size"], cfg["embed_dim"]
    Tt, Hp, Wp = Tin // kt, Him // p_, Wim // p_
    Np = Hp * Wp

    # PatchEmbed: non-overlapping Conv3d == patch extraction + matmul (Pallas)
    xp = x.reshape(B, Cin, Tt, kt, Hp, p_, Wp, p_)
    xp = xp.transpose(0, 2, 4, 6, 1, 3, 5, 7).reshape(B * Tt * Np, Cin * kt * p_ * p_)
    tok = matmul_bias(xp, params["patch_w"], params["patch_b"])         # (B*Tt*Np, E)

    # spatial pos embed  (B*T, N, E) + (1, N, E)
    tok = tok.reshape(B * Tt, Np, E) + params["pos_embed"]
    # '(b t) n m -> (b n) t m'  + temporal pos embed
    tok = tok.reshape(B, Tt, Np, E).transpose(0, 2, 1, 3).reshape(B * Np, Tt, E)
    tok = tok + params["temporal_pos"]
    # '(b n) t m -> b (t n) m'
    tok = tok.reshape(B, Np, Tt, E).transpose(0, 2, 1, 3).reshape(B, Tt * Np, E)

    L = Tt * Np
    hidden2d = tok.reshape(B * L, E)                       # f32
    residual2d = None

    for lp in params["layers"]:
        if residual2d is None:
            # first block: residual is just the hidden stream (no zeros tensor)
            h2 = rmsnorm(hidden2d, lp["norm_w"], cfg["eps"])
            residual2d = hidden2d
        else:
            h2, residual2d = add_rmsnorm(hidden2d, residual2d,
                                         lp["norm_w"], cfg["eps"])
        hidden2d = mamba_mixer(h2, lp, B, L)

    # final fused add + RMSNorm (prenorm=False -> keep only the normed output, f32)
    h_final, _ = add_rmsnorm(hidden2d, residual2d, params["norm_f_w"], cfg["eps"],
                             out_dtype=jnp.float32)
    return h_final.reshape(B, L, E)


# ----------------------------------------------------------------------------------
# deterministic synthetic parameter init.  Weight transposes, A = -exp(A_log), the
# x_proj@dt_proj fusion, the [delta|B|C] weight fusion (padded to 128 lanes), and the
# one-time bf16 casts of all matmul weights are hoisted here.
# ----------------------------------------------------------------------------------
def init_params(key, cfg):
    E, Cin = cfg["embed_dim"], cfg["channels"]
    p_, kt = cfg["patch"], cfg["kernel_size"]
    depth, Nst, K = cfg["depth"], cfg["d_state"], cfg["d_conv"]
    Din = cfg["expand"] * E
    R = max(1, math.ceil(E / 16))                          # dt_rank = "auto"
    Np = (cfg["img_size"] // p_) ** 2
    Tt = cfg["num_frames"] // kt
    BCP = ((2 * Nst + 127) // 128) * 128                   # B/C columns padded to lanes

    keys = jax.random.split(key, 4 + depth)

    def nrm(k, shape, s=0.02):
        return s * jax.random.normal(k, shape, jnp.float32)

    params = dict(
        patch_w=nrm(keys[0], (Cin * kt * p_ * p_, E)).astype(jnp.bfloat16),
        patch_b=jnp.zeros((E,), jnp.float32),
        pos_embed=nrm(keys[1], (1, Np, E)),
        temporal_pos=jnp.zeros((1, Tt, E), jnp.float32),   # module inits this to zeros
        norm_f_w=jnp.ones((E,), jnp.float32),
        layers=[],
    )

    for i in range(depth):
        lk = jax.random.split(keys[4 + i], 10)

        def direction(base):
            x_proj_w = nrm(base[1], (R + 2 * Nst, Din))            # PyTorch (out, in)
            dt_proj_w = nrm(base[2], (Din, R), 0.1)                # PyTorch (out, in)
            A_log = jnp.log(jnp.tile(jnp.arange(1, Nst + 1, dtype=jnp.float32),
                                     (Din, 1)))
            w_delta = x_proj_w[:R, :].T @ dt_proj_w.T              # fused (Din, Din)
            w_bc = x_proj_w[R:, :].T                               # (Din, 2*Nst)
            w_fused = jnp.concatenate(
                [w_delta, w_bc, jnp.zeros((Din, BCP - 2 * Nst), jnp.float32)], axis=1)
            dt_bias = 0.1 * jax.random.normal(base[3], (Din,), jnp.float32)
            b_fused = jnp.concatenate([dt_bias, jnp.zeros((BCP,), jnp.float32)])
            return dict(
                conv_w_kd=nrm(base[0], (K, Din), 0.1),             # conv1d.weight.T
                conv_b=jnp.zeros((Din,), jnp.float32),
                w_fused=w_fused.astype(jnp.bfloat16),              # (Din, Din+BCP)
                b_fused=b_fused,                                   # (Din+BCP,) f32
                A_t=(-jnp.exp(A_log)).T,                           # (Nst, Din)
                D=jnp.ones((Din,), jnp.float32),
            )

        params["layers"].append(dict(
            norm_w=jnp.ones((E,), jnp.float32),
            in_proj_w=nrm(lk[0], (2 * Din, E)).T.astype(jnp.bfloat16),   # (E, 2*Din)
            out_proj_w=nrm(lk[1], (E, Din)).T.astype(jnp.bfloat16),      # (Din, E)
            fwd=direction(lk[2:6]),
            bwd=direction(lk[6:10]),
        ))
    return params


# ----------------------------------------------------------------------------------
if __name__ == "__main__":
    cfg = dict(
        img_size=16, patch=8, kernel_size=1, channels=3,
        embed_dim=128, depth=2, num_frames=2,              # E=128 keeps tiles lane-dense
        d_state=16, d_conv=4, expand=2, eps=1e-5,
    )
    key = jax.random.PRNGKey(0)
    kx, kp = jax.random.split(key)
    params = init_params(kp, cfg)

    # input: (B, C, T, H, W) = (2, 3, 2, 16, 16)   # layout: NCTHW
    x = jax.random.normal(
        kx, (2, cfg["channels"], cfg["num_frames"], cfg["img_size"], cfg["img_size"]),
        jnp.float32)

    fwd = jax.jit(functools.partial(vision_mamba_forward, cfg=cfg))
    out = jax.block_until_ready(fwd(x, params))

    Tt = cfg["num_frames"] // cfg["kernel_size"]
    Np = (cfg["img_size"] // cfg["patch"]) ** 2
    assert out.shape == (2, Tt * Np, cfg["embed_dim"]), out.shape
    assert bool(jnp.all(jnp.isfinite(out)))
    print("KERNEL_OK")
</pallas_src>

<mosaic_0001>
module attributes {stable_mosaic.version = 11 : i64} {
  func.func @_matmul_bias_kernel_fast(%arg0: i32, %arg1: i32, %arg2: memref<16x128xbf16, #tpu.memory_space<vmem>>, %arg3: memref<128x256xbf16, #tpu.memory_space<vmem>>, %arg4: memref<1x256xf32, #tpu.memory_space<vmem>>, %arg5: memref<16x256xf32, #tpu.memory_space<vmem>>) attributes {dimension_semantics = [#tpu.dimension_semantics<parallel>, #tpu.dimension_semantics<parallel>], iteration_bounds = array<i64: 1, 2>, scalar_prefetch = 0 : i64, scratch_operands = 0 : i64, tpu.core_type = #tpu.core_type<tc>, window_params = [{transform_indices = @transform_0, window_bounds = array<i64: 16, 128>}, {transform_indices = @transform_1, window_bounds = array<i64: 128, 256>}, {transform_indices = @transform_2, window_bounds = array<i64: 1, 256>}, {transform_indices = @transform_3, window_bounds = array<i64: 16, 256>}]} {
    %c0 = arith.constant 0 : index
    %c0_0 = arith.constant 0 : index
    %0 = vector.load %arg2[%c0, %c0_0] : memref<16x128xbf16, #tpu.memory_space<vmem>>, vector<16x128xbf16>
    %c0_1 = arith.constant 0 : index
    %c0_2 = arith.constant 0 : index
    %1 = vector.load %arg3[%c0_1, %c0_2] : memref<128x256xbf16, #tpu.memory_space<vmem>>, vector<128x256xbf16>
    %cst = arith.constant dense<0.000000e+00> : vector<16x256xf32>
    %2 = tpu.matmul %0, %1, %cst {dimension_numbers = #tpu.dot_dimension_numbers<[1], [0], [0], [1], [0, 0, 1, 1], [], []>} : vector<16x128xbf16>, vector<128x256xbf16>, vector<16x256xf32> -> vector<16x256xf32>
    %c0_3 = arith.constant 0 : index
    %c0_4 = arith.constant 0 : index
    %3 = vector.load %arg4[%c0_3, %c0_4] : memref<1x256xf32, #tpu.memory_space<vmem>>, vector<1x256xf32>
    %4 = vector.broadcast %3 : vector<1x256xf32> to vector<16x256xf32>
    %5 = arith.addf %2, %4 : vector<16x256xf32>
    %c0_5 = arith.constant 0 : index
    %c0_6 = arith.constant 0 : index
    %6 = vector.load %arg5[%c0_5, %c0_6] : memref<16x256xf32, #tpu.memory_space<vmem>>, vector<16x256xf32>
    tpu.vector_store %arg5[%c0_5, %c0_6], %5 {strides = array<i32>} : memref<16x256xf32, #tpu.memory_space<vmem>>, vector<16x256xf32>,
    return
  }
  func.func @transform_0(%arg0: i32, %arg1: i32) -> (i32, i32) {
    %c0_i32 = arith.constant 0 : i32
    %c0_i32_0 = arith.constant 0 : i32
    return %arg0, %c0_i32 : i32, i32
  }
  func.func @transform_1(%arg0: i32, %arg1: i32) -> (i32, i32) {
    %c0_i32 = arith.constant 0 : i32
    %c0_i32_0 = arith.constant 0 : i32
    return %c0_i32, %arg1 : i32, i32
  }
  func.func @transform_2(%arg0: i32, %arg1: i32) -> (i32, i32) {
    %c0_i32 = arith.constant 0 : i32
    %c0_i32_0 = arith.constant 0 : i32
    return %c0_i32, %arg1 : i32, i32
  }
  func.func @transform_3(%arg0: i32, %arg1: i32) -> (i32, i32) {
    %c0_i32 = arith.constant 0 : i32
    return %arg0, %arg1 : i32, i32
  }
}

module attributes {stable_mosaic.version = 11 : i64} {
  func.func @_rmsnorm_kernel(%arg0: i32, %arg1: memref<16x128xf32, #tpu.memory_space<vmem>>, %arg2: memref<1x128xf32, #tpu.memory_space<vmem>>, %arg3: memref<16x128xbf16, #tpu.memory_space<vmem>>) attributes {dimension_semantics = [#tpu.dimension_semantics<parallel>], iteration_bounds = array<i64: 1>, scalar_prefetch = 0 : i64, scratch_operands = 0 : i64, tpu.core_type = #tpu.core_type<tc>, window_params = [{transform_indices = @transform_0, window_bounds = array<i64: 16, 128>}, {pipeline_mode = #tpu.pipeline_mode<synchronous>, transform_indices = @transform_1, window_bounds = array<i64: 1, 128>}, {transform_indices = @transform_2, window_bounds = array<i64: 16, 128>}]} {
    %c0 = arith.constant 0 : index
    %c0_0 = arith.constant 0 : index
    %0 = vector.load %arg1[%c0, %c0_0] : memref<16x128xf32, #tpu.memory_space<vmem>>, vector<16x128xf32>
    %1 = arith.mulf %0, %0 : vector<16x128xf32>
    %cst = arith.constant dense<0.000000e+00> : vector<16xf32>
    %2 = vector.multi_reduction <add>, %1, %cst [1] : vector<16x128xf32> to vector<16xf32>
    %3 = vector.shape_cast %2 : vector<16xf32> to vector<16x1xf32>
    %cst_1 = arith.constant 1.280000e+02 : f32
    %4 = vector.broadcast %cst_1 : f32 to vector<16x1xf32>
    %5 = arith.divf %3, %4 : vector<16x1xf32>
    %cst_2 = arith.constant 9.99999974E-6 : f32
    %6 = vector.broadcast %cst_2 : f32 to vector<16x1xf32>
    %7 = arith.addf %5, %6 : vector<16x1xf32>
    %8 = math.rsqrt %7 : vector<16x1xf32>
    %9 = vector.broadcast %8 : vector<16x1xf32> to vector<16x128xf32>
    %10 = arith.mulf %0, %9 : vector<16x128xf32>
    %c0_3 = arith.constant 0 : index
    %c0_4 = arith.constant 0 : index
    %11 = vector.load %arg2[%c0_3, %c0_4] : memref<1x128xf32, #tpu.memory_space<vmem>>, vector<1x128xf32>
    %12 = vector.broadcast %11 : vector<1x128xf32> to vector<16x128xf32>
    %13 = arith.mulf %10, %12 : vector<16x128xf32>
    %14 = arith.truncf %13 : vector<16x128xf32> to vector<16x128xbf16>
    %c0_5 = arith.constant 0 : index
    %c0_6 = arith.constant 0 : index
    %15 = vector.load %arg3[%c0_5, %c0_6] : memref<16x128xbf16, #tpu.memory_space<vmem>>, vector<16x128xbf16>
    tpu.vector_store %arg3[%c0_5, %c0_6], %14 {strides = array<i32>} : memref<16x128xbf16, #tpu.memory_space<vmem>>, vector<16x128xbf16>,
    return
  }
  func.func @transform_0(%arg0: i32) -> (i32, i32) {
    %c0_i32 = arith.constant 0 : i32
    %c0_i32_0 = arith.constant 0 : i32
    return %arg0, %c0_i32 : i32, i32
  }
  func.func @transform_1(%arg0: i32) -> (i32, i32) {
    %c0_i32 = arith.constant 0 : i32
    %c0_i32_0 = arith.constant 0 : i32
    %c0_i32_1 = arith.constant 0 : i32
    return %c0_i32, %c0_i32_0 : i32, i32
  }
  func.func @transform_2(%arg0: i32) -> (i32, i32) {
    %c0_i32 = arith.constant 0 : i32
    %c0_i32_0 = arith.constant 0 : i32
    return %arg0, %c0_i32 : i32, i32
  }
}

module attributes {stable_mosaic.version = 11 : i64} {
  func.func @_matmul_bias_kernel_fast(%arg0: i32, %arg1: i32, %arg2: memref<16x192xbf16, #tpu.memory_space<vmem>>, %arg3: memref<192x128xbf16, #tpu.memory_space<vmem>>, %arg4: memref<1x128xf32, #tpu.memory_space<vmem>>, %arg5: memref<16x128xf32, #tpu.memory_space<vmem>>) attributes {dimension_semantics = [#tpu.dimension_semantics<parallel>, #tpu.dimension_semantics<parallel>], iteration_bounds = array<i64: 1, 1>, scalar_prefetch = 0 : i64, scratch_operands = 0 : i64, tpu.core_type = #tpu.core_type<tc>, window_params = [{transform_indices = @transform_0, window_bounds = array<i64: 16, 192>}, {transform_indices = @transform_1, window_bounds = array<i64: 192, 128>}, {transform_indices = @transform_2, window_bounds = array<i64: 1, 128>}, {transform_indices = @transform_3, window_bounds = array<i64: 16, 128>}]} {
    %c0 = arith.constant 0 : index
    %c0_0 = arith.constant 0 : index
    %0 = vector.load %arg2[%c0, %c0_0] : memref<16x192xbf16, #tpu.memory_space<vmem>>, vector<16x192xbf16>
    %c0_1 = arith.constant 0 : index
    %c0_2 = arith.constant 0 : index
    %1 = vector.load %arg3[%c0_1, %c0_2] : memref<192x128xbf16, #tpu.memory_space<vmem>>, vector<192x128xbf16>
    %cst = arith.constant dense<0.000000e+00> : vector<16x128xf32>
    %2 = tpu.matmul %0, %1, %cst {dimension_numbers = #tpu.dot_dimension_numbers<[1], [0], [0], [1], [0, 0, 1, 1], [], []>} : vector<16x192xbf16>, vector<192x128xbf16>, vector<16x128xf32> -> vector<16x128xf32>
    %c0_3 = arith.constant 0 : index
    %c0_4 = arith.constant 0 : index
    %3 = vector.load %arg4[%c0_3, %c0_4] : memref<1x128xf32, #tpu.memory_space<vmem>>, vector<1x128xf32>
    %4 = vector.broadcast %3 : vector<1x128xf32> to vector<16x128xf32>
    %5 = arith.addf %2, %4 : vector<16x128xf32>
    %c0_5 = arith.constant 0 : index
    %c0_6 = arith.constant 0 : index
    %6 = vector.load %arg5[%c0_5, %c0_6] : memref<16x128xf32, #tpu.memory_space<vmem>>, vector<16x128xf32>
    tpu.vector_store %arg5[%c0_5, %c0_6], %5 {strides = array<i32>} : memref<16x128xf32, #tpu.memory_space<vmem>>, vector<16x128xf32>,
    return
  }
  func.func @transform_0(%arg0: i32, %arg1: i32) -> (i32, i32) {
    %c0_i32 = arith.constant 0 : i32
    %c0_i32_0 = arith.constant 0 : i32
    return %arg0, %c0_i32 : i32, i32
  }
  func.func @transform_1(%arg0: i32, %arg1: i32) -> (i32, i32) {
    %c0_i32 = arith.constant 0 : i32
    %c0_i32_0 = arith.constant 0 : i32
    return %c0_i32, %arg1 : i32, i32
  }
  func.func @transform_2(%arg0: i32, %arg1: i32) -> (i32, i32) {
    %c0_i32 = arith.constant 0 : i32
    %c0_i32_0 = arith.constant 0 : i32
    return %c0_i32, %arg1 : i32, i32
  }
  func.func @transform_3(%arg0: i32, %arg1: i32) -> (i32, i32) {
    %c0_i32 = arith.constant 0 : i32
    return %arg0, %arg1 : i32, i32
  }
}

module attributes {stable_mosaic.version = 11 : i64} {
  func.func @_dwconv_silu_kernel(%arg0: i32, %arg1: memref<1x8x256xf32, #tpu.memory_space<vmem>>, %arg2: memref<4x256xf32, #tpu.memory_space<vmem>>, %arg3: memref<1x256xf32, #tpu.memory_space<vmem>>, %arg4: memref<1x8x256xbf16, #tpu.memory_space<vmem>>) attributes {dimension_semantics = [#tpu.dimension_semantics<parallel>], iteration_bounds = array<i64: 2>, scalar_prefetch = 0 : i64, scratch_operands = 0 : i64, tpu.core_type = #tpu.core_type<tc>, window_params = [{transform_indices = @transform_0, window_bounds = array<i64: 1, 8, 256>}, {pipeline_mode = #tpu.pipeline_mode<synchronous>, transform_indices = @transform_1, window_bounds = array<i64: 4, 256>}, {pipeline_mode = #tpu.pipeline_mode<synchronous>, transform_indices = @transform_2, window_bounds = array<i64: 1, 256>}, {transform_indices = @transform_3, window_bounds = array<i64: 1, 8, 256>}]} {
    %c0 = arith.constant 0 : index
    %c0_0 = arith.constant 0 : index
    %c0_1 = arith.constant 0 : index
    %0 = vector.load %arg1[%c0, %c0_0, %c0_1] : memref<1x8x256xf32, #tpu.memory_space<vmem>>, vector<1x8x256xf32>
    %1 = vector.shape_cast %0 : vector<1x8x256xf32> to vector<8x256xf32>
    %2 = tpu.iota {dimensions = array<i32: 0>} : vector<8x256xi32>
    %cst = arith.constant 0.000000e+00 : f32
    %3 = vector.broadcast %cst : f32 to vector<8x256xf32>
    %c5_i32 = arith.constant 5 : i32
    %4 = vector.broadcast %c5_i32 : i32 to vector<8x256xi32>
    %5 = arith.cmpi slt, %2, %4 : vector<8x256xi32>
    %c5_i32_2 = arith.constant 5 : i32
    %6 = tpu.dynamic_rotate %1 by %c5_i32_2 dim 0 : vector<8x256xf32>, i32 -> vector<8x256xf32>
    %cst_3 = arith.constant 0.000000e+00 : f32
    %7 = vector.broadcast %cst_3 : f32 to vector<8x256xf32>
    %8 = arith.select %5, %6, %7 : vector<8x256xi1>, vector<8x256xf32>
    %c0_4 = arith.constant 0 : index
    %c0_5 = arith.constant 0 : index
    %9 = vector.load %arg2[%c0_4, %c0_5] : memref<4x256xf32, #tpu.memory_space<vmem>>, vector<1x256xf32>
    %10 = vector.broadcast %9 : vector<1x256xf32> to vector<8x256xf32>
    %11 = arith.mulf %8, %10 : vector<8x256xf32>
    %12 = arith.addf %3, %11 : vector<8x256xf32>
    %c6_i32 = arith.constant 6 : i32
    %13 = vector.broadcast %c6_i32 : i32 to vector<8x256xi32>
    %14 = arith.cmpi slt, %2, %13 : vector<8x256xi32>
    %c6_i32_6 = arith.constant 6 : i32
    %15 = tpu.dynamic_rotate %1 by %c6_i32_6 dim 0 : vector<8x256xf32>, i32 -> vector<8x256xf32>
    %cst_7 = arith.constant 0.000000e+00 : f32
    %16 = vector.broadcast %cst_7 : f32 to vector<8x256xf32>
    %17 = arith.select %14, %15, %16 : vector<8x256xi1>, vector<8x256xf32>
    %c1 = arith.constant 1 : index
    %c0_8 = arith.constant 0 : index
    %18 = vector.load %arg2[%c1, %c0_8] : memref<4x256xf32, #tpu.memory_space<vmem>>, vector<1x256xf32>
    %19 = vector.broadcast %18 : vector<1x256xf32> to vector<8x256xf32>
    %20 = arith.mulf %17, %19 : vector<8x256xf32>
    %21 = arith.addf %12, %20 : vector<8x256xf32>
    %c7_i32 = arith.constant 7 : i32
    %22 = vector.broadcast %c7_i32 : i32 to vector<8x256xi32>
    %23 = arith.cmpi slt, %2, %22 : vector<8x256xi32>
    %c7_i32_9 = arith.constant 7 : i32
    %24 = tpu.dynamic_rotate %1 by %c7_i32_9 dim 0 : vector<8x256xf32>, i32 -> vector<8x256xf32>
    %cst_10 = arith.constant 0.000000e+00 : f32
    %25 = vector.broadcast %cst_10 : f32 to vector<8x256xf32>
    %26 = arith.select %23, %24, %25 : vector<8x256xi1>, vector<8x256xf32>
    %c2 = arith.constant 2 : index
    %c0_11 = arith.constant 0 : index
    %27 = vector.load %arg2[%c2, %c0_11] : memref<4x256xf32, #tpu.memory_space<vmem>>, vector<1x256xf32>
    %28 = vector.broadcast %27 : vector<1x256xf32> to vector<8x256xf32>
    %29 = arith.mulf %26, %28 : vector<8x256xf32>
    %30 = arith.addf %21, %29 : vector<8x256xf32>
    %c3 = arith.constant 3 : index
    %c0_12 = arith.constant 0 : index
    %31 = vector.load %arg2[%c3, %c0_12] : memref<4x256xf32, #tpu.memory_space<vmem>>, vector<1x256xf32>
    %32 = vector.broadcast %31 : vector<1x256xf32> to vector<8x256xf32>
    %33 = arith.mulf %1, %32 : vector<8x256xf32>
    %34 = arith.addf %30, %33 : vector<8x256xf32>
    %c0_13 = arith.constant 0 : index
    %c0_14 = arith.constant 0 : index
    %35 = vector.load %arg3[%c0_13, %c0_14] : memref<1x256xf32, #tpu.memory_space<vmem>>, vector<1x256xf32>
    %36 = vector.broadcast %35 : vector<1x256xf32> to vector<8x256xf32>
    %37 = arith.addf %34, %36 : vector<8x256xf32>
    %cst_15 = arith.constant 0.000000e+00 : f32
    %38 = vector.broadcast %cst_15 : f32 to vector<8x256xf32>
    %39 = arith.subf %38, %37 : vector<8x256xf32>
    %40 = math.exp %39 : vector<8x256xf32>
    %cst_16 = arith.constant 1.000000e+00 : f32
    %41 = vector.broadcast %cst_16 : f32 to vector<8x256xf32>
    %42 = arith.addf %41, %40 : vector<8x256xf32>
    %cst_17 = arith.constant 1.000000e+00 : f32
    %43 = vector.broadcast %cst_17 : f32 to vector<8x256xf32>
    %44 = arith.divf %43, %42 : vector<8x256xf32>
    %45 = arith.mulf %37, %44 : vector<8x256xf32>
    %46 = arith.truncf %45 : vector<8x256xf32> to vector<8x256xbf16>
    %c0_18 = arith.constant 0 : index
    %c0_19 = arith.constant 0 : index
    %c0_20 = arith.constant 0 : index
    %47 = vector.load %arg4[%c0_18, %c0_19, %c0_20] : memref<1x8x256xbf16, #tpu.memory_space<vmem>>, vector<1x8x256xbf16>
    %48 = vector.shape_cast %47 : vector<1x8x256xbf16> to vector<8x256xbf16>
    %49 = vector.shape_cast %46 : vector<8x256xbf16> to vector<1x8x256xbf16>
    tpu.vector_store %arg4[%c0_18, %c0_19, %c0_20], %49 {strides = array<i32>} : memref<1x8x256xbf16, #tpu.memory_space<vmem>>, vector<1x8x256xbf16>,
    return
  }
  func.func @transform_0(%arg0: i32) -> (i32, i32, i32) {
    %c0_i32 = arith.constant 0 : i32
    %c0_i32_0 = arith.constant 0 : i32
    %c0_i32_1 = arith.constant 0 : i32
    return %arg0, %c0_i32, %c0_i32_0 : i32, i32, i32
  }
  func.func @transform_1(%arg0: i32) -> (i32, i32) {
    %c0_i32 = arith.constant 0 : i32
    %c0_i32_0 = arith.constant 0 : i32
    %c0_i32_1 = arith.constant 0 : i32
    return %c0_i32, %c0_i32_0 : i32, i32
  }
  func.func @transform_2(%arg0: i32) -> (i32, i32) {
    %c0_i32 = arith.constant 0 : i32
    %c0_i32_0 = arith.constant 0 : i32
    %c0_i32_1 = arith.constant 0 : i32
    return %c0_i32, %c0_i32_0 : i32, i32
  }
  func.func @transform_3(%arg0: i32) -> (i32, i32, i32) {
    %c0_i32 = arith.constant 0 : i32
    %c0_i32_0 = arith.constant 0 : i32
    %c0_i32_1 = arith.constant 0 : i32
    return %arg0, %c0_i32, %c0_i32_0 : i32, i32, i32
  }
}

module attributes {stable_mosaic.version = 11 : i64} {
  func.func @_selective_scan_kernel(%arg0: i32, %arg1: i32, %arg2: memref<1x8x256xbf16, #tpu.memory_space<vmem>>, %arg3: memref<1x8x256xf32, #tpu.memory_space<vmem>>, %arg4: memref<1x8x16x1xf32, #tpu.memory_space<vmem>>, %arg5: memref<1x8x16x1xf32, #tpu.memory_space<vmem>>, %arg6: memref<1x8x256xf32, #tpu.memory_space<vmem>>, %arg7: memref<16x256xf32, #tpu.memory_space<vmem>>, %arg8: memref<1x256xf32, #tpu.memory_space<vmem>>, %arg9: memref<1x8x256xf32, #tpu.memory_space<vmem>>, %arg10: memref<16x256xf32, #tpu.memory_space<vmem>>, %arg11: memref<8x16x256xf32, #tpu.memory_space<vmem>>, %arg12: memref<8x16x256xf32, #tpu.memory_space<vmem>>) attributes {dimension_semantics = [#tpu.dimension_semantics<parallel>, #tpu.dimension_semantics<arbitrary>], iteration_bounds = array<i64: 2, 1>, scalar_prefetch = 0 : i64, scratch_operands = 3 : i64, tpu.core_type = #tpu.core_type<tc>, window_params = [{transform_indices = @transform_0, window_bounds = array<i64: 1, 8, 256>}, {transform_indices = @transform_1, window_bounds = array<i64: 1, 8, 256>}, {transform_indices = @transform_2, window_bounds = array<i64: 1, 8, 16, 1>}, {transform_indices = @transform_3, window_bounds = array<i64: 1, 8, 16, 1>}, {transform_indices = @transform_4, window_bounds = array<i64: 1, 8, 256>}, {pipeline_mode = #tpu.pipeline_mode<synchronous>, transform_indices = @transform_5, window_bounds = array<i64: 16, 256>}, {pipeline_mode = #tpu.pipeline_mode<synchronous>, transform_indices = @transform_6, window_bounds = array<i64: 1, 256>}, {transform_indices = @transform_7, window_bounds = array<i64: 1, 8, 256>}]} {
    %c0_i32 = arith.constant 0 : i32
    %0 = arith.cmpi eq, %arg1, %c0_i32 : i32
    %1 = arith.extui %0 : i1 to i32
    %c0_i32_0 = arith.constant 0 : i32
    %2 = arith.cmpi ne, %1, %c0_i32_0 : i32
    scf.if %2 {
      %cst_100 = arith.constant 0.000000e+00 : f32
      %155 = vector.broadcast %cst_100 : f32 to vector<16x256xf32>
      %c0_101 = arith.constant 0 : index
      %c0_102 = arith.constant 0 : index
      %156 = vector.load %arg10[%c0_101, %c0_102] : memref<16x256xf32, #tpu.memory_space<vmem>>, vector<16x256xf32>
      tpu.vector_store %arg10[%c0_101, %c0_102], %155 {strides = array<i32>} : memref<16x256xf32, #tpu.memory_space<vmem>>, vector<16x256xf32>,
    } else {
    }
    %c0 = arith.constant 0 : index
    %c0_1 = arith.constant 0 : index
    %c0_2 = arith.constant 0 : index
    %3 = vector.load %arg2[%c0, %c0_1, %c0_2] : memref<1x8x256xbf16, #tpu.memory_space<vmem>>, vector<1x8x256xbf16>
    %4 = vector.shape_cast %3 : vector<1x8x256xbf16> to vector<8x256xbf16>
    %5 = arith.extf %4 : vector<8x256xbf16> to vector<8x256xf32>
    %c0_3 = arith.constant 0 : index
    %c0_4 = arith.constant 0 : index
    %c0_5 = arith.constant 0 : index
    %6 = vector.load %arg3[%c0_3, %c0_4, %c0_5] : memref<1x8x256xf32, #tpu.memory_space<vmem>>, vector<1x8x256xf32>
    %7 = vector.shape_cast %6 : vector<1x8x256xf32> to vector<8x256xf32>
    %cst = arith.constant 2.000000e+01 : f32
    %8 = vector.broadcast %cst : f32 to vector<8x256xf32>
    %9 = arith.minimumf %7, %8 : vector<8x256xf32>
    %cst_6 = arith.constant 2.000000e+01 : f32
    %10 = vector.broadcast %cst_6 : f32 to vector<8x256xf32>
    %11 = arith.cmpf ogt, %7, %10 : vector<8x256xf32>
    %12 = math.exp %9 : vector<8x256xf32>
    %cst_7 = arith.constant 1.000000e+00 : f32
    %13 = vector.broadcast %cst_7 : f32 to vector<8x256xf32>
    %14 = arith.addf %13, %12 : vector<8x256xf32>
    %15 = math.log %14 : vector<8x256xf32>
    %16 = arith.select %11, %7, %15 : vector<8x256xi1>, vector<8x256xf32>
    %c0_8 = arith.constant 0 : index
    %c0_9 = arith.constant 0 : index
    %17 = vector.load %arg7[%c0_8, %c0_9] : memref<16x256xf32, #tpu.memory_space<vmem>>, vector<16x256xf32>
    %18 = vector.shape_cast %16 : vector<8x256xf32> to vector<8x1x256xf32>
    %19 = vector.shape_cast %17 : vector<16x256xf32> to vector<1x16x256xf32>
    %20 = vector.broadcast %18 : vector<8x1x256xf32> to vector<8x16x256xf32>
    %21 = vector.broadcast %19 : vector<1x16x256xf32> to vector<8x16x256xf32>
    %22 = arith.mulf %20, %21 : vector<8x16x256xf32>
    %23 = math.exp %22 : vector<8x16x256xf32>
    %c0_10 = arith.constant 0 : index
    %c0_11 = arith.constant 0 : index
    %c0_12 = arith.constant 0 : index
    %24 = vector.load %arg11[%c0_10, %c0_11, %c0_12] : memref<8x16x256xf32, #tpu.memory_space<vmem>>, vector<8x16x256xf32>
    tpu.vector_store %arg11[%c0_10, %c0_11, %c0_12], %23 {strides = array<i32>} : memref<8x16x256xf32, #tpu.memory_space<vmem>>, vector<8x16x256xf32>,
    %25 = arith.mulf %16, %5 : vector<8x256xf32>
    %26 = vector.shape_cast %25 : vector<8x256xf32> to vector<8x1x256xf32>
    %c0_13 = arith.constant 0 : index
    %c0_14 = arith.constant 0 : index
    %c0_15 = arith.constant 0 : index
    %c0_16 = arith.constant 0 : index
    %27 = vector.load %arg4[%c0_13, %c0_14, %c0_15, %c0_16] : memref<1x8x16x1xf32, #tpu.memory_space<vmem>>, vector<1x8x16x1xf32>
    %28 = vector.shape_cast %27 : vector<1x8x16x1xf32> to vector<8x16x1xf32>
    %29 = vector.broadcast %26 : vector<8x1x256xf32> to vector<8x16x256xf32>
    %30 = vector.broadcast %28 : vector<8x16x1xf32> to vector<8x16x256xf32>
    %31 = arith.mulf %29, %30 : vector<8x16x256xf32>
    %c0_17 = arith.constant 0 : index
    %c0_18 = arith.constant 0 : index
    %c0_19 = arith.constant 0 : index
    %32 = vector.load %arg12[%c0_17, %c0_18, %c0_19] : memref<8x16x256xf32, #tpu.memory_space<vmem>>, vector<8x16x256xf32>
    tpu.vector_store %arg12[%c0_17, %c0_18, %c0_19], %31 {strides = array<i32>} : memref<8x16x256xf32, #tpu.memory_space<vmem>>, vector<8x16x256xf32>,
    %c0_20 = arith.constant 0 : index
    %c0_21 = arith.constant 0 : index
    %33 = vector.load %arg10[%c0_20, %c0_21] : memref<16x256xf32, #tpu.memory_space<vmem>>, vector<16x256xf32>
    %c0_i32_22 = arith.constant 0 : i32
    %c7_i32 = arith.constant 7 : i32
    %34 = arith.subi %c7_i32, %c0_i32_22 : i32
    %35 = arith.index_cast %34 : i32 to index
    %c0_23 = arith.constant 0 : index
    %c0_24 = arith.constant 0 : index
    %36 = vector.load %arg11[%35, %c0_23, %c0_24] : memref<8x16x256xf32, #tpu.memory_space<vmem>>, vector<1x16x256xf32>
    %37 = vector.shape_cast %36 : vector<1x16x256xf32> to vector<16x256xf32>
    %38 = arith.mulf %37, %33 : vector<16x256xf32>
    %39 = arith.index_cast %34 : i32 to index
    %c0_25 = arith.constant 0 : index
    %c0_26 = arith.constant 0 : index
    %40 = vector.load %arg12[%39, %c0_25, %c0_26] : memref<8x16x256xf32, #tpu.memory_space<vmem>>, vector<1x16x256xf32>
    %41 = vector.shape_cast %40 : vector<1x16x256xf32> to vector<16x256xf32>
    %42 = arith.addf %38, %41 : vector<16x256xf32>
    %43 = vector.shape_cast %42 : vector<16x256xf32> to vector<1x16x256xf32>
    %44 = arith.index_cast %34 : i32 to index
    %c0_27 = arith.constant 0 : index
    %c0_28 = arith.constant 0 : index
    %45 = vector.load %arg12[%44, %c0_27, %c0_28] : memref<8x16x256xf32, #tpu.memory_space<vmem>>, vector<1x16x256xf32>
    tpu.vector_store %arg12[%44, %c0_27, %c0_28], %43 {strides = array<i32>} : memref<8x16x256xf32, #tpu.memory_space<vmem>>, vector<1x16x256xf32>,
    %c1_i32 = arith.constant 1 : i32
    %c7_i32_29 = arith.constant 7 : i32
    %46 = arith.subi %c7_i32_29, %c1_i32 : i32
    %47 = arith.index_cast %46 : i32 to index
    %c0_30 = arith.constant 0 : index
    %c0_31 = arith.constant 0 : index
    %48 = vector.load %arg11[%47, %c0_30, %c0_31] : memref<8x16x256xf32, #tpu.memory_space<vmem>>, vector<1x16x256xf32>
    %49 = vector.shape_cast %48 : vector<1x16x256xf32> to vector<16x256xf32>
    %50 = arith.mulf %49, %42 : vector<16x256xf32>
    %51 = arith.index_cast %46 : i32 to index
    %c0_32 = arith.constant 0 : index
    %c0_33 = arith.constant 0 : index
    %52 = vector.load %arg12[%51, %c0_32, %c0_33] : memref<8x16x256xf32, #tpu.memory_space<vmem>>, vector<1x16x256xf32>
    %53 = vector.shape_cast %52 : vector<1x16x256xf32> to vector<16x256xf32>
    %54 = arith.addf %50, %53 : vector<16x256xf32>
    %55 = vector.shape_cast %54 : vector<16x256xf32> to vector<1x16x256xf32>
    %56 = arith.index_cast %46 : i32 to index
    %c0_34 = arith.constant 0 : index
    %c0_35 = arith.constant 0 : index
    %57 = vector.load %arg12[%56, %c0_34, %c0_35] : memref<8x16x256xf32, #tpu.memory_space<vmem>>, vector<1x16x256xf32>
    tpu.vector_store %arg12[%56, %c0_34, %c0_35], %55 {strides = array<i32>} : memref<8x16x256xf32, #tpu.memory_space<vmem>>, vector<1x16x256xf32>,
    %c2_i32 = arith.constant 2 : i32
    %c7_i32_36 = arith.constant 7 : i32
    %58 = arith.subi %c7_i32_36, %c2_i32 : i32
    %59 = arith.index_cast %58 : i32 to index
    %c0_37 = arith.constant 0 : index
    %c0_38 = arith.constant 0 : index
    %60 = vector.load %arg11[%59, %c0_37, %c0_38] : memref<8x16x256xf32, #tpu.memory_space<vmem>>, vector<1x16x256xf32>
    %61 = vector.shape_cast %60 : vector<1x16x256xf32> to vector<16x256xf32>
    %62 = arith.mulf %61, %54 : vector<16x256xf32>
    %63 = arith.index_cast %58 : i32 to index
    %c0_39 = arith.constant 0 : index
    %c0_40 = arith.constant 0 : index
    %64 = vector.load %arg12[%63, %c0_39, %c0_40] : memref<8x16x256xf32, #tpu.memory_space<vmem>>, vector<1x16x256xf32>
    %65 = vector.shape_cast %64 : vector<1x16x256xf32> to vector<16x256xf32>
    %66 = arith.addf %62, %65 : vector<16x256xf32>
    %67 = vector.shape_cast %66 : vector<16x256xf32> to vector<1x16x256xf32>
    %68 = arith.index_cast %58 : i32 to index
    %c0_41 = arith.constant 0 : index
    %c0_42 = arith.constant 0 : index
    %69 = vector.load %arg12[%68, %c0_41, %c0_42] : memref<8x16x256xf32, #tpu.memory_space<vmem>>, vector<1x16x256xf32>
    tpu.vector_store %arg12[%68, %c0_41, %c0_42], %67 {strides = array<i32>} : memref<8x16x256xf32, #tpu.memory_space<vmem>>, vector<1x16x256xf32>,
    %c3_i32 = arith.constant 3 : i32
    %c7_i32_43 = arith.constant 7 : i32
    %70 = arith.subi %c7_i32_43, %c3_i32 : i32
    %71 = arith.index_cast %70 : i32 to index
    %c0_44 = arith.constant 0 : index
    %c0_45 = arith.constant 0 : index
    %72 = vector.load %arg11[%71, %c0_44, %c0_45] : memref<8x16x256xf32, #tpu.memory_space<vmem>>, vector<1x16x256xf32>
    %73 = vector.shape_cast %72 : vector<1x16x256xf32> to vector<16x256xf32>
    %74 = arith.mulf %73, %66 : vector<16x256xf32>
    %75 = arith.index_cast %70 : i32 to index
    %c0_46 = arith.constant 0 : index
    %c0_47 = arith.constant 0 : index
    %76 = vector.load %arg12[%75, %c0_46, %c0_47] : memref<8x16x256xf32, #tpu.memory_space<vmem>>, vector<1x16x256xf32>
    %77 = vector.shape_cast %76 : vector<1x16x256xf32> to vector<16x256xf32>
    %78 = arith.addf %74, %77 : vector<16x256xf32>
    %79 = vector.shape_cast %78 : vector<16x256xf32> to vector<1x16x256xf32>
    %80 = arith.index_cast %70 : i32 to index
    %c0_48 = arith.constant 0 : index
    %c0_49 = arith.constant 0 : index
    %81 = vector.load %arg12[%80, %c0_48, %c0_49] : memref<8x16x256xf32, #tpu.memory_space<vmem>>, vector<1x16x256xf32>
    tpu.vector_store %arg12[%80, %c0_48, %c0_49], %79 {strides = array<i32>} : memref<8x16x256xf32, #tpu.memory_space<vmem>>, vector<1x16x256xf32>,
    %c4_i32 = arith.constant 4 : i32
    %c7_i32_50 = arith.constant 7 : i32
    %82 = arith.subi %c7_i32_50, %c4_i32 : i32
    %83 = arith.index_cast %82 : i32 to index
    %c0_51 = arith.constant 0 : index
    %c0_52 = arith.constant 0 : index
    %84 = vector.load %arg11[%83, %c0_51, %c0_52] : memref<8x16x256xf32, #tpu.memory_space<vmem>>, vector<1x16x256xf32>
    %85 = vector.shape_cast %84 : vector<1x16x256xf32> to vector<16x256xf32>
    %86 = arith.mulf %85, %78 : vector<16x256xf32>
    %87 = arith.index_cast %82 : i32 to index
    %c0_53 = arith.constant 0 : index
    %c0_54 = arith.constant 0 : index
    %88 = vector.load %arg12[%87, %c0_53, %c0_54] : memref<8x16x256xf32, #tpu.memory_space<vmem>>, vector<1x16x256xf32>
    %89 = vector.shape_cast %88 : vector<1x16x256xf32> to vector<16x256xf32>
    %90 = arith.addf %86, %89 : vector<16x256xf32>
    %91 = vector.shape_cast %90 : vector<16x256xf32> to vector<1x16x256xf32>
    %92 = arith.index_cast %82 : i32 to index
    %c0_55 = arith.constant 0 : index
    %c0_56 = arith.constant 0 : index
    %93 = vector.load %arg12[%92, %c0_55, %c0_56] : memref<8x16x256xf32, #tpu.memory_space<vmem>>, vector<1x16x256xf32>
    tpu.vector_store %arg12[%92, %c0_55, %c0_56], %91 {strides = array<i32>} : memref<8x16x256xf32, #tpu.memory_space<vmem>>, vector<1x16x256xf32>,
    %c5_i32 = arith.constant 5 : i32
    %c7_i32_57 = arith.constant 7 : i32
    %94 = arith.subi %c7_i32_57, %c5_i32 : i32
    %95 = arith.index_cast %94 : i32 to index
    %c0_58 = arith.constant 0 : index
    %c0_59 = arith.constant 0 : index
    %96 = vector.load %arg11[%95, %c0_58, %c0_59] : memref<8x16x256xf32, #tpu.memory_space<vmem>>, vector<1x16x256xf32>
    %97 = vector.shape_cast %96 : vector<1x16x256xf32> to vector<16x256xf32>
    %98 = arith.mulf %97, %90 : vector<16x256xf32>
    %99 = arith.index_cast %94 : i32 to index
    %c0_60 = arith.constant 0 : index
    %c0_61 = arith.constant 0 : index
    %100 = vector.load %arg12[%99, %c0_60, %c0_61] : memref<8x16x256xf32, #tpu.memory_space<vmem>>, vector<1x16x256xf32>
    %101 = vector.shape_cast %100 : vector<1x16x256xf32> to vector<16x256xf32>
    %102 = arith.addf %98, %101 : vector<16x256xf32>
    %103 = vector.shape_cast %102 : vector<16x256xf32> to vector<1x16x256xf32>
    %104 = arith.index_cast %94 : i32 to index
    %c0_62 = arith.constant 0 : index
    %c0_63 = arith.constant 0 : index
    %105 = vector.load %arg12[%104, %c0_62, %c0_63] : memref<8x16x256xf32, #tpu.memory_space<vmem>>, vector<1x16x256xf32>
    tpu.vector_store %arg12[%104, %c0_62, %c0_63], %103 {strides = array<i32>} : memref<8x16x256xf32, #tpu.memory_space<vmem>>, vector<1x16x256xf32>,
    %c6_i32 = arith.constant 6 : i32
    %c7_i32_64 = arith.constant 7 : i32
    %106 = arith.subi %c7_i32_64, %c6_i32 : i32
    %107 = arith.index_cast %106 : i32 to index
    %c0_65 = arith.constant 0 : index
    %c0_66 = arith.constant 0 : index
    %108 = vector.load %arg11[%107, %c0_65, %c0_66] : memref<8x16x256xf32, #tpu.memory_space<vmem>>, vector<1x16x256xf32>
    %109 = vector.shape_cast %108 : vector<1x16x256xf32> to vector<16x256xf32>
    %110 = arith.mulf %109, %102 : vector<16x256xf32>
    %111 = arith.index_cast %106 : i32 to index
    %c0_67 = arith.constant 0 : index
    %c0_68 = arith.constant 0 : index
    %112 = vector.load %arg12[%111, %c0_67, %c0_68] : memref<8x16x256xf32, #tpu.memory_space<vmem>>, vector<1x16x256xf32>
    %113 = vector.shape_cast %112 : vector<1x16x256xf32> to vector<16x256xf32>
    %114 = arith.addf %110, %113 : vector<16x256xf32>
    %115 = vector.shape_cast %114 : vector<16x256xf32> to vector<1x16x256xf32>
    %116 = arith.index_cast %106 : i32 to index
    %c0_69 = arith.constant 0 : index
    %c0_70 = arith.constant 0 : index
    %117 = vector.load %arg12[%116, %c0_69, %c0_70] : memref<8x16x256xf32, #tpu.memory_space<vmem>>, vector<1x16x256xf32>
    tpu.vector_store %arg12[%116, %c0_69, %c0_70], %115 {strides = array<i32>} : memref<8x16x256xf32, #tpu.memory_space<vmem>>, vector<1x16x256xf32>,
    %c7_i32_71 = arith.constant 7 : i32
    %c7_i32_72 = arith.constant 7 : i32
    %118 = arith.subi %c7_i32_72, %c7_i32_71 : i32
    %119 = arith.index_cast %118 : i32 to index
    %c0_73 = arith.constant 0 : index
    %c0_74 = arith.constant 0 : index
    %120 = vector.load %arg11[%119, %c0_73, %c0_74] : memref<8x16x256xf32, #tpu.memory_space<vmem>>, vector<1x16x256xf32>
    %121 = vector.shape_cast %120 : vector<1x16x256xf32> to vector<16x256xf32>
    %122 = arith.mulf %121, %114 : vector<16x256xf32>
    %123 = arith.index_cast %118 : i32 to index
    %c0_75 = arith.constant 0 : index
    %c0_76 = arith.constant 0 : index
    %124 = vector.load %arg12[%123, %c0_75, %c0_76] : memref<8x16x256xf32, #tpu.memory_space<vmem>>, vector<1x16x256xf32>
    %125 = vector.shape_cast %124 : vector<1x16x256xf32> to vector<16x256xf32>
    %126 = arith.addf %122, %125 : vector<16x256xf32>
    %127 = vector.shape_cast %126 : vector<16x256xf32> to vector<1x16x256xf32>
    %128 = arith.index_cast %118 : i32 to index
    %c0_77 = arith.constant 0 : index
    %c0_78 = arith.constant 0 : index
    %129 = vector.load %arg12[%128, %c0_77, %c0_78] : memref<8x16x256xf32, #tpu.memory_space<vmem>>, vector<1x16x256xf32>
    tpu.vector_store %arg12[%128, %c0_77, %c0_78], %127 {strides = array<i32>} : memref<8x16x256xf32, #tpu.memory_space<vmem>>, vector<1x16x256xf32>,
    %c8_i32 = arith.constant 8 : i32
    %c0_79 = arith.constant 0 : index
    %c0_80 = arith.constant 0 : index
    %130 = vector.load %arg10[%c0_79, %c0_80] : memref<16x256xf32, #tpu.memory_space<vmem>>, vector<16x256xf32>
    tpu.vector_store %arg10[%c0_79, %c0_80], %126 {strides = array<i32>} : memref<16x256xf32, #tpu.memory_space<vmem>>, vector<16x256xf32>,
    %c0_81 = arith.constant 0 : index
    %c0_82 = arith.constant 0 : index
    %c0_83 = arith.constant 0 : index
    %c0_84 = arith.constant 0 : index
    %131 = vector.load %arg5[%c0_81, %c0_82, %c0_83, %c0_84] : memref<1x8x16x1xf32, #tpu.memory_space<vmem>>, vector<1x8x16x1xf32>
    %132 = vector.shape_cast %131 : vector<1x8x16x1xf32> to vector<8x16x1xf32>
    %c0_85 = arith.constant 0 : index
    %c0_86 = arith.constant 0 : index
    %c0_87 = arith.constant 0 : index
    %133 = vector.load %arg12[%c0_85, %c0_86, %c0_87] : memref<8x16x256xf32, #tpu.memory_space<vmem>>, vector<8x16x256xf32>
    %134 = vector.broadcast %132 : vector<8x16x1xf32> to vector<8x16x256xf32>
    %135 = arith.mulf %134, %133 : vector<8x16x256xf32>
    %cst_88 = arith.constant dense<0.000000e+00> : vector<8x256xf32>
    %136 = vector.multi_reduction <add>, %135, %cst_88 [1] : vector<8x16x256xf32> to vector<8x256xf32>
    %c0_89 = arith.constant 0 : index
    %c0_90 = arith.constant 0 : index
    %137 = vector.load %arg8[%c0_89, %c0_90] : memref<1x256xf32, #tpu.memory_space<vmem>>, vector<1x256xf32>
    %138 = vector.broadcast %137 : vector<1x256xf32> to vector<8x256xf32>
    %139 = arith.mulf %138, %5 : vector<8x256xf32>
    %140 = arith.addf %136, %139 : vector<8x256xf32>
    %c0_91 = arith.constant 0 : index
    %c0_92 = arith.constant 0 : index
    %c0_93 = arith.constant 0 : index
    %141 = vector.load %arg6[%c0_91, %c0_92, %c0_93] : memref<1x8x256xf32, #tpu.memory_space<vmem>>, vector<1x8x256xf32>
    %142 = vector.shape_cast %141 : vector<1x8x256xf32> to vector<8x256xf32>
    %cst_94 = arith.constant 0.000000e+00 : f32
    %143 = vector.broadcast %cst_94 : f32 to vector<8x256xf32>
    %144 = arith.subf %143, %142 : vector<8x256xf32>
    %145 = math.exp %144 : vector<8x256xf32>
    %cst_95 = arith.constant 1.000000e+00 : f32
    %146 = vector.broadcast %cst_95 : f32 to vector<8x256xf32>
    %147 = arith.addf %146, %145 : vector<8x256xf32>
    %cst_96 = arith.constant 1.000000e+00 : f32
    %148 = vector.broadcast %cst_96 : f32 to vector<8x256xf32>
    %149 = arith.divf %148, %147 : vector<8x256xf32>
    %150 = arith.mulf %142, %149 : vector<8x256xf32>
    %151 = arith.mulf %140, %150 : vector<8x256xf32>
    %c0_97 = arith.constant 0 : index
    %c0_98 = arith.constant 0 : index
    %c0_99 = arith.constant 0 : index
    %152 = vector.load %arg9[%c0_97, %c0_98, %c0_99] : memref<1x8x256xf32, #tpu.memory_space<vmem>>, vector<1x8x256xf32>
    %153 = vector.shape_cast %152 : vector<1x8x256xf32> to vector<8x256xf32>
    %154 = vector.shape_cast %151 : vector<8x256xf32> to vector<1x8x256xf32>
    tpu.vector_store %arg9[%c0_97, %c0_98, %c0_99], %154 {strides = array<i32>} : memref<1x8x256xf32, #tpu.memory_space<vmem>>, vector<1x8x256xf32>,
    return
  }
  func.func @transform_0(%arg0: i32, %arg1: i32) -> (i32, i32, i32) {
    %c0_i32 = arith.constant 0 : i32
    %0 = arith.subi %c0_i32, %arg1 : i32
    %c0_i32_0 = arith.constant 0 : i32
    %c0_i32_1 = arith.constant 0 : i32
    return %arg0, %0, %c0_i32_0 : i32, i32, i32
  }
  func.func @transform_1(%arg0: i32, %arg1: i32) -> (i32, i32, i32) {
    %c0_i32 = arith.constant 0 : i32
    %0 = arith.subi %c0_i32, %arg1 : i32
    %c0_i32_0 = arith.constant 0 : i32
    %c0_i32_1 = arith.constant 0 : i32
    return %arg0, %0, %c0_i32_0 : i32, i32, i32
  }
  func.func @transform_2(%arg0: i32, %arg1: i32) -> (i32, i32, i32, i32) {
    %c0_i32 = arith.constant 0 : i32
    %0 = arith.subi %c0_i32, %arg1 : i32
    %c0_i32_0 = arith.constant 0 : i32
    %c0_i32_1 = arith.constant 0 : i32
    %c0_i32_2 = arith.constant 0 : i32
    return %arg0, %0, %c0_i32_0, %c0_i32_1 : i32, i32, i32, i32
  }
  func.func @transform_3(%arg0: i32, %arg1: i32) -> (i32, i32, i32, i32) {
    %c0_i32 = arith.constant 0 : i32
    %0 = arith.subi %c0_i32, %arg1 : i32
    %c0_i32_0 = arith.constant 0 : i32
    %c0_i32_1 = arith.constant 0 : i32
    %c0_i32_2 = arith.constant 0 : i32
    return %arg0, %0, %c0_i32_0, %c0_i32_1 : i32, i32, i32, i32
  }
  func.func @transform_4(%arg0: i32, %arg1: i32) -> (i32, i32, i32) {
    %c0_i32 = arith.constant 0 : i32
    %0 = arith.subi %c0_i32, %arg1 : i32
    %c1_i32 = arith.constant 1 : i32
    %c0_i32_0 = arith.constant 0 : i32
    return %arg0, %0, %c1_i32 : i32, i32, i32
  }
  func.func @transform_5(%arg0: i32, %arg1: i32) -> (i32, i32) {
    %c0_i32 = arith.constant 0 : i32
    %c0_i32_0 = arith.constant 0 : i32
    %c0_i32_1 = arith.constant 0 : i32
    return %c0_i32, %c0_i32_0 : i32, i32
  }
  func.func @transform_6(%arg0: i32, %arg1: i32) -> (i32, i32) {
    %c0_i32 = arith.constant 0 : i32
    %c0_i32_0 = arith.constant 0 : i32
    %c0_i32_1 = arith.constant 0 : i32
    return %c0_i32, %c0_i32_0 : i32, i32
  }
  func.func @transform_7(%arg0: i32, %arg1: i32) -> (i32, i32, i32) {
    %c0_i32 = arith.constant 0 : i32
    %0 = arith.subi %c0_i32, %arg1 : i32
    %c0_i32_0 = arith.constant 0 : i32
    %c0_i32_1 = arith.constant 0 : i32
    return %arg0, %0, %c0_i32_0 : i32, i32, i32
  }
}

module attributes {stable_mosaic.version = 11 : i64} {
  func.func @_matmul_bias_kernel_fast(%arg0: i32, %arg1: i32, %arg2: memref<16x256xbf16, #tpu.memory_space<vmem>>, %arg3: memref<256x128xbf16, #tpu.memory_space<vmem>>, %arg4: memref<1x128xf32, #tpu.memory_space<vmem>>, %arg5: memref<16x128xf32, #tpu.memory_space<vmem>>) attributes {dimension_semantics = [#tpu.dimension_semantics<parallel>, #tpu.dimension_semantics<parallel>], iteration_bounds = array<i64: 1, 3>, scalar_prefetch = 0 : i64, scratch_operands = 0 : i64, tpu.core_type = #tpu.core_type<tc>, window_params = [{transform_indices = @transform_0, window_bounds = array<i64: 16, 256>}, {transform_indices = @transform_1, window_bounds = array<i64: 256, 128>}, {transform_indices = @transform_2, window_bounds = array<i64: 1, 128>}, {transform_indices = @transform_3, window_bounds = array<i64: 16, 128>}]} {
    %c0 = arith.constant 0 : index
    %c0_0 = arith.constant 0 : index
    %0 = vector.load %arg2[%c0, %c0_0] : memref<16x256xbf16, #tpu.memory_space<vmem>>, vector<16x256xbf16>
    %c0_1 = arith.constant 0 : index
    %c0_2 = arith.constant 0 : index
    %1 = vector.load %arg3[%c0_1, %c0_2] : memref<256x128xbf16, #tpu.memory_space<vmem>>, vector<256x128xbf16>
    %cst = arith.constant dense<0.000000e+00> : vector<16x128xf32>
    %2 = tpu.matmul %0, %1, %cst {dimension_numbers = #tpu.dot_dimension_numbers<[1], [0], [0], [1], [0, 0, 1, 1], [], []>} : vector<16x256xbf16>, vector<256x128xbf16>, vector<16x128xf32> -> vector<16x128xf32>
    %c0_3 = arith.constant 0 : index
    %c0_4 = arith.constant 0 : index
    %3 = vector.load %arg4[%c0_3, %c0_4] : memref<1x128xf32, #tpu.memory_space<vmem>>, vector<1x128xf32>
    %4 = vector.broadcast %3 : vector<1x128xf32> to vector<16x128xf32>
    %5 = arith.addf %2, %4 : vector<16x128xf32>
    %c0_5 = arith.constant 0 : index
    %c0_6 = arith.constant 0 : index
    %6 = vector.load %arg5[%c0_5, %c0_6] : memref<16x128xf32, #tpu.memory_space<vmem>>, vector<16x128xf32>
    tpu.vector_store %arg5[%c0_5, %c0_6], %5 {strides = array<i32>} : memref<16x128xf32, #tpu.memory_space<vmem>>, vector<16x128xf32>,
    return
  }
  func.func @transform_0(%arg0: i32, %arg1: i32) -> (i32, i32) {
    %c0_i32 = arith.constant 0 : i32
    %c0_i32_0 = arith.constant 0 : i32
    return %arg0, %c0_i32 : i32, i32
  }
  func.func @transform_1(%arg0: i32, %arg1: i32) -> (i32, i32) {
    %c0_i32 = arith.constant 0 : i32
    %c0_i32_0 = arith.constant 0 : i32
    return %c0_i32, %arg1 : i32, i32
  }
  func.func @transform_2(%arg0: i32, %arg1: i32) -> (i32, i32) {
    %c0_i32 = arith.constant 0 : i32
    %c0_i32_0 = arith.constant 0 : i32
    return %c0_i32, %arg1 : i32, i32
  }
  func.func @transform_3(%arg0: i32, %arg1: i32) -> (i32, i32) {
    %c0_i32 = arith.constant 0 : i32
    return %arg0, %arg1 : i32, i32
  }
}

module attributes {stable_mosaic.version = 11 : i64} {
  func.func @_dwconv_silu_kernel(%arg0: i32, %arg1: memref<1x8x256xf32, #tpu.memory_space<vmem>>, %arg2: memref<4x256xf32, #tpu.memory_space<vmem>>, %arg3: memref<1x256xf32, #tpu.memory_space<vmem>>, %arg4: memref<1x8x256xbf16, #tpu.memory_space<vmem>>) attributes {dimension_semantics = [#tpu.dimension_semantics<parallel>], iteration_bounds = array<i64: 2>, scalar_prefetch = 0 : i64, scratch_operands = 0 : i64, tpu.core_type = #tpu.core_type<tc>, window_params = [{transform_indices = @transform_0, window_bounds = array<i64: 1, 8, 256>}, {pipeline_mode = #tpu.pipeline_mode<synchronous>, transform_indices = @transform_1, window_bounds = array<i64: 4, 256>}, {pipeline_mode = #tpu.pipeline_mode<synchronous>, transform_indices = @transform_2, window_bounds = array<i64: 1, 256>}, {transform_indices = @transform_3, window_bounds = array<i64: 1, 8, 256>}]} {
    %c0 = arith.constant 0 : index
    %c0_0 = arith.constant 0 : index
    %c0_1 = arith.constant 0 : index
    %0 = vector.load %arg1[%c0, %c0_0, %c0_1] : memref<1x8x256xf32, #tpu.memory_space<vmem>>, vector<1x8x256xf32>
    %1 = vector.shape_cast %0 : vector<1x8x256xf32> to vector<8x256xf32>
    %2 = tpu.iota {dimensions = array<i32: 0>} : vector<8x256xi32>
    %cst = arith.constant 0.000000e+00 : f32
    %3 = vector.broadcast %cst : f32 to vector<8x256xf32>
    %c3_i32 = arith.constant 3 : i32
    %4 = vector.broadcast %c3_i32 : i32 to vector<8x256xi32>
    %5 = arith.cmpi sge, %2, %4 : vector<8x256xi32>
    %c3_i32_2 = arith.constant 3 : i32
    %6 = tpu.dynamic_rotate %1 by %c3_i32_2 dim 0 : vector<8x256xf32>, i32 -> vector<8x256xf32>
    %cst_3 = arith.constant 0.000000e+00 : f32
    %7 = vector.broadcast %cst_3 : f32 to vector<8x256xf32>
    %8 = arith.select %5, %6, %7 : vector<8x256xi1>, vector<8x256xf32>
    %c0_4 = arith.constant 0 : index
    %c0_5 = arith.constant 0 : index
    %9 = vector.load %arg2[%c0_4, %c0_5] : memref<4x256xf32, #tpu.memory_space<vmem>>, vector<1x256xf32>
    %10 = vector.broadcast %9 : vector<1x256xf32> to vector<8x256xf32>
    %11 = arith.mulf %8, %10 : vector<8x256xf32>
    %12 = arith.addf %3, %11 : vector<8x256xf32>
    %c2_i32 = arith.constant 2 : i32
    %13 = vector.broadcast %c2_i32 : i32 to vector<8x256xi32>
    %14 = arith.cmpi sge, %2, %13 : vector<8x256xi32>
    %c2_i32_6 = arith.constant 2 : i32
    %15 = tpu.dynamic_rotate %1 by %c2_i32_6 dim 0 : vector<8x256xf32>, i32 -> vector<8x256xf32>
    %cst_7 = arith.constant 0.000000e+00 : f32
    %16 = vector.broadcast %cst_7 : f32 to vector<8x256xf32>
    %17 = arith.select %14, %15, %16 : vector<8x256xi1>, vector<8x256xf32>
    %c1 = arith.constant 1 : index
    %c0_8 = arith.constant 0 : index
    %18 = vector.load %arg2[%c1, %c0_8] : memref<4x256xf32, #tpu.memory_space<vmem>>, vector<1x256xf32>
    %19 = vector.broadcast %18 : vector<1x256xf32> to vector<8x256xf32>
    %20 = arith.mulf %17, %19 : vector<8x256xf32>
    %21 = arith.addf %12, %20 : vector<8x256xf32>
    %c1_i32 = arith.constant 1 : i32
    %22 = vector.broadcast %c1_i32 : i32 to vector<8x256xi32>
    %23 = arith.cmpi sge, %2, %22 : vector<8x256xi32>
    %c1_i32_9 = arith.constant 1 : i32
    %24 = tpu.dynamic_rotate %1 by %c1_i32_9 dim 0 : vector<8x256xf32>, i32 -> vector<8x256xf32>
    %cst_10 = arith.constant 0.000000e+00 : f32
    %25 = vector.broadcast %cst_10 : f32 to vector<8x256xf32>
    %26 = arith.select %23, %24, %25 : vector<8x256xi1>, vector<8x256xf32>
    %c2 = arith.constant 2 : index
    %c0_11 = arith.constant 0 : index
    %27 = vector.load %arg2[%c2, %c0_11] : memref<4x256xf32, #tpu.memory_space<vmem>>, vector<1x256xf32>
    %28 = vector.broadcast %27 : vector<1x256xf32> to vector<8x256xf32>
    %29 = arith.mulf %26, %28 : vector<8x256xf32>
    %30 = arith.addf %21, %29 : vector<8x256xf32>
    %c3 = arith.constant 3 : index
    %c0_12 = arith.constant 0 : index
    %31 = vector.load %arg2[%c3, %c0_12] : memref<4x256xf32, #tpu.memory_space<vmem>>, vector<1x256xf32>
    %32 = vector.broadcast %31 : vector<1x256xf32> to vector<8x256xf32>
    %33 = arith.mulf %1, %32 : vector<8x256xf32>
    %34 = arith.addf %30, %33 : vector<8x256xf32>
    %c0_13 = arith.constant 0 : index
    %c0_14 = arith.constant 0 : index
    %35 = vector.load %arg3[%c0_13, %c0_14] : memref<1x256xf32, #tpu.memory_space<vmem>>, vector<1x256xf32>
    %36 = vector.broadcast %35 : vector<1x256xf32> to vector<8x256xf32>
    %37 = arith.addf %34, %36 : vector<8x256xf32>
    %cst_15 = arith.constant 0.000000e+00 : f32
    %38 = vector.broadcast %cst_15 : f32 to vector<8x256xf32>
    %39 = arith.subf %38, %37 : vector<8x256xf32>
    %40 = math.exp %39 : vector<8x256xf32>
    %cst_16 = arith.constant 1.000000e+00 : f32
    %41 = vector.broadcast %cst_16 : f32 to vector<8x256xf32>
    %42 = arith.addf %41, %40 : vector<8x256xf32>
    %cst_17 = arith.constant 1.000000e+00 : f32
    %43 = vector.broadcast %cst_17 : f32 to vector<8x256xf32>
    %44 = arith.divf %43, %42 : vector<8x256xf32>
    %45 = arith.mulf %37, %44 : vector<8x256xf32>
    %46 = arith.truncf %45 : vector<8x256xf32> to vector<8x256xbf16>
    %c0_18 = arith.constant 0 : index
    %c0_19 = arith.constant 0 : index
    %c0_20 = arith.constant 0 : index
    %47 = vector.load %arg4[%c0_18, %c0_19, %c0_20] : memref<1x8x256xbf16, #tpu.memory_space<vmem>>, vector<1x8x256xbf16>
    %48 = vector.shape_cast %47 : vector<1x8x256xbf16> to vector<8x256xbf16>
    %49 = vector.shape_cast %46 : vector<8x256xbf16> to vector<1x8x256xbf16>
    tpu.vector_store %arg4[%c0_18, %c0_19, %c0_20], %49 {strides = array<i32>} : memref<1x8x256xbf16, #tpu.memory_space<vmem>>, vector<1x8x256xbf16>,
    return
  }
  func.func @transform_0(%arg0: i32) -> (i32, i32, i32) {
    %c0_i32 = arith.constant 0 : i32
    %c0_i32_0 = arith.constant 0 : i32
    %c0_i32_1 = arith.constant 0 : i32
    return %arg0, %c0_i32, %c0_i32_0 : i32, i32, i32
  }
  func.func @transform_1(%arg0: i32) -> (i32, i32) {
    %c0_i32 = arith.constant 0 : i32
    %c0_i32_0 = arith.constant 0 : i32
    %c0_i32_1 = arith.constant 0 : i32
    return %c0_i32, %c0_i32_0 : i32, i32
  }
  func.func @transform_2(%arg0: i32) -> (i32, i32) {
    %c0_i32 = arith.constant 0 : i32
    %c0_i32_0 = arith.constant 0 : i32
    %c0_i32_1 = arith.constant 0 : i32
    return %c0_i32, %c0_i32_0 : i32, i32
  }
  func.func @transform_3(%arg0: i32) -> (i32, i32, i32) {
    %c0_i32 = arith.constant 0 : i32
    %c0_i32_0 = arith.constant 0 : i32
    %c0_i32_1 = arith.constant 0 : i32
    return %arg0, %c0_i32, %c0_i32_0 : i32, i32, i32
  }
}

module attributes {stable_mosaic.version = 11 : i64} {
  func.func @_selective_scan_kernel(%arg0: i32, %arg1: i32, %arg2: memref<1x8x256xbf16, #tpu.memory_space<vmem>>, %arg3: memref<1x8x256xf32, #tpu.memory_space<vmem>>, %arg4: memref<1x8x16x1xf32, #tpu.memory_space<vmem>>, %arg5: memref<1x8x16x1xf32, #tpu.memory_space<vmem>>, %arg6: memref<1x8x256xf32, #tpu.memory_space<vmem>>, %arg7: memref<16x256xf32, #tpu.memory_space<vmem>>, %arg8: memref<1x256xf32, #tpu.memory_space<vmem>>, %arg9: memref<1x8x256xf32, #tpu.memory_space<vmem>>, %arg10: memref<16x256xf32, #tpu.memory_space<vmem>>, %arg11: memref<8x16x256xf32, #tpu.memory_space<vmem>>, %arg12: memref<8x16x256xf32, #tpu.memory_space<vmem>>) attributes {dimension_semantics = [#tpu.dimension_semantics<parallel>, #tpu.dimension_semantics<arbitrary>], iteration_bounds = array<i64: 2, 1>, scalar_prefetch = 0 : i64, scratch_operands = 3 : i64, tpu.core_type = #tpu.core_type<tc>, window_params = [{transform_indices = @transform_0, window_bounds = array<i64: 1, 8, 256>}, {transform_indices = @transform_1, window_bounds = array<i64: 1, 8, 256>}, {transform_indices = @transform_2, window_bounds = array<i64: 1, 8, 16, 1>}, {transform_indices = @transform_3, window_bounds = array<i64: 1, 8, 16, 1>}, {transform_indices = @transform_4, window_bounds = array<i64: 1, 8, 256>}, {pipeline_mode = #tpu.pipeline_mode<synchronous>, transform_indices = @transform_5, window_bounds = array<i64: 16, 256>}, {pipeline_mode = #tpu.pipeline_mode<synchronous>, transform_indices = @transform_6, window_bounds = array<i64: 1, 256>}, {transform_indices = @transform_7, window_bounds = array<i64: 1, 8, 256>}]} {
    %c0_i32 = arith.constant 0 : i32
    %0 = arith.cmpi eq, %arg1, %c0_i32 : i32
    %1 = arith.extui %0 : i1 to i32
    %c0_i32_0 = arith.constant 0 : i32
    %2 = arith.cmpi ne, %1, %c0_i32_0 : i32
    scf.if %2 {
      %cst_92 = arith.constant 0.000000e+00 : f32
      %147 = vector.broadcast %cst_92 : f32 to vector<16x256xf32>
      %c0_93 = arith.constant 0 : index
      %c0_94 = arith.constant 0 : index
      %148 = vector.load %arg10[%c0_93, %c0_94] : memref<16x256xf32, #tpu.memory_space<vmem>>, vector<16x256xf32>
      tpu.vector_store %arg10[%c0_93, %c0_94], %147 {strides = array<i32>} : memref<16x256xf32, #tpu.memory_space<vmem>>, vector<16x256xf32>,
    } else {
    }
    %c0 = arith.constant 0 : index
    %c0_1 = arith.constant 0 : index
    %c0_2 = arith.constant 0 : index
    %3 = vector.load %arg2[%c0, %c0_1, %c0_2] : memref<1x8x256xbf16, #tpu.memory_space<vmem>>, vector<1x8x256xbf16>
    %4 = vector.shape_cast %3 : vector<1x8x256xbf16> to vector<8x256xbf16>
    %5 = arith.extf %4 : vector<8x256xbf16> to vector<8x256xf32>
    %c0_3 = arith.constant 0 : index
    %c0_4 = arith.constant 0 : index
    %c0_5 = arith.constant 0 : index
    %6 = vector.load %arg3[%c0_3, %c0_4, %c0_5] : memref<1x8x256xf32, #tpu.memory_space<vmem>>, vector<1x8x256xf32>
    %7 = vector.shape_cast %6 : vector<1x8x256xf32> to vector<8x256xf32>
    %cst = arith.constant 2.000000e+01 : f32
    %8 = vector.broadcast %cst : f32 to vector<8x256xf32>
    %9 = arith.minimumf %7, %8 : vector<8x256xf32>
    %cst_6 = arith.constant 2.000000e+01 : f32
    %10 = vector.broadcast %cst_6 : f32 to vector<8x256xf32>
    %11 = arith.cmpf ogt, %7, %10 : vector<8x256xf32>
    %12 = math.exp %9 : vector<8x256xf32>
    %cst_7 = arith.constant 1.000000e+00 : f32
    %13 = vector.broadcast %cst_7 : f32 to vector<8x256xf32>
    %14 = arith.addf %13, %12 : vector<8x256xf32>
    %15 = math.log %14 : vector<8x256xf32>
    %16 = arith.select %11, %7, %15 : vector<8x256xi1>, vector<8x256xf32>
    %c0_8 = arith.constant 0 : index
    %c0_9 = arith.constant 0 : index
    %17 = vector.load %arg7[%c0_8, %c0_9] : memref<16x256xf32, #tpu.memory_space<vmem>>, vector<16x256xf32>
    %18 = vector.shape_cast %16 : vector<8x256xf32> to vector<8x1x256xf32>
    %19 = vector.shape_cast %17 : vector<16x256xf32> to vector<1x16x256xf32>
    %20 = vector.broadcast %18 : vector<8x1x256xf32> to vector<8x16x256xf32>
    %21 = vector.broadcast %19 : vector<1x16x256xf32> to vector<8x16x256xf32>
    %22 = arith.mulf %20, %21 : vector<8x16x256xf32>
    %23 = math.exp %22 : vector<8x16x256xf32>
    %c0_10 = arith.constant 0 : index
    %c0_11 = arith.constant 0 : index
    %c0_12 = arith.constant 0 : index
    %24 = vector.load %arg11[%c0_10, %c0_11, %c0_12] : memref<8x16x256xf32, #tpu.memory_space<vmem>>, vector<8x16x256xf32>
    tpu.vector_store %arg11[%c0_10, %c0_11, %c0_12], %23 {strides = array<i32>} : memref<8x16x256xf32, #tpu.memory_space<vmem>>, vector<8x16x256xf32>,
    %25 = arith.mulf %16, %5 : vector<8x256xf32>
    %26 = vector.shape_cast %25 : vector<8x256xf32> to vector<8x1x256xf32>
    %c0_13 = arith.constant 0 : index
    %c0_14 = arith.constant 0 : index
    %c0_15 = arith.constant 0 : index
    %c0_16 = arith.constant 0 : index
    %27 = vector.load %arg4[%c0_13, %c0_14, %c0_15, %c0_16] : memref<1x8x16x1xf32, #tpu.memory_space<vmem>>, vector<1x8x16x1xf32>
    %28 = vector.shape_cast %27 : vector<1x8x16x1xf32> to vector<8x16x1xf32>
    %29 = vector.broadcast %26 : vector<8x1x256xf32> to vector<8x16x256xf32>
    %30 = vector.broadcast %28 : vector<8x16x1xf32> to vector<8x16x256xf32>
    %31 = arith.mulf %29, %30 : vector<8x16x256xf32>
    %c0_17 = arith.constant 0 : index
    %c0_18 = arith.constant 0 : index
    %c0_19 = arith.constant 0 : index
    %32 = vector.load %arg12[%c0_17, %c0_18, %c0_19] : memref<8x16x256xf32, #tpu.memory_space<vmem>>, vector<8x16x256xf32>
    tpu.vector_store %arg12[%c0_17, %c0_18, %c0_19], %31 {strides = array<i32>} : memref<8x16x256xf32, #tpu.memory_space<vmem>>, vector<8x16x256xf32>,
    %c0_20 = arith.constant 0 : index
    %c0_21 = arith.constant 0 : index
    %33 = vector.load %arg10[%c0_20, %c0_21] : memref<16x256xf32, #tpu.memory_space<vmem>>, vector<16x256xf32>
    %c0_i32_22 = arith.constant 0 : i32
    %34 = arith.index_cast %c0_i32_22 : i32 to index
    %c0_23 = arith.constant 0 : index
    %c0_24 = arith.constant 0 : index
    %35 = vector.load %arg11[%34, %c0_23, %c0_24] : memref<8x16x256xf32, #tpu.memory_space<vmem>>, vector<1x16x256xf32>
    %36 = vector.shape_cast %35 : vector<1x16x256xf32> to vector<16x256xf32>
    %37 = arith.mulf %36, %33 : vector<16x256xf32>
    %38 = arith.index_cast %c0_i32_22 : i32 to index
    %c0_25 = arith.constant 0 : index
    %c0_26 = arith.constant 0 : index
    %39 = vector.load %arg12[%38, %c0_25, %c0_26] : memref<8x16x256xf32, #tpu.memory_space<vmem>>, vector<1x16x256xf32>
    %40 = vector.shape_cast %39 : vector<1x16x256xf32> to vector<16x256xf32>
    %41 = arith.addf %37, %40 : vector<16x256xf32>
    %42 = vector.shape_cast %41 : vector<16x256xf32> to vector<1x16x256xf32>
    %43 = arith.index_cast %c0_i32_22 : i32 to index
    %c0_27 = arith.constant 0 : index
    %c0_28 = arith.constant 0 : index
    %44 = vector.load %arg12[%43, %c0_27, %c0_28] : memref<8x16x256xf32, #tpu.memory_space<vmem>>, vector<1x16x256xf32>
    tpu.vector_store %arg12[%43, %c0_27, %c0_28], %42 {strides = array<i32>} : memref<8x16x256xf32, #tpu.memory_space<vmem>>, vector<1x16x256xf32>,
    %c1_i32 = arith.constant 1 : i32
    %45 = arith.index_cast %c1_i32 : i32 to index
    %c0_29 = arith.constant 0 : index
    %c0_30 = arith.constant 0 : index
    %46 = vector.load %arg11[%45, %c0_29, %c0_30] : memref<8x16x256xf32, #tpu.memory_space<vmem>>, vector<1x16x256xf32>
    %47 = vector.shape_cast %46 : vector<1x16x256xf32> to vector<16x256xf32>
    %48 = arith.mulf %47, %41 : vector<16x256xf32>
    %49 = arith.index_cast %c1_i32 : i32 to index
    %c0_31 = arith.constant 0 : index
    %c0_32 = arith.constant 0 : index
    %50 = vector.load %arg12[%49, %c0_31, %c0_32] : memref<8x16x256xf32, #tpu.memory_space<vmem>>, vector<1x16x256xf32>
    %51 = vector.shape_cast %50 : vector<1x16x256xf32> to vector<16x256xf32>
    %52 = arith.addf %48, %51 : vector<16x256xf32>
    %53 = vector.shape_cast %52 : vector<16x256xf32> to vector<1x16x256xf32>
    %54 = arith.index_cast %c1_i32 : i32 to index
    %c0_33 = arith.constant 0 : index
    %c0_34 = arith.constant 0 : index
    %55 = vector.load %arg12[%54, %c0_33, %c0_34] : memref<8x16x256xf32, #tpu.memory_space<vmem>>, vector<1x16x256xf32>
    tpu.vector_store %arg12[%54, %c0_33, %c0_34], %53 {strides = array<i32>} : memref<8x16x256xf32, #tpu.memory_space<vmem>>, vector<1x16x256xf32>,
    %c2_i32 = arith.constant 2 : i32
    %56 = arith.index_cast %c2_i32 : i32 to index
    %c0_35 = arith.constant 0 : index
    %c0_36 = arith.constant 0 : index
    %57 = vector.load %arg11[%56, %c0_35, %c0_36] : memref<8x16x256xf32, #tpu.memory_space<vmem>>, vector<1x16x256xf32>
    %58 = vector.shape_cast %57 : vector<1x16x256xf32> to vector<16x256xf32>
    %59 = arith.mulf %58, %52 : vector<16x256xf32>
    %60 = arith.index_cast %c2_i32 : i32 to index
    %c0_37 = arith.constant 0 : index
    %c0_38 = arith.constant 0 : index
    %61 = vector.load %arg12[%60, %c0_37, %c0_38] : memref<8x16x256xf32, #tpu.memory_space<vmem>>, vector<1x16x256xf32>
    %62 = vector.shape_cast %61 : vector<1x16x256xf32> to vector<16x256xf32>
    %63 = arith.addf %59, %62 : vector<16x256xf32>
    %64 = vector.shape_cast %63 : vector<16x256xf32> to vector<1x16x256xf32>
    %65 = arith.index_cast %c2_i32 : i32 to index
    %c0_39 = arith.constant 0 : index
    %c0_40 = arith.constant 0 : index
    %66 = vector.load %arg12[%65, %c0_39, %c0_40] : memref<8x16x256xf32, #tpu.memory_space<vmem>>, vector<1x16x256xf32>
    tpu.vector_store %arg12[%65, %c0_39, %c0_40], %64 {strides = array<i32>} : memref<8x16x256xf32, #tpu.memory_space<vmem>>, vector<1x16x256xf32>,
    %c3_i32 = arith.constant 3 : i32
    %67 = arith.index_cast %c3_i32 : i32 to index
    %c0_41 = arith.constant 0 : index
    %c0_42 = arith.constant 0 : index
    %68 = vector.load %arg11[%67, %c0_41, %c0_42] : memref<8x16x256xf32, #tpu.memory_space<vmem>>, vector<1x16x256xf32>
    %69 = vector.shape_cast %68 : vector<1x16x256xf32> to vector<16x256xf32>
    %70 = arith.mulf %69, %63 : vector<16x256xf32>
    %71 = arith.index_cast %c3_i32 : i32 to index
    %c0_43 = arith.constant 0 : index
    %c0_44 = arith.constant 0 : index
    %72 = vector.load %arg12[%71, %c0_43, %c0_44] : memref<8x16x256xf32, #tpu.memory_space<vmem>>, vector<1x16x256xf32>
    %73 = vector.shape_cast %72 : vector<1x16x256xf32> to vector<16x256xf32>
    %74 = arith.addf %70, %73 : vector<16x256xf32>
    %75 = vector.shape_cast %74 : vector<16x256xf32> to vector<1x16x256xf32>
    %76 = arith.index_cast %c3_i32 : i32 to index
    %c0_45 = arith.constant 0 : index
    %c0_46 = arith.constant 0 : index
    %77 = vector.load %arg12[%76, %c0_45, %c0_46] : memref<8x16x256xf32, #tpu.memory_space<vmem>>, vector<1x16x256xf32>
    tpu.vector_store %arg12[%76, %c0_45, %c0_46], %75 {strides = array<i32>} : memref<8x16x256xf32, #tpu.memory_space<vmem>>, vector<1x16x256xf32>,
    %c4_i32 = arith.constant 4 : i32
    %78 = arith.index_cast %c4_i32 : i32 to index
    %c0_47 = arith.constant 0 : index
    %c0_48 = arith.constant 0 : index
    %79 = vector.load %arg11[%78, %c0_47, %c0_48] : memref<8x16x256xf32, #tpu.memory_space<vmem>>, vector<1x16x256xf32>
    %80 = vector.shape_cast %79 : vector<1x16x256xf32> to vector<16x256xf32>
    %81 = arith.mulf %80, %74 : vector<16x256xf32>
    %82 = arith.index_cast %c4_i32 : i32 to index
    %c0_49 = arith.constant 0 : index
    %c0_50 = arith.constant 0 : index
    %83 = vector.load %arg12[%82, %c0_49, %c0_50] : memref<8x16x256xf32, #tpu.memory_space<vmem>>, vector<1x16x256xf32>
    %84 = vector.shape_cast %83 : vector<1x16x256xf32> to vector<16x256xf32>
    %85 = arith.addf %81, %84 : vector<16x256xf32>
    %86 = vector.shape_cast %85 : vector<16x256xf32> to vector<1x16x256xf32>
    %87 = arith.index_cast %c4_i32 : i32 to index
    %c0_51 = arith.constant 0 : index
    %c0_52 = arith.constant 0 : index
    %88 = vector.load %arg12[%87, %c0_51, %c0_52] : memref<8x16x256xf32, #tpu.memory_space<vmem>>, vector<1x16x256xf32>
    tpu.vector_store %arg12[%87, %c0_51, %c0_52], %86 {strides = array<i32>} : memref<8x16x256xf32, #tpu.memory_space<vmem>>, vector<1x16x256xf32>,
    %c5_i32 = arith.constant 5 : i32
    %89 = arith.index_cast %c5_i32 : i32 to index
    %c0_53 = arith.constant 0 : index
    %c0_54 = arith.constant 0 : index
    %90 = vector.load %arg11[%89, %c0_53, %c0_54] : memref<8x16x256xf32, #tpu.memory_space<vmem>>, vector<1x16x256xf32>
    %91 = vector.shape_cast %90 : vector<1x16x256xf32> to vector<16x256xf32>
    %92 = arith.mulf %91, %85 : vector<16x256xf32>
    %93 = arith.index_cast %c5_i32 : i32 to index
    %c0_55 = arith.constant 0 : index
    %c0_56 = arith.constant 0 : index
    %94 = vector.load %arg12[%93, %c0_55, %c0_56] : memref<8x16x256xf32, #tpu.memory_space<vmem>>, vector<1x16x256xf32>
    %95 = vector.shape_cast %94 : vector<1x16x256xf32> to vector<16x256xf32>
    %96 = arith.addf %92, %95 : vector<16x256xf32>
    %97 = vector.shape_cast %96 : vector<16x256xf32> to vector<1x16x256xf32>
    %98 = arith.index_cast %c5_i32 : i32 to index
    %c0_57 = arith.constant 0 : index
    %c0_58 = arith.constant 0 : index
    %99 = vector.load %arg12[%98, %c0_57, %c0_58] : memref<8x16x256xf32, #tpu.memory_space<vmem>>, vector<1x16x256xf32>
    tpu.vector_store %arg12[%98, %c0_57, %c0_58], %97 {strides = array<i32>} : memref<8x16x256xf32, #tpu.memory_space<vmem>>, vector<1x16x256xf32>,
    %c6_i32 = arith.constant 6 : i32
    %100 = arith.index_cast %c6_i32 : i32 to index
    %c0_59 = arith.constant 0 : index
    %c0_60 = arith.constant 0 : index
    %101 = vector.load %arg11[%100, %c0_59, %c0_60] : memref<8x16x256xf32, #tpu.memory_space<vmem>>, vector<1x16x256xf32>
    %102 = vector.shape_cast %101 : vector<1x16x256xf32> to vector<16x256xf32>
    %103 = arith.mulf %102, %96 : vector<16x256xf32>
    %104 = arith.index_cast %c6_i32 : i32 to index
    %c0_61 = arith.constant 0 : index
    %c0_62 = arith.constant 0 : index
    %105 = vector.load %arg12[%104, %c0_61, %c0_62] : memref<8x16x256xf32, #tpu.memory_space<vmem>>, vector<1x16x256xf32>
    %106 = vector.shape_cast %105 : vector<1x16x256xf32> to vector<16x256xf32>
    %107 = arith.addf %103, %106 : vector<16x256xf32>
    %108 = vector.shape_cast %107 : vector<16x256xf32> to vector<1x16x256xf32>
    %109 = arith.index_cast %c6_i32 : i32 to index
    %c0_63 = arith.constant 0 : index
    %c0_64 = arith.constant 0 : index
    %110 = vector.load %arg12[%109, %c0_63, %c0_64] : memref<8x16x256xf32, #tpu.memory_space<vmem>>, vector<1x16x256xf32>
    tpu.vector_store %arg12[%109, %c0_63, %c0_64], %108 {strides = array<i32>} : memref<8x16x256xf32, #tpu.memory_space<vmem>>, vector<1x16x256xf32>,
    %c7_i32 = arith.constant 7 : i32
    %111 = arith.index_cast %c7_i32 : i32 to index
    %c0_65 = arith.constant 0 : index
    %c0_66 = arith.constant 0 : index
    %112 = vector.load %arg11[%111, %c0_65, %c0_66] : memref<8x16x256xf32, #tpu.memory_space<vmem>>, vector<1x16x256xf32>
    %113 = vector.shape_cast %112 : vector<1x16x256xf32> to vector<16x256xf32>
    %114 = arith.mulf %113, %107 : vector<16x256xf32>
    %115 = arith.index_cast %c7_i32 : i32 to index
    %c0_67 = arith.constant 0 : index
    %c0_68 = arith.constant 0 : index
    %116 = vector.load %arg12[%115, %c0_67, %c0_68] : memref<8x16x256xf32, #tpu.memory_space<vmem>>, vector<1x16x256xf32>
    %117 = vector.shape_cast %116 : vector<1x16x256xf32> to vector<16x256xf32>
    %118 = arith.addf %114, %117 : vector<16x256xf32>
    %119 = vector.shape_cast %118 : vector<16x256xf32> to vector<1x16x256xf32>
    %120 = arith.index_cast %c7_i32 : i32 to index
    %c0_69 = arith.constant 0 : index
    %c0_70 = arith.constant 0 : index
    %121 = vector.load %arg12[%120, %c0_69, %c0_70] : memref<8x16x256xf32, #tpu.memory_space<vmem>>, vector<1x16x256xf32>
    tpu.vector_store %arg12[%120, %c0_69, %c0_70], %119 {strides = array<i32>} : memref<8x16x256xf32, #tpu.memory_space<vmem>>, vector<1x16x256xf32>,
    %c8_i32 = arith.constant 8 : i32
    %c0_71 = arith.constant 0 : index
    %c0_72 = arith.constant 0 : index
    %122 = vector.load %arg10[%c0_71, %c0_72] : memref<16x256xf32, #tpu.memory_space<vmem>>, vector<16x256xf32>
    tpu.vector_store %arg10[%c0_71, %c0_72], %118 {strides = array<i32>} : memref<16x256xf32, #tpu.memory_space<vmem>>, vector<16x256xf32>,
    %c0_73 = arith.constant 0 : index
    %c0_74 = arith.constant 0 : index
    %c0_75 = arith.constant 0 : index
    %c0_76 = arith.constant 0 : index
    %123 = vector.load %arg5[%c0_73, %c0_74, %c0_75, %c0_76] : memref<1x8x16x1xf32, #tpu.memory_space<vmem>>, vector<1x8x16x1xf32>
    %124 = vector.shape_cast %123 : vector<1x8x16x1xf32> to vector<8x16x1xf32>
    %c0_77 = arith.constant 0 : index
    %c0_78 = arith.constant 0 : index
    %c0_79 = arith.constant 0 : index
    %125 = vector.load %arg12[%c0_77, %c0_78, %c0_79] : memref<8x16x256xf32, #tpu.memory_space<vmem>>, vector<8x16x256xf32>
    %126 = vector.broadcast %124 : vector<8x16x1xf32> to vector<8x16x256xf32>
    %127 = arith.mulf %126, %125 : vector<8x16x256xf32>
    %cst_80 = arith.constant dense<0.000000e+00> : vector<8x256xf32>
    %128 = vector.multi_reduction <add>, %127, %cst_80 [1] : vector<8x16x256xf32> to vector<8x256xf32>
    %c0_81 = arith.constant 0 : index
    %c0_82 = arith.constant 0 : index
    %129 = vector.load %arg8[%c0_81, %c0_82] : memref<1x256xf32, #tpu.memory_space<vmem>>, vector<1x256xf32>
    %130 = vector.broadcast %129 : vector<1x256xf32> to vector<8x256xf32>
    %131 = arith.mulf %130, %5 : vector<8x256xf32>
    %132 = arith.addf %128, %131 : vector<8x256xf32>
    %c0_83 = arith.constant 0 : index
    %c0_84 = arith.constant 0 : index
    %c0_85 = arith.constant 0 : index
    %133 = vector.load %arg6[%c0_83, %c0_84, %c0_85] : memref<1x8x256xf32, #tpu.memory_space<vmem>>, vector<1x8x256xf32>
    %134 = vector.shape_cast %133 : vector<1x8x256xf32> to vector<8x256xf32>
    %cst_86 = arith.constant 0.000000e+00 : f32
    %135 = vector.broadcast %cst_86 : f32 to vector<8x256xf32>
    %136 = arith.subf %135, %134 : vector<8x256xf32>
    %137 = math.exp %136 : vector<8x256xf32>
    %cst_87 = arith.constant 1.000000e+00 : f32
    %138 = vector.broadcast %cst_87 : f32 to vector<8x256xf32>
    %139 = arith.addf %138, %137 : vector<8x256xf32>
    %cst_88 = arith.constant 1.000000e+00 : f32
    %140 = vector.broadcast %cst_88 : f32 to vector<8x256xf32>
    %141 = arith.divf %140, %139 : vector<8x256xf32>
    %142 = arith.mulf %134, %141 : vector<8x256xf32>
    %143 = arith.mulf %132, %142 : vector<8x256xf32>
    %c0_89 = arith.constant 0 : index
    %c0_90 = arith.constant 0 : index
    %c0_91 = arith.constant 0 : index
    %144 = vector.load %arg9[%c0_89, %c0_90, %c0_91] : memref<1x8x256xf32, #tpu.memory_space<vmem>>, vector<1x8x256xf32>
    %145 = vector.shape_cast %144 : vector<1x8x256xf32> to vector<8x256xf32>
    %146 = vector.shape_cast %143 : vector<8x256xf32> to vector<1x8x256xf32>
    tpu.vector_store %arg9[%c0_89, %c0_90, %c0_91], %146 {strides = array<i32>} : memref<1x8x256xf32, #tpu.memory_space<vmem>>, vector<1x8x256xf32>,
    return
  }
  func.func @transform_0(%arg0: i32, %arg1: i32) -> (i32, i32, i32) {
    %c0_i32 = arith.constant 0 : i32
    %c0_i32_0 = arith.constant 0 : i32
    return %arg0, %arg1, %c0_i32 : i32, i32, i32
  }
  func.func @transform_1(%arg0: i32, %arg1: i32) -> (i32, i32, i32) {
    %c0_i32 = arith.constant 0 : i32
    %c0_i32_0 = arith.constant 0 : i32
    return %arg0, %arg1, %c0_i32 : i32, i32, i32
  }
  func.func @transform_2(%arg0: i32, %arg1: i32) -> (i32, i32, i32, i32) {
    %c0_i32 = arith.constant 0 : i32
    %c0_i32_0 = arith.constant 0 : i32
    %c0_i32_1 = arith.constant 0 : i32
    return %arg0, %arg1, %c0_i32, %c0_i32_0 : i32, i32, i32, i32
  }
  func.func @transform_3(%arg0: i32, %arg1: i32) -> (i32, i32, i32, i32) {
    %c0_i32 = arith.constant 0 : i32
    %c0_i32_0 = arith.constant 0 : i32
    %c0_i32_1 = arith.constant 0 : i32
    return %arg0, %arg1, %c0_i32, %c0_i32_0 : i32, i32, i32, i32
  }
  func.func @transform_4(%arg0: i32, %arg1: i32) -> (i32, i32, i32) {
    %c1_i32 = arith.constant 1 : i32
    %c0_i32 = arith.constant 0 : i32
    return %arg0, %arg1, %c1_i32 : i32, i32, i32
  }
  func.func @transform_5(%arg0: i32, %arg1: i32) -> (i32, i32) {
    %c0_i32 = arith.constant 0 : i32
    %c0_i32_0 = arith.constant 0 : i32
    %c0_i32_1 = arith.constant 0 : i32
    return %c0_i32, %c0_i32_0 : i32, i32
  }
  func.func @transform_6(%arg0: i32, %arg1: i32) -> (i32, i32) {
    %c0_i32 = arith.constant 0 : i32
    %c0_i32_0 = arith.constant 0 : i32
    %c0_i32_1 = arith.constant 0 : i32
    return %c0_i32, %c0_i32_0 : i32, i32
  }
  func.func @transform_7(%arg0: i32, %arg1: i32) -> (i32, i32, i32) {
    %c0_i32 = arith.constant 0 : i32
    %c0_i32_0 = arith.constant 0 : i32
    return %arg0, %arg1, %c0_i32 : i32, i32, i32
  }
}

module attributes {stable_mosaic.version = 11 : i64} {
  func.func @_matmul_bias_kernel_fast(%arg0: i32, %arg1: i32, %arg2: memref<16x256xbf16, #tpu.memory_space<vmem>>, %arg3: memref<256x128xbf16, #tpu.memory_space<vmem>>, %arg4: memref<1x128xf32, #tpu.memory_space<vmem>>, %arg5: memref<16x128xf32, #tpu.memory_space<vmem>>) attributes {dimension_semantics = [#tpu.dimension_semantics<parallel>, #tpu.dimension_semantics<parallel>], iteration_bounds = array<i64: 1, 1>, scalar_prefetch = 0 : i64, scratch_operands = 0 : i64, tpu.core_type = #tpu.core_type<tc>, window_params = [{transform_indices = @transform_0, window_bounds = array<i64: 16, 256>}, {transform_indices = @transform_1, window_bounds = array<i64: 256, 128>}, {transform_indices = @transform_2, window_bounds = array<i64: 1, 128>}, {transform_indices = @transform_3, window_bounds = array<i64: 16, 128>}]} {
    %c0 = arith.constant 0 : index
    %c0_0 = arith.constant 0 : index
    %0 = vector.load %arg2[%c0, %c0_0] : memref<16x256xbf16, #tpu.memory_space<vmem>>, vector<16x256xbf16>
    %c0_1 = arith.constant 0 : index
    %c0_2 = arith.constant 0 : index
    %1 = vector.load %arg3[%c0_1, %c0_2] : memref<256x128xbf16, #tpu.memory_space<vmem>>, vector<256x128xbf16>
    %cst = arith.constant dense<0.000000e+00> : vector<16x128xf32>
    %2 = tpu.matmul %0, %1, %cst {dimension_numbers = #tpu.dot_dimension_numbers<[1], [0], [0], [1], [0, 0, 1, 1], [], []>} : vector<16x256xbf16>, vector<256x128xbf16>, vector<16x128xf32> -> vector<16x128xf32>
    %c0_3 = arith.constant 0 : index
    %c0_4 = arith.constant 0 : index
    %3 = vector.load %arg4[%c0_3, %c0_4] : memref<1x128xf32, #tpu.memory_space<vmem>>, vector<1x128xf32>
    %4 = vector.broadcast %3 : vector<1x128xf32> to vector<16x128xf32>
    %5 = arith.addf %2, %4 : vector<16x128xf32>
    %c0_5 = arith.constant 0 : index
    %c0_6 = arith.constant 0 : index
    %6 = vector.load %arg5[%c0_5, %c0_6] : memref<16x128xf32, #tpu.memory_space<vmem>>, vector<16x128xf32>
    tpu.vector_store %arg5[%c0_5, %c0_6], %5 {strides = array<i32>} : memref<16x128xf32, #tpu.memory_space<vmem>>, vector<16x128xf32>,
    return
  }
  func.func @transform_0(%arg0: i32, %arg1: i32) -> (i32, i32) {
    %c0_i32 = arith.constant 0 : i32
    %c0_i32_0 = arith.constant 0 : i32
    return %arg0, %c0_i32 : i32, i32
  }
  func.func @transform_1(%arg0: i32, %arg1: i32) -> (i32, i32) {
    %c0_i32 = arith.constant 0 : i32
    %c0_i32_0 = arith.constant 0 : i32
    return %c0_i32, %arg1 : i32, i32
  }
  func.func @transform_2(%arg0: i32, %arg1: i32) -> (i32, i32) {
    %c0_i32 = arith.constant 0 : i32
    %c0_i32_0 = arith.constant 0 : i32
    return %c0_i32, %arg1 : i32, i32
  }
  func.func @transform_3(%arg0: i32, %arg1: i32) -> (i32, i32) {
    %c0_i32 = arith.constant 0 : i32
    return %arg0, %arg1 : i32, i32
  }
}

module attributes {stable_mosaic.version = 11 : i64} {
  func.func @_add_rmsnorm_kernel(%arg0: i32, %arg1: memref<16x128xf32, #tpu.memory_space<vmem>>, %arg2: memref<16x128xf32, #tpu.memory_space<vmem>>, %arg3: memref<1x128xf32, #tpu.memory_space<vmem>>, %arg4: memref<16x128xbf16, #tpu.memory_space<vmem>>, %arg5: memref<16x128xf32, #tpu.memory_space<vmem>>) attributes {dimension_semantics = [#tpu.dimension_semantics<parallel>], iteration_bounds = array<i64: 1>, scalar_prefetch = 0 : i64, scratch_operands = 0 : i64, tpu.core_type = #tpu.core_type<tc>, window_params = [{transform_indices = @transform_0, window_bounds = array<i64: 16, 128>}, {transform_indices = @transform_1, window_bounds = array<i64: 16, 128>}, {pipeline_mode = #tpu.pipeline_mode<synchronous>, transform_indices = @transform_2, window_bounds = array<i64: 1, 128>}, {transform_indices = @transform_3, window_bounds = array<i64: 16, 128>}, {transform_indices = @transform_4, window_bounds = array<i64: 16, 128>}]} {
    %c0 = arith.constant 0 : index
    %c0_0 = arith.constant 0 : index
    %0 = vector.load %arg1[%c0, %c0_0] : memref<16x128xf32, #tpu.memory_space<vmem>>, vector<16x128xf32>
    %c0_1 = arith.constant 0 : index
    %c0_2 = arith.constant 0 : index
    %1 = vector.load %arg2[%c0_1, %c0_2] : memref<16x128xf32, #tpu.memory_space<vmem>>, vector<16x128xf32>
    %2 = arith.addf %0, %1 : vector<16x128xf32>
    %3 = arith.mulf %2, %2 : vector<16x128xf32>
    %cst = arith.constant dense<0.000000e+00> : vector<16xf32>
    %4 = vector.multi_reduction <add>, %3, %cst [1] : vector<16x128xf32> to vector<16xf32>
    %5 = vector.shape_cast %4 : vector<16xf32> to vector<16x1xf32>
    %cst_3 = arith.constant 1.280000e+02 : f32
    %6 = vector.broadcast %cst_3 : f32 to vector<16x1xf32>
    %7 = arith.divf %5, %6 : vector<16x1xf32>
    %cst_4 = arith.constant 9.99999974E-6 : f32
    %8 = vector.broadcast %cst_4 : f32 to vector<16x1xf32>
    %9 = arith.addf %7, %8 : vector<16x1xf32>
    %10 = math.rsqrt %9 : vector<16x1xf32>
    %11 = vector.broadcast %10 : vector<16x1xf32> to vector<16x128xf32>
    %12 = arith.mulf %2, %11 : vector<16x128xf32>
    %c0_5 = arith.constant 0 : index
    %c0_6 = arith.constant 0 : index
    %13 = vector.load %arg3[%c0_5, %c0_6] : memref<1x128xf32, #tpu.memory_space<vmem>>, vector<1x128xf32>
    %14 = vector.broadcast %13 : vector<1x128xf32> to vector<16x128xf32>
    %15 = arith.mulf %12, %14 : vector<16x128xf32>
    %16 = arith.truncf %15 : vector<16x128xf32> to vector<16x128xbf16>
    %c0_7 = arith.constant 0 : index
    %c0_8 = arith.constant 0 : index
    %17 = vector.load %arg4[%c0_7, %c0_8] : memref<16x128xbf16, #tpu.memory_space<vmem>>, vector<16x128xbf16>
    tpu.vector_store %arg4[%c0_7, %c0_8], %16 {strides = array<i32>} : memref<16x128xbf16, #tpu.memory_space<vmem>>, vector<16x128xbf16>,
    %c0_9 = arith.constant 0 : index
    %c0_10 = arith.constant 0 : index
    %18 = vector.load %arg5[%c0_9, %c0_10] : memref<16x128xf32, #tpu.memory_space<vmem>>, vector<16x128xf32>
    tpu.vector_store %arg5[%c0_9, %c0_10], %2 {strides = array<i32>} : memref<16x128xf32, #tpu.memory_space<vmem>>, vector<16x128xf32>,
    return
  }
  func.func @transform_0(%arg0: i32) -> (i32, i32) {
    %c0_i32 = arith.constant 0 : i32
    %c0_i32_0 = arith.constant 0 : i32
    return %arg0, %c0_i32 : i32, i32
  }
  func.func @transform_1(%arg0: i32) -> (i32, i32) {
    %c0_i32 = arith.constant 0 : i32
    %c0_i32_0 = arith.constant 0 : i32
    return %arg0, %c0_i32 : i32, i32
  }
  func.func @transform_2(%arg0: i32) -> (i32, i32) {
    %c0_i32 = arith.constant 0 : i32
    %c0_i32_0 = arith.constant 0 : i32
    %c0_i32_1 = arith.constant 0 : i32
    return %c0_i32, %c0_i32_0 : i32, i32
  }
  func.func @transform_3(%arg0: i32) -> (i32, i32) {
    %c0_i32 = arith.constant 0 : i32
    %c0_i32_0 = arith.constant 0 : i32
    return %arg0, %c0_i32 : i32, i32
  }
  func.func @transform_4(%arg0: i32) -> (i32, i32) {
    %c0_i32 = arith.constant 0 : i32
    %c0_i32_0 = arith.constant 0 : i32
    return %arg0, %c0_i32 : i32, i32
  }
}

module attributes {stable_mosaic.version = 11 : i64} {
  func.func @_add_rmsnorm_kernel(%arg0: i32, %arg1: memref<16x128xf32, #tpu.memory_space<vmem>>, %arg2: memref<16x128xf32, #tpu.memory_space<vmem>>, %arg3: memref<1x128xf32, #tpu.memory_space<vmem>>, %arg4: memref<16x128xf32, #tpu.memory_space<vmem>>, %arg5: memref<16x128xf32, #tpu.memory_space<vmem>>) attributes {dimension_semantics = [#tpu.dimension_semantics<parallel>], iteration_bounds = array<i64: 1>, scalar_prefetch = 0 : i64, scratch_operands = 0 : i64, tpu.core_type = #tpu.core_type<tc>, window_params = [{transform_indices = @transform_0, window_bounds = array<i64: 16, 128>}, {transform_indices = @transform_1, window_bounds = array<i64: 16, 128>}, {pipeline_mode = #tpu.pipeline_mode<synchronous>, transform_indices = @transform_2, window_bounds = array<i64: 1, 128>}, {transform_indices = @transform_3, window_bounds = array<i64: 16, 128>}, {transform_indices = @transform_4, window_bounds = array<i64: 16, 128>}]} {
    %c0 = arith.constant 0 : index
    %c0_0 = arith.constant 0 : index
    %0 = vector.load %arg1[%c0, %c0_0] : memref<16x128xf32, #tpu.memory_space<vmem>>, vector<16x128xf32>
    %c0_1 = arith.constant 0 : index
    %c0_2 = arith.constant 0 : index
    %1 = vector.load %arg2[%c0_1, %c0_2] : memref<16x128xf32, #tpu.memory_space<vmem>>, vector<16x128xf32>
    %2 = arith.addf %0, %1 : vector<16x128xf32>
    %3 = arith.mulf %2, %2 : vector<16x128xf32>
    %cst = arith.constant dense<0.000000e+00> : vector<16xf32>
    %4 = vector.multi_reduction <add>, %3, %cst [1] : vector<16x128xf32> to vector<16xf32>
    %5 = vector.shape_cast %4 : vector<16xf32> to vector<16x1xf32>
    %cst_3 = arith.constant 1.280000e+02 : f32
    %6 = vector.broadcast %cst_3 : f32 to vector<16x1xf32>
    %7 = arith.divf %5, %6 : vector<16x1xf32>
    %cst_4 = arith.constant 9.99999974E-6 : f32
    %8 = vector.broadcast %cst_4 : f32 to vector<16x1xf32>
    %9 = arith.addf %7, %8 : vector<16x1xf32>
    %10 = math.rsqrt %9 : vector<16x1xf32>
    %11 = vector.broadcast %10 : vector<16x1xf32> to vector<16x128xf32>
    %12 = arith.mulf %2, %11 : vector<16x128xf32>
    %c0_5 = arith.constant 0 : index
    %c0_6 = arith.constant 0 : index
    %13 = vector.load %arg3[%c0_5, %c0_6] : memref<1x128xf32, #tpu.memory_space<vmem>>, vector<1x128xf32>
    %14 = vector.broadcast %13 : vector<1x128xf32> to vector<16x128xf32>
    %15 = arith.mulf %12, %14 : vector<16x128xf32>
    %c0_7 = arith.constant 0 : index
    %c0_8 = arith.constant 0 : index
    %16 = vector.load %arg4[%c0_7, %c0_8] : memref<16x128xf32, #tpu.memory_space<vmem>>, vector<16x128xf32>
    tpu.vector_store %arg4[%c0_7, %c0_8], %15 {strides = array<i32>} : memref<16x128xf32, #tpu.memory_space<vmem>>, vector<16x128xf32>,
    %c0_9 = arith.constant 0 : index
    %c0_10 = arith.constant 0 : index
    %17 = vector.load %arg5[%c0_9, %c0_10] : memref<16x128xf32, #tpu.memory_space<vmem>>, vector<16x128xf32>
    tpu.vector_store %arg5[%c0_9, %c0_10], %2 {strides = array<i32>} : memref<16x128xf32, #tpu.memory_space<vmem>>, vector<16x128xf32>,
    return
  }
  func.func @transform_0(%arg0: i32) -> (i32, i32) {
    %c0_i32 = arith.constant 0 : i32
    %c0_i32_0 = arith.constant 0 : i32
    return %arg0, %c0_i32 : i32, i32
  }
  func.func @transform_1(%arg0: i32) -> (i32, i32) {
    %c0_i32 = arith.constant 0 : i32
    %c0_i32_0 = arith.constant 0 : i32
    return %arg0, %c0_i32 : i32, i32
  }
  func.func @transform_2(%arg0: i32) -> (i32, i32) {
    %c0_i32 = arith.constant 0 : i32
    %c0_i32_0 = arith.constant 0 : i32
    %c0_i32_1 = arith.constant 0 : i32
    return %c0_i32, %c0_i32_0 : i32, i32
  }
  func.func @transform_3(%arg0: i32) -> (i32, i32) {
    %c0_i32 = arith.constant 0 : i32
    %c0_i32_0 = arith.constant 0 : i32
    return %arg0, %c0_i32 : i32, i32
  }
  func.func @transform_4(%arg0: i32) -> (i32, i32) {
    %c0_i32 = arith.constant 0 : i32
    %c0_i32_0 = arith.constant 0 : i32
    return %arg0, %c0_i32 : i32, i32
  }
}

</mosaic_0001>

<llo_original>
// kernel: vision_mamba_forward.21
$region0: #{vision_mamba_forward.21}
  #allocation0 [shape = 'u32[]', space=smem, size = 0x4, offset = 0x4, fixed_abs, tag = 'smem constant byte address 0x4 - core index']
  #allocation1 [shape = 'u32[144,128]{1,0:T(1,128)}', space=vmem, size = 0x12000, scoped, tag = 'internal scratch']
  %s0 = inlined_call_operand.vmem [shape: f32[16,128], index: 0, kind: input, shape index: {}]
  %s1 = inlined_call_operand.vmem [shape: f32[1,128], index: 1, kind: input, shape index: {}]
  %s2 = inlined_call_operand.vmem [shape: bf16[16,128], index: 2, kind: output, shape index: {}]
  %s3 = sld [smem:[#allocation0]]
  $region18: #{vision_mamba_forward.21} parent=0
    _
  %s5 = ssub.s32 1, %s3
  %s6 = scalar_select 0, %s5, %s3
  // Predicated region
  $region2: #{vision_mamba_forward.21} parent=0 // pred_check
    _
  $region3: #{vision_mamba_forward.21} parent=0 // pred_check_branch
    %8 = sbr.rel (0) target = $region5
  $region4: #{vision_mamba_forward.21} parent=0 // pred_region
    _
  $region5: #{vision_mamba_forward.21} parent=0 // pred_fallthru
    _
  // Predicated region
  $region6: #{vision_mamba_forward.21} parent=0 // pred_check
    _
  $region7: #{vision_mamba_forward.21} parent=0 // pred_check_branch
    %10 = sbr.rel (0) target = $region9
  $region8: #{vision_mamba_forward.21} parent=0 // pred_region
    _
  $region9: #{vision_mamba_forward.21} parent=0 // pred_fallthru
    _
  %v11 = vld [vmem:[%s0] sm:$0xff]
  %v12 = vld [vmem:[%s0 + $0x8] sm:$0xff]
  %v13 = vmul.f32 %v11, %v11
  %v14 = vmul.f32 %v12, %v12
  %15 = vadd.xlane.f32.xlu0 %v13
  %v16 = vpop.xlane.xlu0 %15
  %17 = vadd.xlane.f32.xlu0 %v14
  %v18 = vpop.xlane.xlu0 %17
  %v19 = vrcp.pop 128.0
  %v20 = vmul.f32 %v16, %v19
  %v21 = vmul.f32 %v18, %v19
  %v22 = vadd.f32 %v20, 1e-05
  %v23 = vadd.f32 %v21, 1e-05
  %v24 = vrsqrt.pop %v22
  %v25 = vrsqrt.pop %v23
  %v26 = vmul.f32 %v11, %v24
  %v27 = vmul.f32 %v12, %v25
  %v28 = vld [vmem:[%s1] sm:$0x1]
  %v30 = vlaneseq
  %v31 = vshrl.u32 %v30, 7
  %v32 = vsub.s32 0, %v31
  %v33 = vrot.slane %v28, %v32
  %v35 = vmul.f32 %v26, %v33
  %v36 = vmul.f32 %v27, %v33
  %v37 = vpack.c.bf16 %v36, %v35
  %v39 = vunpack.c.l.b16 %v37
  %v40 = vunpack.c.h.b16 %v37
  %v41 = vpack.c.b16 %v39, %v39
  %v42 = vpack.c.b16 %v40, %v40
  %45 = vst [vmem:[%s2] sm:$0xf] %v41
  %46 = vst [vmem:[%s2 + $0x4] sm:$0xf] %v42
  // Predicated region
  $region10: #{vision_mamba_forward.21} parent=0 // pred_check
    _
  $region11: #{vision_mamba_forward.21} parent=0 // pred_check_branch
    %48 = sbr.rel (0) target = $region13
  $region12: #{vision_mamba_forward.21} parent=0 // pred_region
    _
  $region13: #{vision_mamba_forward.21} parent=0 // pred_fallthru
    _
  // Predicated region
  $region14: #{vision_mamba_forward.21} parent=0 // pred_check
    _
  $region15: #{vision_mamba_forward.21} parent=0 // pred_check_branch
    %50 = sbr.rel (0) target = $region17
  $region16: #{vision_mamba_forward.21} parent=0 // pred_region
    _
  $region17: #{vision_mamba_forward.21} parent=0 // pred_fallthru
    _

// kernel: vision_mamba_forward.22
$region0: #{vision_mamba_forward.22}
  #allocation0 [shape = 'u32[]', space=smem, size = 0x4, offset = 0x4, fixed_abs, tag = 'smem constant byte address 0x4 - core index']
  #allocation1 [shape = 'u32[144,128]{1,0:T(1,128)}', space=vmem, size = 0x12000, scoped, tag = 'internal scratch']
  %s0 = inlined_call_operand.vmem [shape: bf16[16,128], index: 0, kind: input, shape index: {}]
  %s1 = inlined_call_operand.vmem [shape: bf16[128,512], index: 1, kind: input, shape index: {}]
  %s2 = inlined_call_operand.vmem [shape: f32[1,512], index: 2, kind: input, shape index: {}]
  %s3 = inlined_call_operand.vmem [shape: f32[16,512], index: 3, kind: output, shape index: {}]
  %s4 = sld [smem:[#allocation0]]
  $region102: #{vision_mamba_forward.22} parent=0
    _
  %s6 = ssub.s32 1, %s4
  %s7 = scalar_select 0, %s6, %s4
  $region1: #{vision_mamba_forward.22} parent=0
    #allocation2 [shape = 'u8[131072]{0}', space=vmem, size = 0x20000, scoped, tag = 'input window, operand 1']
    #allocation3 [shape = 'u8[32768]{0}', space=vmem, size = 0x8000, scoped, tag = 'output window, operand 0']
    loop: start=0, step=1, limit=4
    $region2: #{vision_mamba_forward.22} parent=1 // loop_pre_header
      _
    $region3: #{vision_mamba_forward.22} parent=1 // loop_header
      %s9 = sphi 0, %s13
      %p10 = scmp.ge.s32.totalorder %s9, 4
      %s16 = sphi 0, %s28
      %s17 = sphi 0, %s24
      %s18 = sphi 0, %s16
      %s19 = sphi 0, %s17
      %s20 = sphi 0, %s18
      %s21 = sphi 0, %s19
      %s31 = sphi 0, %s33
      %s34 = sphi 0, %s31
      %s35 = sphi 0, %s34
      %s51 = sphi 0, %s35
      %s57 = sphi 0, %s59
      %s60 = sphi 0, %s57
      %s61 = sphi 0, %s60
      %s77 = sphi 0, %s61
      %s83 = sphi 0, %s85
      %s86 = sphi 0, %s83
      %s87 = sphi 0, %s86
      %s103 = sphi 0, %s87
      %s111 = sphi 0, %s113
      %s114 = sphi 0, %s111
      %s115 = sphi 0, %s114
      %s131 = sphi 0, %s115
    $region4: #{vision_mamba_forward.22} parent=1 // loop_header_branch
      %12 = sbr.rel (%p10) target = $region8
    $region5: #{vision_mamba_forward.22} parent=1 // loop_body
      %s14 = ssub.s32 %s9, 1
      %s15 = ssub.s32 %s9, 2
      %s22 = sadd.s32 1, %s17
      %p23 = scmp.ge.s32.totalorder %s22, 2
      %s24 = scalar_select %p23, 0, %s22
      %s25 = sadd.s32 1, %s16
      %s26 = scalar_select %p23, %s25, %s16
      %p27 = scmp.ge.s32.totalorder %s26, 1
      %s28 = scalar_select %p27, 0, %s26
      %s29 = ssub.s32 %s16, %s28
      %p30 = scmp.eq.s32.totalorder %s29, 0
      %s32 = sadd.s32 %s31, 1
      %s33 = scalar_select %p30, %s31, %s32
      %p36 = pneg %p30
      %p37 = scmp.eq.s32.totalorder %s9, 1
      %p38 = por %p36, %p37
      %p39 = scmp.ne.s32.totalorder %s31, %s34
      %p40 = scmp.eq.s32.totalorder %s9, 0
      %p41 = por %p39, %p40
      %p42 = scmp.ne.s32.totalorder %s31, %s34
      %p43 = scmp.eq.s32.totalorder %s14, 1
      %p44 = por %p42, %p43
      %p45 = scmp.ne.s32.totalorder %s34, %s35
      %p46 = scmp.eq.s32.totalorder %s14, 0
      %p47 = por %p45, %p46
      %p48 = scmp.ne.s32.totalorder %s34, %s35
      %p49 = scmp.eq.s32.totalorder %s15, 1
      %p50 = por %p48, %p49
      %p52 = scmp.ne.s32.totalorder %s35, %s51
      %p53 = scmp.eq.s32.totalorder %s15, 0
      %p54 = por %p52, %p53
      %s55 = ssub.s32 %s17, %s24
      %p56 = scmp.eq.s32.totalorder %s55, 0
      %s58 = sadd.s32 %s57, 1
      %s59 = scalar_select %p56, %s57, %s58
      %p62 = pneg %p56
      %p63 = scmp.eq.s32.totalorder %s9, 1
      %p64 = por %p62, %p63
      %p65 = scmp.ne.s32.totalorder %s57, %s60
      %p66 = scmp.eq.s32.totalorder %s9, 0
      %p67 = por %p65, %p66
      %p68 = scmp.ne.s32.totalorder %s57, %s60
      %p69 = scmp.eq.s32.totalorder %s14, 1
      %p70 = por %p68, %p69
      %p71 = scmp.ne.s32.totalorder %s60, %s61
      %p72 = scmp.eq.s32.totalorder %s14, 0
      %p73 = por %p71, %p72
      %p74 = scmp.ne.s32.totalorder %s60, %s61
      %p75 = scmp.eq.s32.totalorder %s15, 1
      %p76 = por %p74, %p75
      %p78 = scmp.ne.s32.totalorder %s61, %s77
      %p79 = scmp.eq.s32.totalorder %s15, 0
      %p80 = por %p78, %p79
      %s81 = ssub.s32 %s17, %s24
      %p82 = scmp.eq.s32.totalorder %s81, 0
      %s84 = sadd.s32 %s83, 1
      %s85 = scalar_select %p82, %s83, %s84
      %p88 = pneg %p82
      %p89 = scmp.eq.s32.totalorder %s9, 1
      %p90 = por %p88, %p89
      %p91 = scmp.ne.s32.totalorder %s83, %s86
      %p92 = scmp.eq.s32.totalorder %s9, 0
      %p93 = por %p91, %p92
      %p94 = scmp.ne.s32.totalorder %s83, %s86
      %p95 = scmp.eq.s32.totalorder %s14, 1
      %p96 = por %p94, %p95
      %p97 = scmp.ne.s32.totalorder %s86, %s87
      %p98 = scmp.eq.s32.totalorder %s14, 0
      %p99 = por %p97, %p98
      %p100 = scmp.ne.s32.totalorder %s86, %s87
      %p101 = scmp.eq.s32.totalorder %s15, 1
      %p102 = por %p100, %p101
      %p104 = scmp.ne.s32.totalorder %s87, %s103
      %p105 = scmp.eq.s32.totalorder %s15, 0
      %p106 = por %p104, %p105
      %s107 = ssub.s32 %s16, %s28
      %s108 = ssub.s32 %s17, %s24
      %s109 = sor.u32 %s107, %s108
      %p110 = scmp.eq.s32.totalorder %s109, 0
      %s112 = sadd.s32 %s111, 1
      %s113 = scalar_select %p110, %s111, %s112
      %p116 = pneg %p110
      %p117 = scmp.eq.s32.totalorder %s9, 1
      %p118 = por %p116, %p117
      %p119 = scmp.ne.s32.totalorder %s111, %s114
      %p120 = scmp.eq.s32.totalorder %s9, 0
      %p121 = por %p119, %p120
      %p122 = scmp.ne.s32.totalorder %s111, %s114
      %p123 = scmp.eq.s32.totalorder %s14, 1
      %p124 = por %p122, %p123
      %p125 = scmp.ne.s32.totalorder %s114, %s115
      %p126 = scmp.eq.s32.totalorder %s14, 0
      %p127 = por %p125, %p126
      %p128 = scmp.ne.s32.totalorder %s114, %s115
      %p129 = scmp.eq.s32.totalorder %s15, 1
      %p130 = por %p128, %p129
      %p132 = scmp.ne.s32.totalorder %s115, %s131
      %p133 = scmp.eq.s32.totalorder %s15, 0
      %p134 = por %p132, %p133
      %p135 = scmp.le.s32.totalorder 1, %s9
      %p136 = scmp.lt.s32.totalorder %s9, 3
      %p137 = pnand %p135, %p136
      %p138 = pneg %p137
      // Predicated region
      $region9: #{vision_mamba_forward.22} parent=5 // pred_check
        _
      $region10: #{vision_mamba_forward.22} parent=5 // pred_check_branch
        %140 = sbr.rel (%p137) target = $region12
      $region11: #{vision_mamba_forward.22} parent=5 // pred_region
        %s141 = ssub.s32 %s9, 1
        // Predicated region
        $region13: #{vision_mamba_forward.22} parent=11 // pred_check
          %p142 = pneg %p47
        $region14: #{vision_mamba_forward.22} parent=11 // pred_check_branch
          %144 = sbr.rel (%p142) target = $region16
        $region15: #{vision_mamba_forward.22} parent=11 // pred_region
          %s145 = smul.u32 2, %s18
          %p146 = scmp.lt.s32.totalorder %s145, 1
          %s147 = scalar_select %p146, %s145, 1
          %s148 = smul.addr %s147, 4
          %s149 = scalar_lea.vmem %s0, %s148
          %s150 = smul.u32 2, %s18
        $region16: #{vision_mamba_forward.22} parent=11 // pred_fallthru
          _
      $region12: #{vision_mamba_forward.22} parent=5 // pred_fallthru
        _
      %p151 = scmp.lt.s32.totalorder %s9, 2
      // Predicated region
      $region17: #{vision_mamba_forward.22} parent=5 // pred_check
        %p152 = pneg %p151
      $region18: #{vision_mamba_forward.22} parent=5 // pred_check_branch
        %154 = sbr.rel (%p152) target = $region20
      $region19: #{vision_mamba_forward.22} parent=5 // pred_region
        // Predicated region
        $region21: #{vision_mamba_forward.22} parent=19 // pred_check
          %p155 = pneg %p67
        $region22: #{vision_mamba_forward.22} parent=19 // pred_check_branch
          %157 = sbr.rel (%p155) target = $region24
        $region23: #{vision_mamba_forward.22} parent=19 // pred_region
          %s158 = sand.u32 %s57, 1
          %s159 = sand.u32 %s57, 1
          %s160 = smul.addr %s159, 128
          %s161 = scalar_lea.vmem [#allocation2], %s160
          %s162 = smul.u32 2, %s17
          %s163 = smul.addr %s162, 4
          %s164 = scalar_lea.vmem %s1, %s163
          // Predicated region
          $region25: #{vision_mamba_forward.22} parent=23 // pred_check
            _
          $region26: #{vision_mamba_forward.22} parent=23 // pred_check_branch
            %166 = sbr.rel (0) target = $region28
          $region27: #{vision_mamba_forward.22} parent=23 // pred_region
            // Predicated region
            $region29: #{vision_mamba_forward.22} parent=27 // pred_check
              _
            $region30: #{vision_mamba_forward.22} parent=27 // pred_check_branch
              %168 = sbr.rel (0) target = $region32
            $region31: #{vision_mamba_forward.22} parent=27 // pred_region
              // Predicated region
              $region44: #{vision_mamba_forward.22} parent=31 // pred_check
                _
              $region45: #{vision_mamba_forward.22} parent=31 // pred_check_branch
                %213 = sbr.rel (0) target = $region47
              $region46: #{vision_mamba_forward.22} parent=31 // pred_region
                loop: start=0, step=1, limit=1
                $region48: #{vision_mamba_forward.22} parent=46 // loop_pre_header
                  _
                $region49: #{vision_mamba_forward.22} parent=46 // loop_header
                  %s215 = sphi 0, %s219
                  %p216 = scmp.ge.s32.totalorder %s215, 1
                  %s220 = sphi %s164, %s164
                  %s221 = sphi %s161, %s161
                $region50: #{vision_mamba_forward.22} parent=46 // loop_header_branch
                  %218 = sbr.rel (%p216) target = $region54
                $region51: #{vision_mamba_forward.22} parent=46 // loop_body
                  %v222 = vld [vmem:[%s220] sm:$0xff]
                  %223 = vst [vmem:[%s221] sm:$0xff] %v222
                  %v224 = vld [vmem:[%s220 + $0x10] sm:$0xff]
                  %225 = vst [vmem:[%s221 + $0x8] sm:$0xff] %v224
                  %v226 = vld [vmem:[%s220 + $0x20] sm:$0xff]
                  %227 = vst [vmem:[%s221 + $0x10] sm:$0xff] %v226
                  %v228 = vld [vmem:[%s220 + $0x30] sm:$0xff]
                  %229 = vst [vmem:[%s221 + $0x18] sm:$0xff] %v228
                  %v230 = vld [vmem:[%s220 + $0x40] sm:$0xff]
                  %231 = vst [vmem:[%s221 + $0x20] sm:$0xff] %v230
                  %v232 = vld [vmem:[%s220 + $0x50] sm:$0xff]
                  %233 = vst [vmem:[%s221 + $0x28] sm:$0xff] %v232
                  %v234 = vld [vmem:[%s220 + $0x60] sm:$0xff]
                  %235 = vst [vmem:[%s221 + $0x30] sm:$0xff] %v234
                  %v236 = vld [vmem:[%s220 + $0x70] sm:$0xff]
                  %237 = vst [vmem:[%s221 + $0x38] sm:$0xff] %v236
                  %v238 = vld [vmem:[%s220 + $0x80] sm:$0xff]
                  %239 = vst [vmem:[%s221 + $0x40] sm:$0xff] %v238
                  %v240 = vld [vmem:[%s220 + $0x90] sm:$0xff]
                  %241 = vst [vmem:[%s221 + $0x48] sm:$0xff] %v240
                  %v242 = vld [vmem:[%s220 + $0xa0] sm:$0xff]
                  %243 = vst [vmem:[%s221 + $0x50] sm:$0xff] %v242
                  %v244 = vld [vmem:[%s220 + $0xb0] sm:$0xff]
                  %245 = vst [vmem:[%s221 + $0x58] sm:$0xff] %v244
                  %v246 = vld [vmem:[%s220 + $0xc0] sm:$0xff]
                  %247 = vst [vmem:[%s221 + $0x60] sm:$0xff] %v246
                  %v248 = vld [vmem:[%s220 + $0xd0] sm:$0xff]
                  %249 = vst [vmem:[%s221 + $0x68] sm:$0xff] %v248
                  %v250 = vld [vmem:[%s220 + $0xe0] sm:$0xff]
                  %251 = vst [vmem:[%s221 + $0x70] sm:$0xff] %v250
                  %v252 = vld [vmem:[%s220 + $0xf0] sm:$0xff]
                  %253 = vst [vmem:[%s221 + $0x78] sm:$0xff] %v252
                $region52: #{vision_mamba_forward.22} parent=46 // loop_footer
                  %s219 = sadd.s32 1, %s215
                $region53: #{vision_mamba_forward.22} parent=46 // loop_footer_branch
                  %214 = sbr.rel target = $region49
                $region54: #{vision_mamba_forward.22} parent=46 // loop_exit
                  _
              $region47: #{vision_mamba_forward.22} parent=31 // pred_fallthru
                _
              // Predicated region
              $region55: #{vision_mamba_forward.22} parent=31 // pred_check
                _
              $region56: #{vision_mamba_forward.22} parent=31 // pred_check_branch
                %255 = sbr.rel target = $region58
              $region57: #{vision_mamba_forward.22} parent=31 // pred_region
                _
              $region58: #{vision_mamba_forward.22} parent=31 // pred_fallthru
                _
            $region32: #{vision_mamba_forward.22} parent=27 // pred_fallthru
              _
            // Predicated region
            $region33: #{vision_mamba_forward.22} parent=27 // pred_check
              _
            $region34: #{vision_mamba_forward.22} parent=27 // pred_check_branch
              %170 = sbr.rel target = $region36
            $region35: #{vision_mamba_forward.22} parent=27 // pred_region
              loop: start=0, step=1, limit=1
              $region37: #{vision_mamba_forward.22} parent=35 // loop_pre_header
                _
              $region38: #{vision_mamba_forward.22} parent=35 // loop_header
                %s173 = sphi 0, %s177
                %p174 = scmp.ge.s32.totalorder %s173, 1
                %s178 = sphi %s164, %s164
                %s179 = sphi %s161, %s161
              $region39: #{vision_mamba_forward.22} parent=35 // loop_header_branch
                %176 = sbr.rel (%p174) target = $region43
              $region40: #{vision_mamba_forward.22} parent=35 // loop_body
                %v180 = vld [vmem:[%s178] sm:$0xff]
                %181 = vst [vmem:[%s179] sm:$0xff] %v180
                %v182 = vld [vmem:[%s178 + $0x10] sm:$0xff]
                %183 = vst [vmem:[%s179 + $0x8] sm:$0xff] %v182
                %v184 = vld [vmem:[%s178 + $0x20] sm:$0xff]
                %185 = vst [vmem:[%s179 + $0x10] sm:$0xff] %v184
                %v186 = vld [vmem:[%s178 + $0x30] sm:$0xff]
                %187 = vst [vmem:[%s179 + $0x18] sm:$0xff] %v186
                %v188 = vld [vmem:[%s178 + $0x40] sm:$0xff]
                %189 = vst [vmem:[%s179 + $0x20] sm:$0xff] %v188
                %v190 = vld [vmem:[%s178 + $0x50] sm:$0xff]
                %191 = vst [vmem:[%s179 + $0x28] sm:$0xff] %v190
                %v192 = vld [vmem:[%s178 + $0x60] sm:$0xff]
                %193 = vst [vmem:[%s179 + $0x30] sm:$0xff] %v192
                %v194 = vld [vmem:[%s178 + $0x70] sm:$0xff]
                %195 = vst [vmem:[%s179 + $0x38] sm:$0xff] %v194
                %v196 = vld [vmem:[%s178 + $0x80] sm:$0xff]
                %197 = vst [vmem:[%s179 + $0x40] sm:$0xff] %v196
                %v198 = vld [vmem:[%s178 + $0x90] sm:$0xff]
                %199 = vst [vmem:[%s179 + $0x48] sm:$0xff] %v198
                %v200 = vld [vmem:[%s178 + $0xa0] sm:$0xff]
                %201 = vst [vmem:[%s179 + $0x50] sm:$0xff] %v200
                %v202 = vld [vmem:[%s178 + $0xb0] sm:$0xff]
                %203 = vst [vmem:[%s179 + $0x58] sm:$0xff] %v202
                %v204 = vld [vmem:[%s178 + $0xc0] sm:$0xff]
                %205 = vst [vmem:[%s179 + $0x60] sm:$0xff] %v204
                %v206 = vld [vmem:[%s178 + $0xd0] sm:$0xff]
                %207 = vst [vmem:[%s179 + $0x68] sm:$0xff] %v206
                %v208 = vld [vmem:[%s178 + $0xe0] sm:$0xff]
                %209 = vst [vmem:[%s179 + $0x70] sm:$0xff] %v208
                %v210 = vld [vmem:[%s178 + $0xf0] sm:$0xff]
                %211 = vst [vmem:[%s179 + $0x78] sm:$0xff] %v210
              $region41: #{vision_mamba_forward.22} parent=35 // loop_footer
                %s177 = sadd.s32 1, %s173
              $region42: #{vision_mamba_forward.22} parent=35 // loop_footer_branch
                %172 = sbr.rel target = $region38
              $region43: #{vision_mamba_forward.22} parent=35 // loop_exit
                _
            $region36: #{vision_mamba_forward.22} parent=27 // pred_fallthru
              _
          $region28: #{vision_mamba_forward.22} parent=23 // pred_fallthru
            _
          %256 = vnop
        $region24: #{vision_mamba_forward.22} parent=19 // pred_fallthru
          _
        // Predicated region
        $region59: #{vision_mamba_forward.22} parent=19 // pred_check
          %p257 = pneg %p93
        $region60: #{vision_mamba_forward.22} parent=19 // pred_check_branch
          %259 = sbr.rel (%p257) target = $region62
        $region61: #{vision_mamba_forward.22} parent=19 // pred_region
          %s260 = smul.u32 2, %s17
          %p261 = scmp.lt.s32.totalorder %s260, 3
          %s262 = scalar_select %p261, %s260, 3
          %s263 = scalar_lea.vmem %s2, %s262
          %s264 = smul.u32 2, %s17
        $region62: #{vision_mamba_forward.22} parent=19 // pred_fallthru
          _
      $region20: #{vision_mamba_forward.22} parent=5 // pred_fallthru
        _
      %p265 = scmp.le.s32.totalorder 1, %s9
      %p266 = scmp.lt.s32.totalorder %s9, 3
      %p267 = pnand %p265, %p266
      %p268 = pneg %p267
      // Predicated region
      $region63: #{vision_mamba_forward.22} parent=5 // pred_check
        _
      $region64: #{vision_mamba_forward.22} parent=5 // pred_check_branch
        %270 = sbr.rel (%p267) target = $region66
      $region65: #{vision_mamba_forward.22} parent=5 // pred_region
        %s271 = ssub.s32 %s9, 1
        %s272 = sand.u32 %s60, 1
        %s273 = sand.u32 %s60, 1
        %s274 = smul.addr %s273, 128
        %s275 = scalar_lea.vmem [#allocation2], %s274
        // Predicated region
        $region67: #{vision_mamba_forward.22} parent=65 // pred_check
          %p276 = pneg %p73
        $region68: #{vision_mamba_forward.22} parent=65 // pred_check_branch
          %278 = sbr.rel (%p276) target = $region70
        $region69: #{vision_mamba_forward.22} parent=65 // pred_region
          _
        $region70: #{vision_mamba_forward.22} parent=65 // pred_fallthru
          _
        %s279 = smul.u32 2, %s18
        %p280 = scmp.lt.s32.totalorder %s279, 1
        %s281 = scalar_select %p280, %s279, 1
        %s282 = smul.addr %s281, 4
        %s283 = scalar_lea.vmem %s0, %s282
        %p284 = pneg %p47
        %p285 = pneg %p44
        %s286 = sand.u32 %s60, 1
        %s287 = sand.u32 %s60, 1
        %s288 = smul.addr %s287, 128
        %s289 = scalar_lea.vmem [#allocation2], %s288
        %p290 = pneg %p73
        %p291 = pneg %p70
        %s292 = smul.u32 2, %s19
        %p293 = scmp.lt.s32.totalorder %s292, 3
        %s294 = scalar_select %p293, %s292, 3
        %s295 = scalar_lea.vmem %s2, %s294
        %p296 = pneg %p99
        %p297 = pneg %p96
        %p298 = pneg %p127
        %p299 = pneg %p124
        %s300 = sand.u32 %s114, 1
        %s301 = sand.u32 %s114, 1
        %s302 = smul.addr %s301, 32
        %s303 = scalar_lea.vmem [#allocation3], %s302
        %s304 = smul.u32 2, %s18
        %p305 = scmp.lt.s32.totalorder %s304, 1
        %s306 = scalar_select %p305, %s304, 1
        %s307 = smul.addr %s306, 4
        %s308 = scalar_lea.vmem %s0, %s307
        %s309 = smul.u32 2, %s18
        %s310 = smul.u32 2, %s19
        %s311 = smul.u32 2, %s19
        %p312 = scmp.lt.s32.totalorder %s311, 3
        %s313 = scalar_select %p312, %s311, 3
        %s314 = scalar_lea.vmem %s2, %s313
        %s315 = smul.u32 2, %s19
        %s316 = smul.u32 2, %s18
        %s317 = smul.u32 2, %s19
        %v319 = vld [vmem:[%s308] sm:$0xf]
        %v320 = vld [vmem:[%s308 + $0x4] sm:$0xf]
        %v321 = vld [vmem:[%s275] sm:$0xff]
        %v322 = vld [vmem:[%s275 + $0x8] sm:$0xff]
        %v323 = vld [vmem:[%s275 + $0x10] sm:$0xff]
        %v324 = vld [vmem:[%s275 + $0x18] sm:$0xff]
        %v325 = vld [vmem:[%s275 + $0x20] sm:$0xff]
        %v326 = vld [vmem:[%s275 + $0x28] sm:$0xff]
        %v327 = vld [vmem:[%s275 + $0x30] sm:$0xff]
        %v328 = vld [vmem:[%s275 + $0x38] sm:$0xff]
        %v329 = vld [vmem:[%s275 + $0x40] sm:$0xff]
        %v330 = vld [vmem:[%s275 + $0x48] sm:$0xff]
        %v331 = vld [vmem:[%s275 + $0x50] sm:$0xff]
        %v332 = vld [vmem:[%s275 + $0x58] sm:$0xff]
        %v333 = vld [vmem:[%s275 + $0x60] sm:$0xff]
        %v334 = vld [vmem:[%s275 + $0x68] sm:$0xff]
        %v335 = vld [vmem:[%s275 + $0x70] sm:$0xff]
        %v336 = vld [vmem:[%s275 + $0x78] sm:$0xff]
        %v337 = vld [vmem:[%s314] sm:$0x3]
        %v339 = vlaneseq
        %v340 = vshrl.u32 %v339, 7
        %v341 = vsub.s32 0, %v340
        %v342 = vrot.slane %v337, %v341
        %v343 = vlaneseq
        %v344 = vshrl.u32 %v343, 7
        %v345 = vsub.s32 1, %v344
        %v346 = vrot.slane %v337, %v345
        %v351 = vunpack.c.l.b16 %v319
        %v352 = vunpack.c.l.b16 %v320
        %v353 = vpack.c.b16 %v352, %v351
        %v371 = vunpack.c.l.b16 %v321
        %v372 = vunpack.c.h.b16 %v321
        %v373 = vunpack.c.l.b16 %v322
        %v374 = vunpack.c.h.b16 %v322
        %v375 = vunpack.c.l.b16 %v323
        %v376 = vunpack.c.h.b16 %v323
        %v377 = vunpack.c.l.b16 %v324
        %v378 = vunpack.c.h.b16 %v324
        %v379 = vunpack.c.l.b16 %v325
        %v380 = vunpack.c.h.b16 %v325
        %v381 = vunpack.c.l.b16 %v326
        %v382 = vunpack.c.h.b16 %v326
        %v383 = vunpack.c.l.b16 %v327
        %v384 = vunpack.c.h.b16 %v327
        %v385 = vunpack.c.l.b16 %v328
        %v386 = vunpack.c.h.b16 %v328
        %v387 = vunpack.c.l.b16 %v329
        %v388 = vunpack.c.h.b16 %v329
        %v389 = vunpack.c.l.b16 %v330
        %v390 = vunpack.c.h.b16 %v330
        %v391 = vunpack.c.l.b16 %v331
        %v392 = vunpack.c.h.b16 %v331
        %v393 = vunpack.c.l.b16 %v332
        %v394 = vunpack.c.h.b16 %v332
        %v395 = vunpack.c.l.b16 %v333
        %v396 = vunpack.c.h.b16 %v333
        %v397 = vunpack.c.l.b16 %v334
        %v398 = vunpack.c.h.b16 %v334
        %v399 = vunpack.c.l.b16 %v335
        %v400 = vunpack.c.h.b16 %v335
        %v401 = vunpack.c.l.b16 %v336
        %v402 = vunpack.c.h.b16 %v336
        %v403 = vpack.c.b16 %v373, %v371
        %v404 = vpack.c.b16 %v374, %v372
        %v405 = vpack.c.b16 %v377, %v375
        %v406 = vpack.c.b16 %v378, %v376
        %v407 = vpack.c.b16 %v381, %v379
        %v408 = vpack.c.b16 %v382, %v380
        %v409 = vpack.c.b16 %v385, %v383
        %v410 = vpack.c.b16 %v386, %v384
        %v411 = vpack.c.b16 %v389, %v387
        %v412 = vpack.c.b16 %v390, %v388
        %v413 = vpack.c.b16 %v393, %v391
        %v414 = vpack.c.b16 %v394, %v392
        %v415 = vpack.c.b16 %v397, %v395
        %v416 = vpack.c.b16 %v398, %v396
        %v417 = vpack.c.b16 %v401, %v399
        %v418 = vpack.c.b16 %v402, %v400
        %435 = vmatprep.subr.bf16.mxu0 %v404
        %436 = vmatpush1.bf16.msra.mxu0 %v403
        %437 = vmatprep.subr.bf16.mxu0 %v406
        %438 = vmatpush1.bf16.msra.mxu0 %v405
        %439 = vmatprep.subr.bf16.mxu0 %v408
        %440 = vmatpush1.bf16.msra.mxu0 %v407
        %441 = vmatprep.subr.bf16.mxu0 %v410
        %442 = vmatpush1.bf16.msra.mxu0 %v409
        %443 = vmatprep.subr.bf16.mxu0 %v412
        %444 = vmatpush1.bf16.msra.mxu0 %v411
        %445 = vmatprep.subr.bf16.mxu0 %v414
        %446 = vmatpush1.bf16.msra.mxu0 %v413
        %447 = vmatprep.subr.bf16.mxu0 %v416
        %448 = vmatpush1.bf16.msra.mxu0 %v415
        %449 = vmatprep.subr.bf16.mxu0 %v418
        %450 = vmatpush1.bf16.msra.mxu0 %v417
        %451 = vmatprep.subr.bf16.mxu0 0
        %452 = vmatpush1.bf16.msra.mxu0 0
        %453 = vmatprep.subr.bf16.mxu0 0
        %454 = vmatpush1.bf16.msra.mxu0 0
        %455 = vmatprep.subr.bf16.mxu0 0
        %456 = vmatpush1.bf16.msra.mxu0 0
        %457 = vmatprep.subr.bf16.mxu0 0
        %458 = vmatpush1.bf16.msra.mxu0 0
        %459 = vmatprep.subr.bf16.mxu0 0
        %460 = vmatpush1.bf16.msra.mxu0 0
        %461 = vmatprep.subr.bf16.mxu0 0
        %462 = vmatpush1.bf16.msra.mxu0 0
        %463 = vmatprep.subr.bf16.mxu0 0
        %464 = vmatpush1.bf16.msra.mxu0 0
        %465 = vmatprep.subr.bf16.mxu0 0
        %466 = vmatpush1.bf16.msra.mxu0 0
        %467 = vmatprep.mubr.bf16.mxu0 0
        %468 = vmatmul.mubr.bf16.gmra.mrb[0].mxu0 %v353
        %v469 = vpop.f32.mrb[0].mxu0
        %v470 = vadd.f32 %v342, %v469
        %v471 = vpop.f32.mrb[0].mxu0
        %v472 = vadd.f32 %v346, %v471
        %v473 = vpop.f32.mrb[0].mxu0
        %v474 = vadd.f32 %v342, %v473
        %v475 = vpop.f32.mrb[0].mxu0
        %v476 = vadd.f32 %v346, %v475
        %477 = vdwg.mxu0
        %478 = vst [vmem:[%s303] sm:$0xff] %v470
        %479 = vst [vmem:[%s303 + $0x8] sm:$0xff] %v472
        %480 = vst [vmem:[%s303 + $0x10] sm:$0xff] %v474
        %481 = vst [vmem:[%s303 + $0x18] sm:$0xff] %v476
        %s482 = sand.u32 %s114, 1
        %s483 = sand.u32 %s114, 1
        %s484 = smul.addr %s483, 32
        %s485 = scalar_lea.vmem [#allocation3], %s484
        // Predicated region
        $region71: #{vision_mamba_forward.22} parent=65 // pred_check
          %p486 = pneg %p124
        $region72: #{vision_mamba_forward.22} parent=65 // pred_check_branch
          %488 = sbr.rel (%p486) target = $region74
        $region73: #{vision_mamba_forward.22} parent=65 // pred_region
          %s489 = smul.u32 2, %s18
          %s490 = smul.u32 2, %s19
          %s491 = smul.addr %s489, 4
          %s492 = sadd.s32 %s490, %s491
          %s493 = smul.addr %s492, 8
          %s494 = scalar_lea.vmem %s3, %s493
          // Predicated region
          $region75: #{vision_mamba_forward.22} parent=73 // pred_check
            _
          $region76: #{vision_mamba_forward.22} parent=73 // pred_check_branch
            %496 = sbr.rel (0) target = $region78
          $region77: #{vision_mamba_forward.22} parent=73 // pred_region
            // Predicated region
            $region79: #{vision_mamba_forward.22} parent=77 // pred_check
              _
            $region80: #{vision_mamba_forward.22} parent=77 // pred_check_branch
              %498 = sbr.rel (0) target = $region82
            $region81: #{vision_mamba_forward.22} parent=77 // pred_region
              loop: start=0, step=1, limit=1
              $region83: #{vision_mamba_forward.22} parent=81 // loop_pre_header
                _
              $region84: #{vision_mamba_forward.22} parent=81 // loop_header
                %s500 = sphi 0, %s504
                %p501 = scmp.ge.s32.totalorder %s500, 1
                %s505 = sphi %s485, %s485
                %s506 = sphi %s494, %s494
              $region85: #{vision_mamba_forward.22} parent=81 // loop_header_branch
                %503 = sbr.rel (%p501) target = $region89
              $region86: #{vision_mamba_forward.22} parent=81 // loop_body
                %v507 = vld [vmem:[%s505] sm:$0xff]
                %508 = vst [vmem:[%s506] sm:$0xff] %v507
                %v509 = vld [vmem:[%s505 + $0x8] sm:$0xff]
                %510 = vst [vmem:[%s506 + $0x8] sm:$0xff] %v509
                %v511 = vld [vmem:[%s505 + $0x10] sm:$0xff]
                %512 = vst [vmem:[%s506 + $0x20] sm:$0xff] %v511
                %v513 = vld [vmem:[%s505 + $0x18] sm:$0xff]
                %514 = vst [vmem:[%s506 + $0x28] sm:$0xff] %v513
              $region87: #{vision_mamba_forward.22} parent=81 // loop_footer
                %s504 = sadd.s32 1, %s500
              $region88: #{vision_mamba_forward.22} parent=81 // loop_footer_branch
                %499 = sbr.rel target = $region84
              $region89: #{vision_mamba_forward.22} parent=81 // loop_exit
                _
            $region82: #{vision_mamba_forward.22} parent=77 // pred_fallthru
              _
            // Predicated region
            $region90: #{vision_mamba_forward.22} parent=77 // pred_check
              _
            $region91: #{vision_mamba_forward.22} parent=77 // pred_check_branch
              %516 = sbr.rel target = $region93
            $region92: #{vision_mamba_forward.22} parent=77 // pred_region
              _
            $region93: #{vision_mamba_forward.22} parent=77 // pred_fallthru
              _
          $region78: #{vision_mamba_forward.22} parent=73 // pred_fallthru
            _
          %517 = vnop
        $region74: #{vision_mamba_forward.22} parent=65 // pred_fallthru
          _
      $region66: #{vision_mamba_forward.22} parent=5 // pred_fallthru
        _
      %p518 = scmp.le.s32.totalorder 2, %s9
      // Predicated region
      $region94: #{vision_mamba_forward.22} parent=5 // pred_check
        %p519 = pneg %p518
      $region95: #{vision_mamba_forward.22} parent=5 // pred_check_branch
        %521 = sbr.rel (%p519) target = $region97
      $region96: #{vision_mamba_forward.22} parent=5 // pred_region
        %s522 = ssub.s32 %s9, 2
        // Predicated region
        $region98: #{vision_mamba_forward.22} parent=96 // pred_check
          %p523 = pneg %p130
        $region99: #{vision_mamba_forward.22} parent=96 // pred_check_branch
          %525 = sbr.rel (%p523) target = $region101
        $region100: #{vision_mamba_forward.22} parent=96 // pred_region
          %s526 = sand.u32 %s115, 1
          %s527 = sand.u32 %s115, 1
          %s528 = smul.addr %s527, 32
          %s529 = scalar_lea.vmem [#allocation3], %s528
        $region101: #{vision_mamba_forward.22} parent=96 // pred_fallthru
          _
      $region97: #{vision_mamba_forward.22} parent=5 // pred_fallthru
        _
    $region6: #{vision_mamba_forward.22} parent=1 // loop_footer
      %s13 = sadd.s32 1, %s9
    $region7: #{vision_mamba_forward.22} parent=1 // loop_footer_branch
      %8 = sbr.rel target = $region3
    $region8: #{vision_mamba_forward.22} parent=1 // loop_exit
      _

// kernel: vision_mamba_forward.20
$region0: #{vision_mamba_forward.20}
  #allocation0 [shape = 'u32[]', space=smem, size = 0x4, offset = 0x4, fixed_abs, tag = 'smem constant byte address 0x4 - core index']
  #allocation1 [shape = 'u32[144,128]{1,0:T(1,128)}', space=vmem, size = 0x12000, scoped, tag = 'internal scratch']
  %s0 = inlined_call_operand.vmem [shape: bf16[16,192], index: 0, kind: input, shape index: {}]
  %s1 = inlined_call_operand.vmem [shape: bf16[192,128], index: 1, kind: input, shape index: {}]
  %s2 = inlined_call_operand.vmem [shape: f32[1,128], index: 2, kind: input, shape index: {}]
  %s3 = inlined_call_operand.vmem [shape: f32[16,128], index: 3, kind: output, shape index: {}]
  %s4 = sld [smem:[#allocation0]]
  $region22: #{vision_mamba_forward.20} parent=0
    _
  %s6 = ssub.s32 1, %s4
  %s7 = scalar_select 0, %s6, %s4
  // Predicated region
  $region2: #{vision_mamba_forward.20} parent=0 // pred_check
    _
  $region3: #{vision_mamba_forward.20} parent=0 // pred_check_branch
    %9 = sbr.rel (0) target = $region5
  $region4: #{vision_mamba_forward.20} parent=0 // pred_region
    _
  $region5: #{vision_mamba_forward.20} parent=0 // pred_fallthru
    _
  // Predicated region
  $region6: #{vision_mamba_forward.20} parent=0 // pred_check
    _
  $region7: #{vision_mamba_forward.20} parent=0 // pred_check_branch
    %11 = sbr.rel (0) target = $region9
  $region8: #{vision_mamba_forward.20} parent=0 // pred_region
    _
  $region9: #{vision_mamba_forward.20} parent=0 // pred_fallthru
    _
  // Predicated region
  $region10: #{vision_mamba_forward.20} parent=0 // pred_check
    _
  $region11: #{vision_mamba_forward.20} parent=0 // pred_check_branch
    %13 = sbr.rel (0) target = $region13
  $region12: #{vision_mamba_forward.20} parent=0 // pred_region
    _
  $region13: #{vision_mamba_forward.20} parent=0 // pred_fallthru
    _
  %v15 = vld [vmem:[%s0] sm:$0xff]
  %v16 = vld [vmem:[%s0 + $0x8] sm:$0xff]
  %v17 = vld [vmem:[%s1] sm:$0xf]
  %v18 = vld [vmem:[%s1 + $0x4] sm:$0xf]
  %v19 = vld [vmem:[%s1 + $0x8] sm:$0xf]
  %v20 = vld [vmem:[%s1 + $0xc] sm:$0xf]
  %v21 = vld [vmem:[%s1 + $0x10] sm:$0xf]
  %v22 = vld [vmem:[%s1 + $0x14] sm:$0xf]
  %v23 = vld [vmem:[%s1 + $0x18] sm:$0xf]
  %v24 = vld [vmem:[%s1 + $0x1c] sm:$0xf]
  %v25 = vld [vmem:[%s1 + $0x20] sm:$0xf]
  %v26 = vld [vmem:[%s1 + $0x24] sm:$0xf]
  %v27 = vld [vmem:[%s1 + $0x28] sm:$0xf]
  %v28 = vld [vmem:[%s1 + $0x2c] sm:$0xf]
  %v29 = vld [vmem:[%s1 + $0x30] sm:$0xf]
  %v30 = vld [vmem:[%s1 + $0x34] sm:$0xf]
  %v31 = vld [vmem:[%s1 + $0x38] sm:$0xf]
  %v32 = vld [vmem:[%s1 + $0x3c] sm:$0xf]
  %v33 = vld [vmem:[%s1 + $0x40] sm:$0xf]
  %v34 = vld [vmem:[%s1 + $0x44] sm:$0xf]
  %v35 = vld [vmem:[%s1 + $0x48] sm:$0xf]
  %v36 = vld [vmem:[%s1 + $0x4c] sm:$0xf]
  %v37 = vld [vmem:[%s1 + $0x50] sm:$0xf]
  %v38 = vld [vmem:[%s1 + $0x54] sm:$0xf]
  %v39 = vld [vmem:[%s1 + $0x58] sm:$0xf]
  %v40 = vld [vmem:[%s1 + $0x5c] sm:$0xf]
  %v41 = vld [vmem:[%s2] sm:$0x1]
  %v43 = vlaneseq
  %v44 = vshrl.u32 %v43, 7
  %v45 = vsub.s32 0, %v44
  %v46 = vrot.slane %v41, %v45
  %v50 = vunpack.c.l.b16 %v15
  %v51 = vunpack.c.h.b16 %v15
  %v52 = vunpack.c.l.b16 %v16
  %v53 = vunpack.c.h.b16 %v16
  %v54 = vpack.c.b16 %v52, %v50
  %v55 = vpack.c.b16 %v53, %v51
  %v81 = vunpack.c.l.b16 %v17
  %v82 = vunpack.c.l.b16 %v18
  %v83 = vunpack.c.l.b16 %v19
  %v84 = vunpack.c.l.b16 %v20
  %v85 = vunpack.c.l.b16 %v21
  %v86 = vunpack.c.l.b16 %v22
  %v87 = vunpack.c.l.b16 %v23
  %v88 = vunpack.c.l.b16 %v24
  %v89 = vunpack.c.l.b16 %v25
  %v90 = vunpack.c.l.b16 %v26
  %v91 = vunpack.c.l.b16 %v27
  %v92 = vunpack.c.l.b16 %v28
  %v93 = vunpack.c.l.b16 %v29
  %v94 = vunpack.c.l.b16 %v30
  %v95 = vunpack.c.l.b16 %v31
  %v96 = vunpack.c.l.b16 %v32
  %v97 = vunpack.c.l.b16 %v33
  %v98 = vunpack.c.l.b16 %v34
  %v99 = vunpack.c.l.b16 %v35
  %v100 = vunpack.c.l.b16 %v36
  %v101 = vunpack.c.l.b16 %v37
  %v102 = vunpack.c.l.b16 %v38
  %v103 = vunpack.c.l.b16 %v39
  %v104 = vunpack.c.l.b16 %v40
  %v105 = vpack.c.b16 %v82, %v81
  %v106 = vpack.c.b16 %v84, %v83
  %v107 = vpack.c.b16 %v86, %v85
  %v108 = vpack.c.b16 %v88, %v87
  %v109 = vpack.c.b16 %v90, %v89
  %v110 = vpack.c.b16 %v92, %v91
  %v111 = vpack.c.b16 %v94, %v93
  %v112 = vpack.c.b16 %v96, %v95
  %v113 = vpack.c.b16 %v98, %v97
  %v114 = vpack.c.b16 %v100, %v99
  %v115 = vpack.c.b16 %v102, %v101
  %v116 = vpack.c.b16 %v104, %v103
  %vm129 = vcmask 523264
  %v131 = vsel %vm129, %v55, 0
  %133 = vmatprep.subr.bf16.mxu0 0
  %134 = vmatpush1.bf16.msra.mxu0 %v105
  %135 = vmatprep.subr.bf16.mxu0 0
  %136 = vmatpush1.bf16.msra.mxu0 %v106
  %137 = vmatprep.subr.bf16.mxu0 0
  %138 = vmatpush1.bf16.msra.mxu0 %v107
  %139 = vmatprep.subr.bf16.mxu0 0
  %140 = vmatpush1.bf16.msra.mxu0 %v108
  %141 = vmatprep.subr.bf16.mxu0 0
  %142 = vmatpush1.bf16.msra.mxu0 %v109
  %143 = vmatprep.subr.bf16.mxu0 0
  %144 = vmatpush1.bf16.msra.mxu0 %v110
  %145 = vmatprep.subr.bf16.mxu0 0
  %146 = vmatpush1.bf16.msra.mxu0 %v111
  %147 = vmatprep.subr.bf16.mxu0 0
  %148 = vmatpush1.bf16.msra.mxu0 %v112
  %149 = vmatprep.subr.bf16.mxu0 0
  %150 = vmatpush1.bf16.msra.mxu0 %v113
  %151 = vmatprep.subr.bf16.mxu0 0
  %152 = vmatpush1.bf16.msra.mxu0 %v114
  %153 = vmatprep.subr.bf16.mxu0 0
  %154 = vmatpush1.bf16.msra.mxu0 %v115
  %155 = vmatprep.subr.bf16.mxu0 0
  %156 = vmatpush1.bf16.msra.mxu0 %v116
  %157 = vmatprep.subr.bf16.mxu0 0
  %158 = vmatpush1.bf16.msra.mxu0 0
  %159 = vmatprep.subr.bf16.mxu0 0
  %160 = vmatpush1.bf16.msra.mxu0 0
  %161 = vmatprep.subr.bf16.mxu0 0
  %162 = vmatpush1.bf16.msra.mxu0 0
  %163 = vmatprep.subr.bf16.mxu0 0
  %164 = vmatpush1.bf16.msra.mxu0 0
  %165 = vmatprep.mubr.bf16.mxu0 %v131
  %166 = vmatmul.mubr.bf16.gmra.mrb[0].mxu0 %v54
  %v167 = vpop.f32.mrb[0].mxu0
  %v168 = vadd.f32 %v46, %v167
  %v169 = vpop.f32.mrb[0].mxu0
  %v170 = vpop.f32.mrb[0].mxu0
  %v171 = vadd.f32 %v46, %v170
  %v172 = vpop.f32.mrb[0].mxu0
  %173 = vdwg.mxu0
  %174 = vst [vmem:[%s3] sm:$0xff] %v168
  %175 = vst [vmem:[%s3 + $0x8] sm:$0xff] %v171
  // Predicated region
  $region14: #{vision_mamba_forward.20} parent=0 // pred_check
    _
  $region15: #{vision_mamba_forward.20} parent=0 // pred_check_branch
    %177 = sbr.rel (0) target = $region17
  $region16: #{vision_mamba_forward.20} parent=0 // pred_region
    _
  $region17: #{vision_mamba_forward.20} parent=0 // pred_fallthru
    _
  // Predicated region
  $region18: #{vision_mamba_forward.20} parent=0 // pred_check
    _
  $region19: #{vision_mamba_forward.20} parent=0 // pred_check_branch
    %179 = sbr.rel (0) target = $region21
  $region20: #{vision_mamba_forward.20} parent=0 // pred_region
    _
  $region21: #{vision_mamba_forward.20} parent=0 // pred_fallthru
    _

// kernel: vision_mamba_forward.26
$region0: #{vision_mamba_forward.26}
  #allocation0 [shape = 'u32[]', space=smem, size = 0x4, offset = 0x4, fixed_abs, tag = 'smem constant byte address 0x4 - core index']
  #allocation1 [shape = 'u32[144,128]{1,0:T(1,128)}', space=vmem, size = 0x12000, scoped, tag = 'internal scratch']
  %s0 = inlined_call_operand.vmem [shape: f32[2,8,512], index: 0, kind: input, shape index: {}]
  %s1 = inlined_call_operand.vmem [shape: f32[4,256], index: 1, kind: input, shape index: {}]
  %s2 = inlined_call_operand.vmem [shape: f32[1,256], index: 2, kind: input, shape index: {}]
  %s3 = inlined_call_operand.vmem [shape: bf16[2,8,256], index: 3, kind: output, shape index: {}]
  %s4 = sld [smem:[#allocation0]]
  $region45: #{vision_mamba_forward.26} parent=0
    _
  %s6 = ssub.s32 1, %s4
  %s7 = scalar_select 0, %s6, %s4
  loop: start=0, step=1, limit=4
  $region2: #{vision_mamba_forward.26} parent=0 // loop_pre_header
    _
  $region3: #{vision_mamba_forward.26} parent=0 // loop_header
    %s9 = sphi 0, %s13
    %p10 = scmp.ge.s32.totalorder %s9, 4
    %s19 = sphi 0, %s21
    %s22 = sphi 0, %s19
    %s23 = sphi 0, %s22
    %s39 = sphi 0, %s23
    %s43 = sphi 0, %s43
    %s45 = sphi 0, %s43
    %s46 = sphi 0, %s45
    %s60 = sphi 0, %s46
    %s64 = sphi 0, %s64
    %s66 = sphi 0, %s64
    %s67 = sphi 0, %s66
    %s81 = sphi 0, %s67
    %s87 = sphi 0, %s89
    %s90 = sphi 0, %s87
    %s91 = sphi 0, %s90
    %s107 = sphi 0, %s91
  $region4: #{vision_mamba_forward.26} parent=0 // loop_header_branch
    %12 = sbr.rel (%p10) target = $region8
  $region5: #{vision_mamba_forward.26} parent=0 // loop_body
    %s14 = ssub.s32 %s9, 1
    %s15 = ssub.s32 %s9, 2
    %s16 = sadd.s32 %s9, 1
    %s17 = ssub.s32 %s9, %s16
    %p18 = scmp.eq.s32.totalorder %s17, 0
    %s20 = sadd.s32 %s19, 1
    %s21 = scalar_select %p18, %s19, %s20
    %p24 = pneg %p18
    %p25 = scmp.eq.s32.totalorder %s9, 1
    %p26 = por %p24, %p25
    %p27 = scmp.ne.s32.totalorder %s19, %s22
    %p28 = scmp.eq.s32.totalorder %s9, 0
    %p29 = por %p27, %p28
    %p30 = scmp.ne.s32.totalorder %s19, %s22
    %p31 = scmp.eq.s32.totalorder %s14, 1
    %p32 = por %p30, %p31
    %p33 = scmp.ne.s32.totalorder %s22, %s23
    %p34 = scmp.eq.s32.totalorder %s14, 0
    %p35 = por %p33, %p34
    %p36 = scmp.ne.s32.totalorder %s22, %s23
    %p37 = scmp.eq.s32.totalorder %s15, 1
    %p38 = por %p36, %p37
    %p40 = scmp.ne.s32.totalorder %s23, %s39
    %p41 = scmp.eq.s32.totalorder %s15, 0
    %p42 = por %p40, %p41
    %s44 = sadd.s32 %s43, 1
    %p47 = scmp.eq.s32.totalorder %s9, 1
    %p48 = scmp.ne.s32.totalorder %s43, %s45
    %p49 = scmp.eq.s32.totalorder %s9, 0
    %p50 = por %p48, %p49
    %p51 = scmp.ne.s32.totalorder %s43, %s45
    %p52 = scmp.eq.s32.totalorder %s14, 1
    %p53 = por %p51, %p52
    %p54 = scmp.ne.s32.totalorder %s45, %s46
    %p55 = scmp.eq.s32.totalorder %s14, 0
    %p56 = por %p54, %p55
    %p57 = scmp.ne.s32.totalorder %s45, %s46
    %p58 = scmp.eq.s32.totalorder %s15, 1
    %p59 = por %p57, %p58
    %p61 = scmp.ne.s32.totalorder %s46, %s60
    %p62 = scmp.eq.s32.totalorder %s15, 0
    %p63 = por %p61, %p62
    %s65 = sadd.s32 %s64, 1
    %p68 = scmp.eq.s32.totalorder %s9, 1
    %p69 = scmp.ne.s32.totalorder %s64, %s66
    %p70 = scmp.eq.s32.totalorder %s9, 0
    %p71 = por %p69, %p70
    %p72 = scmp.ne.s32.totalorder %s64, %s66
    %p73 = scmp.eq.s32.totalorder %s14, 1
    %p74 = por %p72, %p73
    %p75 = scmp.ne.s32.totalorder %s66, %s67
    %p76 = scmp.eq.s32.totalorder %s14, 0
    %p77 = por %p75, %p76
    %p78 = scmp.ne.s32.totalorder %s66, %s67
    %p79 = scmp.eq.s32.totalorder %s15, 1
    %p80 = por %p78, %p79
    %p82 = scmp.ne.s32.totalorder %s67, %s81
    %p83 = scmp.eq.s32.totalorder %s15, 0
    %p84 = por %p82, %p83
    %s85 = ssub.s32 %s9, %s16
    %p86 = scmp.eq.s32.totalorder %s85, 0
    %s88 = sadd.s32 %s87, 1
    %s89 = scalar_select %p86, %s87, %s88
    %p92 = pneg %p86
    %p93 = scmp.eq.s32.totalorder %s9, 1
    %p94 = por %p92, %p93
    %p95 = scmp.ne.s32.totalorder %s87, %s90
    %p96 = scmp.eq.s32.totalorder %s9, 0
    %p97 = por %p95, %p96
    %p98 = scmp.ne.s32.totalorder %s87, %s90
    %p99 = scmp.eq.s32.totalorder %s14, 1
    %p100 = por %p98, %p99
    %p101 = scmp.ne.s32.totalorder %s90, %s91
    %p102 = scmp.eq.s32.totalorder %s14, 0
    %p103 = por %p101, %p102
    %p104 = scmp.ne.s32.totalorder %s90, %s91
    %p105 = scmp.eq.s32.totalorder %s15, 1
    %p106 = por %p104, %p105
    %p108 = scmp.ne.s32.totalorder %s91, %s107
    %p109 = scmp.eq.s32.totalorder %s15, 0
    %p110 = por %p108, %p109
    %p111 = scmp.le.s32.totalorder 1, %s9
    %p112 = scmp.lt.s32.totalorder %s9, 3
    %p113 = pnand %p111, %p112
    %p114 = pneg %p113
    // Predicated region
    $region9: #{vision_mamba_forward.26} parent=5 // pred_check
      _
    $region10: #{vision_mamba_forward.26} parent=5 // pred_check_branch
      %116 = sbr.rel (%p113) target = $region12
    $region11: #{vision_mamba_forward.26} parent=5 // pred_region
      %s117 = ssub.s32 %s9, 1
      // Predicated region
      $region13: #{vision_mamba_forward.26} parent=11 // pred_check
        %p118 = pneg %p56
      $region14: #{vision_mamba_forward.26} parent=11 // pred_check_branch
        %120 = sbr.rel (%p118) target = $region16
      $region15: #{vision_mamba_forward.26} parent=11 // pred_region
        _
      $region16: #{vision_mamba_forward.26} parent=11 // pred_fallthru
        _
      // Predicated region
      $region17: #{vision_mamba_forward.26} parent=11 // pred_check
        %p121 = pneg %p77
      $region18: #{vision_mamba_forward.26} parent=11 // pred_check_branch
        %123 = sbr.rel (%p121) target = $region20
      $region19: #{vision_mamba_forward.26} parent=11 // pred_region
        _
      $region20: #{vision_mamba_forward.26} parent=11 // pred_fallthru
        _
    $region12: #{vision_mamba_forward.26} parent=5 // pred_fallthru
      _
    %p124 = scmp.lt.s32.totalorder %s9, 2
    // Predicated region
    $region21: #{vision_mamba_forward.26} parent=5 // pred_check
      %p125 = pneg %p124
    $region22: #{vision_mamba_forward.26} parent=5 // pred_check_branch
      %127 = sbr.rel (%p125) target = $region24
    $region23: #{vision_mamba_forward.26} parent=5 // pred_region
      // Predicated region
      $region25: #{vision_mamba_forward.26} parent=23 // pred_check
        %p128 = pneg %p29
      $region26: #{vision_mamba_forward.26} parent=23 // pred_check_branch
        %130 = sbr.rel (%p128) target = $region28
      $region27: #{vision_mamba_forward.26} parent=23 // pred_region
        %p131 = scmp.lt.s32.totalorder %s9, 1
        %s132 = scalar_select %p131, %s9, 1
        %s133 = smul.addr %s132, 4
        %s134 = smul.addr %s133, 8
        %s135 = scalar_lea.vmem %s0, %s134
      $region28: #{vision_mamba_forward.26} parent=23 // pred_fallthru
        _
    $region24: #{vision_mamba_forward.26} parent=5 // pred_fallthru
      _
    %p136 = scmp.le.s32.totalorder 1, %s9
    %p137 = scmp.lt.s32.totalorder %s9, 3
    %p138 = pnand %p136, %p137
    %p139 = pneg %p138
    // Predicated region
    $region29: #{vision_mamba_forward.26} parent=5 // pred_check
      _
    $region30: #{vision_mamba_forward.26} parent=5 // pred_check_branch
      %141 = sbr.rel (%p138) target = $region32
    $region31: #{vision_mamba_forward.26} parent=5 // pred_region
      %s142 = ssub.s32 %s9, 1
      %p143 = scmp.lt.s32.totalorder %s14, 1
      %s144 = scalar_select %p143, %s14, 1
      %s145 = smul.addr %s144, 4
      %s146 = smul.addr %s145, 8
      %s147 = scalar_lea.vmem %s0, %s146
      %p148 = pneg %p35
      %p149 = pneg %p32
      %p150 = pneg %p56
      %p151 = pneg %p53
      %p152 = pneg %p77
      %p153 = pneg %p74
      %p154 = pneg %p103
      %p155 = pneg %p100
      %p156 = scmp.lt.s32.totalorder %s14, 1
      %s157 = scalar_select %p156, %s14, 1
      %s158 = smul.addr %s157, 2
      %s159 = smul.addr %s158, 4
      %s160 = scalar_lea.vmem %s3, %s159
      %p161 = scmp.lt.s32.totalorder %s14, 1
      %s162 = scalar_select %p161, %s14, 1
      %s163 = smul.addr %s162, 4
      %s164 = smul.addr %s163, 8
      %s165 = scalar_lea.vmem %s0, %s164
      %p166 = scmp.lt.s32.totalorder %s14, 1
      %s167 = scalar_select %p166, %s14, 1
      %s168 = smul.addr %s167, 2
      %s169 = smul.addr %s168, 4
      %s170 = scalar_lea.vmem %s3, %s169
      %v171 = vld [vmem:[%s165] sm:$0xff]
      %v172 = vld [vmem:[%s165 + $0x8] sm:$0xff]
      %v173 = vlaneseq
      %v174 = vshrl.u32 %v173, 7
      %vm175 = vcmp.lt.s32.totalorder %v174, 5
      %v176 = vrot.slane %v171, 3
      %v177 = vrot.slane %v172, 3
      %v178 = vsel %vm175, %v176, 0.0
      %v179 = vsel %vm175, %v177, 0.0
      %v180 = vld [vmem:[%s1] ss:$4 sm:$0x3]
      %v182 = vlaneseq
      %v183 = vshrl.u32 %v182, 7
      %v184 = vsub.s32 0, %v183
      %v185 = vrot.slane %v180, %v184
      %v186 = vlaneseq
      %v187 = vshrl.u32 %v186, 7
      %v188 = vsub.s32 1, %v187
      %v189 = vrot.slane %v180, %v188
      %v192 = vmul.f32 %v178, %v185
      %v193 = vmul.f32 %v179, %v189
      %v194 = vadd.f32 %v192, 0.0
      %v195 = vadd.f32 %v193, 0.0
      %vm196 = vcmp.lt.s32.totalorder %v174, 6
      %v197 = vrot.slane %v171, 2
      %v198 = vrot.slane %v172, 2
      %v199 = vsel %vm196, %v197, 0.0
      %v200 = vsel %vm196, %v198, 0.0
      %s201 = scalar_lea.vmem %s1, 1
      %v202 = vld [vmem:[%s201] ss:$4 sm:$0x3]
      %v204 = vlaneseq
      %v205 = vshrl.u32 %v204, 7
      %v206 = vsub.s32 0, %v205
      %v207 = vrot.slane %v202, %v206
      %v208 = vlaneseq
      %v209 = vshrl.u32 %v208, 7
      %v210 = vsub.s32 1, %v209
      %v211 = vrot.slane %v202, %v210
      %v214 = vmul.f32 %v199, %v207
      %v215 = vmul.f32 %v200, %v211
      %v216 = vadd.f32 %v194, %v214
      %v217 = vadd.f32 %v195, %v215
      %vm218 = vcmp.lt.s32.totalorder %v174, 7
      %v219 = vrot.slane %v171, 1
      %v220 = vrot.slane %v172, 1
      %v221 = vsel %vm218, %v219, 0.0
      %v222 = vsel %vm218, %v220, 0.0
      %s223 = scalar_lea.vmem %s1, 2
      %v224 = vld [vmem:[%s223] ss:$4 sm:$0x3]
      %v226 = vlaneseq
      %v227 = vshrl.u32 %v226, 7
      %v228 = vsub.s32 0, %v227
      %v229 = vrot.slane %v224, %v228
      %v230 = vlaneseq
      %v231 = vshrl.u32 %v230, 7
      %v232 = vsub.s32 1, %v231
      %v233 = vrot.slane %v224, %v232
      %v236 = vmul.f32 %v221, %v229
      %v237 = vmul.f32 %v222, %v233
      %v238 = vadd.f32 %v216, %v236
      %v239 = vadd.f32 %v217, %v237
      %s240 = scalar_lea.vmem %s1, 3
      %v241 = vld [vmem:[%s240] ss:$4 sm:$0x3]
      %v243 = vlaneseq
      %v244 = vshrl.u32 %v243, 7
      %v245 = vsub.s32 0, %v244
      %v246 = vrot.slane %v241, %v245
      %v247 = vlaneseq
      %v248 = vshrl.u32 %v247, 7
      %v249 = vsub.s32 1, %v248
      %v250 = vrot.slane %v241, %v249
      %v253 = vmul.f32 %v171, %v246
      %v254 = vmul.f32 %v172, %v250
      %v255 = vadd.f32 %v238, %v253
      %v256 = vadd.f32 %v239, %v254
      %v257 = vld [vmem:[%s2] sm:$0x3]
      %v259 = vlaneseq
      %v260 = vshrl.u32 %v259, 7
      %v261 = vsub.s32 0, %v260
      %v262 = vrot.slane %v257, %v261
      %v263 = vlaneseq
      %v264 = vshrl.u32 %v263, 7
      %v265 = vsub.s32 1, %v264
      %v266 = vrot.slane %v257, %v265
      %v269 = vadd.f32 %v255, %v262
      %v270 = vadd.f32 %v256, %v266
      %v271 = vsub.f32 0.0, %v269
      %v272 = vsub.f32 0.0, %v270
      %v273 = vmul.f32 %v271, 1.442695
      %v274 = vpow.pop %v273
      %v275 = vmul.f32 %v272, 1.442695
      %v276 = vpow.pop %v275
      %v277 = vadd.f32 %v274, 1.0
      %v278 = vadd.f32 %v276, 1.0
      %v279 = vrcp.pop %v277
      %v280 = vmul.f32 1.0, %v279
      %v281 = vrcp.pop %v278
      %v282 = vmul.f32 1.0, %v281
      %v283 = vmul.f32 %v269, %v280
      %v284 = vmul.f32 %v270, %v282
      %v285 = vpack.c.bf16 %v283, %v283
      %v286 = vpack.c.bf16 %v284, %v284
      %v289 = vunpack.c.l.b16 %v285
      %v290 = vunpack.c.l.b16 %v286
      %v291 = vpack.c.b16 %v290, %v289
      %293 = vst [vmem:[%s170] sm:$0xff] %v291
      %p294 = scmp.lt.s32.totalorder %s14, 1
      %s295 = scalar_select %p294, %s14, 1
      %s296 = smul.addr %s295, 2
      %s297 = smul.addr %s296, 4
      %s298 = scalar_lea.vmem %s3, %s297
      // Predicated region
      $region33: #{vision_mamba_forward.26} parent=31 // pred_check
        %p299 = pneg %p100
      $region34: #{vision_mamba_forward.26} parent=31 // pred_check_branch
        %301 = sbr.rel (%p299) target = $region36
      $region35: #{vision_mamba_forward.26} parent=31 // pred_region
        _
      $region36: #{vision_mamba_forward.26} parent=31 // pred_fallthru
        _
    $region32: #{vision_mamba_forward.26} parent=5 // pred_fallthru
      _
    %p302 = scmp.le.s32.totalorder 2, %s9
    // Predicated region
    $region37: #{vision_mamba_forward.26} parent=5 // pred_check
      %p303 = pneg %p302
    $region38: #{vision_mamba_forward.26} parent=5 // pred_check_branch
      %305 = sbr.rel (%p303) target = $region40
    $region39: #{vision_mamba_forward.26} parent=5 // pred_region
      %s306 = ssub.s32 %s9, 2
      // Predicated region
      $region41: #{vision_mamba_forward.26} parent=39 // pred_check
        %p307 = pneg %p106
      $region42: #{vision_mamba_forward.26} parent=39 // pred_check_branch
        %309 = sbr.rel (%p307) target = $region44
      $region43: #{vision_mamba_forward.26} parent=39 // pred_region
        %p310 = scmp.lt.s32.totalorder %s15, 1
        %s311 = scalar_select %p310, %s15, 1
        %s312 = smul.addr %s311, 2
        %s313 = smul.addr %s312, 4
        %s314 = scalar_lea.vmem %s3, %s313
      $region44: #{vision_mamba_forward.26} parent=39 // pred_fallthru
        _
    $region40: #{vision_mamba_forward.26} parent=5 // pred_fallthru
      _
  $region6: #{vision_mamba_forward.26} parent=0 // loop_footer
    %s13 = sadd.s32 1, %s9
  $region7: #{vision_mamba_forward.26} parent=0 // loop_footer_branch
    %8 = sbr.rel target = $region3
  $region8: #{vision_mamba_forward.26} parent=0 // loop_exit
    _

// kernel: vision_mamba_forward.23
$region0: #{vision_mamba_forward.23}
  #allocation0 [shape = 'u32[]', space=smem, size = 0x4, offset = 0x4, fixed_abs, tag = 'smem constant byte address 0x4 - core index']
  #allocation1 [shape = 'u32[144,128]{1,0:T(1,128)}', space=vmem, size = 0x12000, scoped, tag = 'internal scratch']
  %s0 = inlined_call_operand.vmem [shape: f32[2,8,512], index: 0, kind: input, shape index: {}]
  %s1 = inlined_call_operand.vmem [shape: f32[4,256], index: 1, kind: input, shape index: {}]
  %s2 = inlined_call_operand.vmem [shape: f32[1,256], index: 2, kind: input, shape index: {}]
  %s3 = inlined_call_operand.vmem [shape: bf16[2,8,256], index: 3, kind: output, shape index: {}]
  %s4 = sld [smem:[#allocation0]]
  $region45: #{vision_mamba_forward.23} parent=0
    _
  %s6 = ssub.s32 1, %s4
  %s7 = scalar_select 0, %s6, %s4
  loop: start=0, step=1, limit=4
  $region2: #{vision_mamba_forward.23} parent=0 // loop_pre_header
    _
  $region3: #{vision_mamba_forward.23} parent=0 // loop_header
    %s9 = sphi 0, %s13
    %p10 = scmp.ge.s32.totalorder %s9, 4
    %s19 = sphi 0, %s21
    %s22 = sphi 0, %s19
    %s23 = sphi 0, %s22
    %s39 = sphi 0, %s23
    %s43 = sphi 0, %s43
    %s45 = sphi 0, %s43
    %s46 = sphi 0, %s45
    %s60 = sphi 0, %s46
    %s64 = sphi 0, %s64
    %s66 = sphi 0, %s64
    %s67 = sphi 0, %s66
    %s81 = sphi 0, %s67
    %s87 = sphi 0, %s89
    %s90 = sphi 0, %s87
    %s91 = sphi 0, %s90
    %s107 = sphi 0, %s91
  $region4: #{vision_mamba_forward.23} parent=0 // loop_header_branch
    %12 = sbr.rel (%p10) target = $region8
  $region5: #{vision_mamba_forward.23} parent=0 // loop_body
    %s14 = ssub.s32 %s9, 1
    %s15 = ssub.s32 %s9, 2
    %s16 = sadd.s32 %s9, 1
    %s17 = ssub.s32 %s9, %s16
    %p18 = scmp.eq.s32.totalorder %s17, 0
    %s20 = sadd.s32 %s19, 1
    %s21 = scalar_select %p18, %s19, %s20
    %p24 = pneg %p18
    %p25 = scmp.eq.s32.totalorder %s9, 1
    %p26 = por %p24, %p25
    %p27 = scmp.ne.s32.totalorder %s19, %s22
    %p28 = scmp.eq.s32.totalorder %s9, 0
    %p29 = por %p27, %p28
    %p30 = scmp.ne.s32.totalorder %s19, %s22
    %p31 = scmp.eq.s32.totalorder %s14, 1
    %p32 = por %p30, %p31
    %p33 = scmp.ne.s32.totalorder %s22, %s23
    %p34 = scmp.eq.s32.totalorder %s14, 0
    %p35 = por %p33, %p34
    %p36 = scmp.ne.s32.totalorder %s22, %s23
    %p37 = scmp.eq.s32.totalorder %s15, 1
    %p38 = por %p36, %p37
    %p40 = scmp.ne.s32.totalorder %s23, %s39
    %p41 = scmp.eq.s32.totalorder %s15, 0
    %p42 = por %p40, %p41
    %s44 = sadd.s32 %s43, 1
    %p47 = scmp.eq.s32.totalorder %s9, 1
    %p48 = scmp.ne.s32.totalorder %s43, %s45
    %p49 = scmp.eq.s32.totalorder %s9, 0
    %p50 = por %p48, %p49
    %p51 = scmp.ne.s32.totalorder %s43, %s45
    %p52 = scmp.eq.s32.totalorder %s14, 1
    %p53 = por %p51, %p52
    %p54 = scmp.ne.s32.totalorder %s45, %s46
    %p55 = scmp.eq.s32.totalorder %s14, 0
    %p56 = por %p54, %p55
    %p57 = scmp.ne.s32.totalorder %s45, %s46
    %p58 = scmp.eq.s32.totalorder %s15, 1
    %p59 = por %p57, %p58
    %p61 = scmp.ne.s32.totalorder %s46, %s60
    %p62 = scmp.eq.s32.totalorder %s15, 0
    %p63 = por %p61, %p62
    %s65 = sadd.s32 %s64, 1
    %p68 = scmp.eq.s32.totalorder %s9, 1
    %p69 = scmp.ne.s32.totalorder %s64, %s66
    %p70 = scmp.eq.s32.totalorder %s9, 0
    %p71 = por %p69, %p70
    %p72 = scmp.ne.s32.totalorder %s64, %s66
    %p73 = scmp.eq.s32.totalorder %s14, 1
    %p74 = por %p72, %p73
    %p75 = scmp.ne.s32.totalorder %s66, %s67
    %p76 = scmp.eq.s32.totalorder %s14, 0
    %p77 = por %p75, %p76
    %p78 = scmp.ne.s32.totalorder %s66, %s67
    %p79 = scmp.eq.s32.totalorder %s15, 1
    %p80 = por %p78, %p79
    %p82 = scmp.ne.s32.totalorder %s67, %s81
    %p83 = scmp.eq.s32.totalorder %s15, 0
    %p84 = por %p82, %p83
    %s85 = ssub.s32 %s9, %s16
    %p86 = scmp.eq.s32.totalorder %s85, 0
    %s88 = sadd.s32 %s87, 1
    %s89 = scalar_select %p86, %s87, %s88
    %p92 = pneg %p86
    %p93 = scmp.eq.s32.totalorder %s9, 1
    %p94 = por %p92, %p93
    %p95 = scmp.ne.s32.totalorder %s87, %s90
    %p96 = scmp.eq.s32.totalorder %s9, 0
    %p97 = por %p95, %p96
    %p98 = scmp.ne.s32.totalorder %s87, %s90
    %p99 = scmp.eq.s32.totalorder %s14, 1
    %p100 = por %p98, %p99
    %p101 = scmp.ne.s32.totalorder %s90, %s91
    %p102 = scmp.eq.s32.totalorder %s14, 0
    %p103 = por %p101, %p102
    %p104 = scmp.ne.s32.totalorder %s90, %s91
    %p105 = scmp.eq.s32.totalorder %s15, 1
    %p106 = por %p104, %p105
    %p108 = scmp.ne.s32.totalorder %s91, %s107
    %p109 = scmp.eq.s32.totalorder %s15, 0
    %p110 = por %p108, %p109
    %p111 = scmp.le.s32.totalorder 1, %s9
    %p112 = scmp.lt.s32.totalorder %s9, 3
    %p113 = pnand %p111, %p112
    %p114 = pneg %p113
    // Predicated region
    $region9: #{vision_mamba_forward.23} parent=5 // pred_check
      _
    $region10: #{vision_mamba_forward.23} parent=5 // pred_check_branch
      %116 = sbr.rel (%p113) target = $region12
    $region11: #{vision_mamba_forward.23} parent=5 // pred_region
      %s117 = ssub.s32 %s9, 1
      // Predicated region
      $region13: #{vision_mamba_forward.23} parent=11 // pred_check
        %p118 = pneg %p56
      $region14: #{vision_mamba_forward.23} parent=11 // pred_check_branch
        %120 = sbr.rel (%p118) target = $region16
      $region15: #{vision_mamba_forward.23} parent=11 // pred_region
        _
      $region16: #{vision_mamba_forward.23} parent=11 // pred_fallthru
        _
      // Predicated region
      $region17: #{vision_mamba_forward.23} parent=11 // pred_check
        %p121 = pneg %p77
      $region18: #{vision_mamba_forward.23} parent=11 // pred_check_branch
        %123 = sbr.rel (%p121) target = $region20
      $region19: #{vision_mamba_forward.23} parent=11 // pred_region
        _
      $region20: #{vision_mamba_forward.23} parent=11 // pred_fallthru
        _
    $region12: #{vision_mamba_forward.23} parent=5 // pred_fallthru
      _
    %p124 = scmp.lt.s32.totalorder %s9, 2
    // Predicated region
    $region21: #{vision_mamba_forward.23} parent=5 // pred_check
      %p125 = pneg %p124
    $region22: #{vision_mamba_forward.23} parent=5 // pred_check_branch
      %127 = sbr.rel (%p125) target = $region24
    $region23: #{vision_mamba_forward.23} parent=5 // pred_region
      // Predicated region
      $region25: #{vision_mamba_forward.23} parent=23 // pred_check
        %p128 = pneg %p29
      $region26: #{vision_mamba_forward.23} parent=23 // pred_check_branch
        %130 = sbr.rel (%p128) target = $region28
      $region27: #{vision_mamba_forward.23} parent=23 // pred_region
        %p131 = scmp.lt.s32.totalorder %s9, 1
        %s132 = scalar_select %p131, %s9, 1
        %s133 = smul.addr %s132, 4
        %s134 = smul.addr %s133, 8
        %s135 = scalar_lea.vmem %s0, %s134
      $region28: #{vision_mamba_forward.23} parent=23 // pred_fallthru
        _
    $region24: #{vision_mamba_forward.23} parent=5 // pred_fallthru
      _
    %p136 = scmp.le.s32.totalorder 1, %s9
    %p137 = scmp.lt.s32.totalorder %s9, 3
    %p138 = pnand %p136, %p137
    %p139 = pneg %p138
    // Predicated region
    $region29: #{vision_mamba_forward.23} parent=5 // pred_check
      _
    $region30: #{vision_mamba_forward.23} parent=5 // pred_check_branch
      %141 = sbr.rel (%p138) target = $region32
    $region31: #{vision_mamba_forward.23} parent=5 // pred_region
      %s142 = ssub.s32 %s9, 1
      %p143 = scmp.lt.s32.totalorder %s14, 1
      %s144 = scalar_select %p143, %s14, 1
      %s145 = smul.addr %s144, 4
      %s146 = smul.addr %s145, 8
      %s147 = scalar_lea.vmem %s0, %s146
      %p148 = pneg %p35
      %p149 = pneg %p32
      %p150 = pneg %p56
      %p151 = pneg %p53
      %p152 = pneg %p77
      %p153 = pneg %p74
      %p154 = pneg %p103
      %p155 = pneg %p100
      %p156 = scmp.lt.s32.totalorder %s14, 1
      %s157 = scalar_select %p156, %s14, 1
      %s158 = smul.addr %s157, 2
      %s159 = smul.addr %s158, 4
      %s160 = scalar_lea.vmem %s3, %s159
      %p161 = scmp.lt.s32.totalorder %s14, 1
      %s162 = scalar_select %p161, %s14, 1
      %s163 = smul.addr %s162, 4
      %s164 = smul.addr %s163, 8
      %s165 = scalar_lea.vmem %s0, %s164
      %p166 = scmp.lt.s32.totalorder %s14, 1
      %s167 = scalar_select %p166, %s14, 1
      %s168 = smul.addr %s167, 2
      %s169 = smul.addr %s168, 4
      %s170 = scalar_lea.vmem %s3, %s169
      %v171 = vld [vmem:[%s165] sm:$0xff]
      %v172 = vld [vmem:[%s165 + $0x8] sm:$0xff]
      %v173 = vlaneseq
      %v174 = vshrl.u32 %v173, 7
      %vm175 = vcmp.ge.s32.totalorder %v174, 3
      %v176 = vrot.slane %v171, 5
      %v177 = vrot.slane %v172, 5
      %v178 = vsel %vm175, %v176, 0.0
      %v179 = vsel %vm175, %v177, 0.0
      %v180 = vld [vmem:[%s1] ss:$4 sm:$0x3]
      %v182 = vlaneseq
      %v183 = vshrl.u32 %v182, 7
      %v184 = vsub.s32 0, %v183
      %v185 = vrot.slane %v180, %v184
      %v186 = vlaneseq
      %v187 = vshrl.u32 %v186, 7
      %v188 = vsub.s32 1, %v187
      %v189 = vrot.slane %v180, %v188
      %v192 = vmul.f32 %v178, %v185
      %v193 = vmul.f32 %v179, %v189
      %v194 = vadd.f32 %v192, 0.0
      %v195 = vadd.f32 %v193, 0.0
      %vm196 = vcmp.ge.s32.totalorder %v174, 2
      %v197 = vrot.slane %v171, 6
      %v198 = vrot.slane %v172, 6
      %v199 = vsel %vm196, %v197, 0.0
      %v200 = vsel %vm196, %v198, 0.0
      %s201 = scalar_lea.vmem %s1, 1
      %v202 = vld [vmem:[%s201] ss:$4 sm:$0x3]
      %v204 = vlaneseq
      %v205 = vshrl.u32 %v204, 7
      %v206 = vsub.s32 0, %v205
      %v207 = vrot.slane %v202, %v206
      %v208 = vlaneseq
      %v209 = vshrl.u32 %v208, 7
      %v210 = vsub.s32 1, %v209
      %v211 = vrot.slane %v202, %v210
      %v214 = vmul.f32 %v199, %v207
      %v215 = vmul.f32 %v200, %v211
      %v216 = vadd.f32 %v194, %v214
      %v217 = vadd.f32 %v195, %v215
      %vm218 = vcmp.ge.s32.totalorder %v174, 1
      %v219 = vrot.slane %v171, 7
      %v220 = vrot.slane %v172, 7
      %v221 = vsel %vm218, %v219, 0.0
      %v222 = vsel %vm218, %v220, 0.0
      %s223 = scalar_lea.vmem %s1, 2
      %v224 = vld [vmem:[%s223] ss:$4 sm:$0x3]
      %v226 = vlaneseq
      %v227 = vshrl.u32 %v226, 7
      %v228 = vsub.s32 0, %v227
      %v229 = vrot.slane %v224, %v228
      %v230 = vlaneseq
      %v231 = vshrl.u32 %v230, 7
      %v232 = vsub.s32 1, %v231
      %v233 = vrot.slane %v224, %v232
      %v236 = vmul.f32 %v221, %v229
      %v237 = vmul.f32 %v222, %v233
      %v238 = vadd.f32 %v216, %v236
      %v239 = vadd.f32 %v217, %v237
      %s240 = scalar_lea.vmem %s1, 3
      %v241 = vld [vmem:[%s240] ss:$4 sm:$0x3]
      %v243 = vlaneseq
      %v244 = vshrl.u32 %v243, 7
      %v245 = vsub.s32 0, %v244
      %v246 = vrot.slane %v241, %v245
      %v247 = vlaneseq
      %v248 = vshrl.u32 %v247, 7
      %v249 = vsub.s32 1, %v248
      %v250 = vrot.slane %v241, %v249
      %v253 = vmul.f32 %v171, %v246
      %v254 = vmul.f32 %v172, %v250
      %v255 = vadd.f32 %v238, %v253
      %v256 = vadd.f32 %v239, %v254
      %v257 = vld [vmem:[%s2] sm:$0x3]
      %v259 = vlaneseq
      %v260 = vshrl.u32 %v259, 7
      %v261 = vsub.s32 0, %v260
      %v262 = vrot.slane %v257, %v261
      %v263 = vlaneseq
      %v264 = vshrl.u32 %v263, 7
      %v265 = vsub.s32 1, %v264
      %v266 = vrot.slane %v257, %v265
      %v269 = vadd.f32 %v255, %v262
      %v270 = vadd.f32 %v256, %v266
      %v271 = vsub.f32 0.0, %v269
      %v272 = vsub.f32 0.0, %v270
      %v273 = vmul.f32 %v271, 1.442695
      %v274 = vpow.pop %v273
      %v275 = vmul.f32 %v272, 1.442695
      %v276 = vpow.pop %v275
      %v277 = vadd.f32 %v274, 1.0
      %v278 = vadd.f32 %v276, 1.0
      %v279 = vrcp.pop %v277
      %v280 = vmul.f32 1.0, %v279
      %v281 = vrcp.pop %v278
      %v282 = vmul.f32 1.0, %v281
      %v283 = vmul.f32 %v269, %v280
      %v284 = vmul.f32 %v270, %v282
      %v285 = vpack.c.bf16 %v283, %v283
      %v286 = vpack.c.bf16 %v284, %v284
      %v289 = vunpack.c.l.b16 %v285
      %v290 = vunpack.c.l.b16 %v286
      %v291 = vpack.c.b16 %v290, %v289
      %293 = vst [vmem:[%s170] sm:$0xff] %v291
      %p294 = scmp.lt.s32.totalorder %s14, 1
      %s295 = scalar_select %p294, %s14, 1
      %s296 = smul.addr %s295, 2
      %s297 = smul.addr %s296, 4
      %s298 = scalar_lea.vmem %s3, %s297
      // Predicated region
      $region33: #{vision_mamba_forward.23} parent=31 // pred_check
        %p299 = pneg %p100
      $region34: #{vision_mamba_forward.23} parent=31 // pred_check_branch
        %301 = sbr.rel (%p299) target = $region36
      $region35: #{vision_mamba_forward.23} parent=31 // pred_region
        _
      $region36: #{vision_mamba_forward.23} parent=31 // pred_fallthru
        _
    $region32: #{vision_mamba_forward.23} parent=5 // pred_fallthru
      _
    %p302 = scmp.le.s32.totalorder 2, %s9
    // Predicated region
    $region37: #{vision_mamba_forward.23} parent=5 // pred_check
      %p303 = pneg %p302
    $region38: #{vision_mamba_forward.23} parent=5 // pred_check_branch
      %305 = sbr.rel (%p303) target = $region40
    $region39: #{vision_mamba_forward.23} parent=5 // pred_region
      %s306 = ssub.s32 %s9, 2
      // Predicated region
      $region41: #{vision_mamba_forward.23} parent=39 // pred_check
        %p307 = pneg %p106
      $region42: #{vision_mamba_forward.23} parent=39 // pred_check_branch
        %309 = sbr.rel (%p307) target = $region44
      $region43: #{vision_mamba_forward.23} parent=39 // pred_region
        %p310 = scmp.lt.s32.totalorder %s15, 1
        %s311 = scalar_select %p310, %s15, 1
        %s312 = smul.addr %s311, 2
        %s313 = smul.addr %s312, 4
        %s314 = scalar_lea.vmem %s3, %s313
      $region44: #{vision_mamba_forward.23} parent=39 // pred_fallthru
        _
    $region40: #{vision_mamba_forward.23} parent=5 // pred_fallthru
      _
  $region6: #{vision_mamba_forward.23} parent=0 // loop_footer
    %s13 = sadd.s32 1, %s9
  $region7: #{vision_mamba_forward.23} parent=0 // loop_footer_branch
    %8 = sbr.rel target = $region3
  $region8: #{vision_mamba_forward.23} parent=0 // loop_exit
    _

// kernel: vision_mamba_forward.27
$region0: #{vision_mamba_forward.27}
  #allocation0 [shape = 'u32[]', space=smem, size = 0x4, offset = 0x4, fixed_abs, tag = 'smem constant byte address 0x4 - core index']
  #allocation1 [shape = 'u32[144,128]{1,0:T(1,128)}', space=vmem, size = 0x12000, scoped, tag = 'internal scratch']
  %s0 = inlined_call_operand.vmem [shape: bf16[16,256], index: 0, kind: input, shape index: {}]
  %s1 = inlined_call_operand.vmem [shape: bf16[256,384], index: 1, kind: input, shape index: {}]
  %s2 = inlined_call_operand.vmem [shape: f32[1,384], index: 2, kind: input, shape index: {}]
  %s3 = inlined_call_operand.vmem [shape: f32[16,384], index: 3, kind: output, shape index: {}]
  %s4 = sld [smem:[#allocation0]]
  $region120: #{vision_mamba_forward.27} parent=0
    _
  %s6 = ssub.s32 1, %s4
  %s7 = scalar_select 0, %s6, %s4
  $region1: #{vision_mamba_forward.27} parent=0
    #allocation2 [shape = 'u8[131072]{0}', space=vmem, size = 0x20000, scoped, tag = 'input window, operand 1']
    #allocation3 [shape = 'u8[16384]{0}', space=vmem, size = 0x4000, scoped, tag = 'output window, operand 0']
    loop: start=0, step=1, limit=5
    $region2: #{vision_mamba_forward.27} parent=1 // loop_pre_header
      _
    $region3: #{vision_mamba_forward.27} parent=1 // loop_header
      %s9 = sphi 0, %s13
      %p10 = scmp.ge.s32.totalorder %s9, 5
      %s16 = sphi 0, %s28
      %s17 = sphi 0, %s24
      %s18 = sphi 0, %s16
      %s19 = sphi 0, %s17
      %s20 = sphi 0, %s18
      %s21 = sphi 0, %s19
      %s31 = sphi 0, %s33
      %s34 = sphi 0, %s31
      %s35 = sphi 0, %s34
      %s51 = sphi 0, %s35
      %s57 = sphi 0, %s59
      %s60 = sphi 0, %s57
      %s61 = sphi 0, %s60
      %s77 = sphi 0, %s61
      %s83 = sphi 0, %s85
      %s86 = sphi 0, %s83
      %s87 = sphi 0, %s86
      %s103 = sphi 0, %s87
      %s111 = sphi 0, %s113
      %s114 = sphi 0, %s111
      %s115 = sphi 0, %s114
      %s131 = sphi 0, %s115
    $region4: #{vision_mamba_forward.27} parent=1 // loop_header_branch
      %12 = sbr.rel (%p10) target = $region8
    $region5: #{vision_mamba_forward.27} parent=1 // loop_body
      %s14 = ssub.s32 %s9, 1
      %s15 = ssub.s32 %s9, 2
      %s22 = sadd.s32 1, %s17
      %p23 = scmp.ge.s32.totalorder %s22, 3
      %s24 = scalar_select %p23, 0, %s22
      %s25 = sadd.s32 1, %s16
      %s26 = scalar_select %p23, %s25, %s16
      %p27 = scmp.ge.s32.totalorder %s26, 1
      %s28 = scalar_select %p27, 0, %s26
      %s29 = ssub.s32 %s16, %s28
      %p30 = scmp.eq.s32.totalorder %s29, 0
      %s32 = sadd.s32 %s31, 1
      %s33 = scalar_select %p30, %s31, %s32
      %p36 = pneg %p30
      %p37 = scmp.eq.s32.totalorder %s9, 2
      %p38 = por %p36, %p37
      %p39 = scmp.ne.s32.totalorder %s31, %s34
      %p40 = scmp.eq.s32.totalorder %s9, 0
      %p41 = por %p39, %p40
      %p42 = scmp.ne.s32.totalorder %s31, %s34
      %p43 = scmp.eq.s32.totalorder %s14, 2
      %p44 = por %p42, %p43
      %p45 = scmp.ne.s32.totalorder %s34, %s35
      %p46 = scmp.eq.s32.totalorder %s14, 0
      %p47 = por %p45, %p46
      %p48 = scmp.ne.s32.totalorder %s34, %s35
      %p49 = scmp.eq.s32.totalorder %s15, 2
      %p50 = por %p48, %p49
      %p52 = scmp.ne.s32.totalorder %s35, %s51
      %p53 = scmp.eq.s32.totalorder %s15, 0
      %p54 = por %p52, %p53
      %s55 = ssub.s32 %s17, %s24
      %p56 = scmp.eq.s32.totalorder %s55, 0
      %s58 = sadd.s32 %s57, 1
      %s59 = scalar_select %p56, %s57, %s58
      %p62 = pneg %p56
      %p63 = scmp.eq.s32.totalorder %s9, 2
      %p64 = por %p62, %p63
      %p65 = scmp.ne.s32.totalorder %s57, %s60
      %p66 = scmp.eq.s32.totalorder %s9, 0
      %p67 = por %p65, %p66
      %p68 = scmp.ne.s32.totalorder %s57, %s60
      %p69 = scmp.eq.s32.totalorder %s14, 2
      %p70 = por %p68, %p69
      %p71 = scmp.ne.s32.totalorder %s60, %s61
      %p72 = scmp.eq.s32.totalorder %s14, 0
      %p73 = por %p71, %p72
      %p74 = scmp.ne.s32.totalorder %s60, %s61
      %p75 = scmp.eq.s32.totalorder %s15, 2
      %p76 = por %p74, %p75
      %p78 = scmp.ne.s32.totalorder %s61, %s77
      %p79 = scmp.eq.s32.totalorder %s15, 0
      %p80 = por %p78, %p79
      %s81 = ssub.s32 %s17, %s24
      %p82 = scmp.eq.s32.totalorder %s81, 0
      %s84 = sadd.s32 %s83, 1
      %s85 = scalar_select %p82, %s83, %s84
      %p88 = pneg %p82
      %p89 = scmp.eq.s32.totalorder %s9, 2
      %p90 = por %p88, %p89
      %p91 = scmp.ne.s32.totalorder %s83, %s86
      %p92 = scmp.eq.s32.totalorder %s9, 0
      %p93 = por %p91, %p92
      %p94 = scmp.ne.s32.totalorder %s83, %s86
      %p95 = scmp.eq.s32.totalorder %s14, 2
      %p96 = por %p94, %p95
      %p97 = scmp.ne.s32.totalorder %s86, %s87
      %p98 = scmp.eq.s32.totalorder %s14, 0
      %p99 = por %p97, %p98
      %p100 = scmp.ne.s32.totalorder %s86, %s87
      %p101 = scmp.eq.s32.totalorder %s15, 2
      %p102 = por %p100, %p101
      %p104 = scmp.ne.s32.totalorder %s87, %s103
      %p105 = scmp.eq.s32.totalorder %s15, 0
      %p106 = por %p104, %p105
      %s107 = ssub.s32 %s16, %s28
      %s108 = ssub.s32 %s17, %s24
      %s109 = sor.u32 %s107, %s108
      %p110 = scmp.eq.s32.totalorder %s109, 0
      %s112 = sadd.s32 %s111, 1
      %s113 = scalar_select %p110, %s111, %s112
      %p116 = pneg %p110
      %p117 = scmp.eq.s32.totalorder %s9, 2
      %p118 = por %p116, %p117
      %p119 = scmp.ne.s32.totalorder %s111, %s114
      %p120 = scmp.eq.s32.totalorder %s9, 0
      %p121 = por %p119, %p120
      %p122 = scmp.ne.s32.totalorder %s111, %s114
      %p123 = scmp.eq.s32.totalorder %s14, 2
      %p124 = por %p122, %p123
      %p125 = scmp.ne.s32.totalorder %s114, %s115
      %p126 = scmp.eq.s32.totalorder %s14, 0
      %p127 = por %p125, %p126
      %p128 = scmp.ne.s32.totalorder %s114, %s115
      %p129 = scmp.eq.s32.totalorder %s15, 2
      %p130 = por %p128, %p129
      %p132 = scmp.ne.s32.totalorder %s115, %s131
      %p133 = scmp.eq.s32.totalorder %s15, 0
      %p134 = por %p132, %p133
      %p135 = scmp.le.s32.totalorder 1, %s9
      %p136 = scmp.lt.s32.totalorder %s9, 4
      %p137 = pnand %p135, %p136
      %p138 = pneg %p137
      // Predicated region
      $region9: #{vision_mamba_forward.27} parent=5 // pred_check
        _
      $region10: #{vision_mamba_forward.27} parent=5 // pred_check_branch
        %140 = sbr.rel (%p137) target = $region12
      $region11: #{vision_mamba_forward.27} parent=5 // pred_region
        %s141 = ssub.s32 %s9, 1
        // Predicated region
        $region13: #{vision_mamba_forward.27} parent=11 // pred_check
          %p142 = pneg %p47
        $region14: #{vision_mamba_forward.27} parent=11 // pred_check_branch
          %144 = sbr.rel (%p142) target = $region16
        $region15: #{vision_mamba_forward.27} parent=11 // pred_region
          %s145 = smul.u32 2, %s18
          %p146 = scmp.lt.s32.totalorder %s145, 1
          %s147 = scalar_select %p146, %s145, 1
          %s148 = smul.addr %s147, 2
          %s149 = smul.addr %s148, 4
          %s150 = scalar_lea.vmem %s0, %s149
          %s151 = smul.u32 2, %s18
        $region16: #{vision_mamba_forward.27} parent=11 // pred_fallthru
          _
      $region12: #{vision_mamba_forward.27} parent=5 // pred_fallthru
        _
      %p152 = scmp.lt.s32.totalorder %s9, 3
      // Predicated region
      $region17: #{vision_mamba_forward.27} parent=5 // pred_check
        %p153 = pneg %p152
      $region18: #{vision_mamba_forward.27} parent=5 // pred_check_branch
        %155 = sbr.rel (%p153) target = $region20
      $region19: #{vision_mamba_forward.27} parent=5 // pred_region
        // Predicated region
        $region21: #{vision_mamba_forward.27} parent=19 // pred_check
          %p156 = pneg %p67
        $region22: #{vision_mamba_forward.27} parent=19 // pred_check_branch
          %158 = sbr.rel (%p156) target = $region24
        $region23: #{vision_mamba_forward.27} parent=19 // pred_region
          %s159 = sand.u32 %s57, 1
          %s160 = sand.u32 %s57, 1
          %s161 = smul.addr %s160, 128
          %s162 = scalar_lea.vmem [#allocation2], %s161
          %s163 = smul.addr %s17, 4
          %s164 = scalar_lea.vmem %s1, %s163
          // Predicated region
          $region25: #{vision_mamba_forward.27} parent=23 // pred_check
            _
          $region26: #{vision_mamba_forward.27} parent=23 // pred_check_branch
            %166 = sbr.rel (0) target = $region28
          $region27: #{vision_mamba_forward.27} parent=23 // pred_region
            // Predicated region
            $region29: #{vision_mamba_forward.27} parent=27 // pred_check
              _
            $region30: #{vision_mamba_forward.27} parent=27 // pred_check_branch
              %168 = sbr.rel target = $region32
            $region31: #{vision_mamba_forward.27} parent=27 // pred_region
              // Predicated region
              $region44: #{vision_mamba_forward.27} parent=31 // pred_check
                _
              $region45: #{vision_mamba_forward.27} parent=31 // pred_check_branch
                %245 = sbr.rel (0) target = $region47
              $region46: #{vision_mamba_forward.27} parent=31 // pred_region
                loop: start=0, step=1, limit=1
                $region48: #{vision_mamba_forward.27} parent=46 // loop_pre_header
                  _
                $region49: #{vision_mamba_forward.27} parent=46 // loop_header
                  %s247 = sphi 0, %s251
                  %p248 = scmp.ge.s32.totalorder %s247, 1
                  %s252 = sphi %s164, %s164
                  %s253 = sphi %s162, %s162
                $region50: #{vision_mamba_forward.27} parent=46 // loop_header_branch
                  %250 = sbr.rel (%p248) target = $region54
                $region51: #{vision_mamba_forward.27} parent=46 // loop_body
                  _
                $region52: #{vision_mamba_forward.27} parent=46 // loop_footer
                  %s251 = sadd.s32 1, %s247
                $region53: #{vision_mamba_forward.27} parent=46 // loop_footer_branch
                  %246 = sbr.rel target = $region49
                $region54: #{vision_mamba_forward.27} parent=46 // loop_exit
                  _
                loop: start=0, step=1, limit=1
                $region55: #{vision_mamba_forward.27} parent=46 // loop_pre_header
                  _
                $region56: #{vision_mamba_forward.27} parent=46 // loop_header
                  %s256 = sphi 0, %s260
                  %p257 = scmp.ge.s32.totalorder %s256, 1
                  %s261 = sphi %s164, %s164
                  %s262 = sphi %s162, %s162
                $region57: #{vision_mamba_forward.27} parent=46 // loop_header_branch
                  %259 = sbr.rel (%p257) target = $region61
                $region58: #{vision_mamba_forward.27} parent=46 // loop_body
                  %v263 = vld [vmem:[%s261] sm:$0xf]
                  %264 = vst [vmem:[%s262] sm:$0xf] %v263
                  %v265 = vld [vmem:[%s261 + $0xc] sm:$0xf]
                  %266 = vst [vmem:[%s262 + $0x4] sm:$0xf] %v265
                  %v267 = vld [vmem:[%s261 + $0x18] sm:$0xf]
                  %268 = vst [vmem:[%s262 + $0x8] sm:$0xf] %v267
                  %v269 = vld [vmem:[%s261 + $0x24] sm:$0xf]
                  %270 = vst [vmem:[%s262 + $0xc] sm:$0xf] %v269
                  %v271 = vld [vmem:[%s261 + $0x30] sm:$0xf]
                  %272 = vst [vmem:[%s262 + $0x10] sm:$0xf] %v271
                  %v273 = vld [vmem:[%s261 + $0x3c] sm:$0xf]
                  %274 = vst [vmem:[%s262 + $0x14] sm:$0xf] %v273
                  %v275 = vld [vmem:[%s261 + $0x48] sm:$0xf]
                  %276 = vst [vmem:[%s262 + $0x18] sm:$0xf] %v275
                  %v277 = vld [vmem:[%s261 + $0x54] sm:$0xf]
                  %278 = vst [vmem:[%s262 + $0x1c] sm:$0xf] %v277
                  %v279 = vld [vmem:[%s261 + $0x60] sm:$0xf]
                  %280 = vst [vmem:[%s262 + $0x20] sm:$0xf] %v279
                  %v281 = vld [vmem:[%s261 + $0x6c] sm:$0xf]
                  %282 = vst [vmem:[%s262 + $0x24] sm:$0xf] %v281
                  %v283 = vld [vmem:[%s261 + $0x78] sm:$0xf]
                  %284 = vst [vmem:[%s262 + $0x28] sm:$0xf] %v283
                  %v285 = vld [vmem:[%s261 + $0x84] sm:$0xf]
                  %286 = vst [vmem:[%s262 + $0x2c] sm:$0xf] %v285
                  %v287 = vld [vmem:[%s261 + $0x90] sm:$0xf]
                  %288 = vst [vmem:[%s262 + $0x30] sm:$0xf] %v287
                  %v289 = vld [vmem:[%s261 + $0x9c] sm:$0xf]
                  %290 = vst [vmem:[%s262 + $0x34] sm:$0xf] %v289
                  %v291 = vld [vmem:[%s261 + $0xa8] sm:$0xf]
                  %292 = vst [vmem:[%s262 + $0x38] sm:$0xf] %v291
                  %v293 = vld [vmem:[%s261 + $0xb4] sm:$0xf]
                  %294 = vst [vmem:[%s262 + $0x3c] sm:$0xf] %v293
                  %v295 = vld [vmem:[%s261 + $0xc0] sm:$0xf]
                  %296 = vst [vmem:[%s262 + $0x40] sm:$0xf] %v295
                  %v297 = vld [vmem:[%s261 + $0xcc] sm:$0xf]
                  %298 = vst [vmem:[%s262 + $0x44] sm:$0xf] %v297
                  %v299 = vld [vmem:[%s261 + $0xd8] sm:$0xf]
                  %300 = vst [vmem:[%s262 + $0x48] sm:$0xf] %v299
                  %v301 = vld [vmem:[%s261 + $0xe4] sm:$0xf]
                  %302 = vst [vmem:[%s262 + $0x4c] sm:$0xf] %v301
                  %v303 = vld [vmem:[%s261 + $0xf0] sm:$0xf]
                  %304 = vst [vmem:[%s262 + $0x50] sm:$0xf] %v303
                  %v305 = vld [vmem:[%s261 + $0xfc] sm:$0xf]
                  %306 = vst [vmem:[%s262 + $0x54] sm:$0xf] %v305
                  %v307 = vld [vmem:[%s261 + $0x108] sm:$0xf]
                  %308 = vst [vmem:[%s262 + $0x58] sm:$0xf] %v307
                  %v309 = vld [vmem:[%s261 + $0x114] sm:$0xf]
                  %310 = vst [vmem:[%s262 + $0x5c] sm:$0xf] %v309
                  %v311 = vld [vmem:[%s261 + $0x120] sm:$0xf]
                  %312 = vst [vmem:[%s262 + $0x60] sm:$0xf] %v311
                  %v313 = vld [vmem:[%s261 + $0x12c] sm:$0xf]
                  %314 = vst [vmem:[%s262 + $0x64] sm:$0xf] %v313
                  %v315 = vld [vmem:[%s261 + $0x138] sm:$0xf]
                  %316 = vst [vmem:[%s262 + $0x68] sm:$0xf] %v315
                  %v317 = vld [vmem:[%s261 + $0x144] sm:$0xf]
                  %318 = vst [vmem:[%s262 + $0x6c] sm:$0xf] %v317
                  %v319 = vld [vmem:[%s261 + $0x150] sm:$0xf]
                  %320 = vst [vmem:[%s262 + $0x70] sm:$0xf] %v319
                  %v321 = vld [vmem:[%s261 + $0x15c] sm:$0xf]
                  %322 = vst [vmem:[%s262 + $0x74] sm:$0xf] %v321
                  %v323 = vld [vmem:[%s261 + $0x168] sm:$0xf]
                  %324 = vst [vmem:[%s262 + $0x78] sm:$0xf] %v323
                  %v325 = vld [vmem:[%s261 + $0x174] sm:$0xf]
                  %326 = vst [vmem:[%s262 + $0x7c] sm:$0xf] %v325
                $region59: #{vision_mamba_forward.27} parent=46 // loop_footer
                  %s260 = sadd.s32 1, %s256
                $region60: #{vision_mamba_forward.27} parent=46 // loop_footer_branch
                  %255 = sbr.rel target = $region56
                $region61: #{vision_mamba_forward.27} parent=46 // loop_exit
                  _
              $region47: #{vision_mamba_forward.27} parent=31 // pred_fallthru
                _
            $region32: #{vision_mamba_forward.27} parent=27 // pred_fallthru
              _
            // Predicated region
            $region33: #{vision_mamba_forward.27} parent=27 // pred_check
              _
            $region34: #{vision_mamba_forward.27} parent=27 // pred_check_branch
              %170 = sbr.rel (0) target = $region36
            $region35: #{vision_mamba_forward.27} parent=27 // pred_region
              loop: start=0, step=1, limit=1
              $region37: #{vision_mamba_forward.27} parent=35 // loop_pre_header
                _
              $region38: #{vision_mamba_forward.27} parent=35 // loop_header
                %s173 = sphi 0, %s177
                %p174 = scmp.ge.s32.totalorder %s173, 1
                %s178 = sphi %s164, %s164
                %s179 = sphi %s162, %s162
              $region39: #{vision_mamba_forward.27} parent=35 // loop_header_branch
                %176 = sbr.rel (%p174) target = $region43
              $region40: #{vision_mamba_forward.27} parent=35 // loop_body
                %v180 = vld [vmem:[%s178] sm:$0xf]
                %181 = vst [vmem:[%s179] sm:$0xf] %v180
                %v182 = vld [vmem:[%s178 + $0xc] sm:$0xf]
                %183 = vst [vmem:[%s179 + $0x4] sm:$0xf] %v182
                %v184 = vld [vmem:[%s178 + $0x18] sm:$0xf]
                %185 = vst [vmem:[%s179 + $0x8] sm:$0xf] %v184
                %v186 = vld [vmem:[%s178 + $0x24] sm:$0xf]
                %187 = vst [vmem:[%s179 + $0xc] sm:$0xf] %v186
                %v188 = vld [vmem:[%s178 + $0x30] sm:$0xf]
                %189 = vst [vmem:[%s179 + $0x10] sm:$0xf] %v188
                %v190 = vld [vmem:[%s178 + $0x3c] sm:$0xf]
                %191 = vst [vmem:[%s179 + $0x14] sm:$0xf] %v190
                %v192 = vld [vmem:[%s178 + $0x48] sm:$0xf]
                %193 = vst [vmem:[%s179 + $0x18] sm:$0xf] %v192
                %v194 = vld [vmem:[%s178 + $0x54] sm:$0xf]
                %195 = vst [vmem:[%s179 + $0x1c] sm:$0xf] %v194
                %v196 = vld [vmem:[%s178 + $0x60] sm:$0xf]
                %197 = vst [vmem:[%s179 + $0x20] sm:$0xf] %v196
                %v198 = vld [vmem:[%s178 + $0x6c] sm:$0xf]
                %199 = vst [vmem:[%s179 + $0x24] sm:$0xf] %v198
                %v200 = vld [vmem:[%s178 + $0x78] sm:$0xf]
                %201 = vst [vmem:[%s179 + $0x28] sm:$0xf] %v200
                %v202 = vld [vmem:[%s178 + $0x84] sm:$0xf]
                %203 = vst [vmem:[%s179 + $0x2c] sm:$0xf] %v202
                %v204 = vld [vmem:[%s178 + $0x90] sm:$0xf]
                %205 = vst [vmem:[%s179 + $0x30] sm:$0xf] %v204
                %v206 = vld [vmem:[%s178 + $0x9c] sm:$0xf]
                %207 = vst [vmem:[%s179 + $0x34] sm:$0xf] %v206
                %v208 = vld [vmem:[%s178 + $0xa8] sm:$0xf]
                %209 = vst [vmem:[%s179 + $0x38] sm:$0xf] %v208
                %v210 = vld [vmem:[%s178 + $0xb4] sm:$0xf]
                %211 = vst [vmem:[%s179 + $0x3c] sm:$0xf] %v210
                %v212 = vld [vmem:[%s178 + $0xc0] sm:$0xf]
                %213 = vst [vmem:[%s179 + $0x40] sm:$0xf] %v212
                %v214 = vld [vmem:[%s178 + $0xcc] sm:$0xf]
                %215 = vst [vmem:[%s179 + $0x44] sm:$0xf] %v214
                %v216 = vld [vmem:[%s178 + $0xd8] sm:$0xf]
                %217 = vst [vmem:[%s179 + $0x48] sm:$0xf] %v216
                %v218 = vld [vmem:[%s178 + $0xe4] sm:$0xf]
                %219 = vst [vmem:[%s179 + $0x4c] sm:$0xf] %v218
                %v220 = vld [vmem:[%s178 + $0xf0] sm:$0xf]
                %221 = vst [vmem:[%s179 + $0x50] sm:$0xf] %v220
                %v222 = vld [vmem:[%s178 + $0xfc] sm:$0xf]
                %223 = vst [vmem:[%s179 + $0x54] sm:$0xf] %v222
                %v224 = vld [vmem:[%s178 + $0x108] sm:$0xf]
                %225 = vst [vmem:[%s179 + $0x58] sm:$0xf] %v224
                %v226 = vld [vmem:[%s178 + $0x114] sm:$0xf]
                %227 = vst [vmem:[%s179 + $0x5c] sm:$0xf] %v226
                %v228 = vld [vmem:[%s178 + $0x120] sm:$0xf]
                %229 = vst [vmem:[%s179 + $0x60] sm:$0xf] %v228
                %v230 = vld [vmem:[%s178 + $0x12c] sm:$0xf]
                %231 = vst [vmem:[%s179 + $0x64] sm:$0xf] %v230
                %v232 = vld [vmem:[%s178 + $0x138] sm:$0xf]
                %233 = vst [vmem:[%s179 + $0x68] sm:$0xf] %v232
                %v234 = vld [vmem:[%s178 + $0x144] sm:$0xf]
                %235 = vst [vmem:[%s179 + $0x6c] sm:$0xf] %v234
                %v236 = vld [vmem:[%s178 + $0x150] sm:$0xf]
                %237 = vst [vmem:[%s179 + $0x70] sm:$0xf] %v236
                %v238 = vld [vmem:[%s178 + $0x15c] sm:$0xf]
                %239 = vst [vmem:[%s179 + $0x74] sm:$0xf] %v238
                %v240 = vld [vmem:[%s178 + $0x168] sm:$0xf]
                %241 = vst [vmem:[%s179 + $0x78] sm:$0xf] %v240
                %v242 = vld [vmem:[%s178 + $0x174] sm:$0xf]
                %243 = vst [vmem:[%s179 + $0x7c] sm:$0xf] %v242
              $region41: #{vision_mamba_forward.27} parent=35 // loop_footer
                %s177 = sadd.s32 1, %s173
              $region42: #{vision_mamba_forward.27} parent=35 // loop_footer_branch
                %172 = sbr.rel target = $region38
              $region43: #{vision_mamba_forward.27} parent=35 // loop_exit
                _
            $region36: #{vision_mamba_forward.27} parent=27 // pred_fallthru
              _
          $region28: #{vision_mamba_forward.27} parent=23 // pred_fallthru
            _
          %327 = vnop
        $region24: #{vision_mamba_forward.27} parent=19 // pred_fallthru
          _
        // Predicated region
        $region62: #{vision_mamba_forward.27} parent=19 // pred_check
          %p328 = pneg %p93
        $region63: #{vision_mamba_forward.27} parent=19 // pred_check_branch
          %330 = sbr.rel (%p328) target = $region65
        $region64: #{vision_mamba_forward.27} parent=19 // pred_region
          %p331 = scmp.lt.s32.totalorder %s17, 2
          %s332 = scalar_select %p331, %s17, 2
          %s333 = scalar_lea.vmem %s2, %s332
        $region65: #{vision_mamba_forward.27} parent=19 // pred_fallthru
          _
      $region20: #{vision_mamba_forward.27} parent=5 // pred_fallthru
        _
      %p334 = scmp.le.s32.totalorder 1, %s9
      %p335 = scmp.lt.s32.totalorder %s9, 4
      %p336 = pnand %p334, %p335
      %p337 = pneg %p336
      // Predicated region
      $region66: #{vision_mamba_forward.27} parent=5 // pred_check
        _
      $region67: #{vision_mamba_forward.27} parent=5 // pred_check_branch
        %339 = sbr.rel (%p336) target = $region69
      $region68: #{vision_mamba_forward.27} parent=5 // pred_region
        %s340 = ssub.s32 %s9, 1
        %s341 = sand.u32 %s60, 1
        %s342 = sand.u32 %s60, 1
        %s343 = smul.addr %s342, 128
        %s344 = scalar_lea.vmem [#allocation2], %s343
        // Predicated region
        $region70: #{vision_mamba_forward.27} parent=68 // pred_check
          %p345 = pneg %p73
        $region71: #{vision_mamba_forward.27} parent=68 // pred_check_branch
          %347 = sbr.rel (%p345) target = $region73
        $region72: #{vision_mamba_forward.27} parent=68 // pred_region
          _
        $region73: #{vision_mamba_forward.27} parent=68 // pred_fallthru
          _
        %s348 = smul.u32 2, %s18
        %p349 = scmp.lt.s32.totalorder %s348, 1
        %s350 = scalar_select %p349, %s348, 1
        %s351 = smul.addr %s350, 2
        %s352 = smul.addr %s351, 4
        %s353 = scalar_lea.vmem %s0, %s352
        %p354 = pneg %p47
        %p355 = pneg %p44
        %s356 = sand.u32 %s60, 1
        %s357 = sand.u32 %s60, 1
        %s358 = smul.addr %s357, 128
        %s359 = scalar_lea.vmem [#allocation2], %s358
        %p360 = pneg %p73
        %p361 = pneg %p70
        %p362 = scmp.lt.s32.totalorder %s19, 2
        %s363 = scalar_select %p362, %s19, 2
        %s364 = scalar_lea.vmem %s2, %s363
        %p365 = pneg %p99
        %p366 = pneg %p96
        %p367 = pneg %p127
        %p368 = pneg %p124
        %s369 = sand.u32 %s114, 1
        %s370 = sand.u32 %s114, 1
        %s371 = smul.addr %s370, 16
        %s372 = scalar_lea.vmem [#allocation3], %s371
        %s373 = smul.u32 2, %s18
        %p374 = scmp.lt.s32.totalorder %s373, 1
        %s375 = scalar_select %p374, %s373, 1
        %s376 = smul.addr %s375, 2
        %s377 = smul.addr %s376, 4
        %s378 = scalar_lea.vmem %s0, %s377
        %s379 = smul.u32 2, %s18
        %p380 = scmp.lt.s32.totalorder %s19, 2
        %s381 = scalar_select %p380, %s19, 2
        %s382 = scalar_lea.vmem %s2, %s381
        %s383 = smul.u32 2, %s18
        %v385 = vld [vmem:[%s378] sm:$0xff]
        %v386 = vld [vmem:[%s378 + $0x8] sm:$0xff]
        %v387 = vld [vmem:[%s344] sm:$0xf]
        %v388 = vld [vmem:[%s344 + $0x4] sm:$0xf]
        %v389 = vld [vmem:[%s344 + $0x8] sm:$0xf]
        %v390 = vld [vmem:[%s344 + $0xc] sm:$0xf]
        %v391 = vld [vmem:[%s344 + $0x10] sm:$0xf]
        %v392 = vld [vmem:[%s344 + $0x14] sm:$0xf]
        %v393 = vld [vmem:[%s344 + $0x18] sm:$0xf]
        %v394 = vld [vmem:[%s344 + $0x1c] sm:$0xf]
        %v395 = vld [vmem:[%s344 + $0x20] sm:$0xf]
        %v396 = vld [vmem:[%s344 + $0x24] sm:$0xf]
        %v397 = vld [vmem:[%s344 + $0x28] sm:$0xf]
        %v398 = vld [vmem:[%s344 + $0x2c] sm:$0xf]
        %v399 = vld [vmem:[%s344 + $0x30] sm:$0xf]
        %v400 = vld [vmem:[%s344 + $0x34] sm:$0xf]
        %v401 = vld [vmem:[%s344 + $0x38] sm:$0xf]
        %v402 = vld [vmem:[%s344 + $0x3c] sm:$0xf]
        %v403 = vld [vmem:[%s344 + $0x40] sm:$0xf]
        %v404 = vld [vmem:[%s344 + $0x44] sm:$0xf]
        %v405 = vld [vmem:[%s344 + $0x48] sm:$0xf]
        %v406 = vld [vmem:[%s344 + $0x4c] sm:$0xf]
        %v407 = vld [vmem:[%s344 + $0x50] sm:$0xf]
        %v408 = vld [vmem:[%s344 + $0x54] sm:$0xf]
        %v409 = vld [vmem:[%s344 + $0x58] sm:$0xf]
        %v410 = vld [vmem:[%s344 + $0x5c] sm:$0xf]
        %v411 = vld [vmem:[%s344 + $0x60] sm:$0xf]
        %v412 = vld [vmem:[%s344 + $0x64] sm:$0xf]
        %v413 = vld [vmem:[%s344 + $0x68] sm:$0xf]
        %v414 = vld [vmem:[%s344 + $0x6c] sm:$0xf]
        %v415 = vld [vmem:[%s344 + $0x70] sm:$0xf]
        %v416 = vld [vmem:[%s344 + $0x74] sm:$0xf]
        %v417 = vld [vmem:[%s344 + $0x78] sm:$0xf]
        %v418 = vld [vmem:[%s344 + $0x7c] sm:$0xf]
        %v419 = vld [vmem:[%s382] sm:$0x1]
        %v421 = vlaneseq
        %v422 = vshrl.u32 %v421, 7
        %v423 = vsub.s32 0, %v422
        %v424 = vrot.slane %v419, %v423
        %v428 = vunpack.c.l.b16 %v385
        %v429 = vunpack.c.h.b16 %v385
        %v430 = vunpack.c.l.b16 %v386
        %v431 = vunpack.c.h.b16 %v386
        %v432 = vpack.c.b16 %v430, %v428
        %v433 = vpack.c.b16 %v431, %v429
        %v468 = vunpack.c.l.b16 %v387
        %v469 = vunpack.c.l.b16 %v388
        %v470 = vunpack.c.l.b16 %v389
        %v471 = vunpack.c.l.b16 %v390
        %v472 = vunpack.c.l.b16 %v391
        %v473 = vunpack.c.l.b16 %v392
        %v474 = vunpack.c.l.b16 %v393
        %v475 = vunpack.c.l.b16 %v394
        %v476 = vunpack.c.l.b16 %v395
        %v477 = vunpack.c.l.b16 %v396
        %v478 = vunpack.c.l.b16 %v397
        %v479 = vunpack.c.l.b16 %v398
        %v480 = vunpack.c.l.b16 %v399
        %v481 = vunpack.c.l.b16 %v400
        %v482 = vunpack.c.l.b16 %v401
        %v483 = vunpack.c.l.b16 %v402
        %v484 = vunpack.c.l.b16 %v403
        %v485 = vunpack.c.l.b16 %v404
        %v486 = vunpack.c.l.b16 %v405
        %v487 = vunpack.c.l.b16 %v406
        %v488 = vunpack.c.l.b16 %v407
        %v489 = vunpack.c.l.b16 %v408
        %v490 = vunpack.c.l.b16 %v409
        %v491 = vunpack.c.l.b16 %v410
        %v492 = vunpack.c.l.b16 %v411
        %v493 = vunpack.c.l.b16 %v412
        %v494 = vunpack.c.l.b16 %v413
        %v495 = vunpack.c.l.b16 %v414
        %v496 = vunpack.c.l.b16 %v415
        %v497 = vunpack.c.l.b16 %v416
        %v498 = vunpack.c.l.b16 %v417
        %v499 = vunpack.c.l.b16 %v418
        %v500 = vpack.c.b16 %v469, %v468
        %v501 = vpack.c.b16 %v471, %v470
        %v502 = vpack.c.b16 %v473, %v472
        %v503 = vpack.c.b16 %v475, %v474
        %v504 = vpack.c.b16 %v477, %v476
        %v505 = vpack.c.b16 %v479, %v478
        %v506 = vpack.c.b16 %v481, %v480
        %v507 = vpack.c.b16 %v483, %v482
        %v508 = vpack.c.b16 %v485, %v484
        %v509 = vpack.c.b16 %v487, %v486
        %v510 = vpack.c.b16 %v489, %v488
        %v511 = vpack.c.b16 %v491, %v490
        %v512 = vpack.c.b16 %v493, %v492
        %v513 = vpack.c.b16 %v495, %v494
        %v514 = vpack.c.b16 %v497, %v496
        %v515 = vpack.c.b16 %v499, %v498
        %532 = vmatprep.subr.bf16.mxu0 0
        %533 = vmatpush1.bf16.msra.mxu0 %v500
        %534 = vmatprep.subr.bf16.mxu0 0
        %535 = vmatpush1.bf16.msra.mxu0 %v501
        %536 = vmatprep.subr.bf16.mxu0 0
        %537 = vmatpush1.bf16.msra.mxu0 %v502
        %538 = vmatprep.subr.bf16.mxu0 0
        %539 = vmatpush1.bf16.msra.mxu0 %v503
        %540 = vmatprep.subr.bf16.mxu0 0
        %541 = vmatpush1.bf16.msra.mxu0 %v504
        %542 = vmatprep.subr.bf16.mxu0 0
        %543 = vmatpush1.bf16.msra.mxu0 %v505
        %544 = vmatprep.subr.bf16.mxu0 0
        %545 = vmatpush1.bf16.msra.mxu0 %v506
        %546 = vmatprep.subr.bf16.mxu0 0
        %547 = vmatpush1.bf16.msra.mxu0 %v507
        %548 = vmatprep.subr.bf16.mxu0 0
        %549 = vmatpush1.bf16.msra.mxu0 %v508
        %550 = vmatprep.subr.bf16.mxu0 0
        %551 = vmatpush1.bf16.msra.mxu0 %v509
        %552 = vmatprep.subr.bf16.mxu0 0
        %553 = vmatpush1.bf16.msra.mxu0 %v510
        %554 = vmatprep.subr.bf16.mxu0 0
        %555 = vmatpush1.bf16.msra.mxu0 %v511
        %556 = vmatprep.subr.bf16.mxu0 0
        %557 = vmatpush1.bf16.msra.mxu0 %v512
        %558 = vmatprep.subr.bf16.mxu0 0
        %559 = vmatpush1.bf16.msra.mxu0 %v513
        %560 = vmatprep.subr.bf16.mxu0 0
        %561 = vmatpush1.bf16.msra.mxu0 %v514
        %562 = vmatprep.subr.bf16.mxu0 0
        %563 = vmatpush1.bf16.msra.mxu0 %v515
        %564 = vmatprep.mubr.bf16.mxu0 %v433
        %565 = vmatmul.mubr.bf16.gmra.mrb[0].mxu0 %v432
        %v566 = vpop.f32.mrb[0].mxu0
        %v567 = vadd.f32 %v424, %v566
        %v568 = vpop.f32.mrb[0].mxu0
        %v569 = vpop.f32.mrb[0].mxu0
        %v570 = vadd.f32 %v424, %v569
        %v571 = vpop.f32.mrb[0].mxu0
        %572 = vdwg.mxu0
        %573 = vst [vmem:[%s372] sm:$0xff] %v567
        %574 = vst [vmem:[%s372 + $0x8] sm:$0xff] %v570
        %s575 = sand.u32 %s114, 1
        %s576 = sand.u32 %s114, 1
        %s577 = smul.addr %s576, 16
        %s578 = scalar_lea.vmem [#allocation3], %s577
        // Predicated region
        $region74: #{vision_mamba_forward.27} parent=68 // pred_check
          %p579 = pneg %p124
        $region75: #{vision_mamba_forward.27} parent=68 // pred_check_branch
          %581 = sbr.rel (%p579) target = $region77
        $region76: #{vision_mamba_forward.27} parent=68 // pred_region
          %s582 = smul.u32 2, %s18
          %s583 = smul.addr %s582, 3
          %s584 = sadd.s32 %s19, %s583
          %s585 = smul.addr %s584, 8
          %s586 = scalar_lea.vmem %s3, %s585
          // Predicated region
          $region78: #{vision_mamba_forward.27} parent=76 // pred_check
            _
          $region79: #{vision_mamba_forward.27} parent=76 // pred_check_branch
            %588 = sbr.rel (0) target = $region81
          $region80: #{vision_mamba_forward.27} parent=76 // pred_region
            // Predicated region
            $region82: #{vision_mamba_forward.27} parent=80 // pred_check
              _
            $region83: #{vision_mamba_forward.27} parent=80 // pred_check_branch
              %590 = sbr.rel (0) target = $region85
            $region84: #{vision_mamba_forward.27} parent=80 // pred_region
              // Predicated region
              $region97: #{vision_mamba_forward.27} parent=84 // pred_check
                _
              $region98: #{vision_mamba_forward.27} parent=84 // pred_check_branch
                %607 = sbr.rel (0) target = $region100
              $region99: #{vision_mamba_forward.27} parent=84 // pred_region
                loop: start=0, step=1, limit=1
                $region101: #{vision_mamba_forward.27} parent=99 // loop_pre_header
                  _
                $region102: #{vision_mamba_forward.27} parent=99 // loop_header
                  %s609 = sphi 0, %s613
                  %p610 = scmp.ge.s32.totalorder %s609, 1
                  %s614 = sphi %s578, %s578
                  %s615 = sphi %s586, %s586
                $region103: #{vision_mamba_forward.27} parent=99 // loop_header_branch
                  %612 = sbr.rel (%p610) target = $region107
                $region104: #{vision_mamba_forward.27} parent=99 // loop_body
                  %v616 = vld [vmem:[%s614] sm:$0xff]
                  %617 = vst [vmem:[%s615] sm:$0xff] %v616
                  %v618 = vld [vmem:[%s614 + $0x8] sm:$0xff]
                  %619 = vst [vmem:[%s615 + $0x18] sm:$0xff] %v618
                $region105: #{vision_mamba_forward.27} parent=99 // loop_footer
                  %s613 = sadd.s32 1, %s609
                $region106: #{vision_mamba_forward.27} parent=99 // loop_footer_branch
                  %608 = sbr.rel target = $region102
                $region107: #{vision_mamba_forward.27} parent=99 // loop_exit
                  _
              $region100: #{vision_mamba_forward.27} parent=84 // pred_fallthru
                _
              // Predicated region
              $region108: #{vision_mamba_forward.27} parent=84 // pred_check
                _
              $region109: #{vision_mamba_forward.27} parent=84 // pred_check_branch
                %621 = sbr.rel target = $region111
              $region110: #{vision_mamba_forward.27} parent=84 // pred_region
                _
              $region111: #{vision_mamba_forward.27} parent=84 // pred_fallthru
                _
            $region85: #{vision_mamba_forward.27} parent=80 // pred_fallthru
              _
            // Predicated region
            $region86: #{vision_mamba_forward.27} parent=80 // pred_check
              _
            $region87: #{vision_mamba_forward.27} parent=80 // pred_check_branch
              %592 = sbr.rel target = $region89
            $region88: #{vision_mamba_forward.27} parent=80 // pred_region
              loop: start=0, step=1, limit=1
              $region90: #{vision_mamba_forward.27} parent=88 // loop_pre_header
                _
              $region91: #{vision_mamba_forward.27} parent=88 // loop_header
                %s595 = sphi 0, %s599
                %p596 = scmp.ge.s32.totalorder %s595, 1
                %s600 = sphi %s578, %s578
                %s601 = sphi %s586, %s586
              $region92: #{vision_mamba_forward.27} parent=88 // loop_header_branch
                %598 = sbr.rel (%p596) target = $region96
              $region93: #{vision_mamba_forward.27} parent=88 // loop_body
                %v602 = vld [vmem:[%s600] sm:$0xff]
                %603 = vst [vmem:[%s601] sm:$0xff] %v602
                %v604 = vld [vmem:[%s600 + $0x8] sm:$0xff]
                %605 = vst [vmem:[%s601 + $0x18] sm:$0xff] %v604
              $region94: #{vision_mamba_forward.27} parent=88 // loop_footer
                %s599 = sadd.s32 1, %s595
              $region95: #{vision_mamba_forward.27} parent=88 // loop_footer_branch
                %594 = sbr.rel target = $region91
              $region96: #{vision_mamba_forward.27} parent=88 // loop_exit
                _
            $region89: #{vision_mamba_forward.27} parent=80 // pred_fallthru
              _
          $region81: #{vision_mamba_forward.27} parent=76 // pred_fallthru
            _
          %622 = vnop
        $region77: #{vision_mamba_forward.27} parent=68 // pred_fallthru
          _
      $region69: #{vision_mamba_forward.27} parent=5 // pred_fallthru
        _
      %p623 = scmp.le.s32.totalorder 2, %s9
      // Predicated region
      $region112: #{vision_mamba_forward.27} parent=5 // pred_check
        %p624 = pneg %p623
      $region113: #{vision_mamba_forward.27} parent=5 // pred_check_branch
        %626 = sbr.rel (%p624) target = $region115
      $region114: #{vision_mamba_forward.27} parent=5 // pred_region
        %s627 = ssub.s32 %s9, 2
        // Predicated region
        $region116: #{vision_mamba_forward.27} parent=114 // pred_check
          %p628 = pneg %p130
        $region117: #{vision_mamba_forward.27} parent=114 // pred_check_branch
          %630 = sbr.rel (%p628) target = $region119
        $region118: #{vision_mamba_forward.27} parent=114 // pred_region
          %s631 = sand.u32 %s115, 1
          %s632 = sand.u32 %s115, 1
          %s633 = smul.addr %s632, 16
          %s634 = scalar_lea.vmem [#allocation3], %s633
        $region119: #{vision_mamba_forward.27} parent=114 // pred_fallthru
          _
      $region115: #{vision_mamba_forward.27} parent=5 // pred_fallthru
        _
    $region6: #{vision_mamba_forward.27} parent=1 // loop_footer
      %s13 = sadd.s32 1, %s9
    $region7: #{vision_mamba_forward.27} parent=1 // loop_footer_branch
      %8 = sbr.rel target = $region3
    $region8: #{vision_mamba_forward.27} parent=1 // loop_exit
      _

// kernel: vision_mamba_forward.29
$region0: #{vision_mamba_forward.29}
  #allocation0 [shape = 'u32[]', space=smem, size = 0x4, offset = 0x4, fixed_abs, tag = 'smem constant byte address 0x4 - core index']
  #allocation1 [shape = 'u32[144,128]{1,0:T(1,128)}', space=vmem, size = 0x12000, scoped, tag = 'internal scratch']
  %s0 = inlined_call_operand.vmem [shape: bf16[16,256], index: 0, kind: input, shape index: {}]
  %s1 = inlined_call_operand.vmem [shape: bf16[256,128], index: 1, kind: input, shape index: {}]
  %s2 = inlined_call_operand.vmem [shape: f32[1,128], index: 2, kind: input, shape index: {}]
  %s3 = inlined_call_operand.vmem [shape: f32[16,128], index: 3, kind: output, shape index: {}]
  %s4 = sld [smem:[#allocation0]]
  $region22: #{vision_mamba_forward.29} parent=0
    _
  %s6 = ssub.s32 1, %s4
  %s7 = scalar_select 0, %s6, %s4
  // Predicated region
  $region2: #{vision_mamba_forward.29} parent=0 // pred_check
    _
  $region3: #{vision_mamba_forward.29} parent=0 // pred_check_branch
    %9 = sbr.rel (0) target = $region5
  $region4: #{vision_mamba_forward.29} parent=0 // pred_region
    _
  $region5: #{vision_mamba_forward.29} parent=0 // pred_fallthru
    _
  // Predicated region
  $region6: #{vision_mamba_forward.29} parent=0 // pred_check
    _
  $region7: #{vision_mamba_forward.29} parent=0 // pred_check_branch
    %11 = sbr.rel (0) target = $region9
  $region8: #{vision_mamba_forward.29} parent=0 // pred_region
    _
  $region9: #{vision_mamba_forward.29} parent=0 // pred_fallthru
    _
  // Predicated region
  $region10: #{vision_mamba_forward.29} parent=0 // pred_check
    _
  $region11: #{vision_mamba_forward.29} parent=0 // pred_check_branch
    %13 = sbr.rel (0) target = $region13
  $region12: #{vision_mamba_forward.29} parent=0 // pred_region
    _
  $region13: #{vision_mamba_forward.29} parent=0 // pred_fallthru
    _
  %v15 = vld [vmem:[%s0] sm:$0xff]
  %v16 = vld [vmem:[%s0 + $0x8] sm:$0xff]
  %v17 = vld [vmem:[%s1] sm:$0xf]
  %v18 = vld [vmem:[%s1 + $0x4] sm:$0xf]
  %v19 = vld [vmem:[%s1 + $0x8] sm:$0xf]
  %v20 = vld [vmem:[%s1 + $0xc] sm:$0xf]
  %v21 = vld [vmem:[%s1 + $0x10] sm:$0xf]
  %v22 = vld [vmem:[%s1 + $0x14] sm:$0xf]
  %v23 = vld [vmem:[%s1 + $0x18] sm:$0xf]
  %v24 = vld [vmem:[%s1 + $0x1c] sm:$0xf]
  %v25 = vld [vmem:[%s1 + $0x20] sm:$0xf]
  %v26 = vld [vmem:[%s1 + $0x24] sm:$0xf]
  %v27 = vld [vmem:[%s1 + $0x28] sm:$0xf]
  %v28 = vld [vmem:[%s1 + $0x2c] sm:$0xf]
  %v29 = vld [vmem:[%s1 + $0x30] sm:$0xf]
  %v30 = vld [vmem:[%s1 + $0x34] sm:$0xf]
  %v31 = vld [vmem:[%s1 + $0x38] sm:$0xf]
  %v32 = vld [vmem:[%s1 + $0x3c] sm:$0xf]
  %v33 = vld [vmem:[%s1 + $0x40] sm:$0xf]
  %v34 = vld [vmem:[%s1 + $0x44] sm:$0xf]
  %v35 = vld [vmem:[%s1 + $0x48] sm:$0xf]
  %v36 = vld [vmem:[%s1 + $0x4c] sm:$0xf]
  %v37 = vld [vmem:[%s1 + $0x50] sm:$0xf]
  %v38 = vld [vmem:[%s1 + $0x54] sm:$0xf]
  %v39 = vld [vmem:[%s1 + $0x58] sm:$0xf]
  %v40 = vld [vmem:[%s1 + $0x5c] sm:$0xf]
  %v41 = vld [vmem:[%s1 + $0x60] sm:$0xf]
  %v42 = vld [vmem:[%s1 + $0x64] sm:$0xf]
  %v43 = vld [vmem:[%s1 + $0x68] sm:$0xf]
  %v44 = vld [vmem:[%s1 + $0x6c] sm:$0xf]
  %v45 = vld [vmem:[%s1 + $0x70] sm:$0xf]
  %v46 = vld [vmem:[%s1 + $0x74] sm:$0xf]
  %v47 = vld [vmem:[%s1 + $0x78] sm:$0xf]
  %v48 = vld [vmem:[%s1 + $0x7c] sm:$0xf]
  %v49 = vld [vmem:[%s2] sm:$0x1]
  %v51 = vlaneseq
  %v52 = vshrl.u32 %v51, 7
  %v53 = vsub.s32 0, %v52
  %v54 = vrot.slane %v49, %v53
  %v58 = vunpack.c.l.b16 %v15
  %v59 = vunpack.c.h.b16 %v15
  %v60 = vunpack.c.l.b16 %v16
  %v61 = vunpack.c.h.b16 %v16
  %v62 = vpack.c.b16 %v60, %v58
  %v63 = vpack.c.b16 %v61, %v59
  %v98 = vunpack.c.l.b16 %v17
  %v99 = vunpack.c.l.b16 %v18
  %v100 = vunpack.c.l.b16 %v19
  %v101 = vunpack.c.l.b16 %v20
  %v102 = vunpack.c.l.b16 %v21
  %v103 = vunpack.c.l.b16 %v22
  %v104 = vunpack.c.l.b16 %v23
  %v105 = vunpack.c.l.b16 %v24
  %v106 = vunpack.c.l.b16 %v25
  %v107 = vunpack.c.l.b16 %v26
  %v108 = vunpack.c.l.b16 %v27
  %v109 = vunpack.c.l.b16 %v28
  %v110 = vunpack.c.l.b16 %v29
  %v111 = vunpack.c.l.b16 %v30
  %v112 = vunpack.c.l.b16 %v31
  %v113 = vunpack.c.l.b16 %v32
  %v114 = vunpack.c.l.b16 %v33
  %v115 = vunpack.c.l.b16 %v34
  %v116 = vunpack.c.l.b16 %v35
  %v117 = vunpack.c.l.b16 %v36
  %v118 = vunpack.c.l.b16 %v37
  %v119 = vunpack.c.l.b16 %v38
  %v120 = vunpack.c.l.b16 %v39
  %v121 = vunpack.c.l.b16 %v40
  %v122 = vunpack.c.l.b16 %v41
  %v123 = vunpack.c.l.b16 %v42
  %v124 = vunpack.c.l.b16 %v43
  %v125 = vunpack.c.l.b16 %v44
  %v126 = vunpack.c.l.b16 %v45
  %v127 = vunpack.c.l.b16 %v46
  %v128 = vunpack.c.l.b16 %v47
  %v129 = vunpack.c.l.b16 %v48
  %v130 = vpack.c.b16 %v99, %v98
  %v131 = vpack.c.b16 %v101, %v100
  %v132 = vpack.c.b16 %v103, %v102
  %v133 = vpack.c.b16 %v105, %v104
  %v134 = vpack.c.b16 %v107, %v106
  %v135 = vpack.c.b16 %v109, %v108
  %v136 = vpack.c.b16 %v111, %v110
  %v137 = vpack.c.b16 %v113, %v112
  %v138 = vpack.c.b16 %v115, %v114
  %v139 = vpack.c.b16 %v117, %v116
  %v140 = vpack.c.b16 %v119, %v118
  %v141 = vpack.c.b16 %v121, %v120
  %v142 = vpack.c.b16 %v123, %v122
  %v143 = vpack.c.b16 %v125, %v124
  %v144 = vpack.c.b16 %v127, %v126
  %v145 = vpack.c.b16 %v129, %v128
  %162 = vmatprep.subr.bf16.mxu0 0
  %163 = vmatpush1.bf16.msra.mxu0 %v130
  %164 = vmatprep.subr.bf16.mxu0 0
  %165 = vmatpush1.bf16.msra.mxu0 %v131
  %166 = vmatprep.subr.bf16.mxu0 0
  %167 = vmatpush1.bf16.msra.mxu0 %v132
  %168 = vmatprep.subr.bf16.mxu0 0
  %169 = vmatpush1.bf16.msra.mxu0 %v133
  %170 = vmatprep.subr.bf16.mxu0 0
  %171 = vmatpush1.bf16.msra.mxu0 %v134
  %172 = vmatprep.subr.bf16.mxu0 0
  %173 = vmatpush1.bf16.msra.mxu0 %v135
  %174 = vmatprep.subr.bf16.mxu0 0
  %175 = vmatpush1.bf16.msra.mxu0 %v136
  %176 = vmatprep.subr.bf16.mxu0 0
  %177 = vmatpush1.bf16.msra.mxu0 %v137
  %178 = vmatprep.subr.bf16.mxu0 0
  %179 = vmatpush1.bf16.msra.mxu0 %v138
  %180 = vmatprep.subr.bf16.mxu0 0
  %181 = vmatpush1.bf16.msra.mxu0 %v139
  %182 = vmatprep.subr.bf16.mxu0 0
  %183 = vmatpush1.bf16.msra.mxu0 %v140
  %184 = vmatprep.subr.bf16.mxu0 0
  %185 = vmatpush1.bf16.msra.mxu0 %v141
  %186 = vmatprep.subr.bf16.mxu0 0
  %187 = vmatpush1.bf16.msra.mxu0 %v142
  %188 = vmatprep.subr.bf16.mxu0 0
  %189 = vmatpush1.bf16.msra.mxu0 %v143
  %190 = vmatprep.subr.bf16.mxu0 0
  %191 = vmatpush1.bf16.msra.mxu0 %v144
  %192 = vmatprep.subr.bf16.mxu0 0
  %193 = vmatpush1.bf16.msra.mxu0 %v145
  %194 = vmatprep.mubr.bf16.mxu0 %v63
  %195 = vmatmul.mubr.bf16.gmra.mrb[0].mxu0 %v62
  %v196 = vpop.f32.mrb[0].mxu0
  %v197 = vadd.f32 %v54, %v196
  %v198 = vpop.f32.mrb[0].mxu0
  %v199 = vpop.f32.mrb[0].mxu0
  %v200 = vadd.f32 %v54, %v199
  %v201 = vpop.f32.mrb[0].mxu0
  %202 = vdwg.mxu0
  %203 = vst [vmem:[%s3] sm:$0xff] %v197
  %204 = vst [vmem:[%s3 + $0x8] sm:$0xff] %v200
  // Predicated region
  $region14: #{vision_mamba_forward.29} parent=0 // pred_check
    _
  $region15: #{vision_mamba_forward.29} parent=0 // pred_check_branch
    %206 = sbr.rel (0) target = $region17
  $region16: #{vision_mamba_forward.29} parent=0 // pred_region
    _
  $region17: #{vision_mamba_forward.29} parent=0 // pred_fallthru
    _
  // Predicated region
  $region18: #{vision_mamba_forward.29} parent=0 // pred_check
    _
  $region19: #{vision_mamba_forward.29} parent=0 // pred_check_branch
    %208 = sbr.rel (0) target = $region21
  $region20: #{vision_mamba_forward.29} parent=0 // pred_region
    _
  $region21: #{vision_mamba_forward.29} parent=0 // pred_fallthru
    _

// kernel: vision_mamba_forward.28
$region0: #{vision_mamba_forward.28}
  #allocation0 [shape = 'u32[]', space=smem, size = 0x4, offset = 0x4, fixed_abs, tag = 'smem constant byte address 0x4 - core index']
  #allocation1 [shape = 'u32[144,128]{1,0:T(1,128)}', space=vmem, size = 0x12000, scoped, tag = 'internal scratch']
  #allocation2 [shape = 'f32[16,256]{1,0:T(8,128)}', space=vmem, size = 0x4000, scoped, tag = 'scratch operand']
  #allocation3 [shape = 'f32[8,16,256]{2,1,0:T(8,128)}', space=vmem, size = 0x20000, scoped, tag = 'scratch operand']
  #allocation4 [shape = 'f32[8,16,256]{2,1,0:T(8,128)}', space=vmem, size = 0x20000, scoped, tag = 'scratch operand']
  %s0 = inlined_call_operand.vmem [shape: bf16[2,8,256], index: 0, kind: input, shape index: {}]
  %s1 = inlined_call_operand.vmem [shape: f32[2,8,384], index: 1, kind: input, shape index: {}]
  %s2 = inlined_call_operand.vmem [shape: f32[2,8,16,1], index: 2, kind: input, shape index: {}]
  %s3 = inlined_call_operand.vmem [shape: f32[2,8,16,1], index: 3, kind: input, shape index: {}]
  %s4 = inlined_call_operand.vmem [shape: f32[2,8,512], index: 4, kind: input, shape index: {}]
  %s5 = inlined_call_operand.vmem [shape: f32[16,256], index: 5, kind: input, shape index: {}]
  %s6 = inlined_call_operand.vmem [shape: f32[1,256], index: 6, kind: input, shape index: {}]
  %s7 = inlined_call_operand.vmem [shape: f32[2,8,256], index: 7, kind: output, shape index: {}]
  %s8 = sld [smem:[#allocation0]]
  $region65: #{vision_mamba_forward.28} parent=0
    _
  %s10 = ssub.s32 1, %s8
  %s11 = scalar_select 0, %s10, %s8
  loop: start=0, step=1, limit=4
  $region2: #{vision_mamba_forward.28} parent=0 // loop_pre_header
    _
  $region3: #{vision_mamba_forward.28} parent=0 // loop_header
    %s13 = sphi 0, %s17
    %p14 = scmp.ge.s32.totalorder %s13, 4
    %s20 = sphi 0, %s32
    %s21 = sphi 0, %s28
    %s22 = sphi 0, %s20
    %s23 = sphi 0, %s21
    %s24 = sphi 0, %s22
    %s25 = sphi 0, %s23
    %s39 = sphi 0, %s41
    %s42 = sphi 0, %s39
    %s43 = sphi 0, %s42
    %s59 = sphi 0, %s43
    %s69 = sphi 0, %s71
    %s72 = sphi 0, %s69
    %s73 = sphi 0, %s72
    %s89 = sphi 0, %s73
    %s99 = sphi 0, %s101
    %s102 = sphi 0, %s99
    %s103 = sphi 0, %s102
    %s119 = sphi 0, %s103
    %s129 = sphi 0, %s131
    %s132 = sphi 0, %s129
    %s133 = sphi 0, %s132
    %s149 = sphi 0, %s133
    %s159 = sphi 0, %s161
    %s162 = sphi 0, %s159
    %s163 = sphi 0, %s162
    %s179 = sphi 0, %s163
    %s183 = sphi 0, %s183
    %s185 = sphi 0, %s183
    %s186 = sphi 0, %s185
    %s200 = sphi 0, %s186
    %s204 = sphi 0, %s204
    %s206 = sphi 0, %s204
    %s207 = sphi 0, %s206
    %s221 = sphi 0, %s207
    %s231 = sphi 0, %s233
    %s234 = sphi 0, %s231
    %s235 = sphi 0, %s234
    %s251 = sphi 0, %s235
  $region4: #{vision_mamba_forward.28} parent=0 // loop_header_branch
    %16 = sbr.rel (%p14) target = $region8
  $region5: #{vision_mamba_forward.28} parent=0 // loop_body
    %s18 = ssub.s32 %s13, 1
    %s19 = ssub.s32 %s13, 2
    %s26 = sadd.s32 1, %s21
    %p27 = scmp.ge.s32.totalorder %s26, 1
    %s28 = scalar_select %p27, 0, %s26
    %s29 = sadd.s32 1, %s20
    %s30 = scalar_select %p27, %s29, %s20
    %p31 = scmp.ge.s32.totalorder %s30, 2
    %s32 = scalar_select %p31, 0, %s30
    %s33 = ssub.s32 0, %s21
    %s34 = ssub.s32 0, %s28
    %s35 = ssub.s32 %s20, %s32
    %s36 = ssub.s32 %s33, %s34
    %s37 = sor.u32 %s35, %s36
    %p38 = scmp.eq.s32.totalorder %s37, 0
    %s40 = sadd.s32 %s39, 1
    %s41 = scalar_select %p38, %s39, %s40
    %p44 = pneg %p38
    %p45 = scmp.eq.s32.totalorder %s13, 1
    %p46 = por %p44, %p45
    %p47 = scmp.ne.s32.totalorder %s39, %s42
    %p48 = scmp.eq.s32.totalorder %s13, 0
    %p49 = por %p47, %p48
    %p50 = scmp.ne.s32.totalorder %s39, %s42
    %p51 = scmp.eq.s32.totalorder %s18, 1
    %p52 = por %p50, %p51
    %p53 = scmp.ne.s32.totalorder %s42, %s43
    %p54 = scmp.eq.s32.totalorder %s18, 0
    %p55 = por %p53, %p54
    %p56 = scmp.ne.s32.totalorder %s42, %s43
    %p57 = scmp.eq.s32.totalorder %s19, 1
    %p58 = por %p56, %p57
    %p60 = scmp.ne.s32.totalorder %s43, %s59
    %p61 = scmp.eq.s32.totalorder %s19, 0
    %p62 = por %p60, %p61
    %s63 = ssub.s32 0, %s21
    %s64 = ssub.s32 0, %s28
    %s65 = ssub.s32 %s20, %s32
    %s66 = ssub.s32 %s63, %s64
    %s67 = sor.u32 %s65, %s66
    %p68 = scmp.eq.s32.totalorder %s67, 0
    %s70 = sadd.s32 %s69, 1
    %s71 = scalar_select %p68, %s69, %s70
    %p74 = pneg %p68
    %p75 = scmp.eq.s32.totalorder %s13, 1
    %p76 = por %p74, %p75
    %p77 = scmp.ne.s32.totalorder %s69, %s72
    %p78 = scmp.eq.s32.totalorder %s13, 0
    %p79 = por %p77, %p78
    %p80 = scmp.ne.s32.totalorder %s69, %s72
    %p81 = scmp.eq.s32.totalorder %s18, 1
    %p82 = por %p80, %p81
    %p83 = scmp.ne.s32.totalorder %s72, %s73
    %p84 = scmp.eq.s32.totalorder %s18, 0
    %p85 = por %p83, %p84
    %p86 = scmp.ne.s32.totalorder %s72, %s73
    %p87 = scmp.eq.s32.totalorder %s19, 1
    %p88 = por %p86, %p87
    %p90 = scmp.ne.s32.totalorder %s73, %s89
    %p91 = scmp.eq.s32.totalorder %s19, 0
    %p92 = por %p90, %p91
    %s93 = ssub.s32 0, %s21
    %s94 = ssub.s32 0, %s28
    %s95 = ssub.s32 %s20, %s32
    %s96 = ssub.s32 %s93, %s94
    %s97 = sor.u32 %s95, %s96
    %p98 = scmp.eq.s32.totalorder %s97, 0
    %s100 = sadd.s32 %s99, 1
    %s101 = scalar_select %p98, %s99, %s100
    %p104 = pneg %p98
    %p105 = scmp.eq.s32.totalorder %s13, 1
    %p106 = por %p104, %p105
    %p107 = scmp.ne.s32.totalorder %s99, %s102
    %p108 = scmp.eq.s32.totalorder %s13, 0
    %p109 = por %p107, %p108
    %p110 = scmp.ne.s32.totalorder %s99, %s102
    %p111 = scmp.eq.s32.totalorder %s18, 1
    %p112 = por %p110, %p111
    %p113 = scmp.ne.s32.totalorder %s102, %s103
    %p114 = scmp.eq.s32.totalorder %s18, 0
    %p115 = por %p113, %p114
    %p116 = scmp.ne.s32.totalorder %s102, %s103
    %p117 = scmp.eq.s32.totalorder %s19, 1
    %p118 = por %p116, %p117
    %p120 = scmp.ne.s32.totalorder %s103, %s119
    %p121 = scmp.eq.s32.totalorder %s19, 0
    %p122 = por %p120, %p121
    %s123 = ssub.s32 0, %s21
    %s124 = ssub.s32 0, %s28
    %s125 = ssub.s32 %s20, %s32
    %s126 = ssub.s32 %s123, %s124
    %s127 = sor.u32 %s125, %s126
    %p128 = scmp.eq.s32.totalorder %s127, 0
    %s130 = sadd.s32 %s129, 1
    %s131 = scalar_select %p128, %s129, %s130
    %p134 = pneg %p128
    %p135 = scmp.eq.s32.totalorder %s13, 1
    %p136 = por %p134, %p135
    %p137 = scmp.ne.s32.totalorder %s129, %s132
    %p138 = scmp.eq.s32.totalorder %s13, 0
    %p139 = por %p137, %p138
    %p140 = scmp.ne.s32.totalorder %s129, %s132
    %p141 = scmp.eq.s32.totalorder %s18, 1
    %p142 = por %p140, %p141
    %p143 = scmp.ne.s32.totalorder %s132, %s133
    %p144 = scmp.eq.s32.totalorder %s18, 0
    %p145 = por %p143, %p144
    %p146 = scmp.ne.s32.totalorder %s132, %s133
    %p147 = scmp.eq.s32.totalorder %s19, 1
    %p148 = por %p146, %p147
    %p150 = scmp.ne.s32.totalorder %s133, %s149
    %p151 = scmp.eq.s32.totalorder %s19, 0
    %p152 = por %p150, %p151
    %s153 = ssub.s32 0, %s21
    %s154 = ssub.s32 0, %s28
    %s155 = ssub.s32 %s20, %s32
    %s156 = ssub.s32 %s153, %s154
    %s157 = sor.u32 %s155, %s156
    %p158 = scmp.eq.s32.totalorder %s157, 0
    %s160 = sadd.s32 %s159, 1
    %s161 = scalar_select %p158, %s159, %s160
    %p164 = pneg %p158
    %p165 = scmp.eq.s32.totalorder %s13, 1
    %p166 = por %p164, %p165
    %p167 = scmp.ne.s32.totalorder %s159, %s162
    %p168 = scmp.eq.s32.totalorder %s13, 0
    %p169 = por %p167, %p168
    %p170 = scmp.ne.s32.totalorder %s159, %s162
    %p171 = scmp.eq.s32.totalorder %s18, 1
    %p172 = por %p170, %p171
    %p173 = scmp.ne.s32.totalorder %s162, %s163
    %p174 = scmp.eq.s32.totalorder %s18, 0
    %p175 = por %p173, %p174
    %p176 = scmp.ne.s32.totalorder %s162, %s163
    %p177 = scmp.eq.s32.totalorder %s19, 1
    %p178 = por %p176, %p177
    %p180 = scmp.ne.s32.totalorder %s163, %s179
    %p181 = scmp.eq.s32.totalorder %s19, 0
    %p182 = por %p180, %p181
    %s184 = sadd.s32 %s183, 1
    %p187 = scmp.eq.s32.totalorder %s13, 1
    %p188 = scmp.ne.s32.totalorder %s183, %s185
    %p189 = scmp.eq.s32.totalorder %s13, 0
    %p190 = por %p188, %p189
    %p191 = scmp.ne.s32.totalorder %s183, %s185
    %p192 = scmp.eq.s32.totalorder %s18, 1
    %p193 = por %p191, %p192
    %p194 = scmp.ne.s32.totalorder %s185, %s186
    %p195 = scmp.eq.s32.totalorder %s18, 0
    %p196 = por %p194, %p195
    %p197 = scmp.ne.s32.totalorder %s185, %s186
    %p198 = scmp.eq.s32.totalorder %s19, 1
    %p199 = por %p197, %p198
    %p201 = scmp.ne.s32.totalorder %s186, %s200
    %p202 = scmp.eq.s32.totalorder %s19, 0
    %p203 = por %p201, %p202
    %s205 = sadd.s32 %s204, 1
    %p208 = scmp.eq.s32.totalorder %s13, 1
    %p209 = scmp.ne.s32.totalorder %s204, %s206
    %p210 = scmp.eq.s32.totalorder %s13, 0
    %p211 = por %p209, %p210
    %p212 = scmp.ne.s32.totalorder %s204, %s206
    %p213 = scmp.eq.s32.totalorder %s18, 1
    %p214 = por %p212, %p213
    %p215 = scmp.ne.s32.totalorder %s206, %s207
    %p216 = scmp.eq.s32.totalorder %s18, 0
    %p217 = por %p215, %p216
    %p218 = scmp.ne.s32.totalorder %s206, %s207
    %p219 = scmp.eq.s32.totalorder %s19, 1
    %p220 = por %p218, %p219
    %p222 = scmp.ne.s32.totalorder %s207, %s221
    %p223 = scmp.eq.s32.totalorder %s19, 0
    %p224 = por %p222, %p223
    %s225 = ssub.s32 0, %s21
    %s226 = ssub.s32 0, %s28
    %s227 = ssub.s32 %s20, %s32
    %s228 = ssub.s32 %s225, %s226
    %s229 = sor.u32 %s227, %s228
    %p230 = scmp.eq.s32.totalorder %s229, 0
    %s232 = sadd.s32 %s231, 1
    %s233 = scalar_select %p230, %s231, %s232
    %p236 = pneg %p230
    %p237 = scmp.eq.s32.totalorder %s13, 1
    %p238 = por %p236, %p237
    %p239 = scmp.ne.s32.totalorder %s231, %s234
    %p240 = scmp.eq.s32.totalorder %s13, 0
    %p241 = por %p239, %p240
    %p242 = scmp.ne.s32.totalorder %s231, %s234
    %p243 = scmp.eq.s32.totalorder %s18, 1
    %p244 = por %p242, %p243
    %p245 = scmp.ne.s32.totalorder %s234, %s235
    %p246 = scmp.eq.s32.totalorder %s18, 0
    %p247 = por %p245, %p246
    %p248 = scmp.ne.s32.totalorder %s234, %s235
    %p249 = scmp.eq.s32.totalorder %s19, 1
    %p250 = por %p248, %p249
    %p252 = scmp.ne.s32.totalorder %s235, %s251
    %p253 = scmp.eq.s32.totalorder %s19, 0
    %p254 = por %p252, %p253
    %p255 = scmp.le.s32.totalorder 1, %s13
    %p256 = scmp.lt.s32.totalorder %s13, 3
    %p257 = pnand %p255, %p256
    %p258 = pneg %p257
    // Predicated region
    $region9: #{vision_mamba_forward.28} parent=5 // pred_check
      _
    $region10: #{vision_mamba_forward.28} parent=5 // pred_check_branch
      %260 = sbr.rel (%p257) target = $region12
    $region11: #{vision_mamba_forward.28} parent=5 // pred_region
      %s261 = ssub.s32 %s13, 1
      // Predicated region
      $region13: #{vision_mamba_forward.28} parent=11 // pred_check
        %p262 = pneg %p196
      $region14: #{vision_mamba_forward.28} parent=11 // pred_check_branch
        %264 = sbr.rel (%p262) target = $region16
      $region15: #{vision_mamba_forward.28} parent=11 // pred_region
        _
      $region16: #{vision_mamba_forward.28} parent=11 // pred_fallthru
        _
      // Predicated region
      $region17: #{vision_mamba_forward.28} parent=11 // pred_check
        %p265 = pneg %p217
      $region18: #{vision_mamba_forward.28} parent=11 // pred_check_branch
        %267 = sbr.rel (%p265) target = $region20
      $region19: #{vision_mamba_forward.28} parent=11 // pred_region
        _
      $region20: #{vision_mamba_forward.28} parent=11 // pred_fallthru
        _
    $region12: #{vision_mamba_forward.28} parent=5 // pred_fallthru
      _
    %p268 = scmp.lt.s32.totalorder %s13, 2
    // Predicated region
    $region21: #{vision_mamba_forward.28} parent=5 // pred_check
      %p269 = pneg %p268
    $region22: #{vision_mamba_forward.28} parent=5 // pred_check_branch
      %271 = sbr.rel (%p269) target = $region24
    $region23: #{vision_mamba_forward.28} parent=5 // pred_region
      // Predicated region
      $region25: #{vision_mamba_forward.28} parent=23 // pred_check
        %p272 = pneg %p49
      $region26: #{vision_mamba_forward.28} parent=23 // pred_check_branch
        %274 = sbr.rel (%p272) target = $region28
      $region27: #{vision_mamba_forward.28} parent=23 // pred_region
        %s275 = ssub.s32 0, %s21
        %p276 = scmp.lt.s32.totalorder %s20, 1
        %s277 = scalar_select %p276, %s20, 1
        %p278 = scmp.lt.s32.totalorder %s275, 0
        %s279 = scalar_select %p278, %s275, 0
        %s280 = smul.addr %s279, 2
        %s281 = smul.addr %s277, 2
        %s282 = sadd.s32 %s280, %s281
        %s283 = smul.addr %s282, 4
        %s284 = scalar_lea.vmem %s0, %s283
        %s285 = ssub.s32 0, %s21
      $region28: #{vision_mamba_forward.28} parent=23 // pred_fallthru
        _
      // Predicated region
      $region29: #{vision_mamba_forward.28} parent=23 // pred_check
        %p286 = pneg %p79
      $region30: #{vision_mamba_forward.28} parent=23 // pred_check_branch
        %288 = sbr.rel (%p286) target = $region32
      $region31: #{vision_mamba_forward.28} parent=23 // pred_region
        %s289 = ssub.s32 0, %s21
        %p290 = scmp.lt.s32.totalorder %s20, 1
        %s291 = scalar_select %p290, %s20, 1
        %p292 = scmp.lt.s32.totalorder %s289, 0
        %s293 = scalar_select %p292, %s289, 0
        %s294 = smul.addr %s293, 3
        %s295 = smul.addr %s291, 3
        %s296 = sadd.s32 %s294, %s295
        %s297 = smul.addr %s296, 8
        %s298 = scalar_lea.vmem %s1, %s297
        %s299 = ssub.s32 0, %s21
      $region32: #{vision_mamba_forward.28} parent=23 // pred_fallthru
        _
      // Predicated region
      $region33: #{vision_mamba_forward.28} parent=23 // pred_check
        %p300 = pneg %p109
      $region34: #{vision_mamba_forward.28} parent=23 // pred_check_branch
        %302 = sbr.rel (%p300) target = $region36
      $region35: #{vision_mamba_forward.28} parent=23 // pred_region
        %s303 = ssub.s32 0, %s21
        %s304 = smul.u32 8, %s303
        %p305 = scmp.lt.s32.totalorder %s20, 1
        %s306 = scalar_select %p305, %s20, 1
        %p307 = scmp.lt.s32.totalorder %s304, 7
        %s308 = scalar_select %p307, %s304, 7
        %s309 = smul.addr %s308, 2
        %s310 = smul.addr %s306, 16
        %s311 = sadd.s32 %s309, %s310
        %s312 = smul.addr %s311, 8
        %s313 = scalar_lea.vmem %s2, %s312
        %s314 = ssub.s32 0, %s21
        %s315 = smul.u32 8, %s314
      $region36: #{vision_mamba_forward.28} parent=23 // pred_fallthru
        _
      // Predicated region
      $region37: #{vision_mamba_forward.28} parent=23 // pred_check
        %p316 = pneg %p139
      $region38: #{vision_mamba_forward.28} parent=23 // pred_check_branch
        %318 = sbr.rel (%p316) target = $region40
      $region39: #{vision_mamba_forward.28} parent=23 // pred_region
        %s319 = ssub.s32 0, %s21
        %s320 = smul.u32 8, %s319
        %p321 = scmp.lt.s32.totalorder %s20, 1
        %s322 = scalar_select %p321, %s20, 1
        %p323 = scmp.lt.s32.totalorder %s320, 7
        %s324 = scalar_select %p323, %s320, 7
        %s325 = smul.addr %s324, 2
        %s326 = smul.addr %s322, 16
        %s327 = sadd.s32 %s325, %s326
        %s328 = smul.addr %s327, 8
        %s329 = scalar_lea.vmem %s3, %s328
        %s330 = ssub.s32 0, %s21
        %s331 = smul.u32 8, %s330
      $region40: #{vision_mamba_forward.28} parent=23 // pred_fallthru
        _
      // Predicated region
      $region41: #{vision_mamba_forward.28} parent=23 // pred_check
        %p332 = pneg %p169
      $region42: #{vision_mamba_forward.28} parent=23 // pred_check_branch
        %334 = sbr.rel (%p332) target = $region44
      $region43: #{vision_mamba_forward.28} parent=23 // pred_region
        %s335 = ssub.s32 0, %s21
        %p336 = scmp.lt.s32.totalorder %s20, 1
        %s337 = scalar_select %p336, %s20, 1
        %p338 = scmp.lt.s32.totalorder %s335, 0
        %s339 = scalar_select %p338, %s335, 0
        %s340 = smul.addr %s339, 4
        %s341 = sadd.s32 2, %s340
        %s342 = smul.addr %s337, 4
        %s343 = sadd.s32 %s341, %s342
        %s344 = smul.addr %s343, 8
        %s345 = scalar_lea.vmem %s4, %s344
        %s346 = ssub.s32 0, %s21
      $region44: #{vision_mamba_forward.28} parent=23 // pred_fallthru
        _
    $region24: #{vision_mamba_forward.28} parent=5 // pred_fallthru
      _
    %p347 = scmp.le.s32.totalorder 1, %s13
    %p348 = scmp.lt.s32.totalorder %s13, 3
    %p349 = pnand %p347, %p348
    %p350 = pneg %p349
    // Predicated region
    $region45: #{vision_mamba_forward.28} parent=5 // pred_check
      _
    $region46: #{vision_mamba_forward.28} parent=5 // pred_check_branch
      %352 = sbr.rel (%p349) target = $region48
    $region47: #{vision_mamba_forward.28} parent=5 // pred_region
      %s353 = ssub.s32 %s13, 1
      %s354 = ssub.s32 0, %s23
      %p355 = scmp.lt.s32.totalorder %s22, 1
      %s356 = scalar_select %p355, %s22, 1
      %p357 = scmp.lt.s32.totalorder %s354, 0
      %s358 = scalar_select %p357, %s354, 0
      %s359 = smul.addr %s358, 2
      %s360 = smul.addr %s356, 2
      %s361 = sadd.s32 %s359, %s360
      %s362 = smul.addr %s361, 4
      %s363 = scalar_lea.vmem %s0, %s362
      %p364 = pneg %p55
      %p365 = pneg %p52
      %s366 = ssub.s32 0, %s23
      %p367 = scmp.lt.s32.totalorder %s22, 1
      %s368 = scalar_select %p367, %s22, 1
      %p369 = scmp.lt.s32.totalorder %s366, 0
      %s370 = scalar_select %p369, %s366, 0
      %s371 = smul.addr %s370, 3
      %s372 = smul.addr %s368, 3
      %s373 = sadd.s32 %s371, %s372
      %s374 = smul.addr %s373, 8
      %s375 = scalar_lea.vmem %s1, %s374
      %p376 = pneg %p85
      %p377 = pneg %p82
      %s378 = ssub.s32 0, %s23
      %s379 = smul.u32 8, %s378
      %p380 = scmp.lt.s32.totalorder %s22, 1
      %s381 = scalar_select %p380, %s22, 1
      %p382 = scmp.lt.s32.totalorder %s379, 7
      %s383 = scalar_select %p382, %s379, 7
      %s384 = smul.addr %s383, 2
      %s385 = smul.addr %s381, 16
      %s386 = sadd.s32 %s384, %s385
      %s387 = smul.addr %s386, 8
      %s388 = scalar_lea.vmem %s2, %s387
      %p389 = pneg %p115
      %p390 = pneg %p112
      %s391 = ssub.s32 0, %s23
      %s392 = smul.u32 8, %s391
      %p393 = scmp.lt.s32.totalorder %s22, 1
      %s394 = scalar_select %p393, %s22, 1
      %p395 = scmp.lt.s32.totalorder %s392, 7
      %s396 = scalar_select %p395, %s392, 7
      %s397 = smul.addr %s396, 2
      %s398 = smul.addr %s394, 16
      %s399 = sadd.s32 %s397, %s398
      %s400 = smul.addr %s399, 8
      %s401 = scalar_lea.vmem %s3, %s400
      %p402 = pneg %p145
      %p403 = pneg %p142
      %s404 = ssub.s32 0, %s23
      %p405 = scmp.lt.s32.totalorder %s22, 1
      %s406 = scalar_select %p405, %s22, 1
      %p407 = scmp.lt.s32.totalorder %s404, 0
      %s408 = scalar_select %p407, %s404, 0
      %s409 = smul.addr %s408, 4
      %s410 = sadd.s32 2, %s409
      %s411 = smul.addr %s406, 4
      %s412 = sadd.s32 %s410, %s411
      %s413 = smul.addr %s412, 8
      %s414 = scalar_lea.vmem %s4, %s413
      %p415 = pneg %p175
      %p416 = pneg %p172
      %p417 = pneg %p196
      %p418 = pneg %p193
      %p419 = pneg %p217
      %p420 = pneg %p214
      %p421 = pneg %p247
      %p422 = pneg %p244
      %s423 = ssub.s32 0, %s23
      %p424 = scmp.lt.s32.totalorder %s22, 1
      %s425 = scalar_select %p424, %s22, 1
      %p426 = scmp.lt.s32.totalorder %s423, 0
      %s427 = scalar_select %p426, %s423, 0
      %s428 = smul.addr %s427, 2
      %s429 = smul.addr %s425, 2
      %s430 = sadd.s32 %s428, %s429
      %s431 = smul.addr %s430, 8
      %s432 = scalar_lea.vmem %s7, %s431
      %s433 = ssub.s32 0, %s23
      %p434 = scmp.lt.s32.totalorder %s22, 1
      %s435 = scalar_select %p434, %s22, 1
      %p436 = scmp.lt.s32.totalorder %s433, 0
      %s437 = scalar_select %p436, %s433, 0
      %s438 = smul.addr %s437, 2
      %s439 = smul.addr %s435, 2
      %s440 = sadd.s32 %s438, %s439
      %s441 = smul.addr %s440, 4
      %s442 = scalar_lea.vmem %s0, %s441
      %s443 = ssub.s32 0, %s23
      %s444 = ssub.s32 0, %s23
      %p445 = scmp.lt.s32.totalorder %s22, 1
      %s446 = scalar_select %p445, %s22, 1
      %p447 = scmp.lt.s32.totalorder %s444, 0
      %s448 = scalar_select %p447, %s444, 0
      %s449 = smul.addr %s448, 3
      %s450 = smul.addr %s446, 3
      %s451 = sadd.s32 %s449, %s450
      %s452 = smul.addr %s451, 8
      %s453 = scalar_lea.vmem %s1, %s452
      %s454 = ssub.s32 0, %s23
      %s455 = ssub.s32 0, %s23
      %s456 = smul.u32 8, %s455
      %p457 = scmp.lt.s32.totalorder %s22, 1
      %s458 = scalar_select %p457, %s22, 1
      %p459 = scmp.lt.s32.totalorder %s456, 7
      %s460 = scalar_select %p459, %s456, 7
      %s461 = smul.addr %s460, 2
      %s462 = smul.addr %s458, 16
      %s463 = sadd.s32 %s461, %s462
      %s464 = smul.addr %s463, 8
      %s465 = scalar_lea.vmem %s2, %s464
      %s466 = ssub.s32 0, %s23
      %s467 = smul.u32 8, %s466
      %s468 = ssub.s32 0, %s23
      %s469 = smul.u32 8, %s468
      %p470 = scmp.lt.s32.totalorder %s22, 1
      %s471 = scalar_select %p470, %s22, 1
      %p472 = scmp.lt.s32.totalorder %s469, 7
      %s473 = scalar_select %p472, %s469, 7
      %s474 = smul.addr %s473, 2
      %s475 = smul.addr %s471, 16
      %s476 = sadd.s32 %s474, %s475
      %s477 = smul.addr %s476, 8
      %s478 = scalar_lea.vmem %s3, %s477
      %s479 = ssub.s32 0, %s23
      %s480 = smul.u32 8, %s479
      %s481 = ssub.s32 0, %s23
      %p482 = scmp.lt.s32.totalorder %s22, 1
      %s483 = scalar_select %p482, %s22, 1
      %p484 = scmp.lt.s32.totalorder %s481, 0
      %s485 = scalar_select %p484, %s481, 0
      %s486 = smul.addr %s485, 4
      %s487 = sadd.s32 2, %s486
      %s488 = smul.addr %s483, 4
      %s489 = sadd.s32 %s487, %s488
      %s490 = smul.addr %s489, 8
      %s491 = scalar_lea.vmem %s4, %s490
      %s492 = ssub.s32 0, %s23
      %s493 = ssub.s32 0, %s23
      %p494 = scmp.lt.s32.totalorder %s22, 1
      %s495 = scalar_select %p494, %s22, 1
      %p496 = scmp.lt.s32.totalorder %s493, 0
      %s497 = scalar_select %p496, %s493, 0
      %s498 = smul.addr %s497, 2
      %s499 = smul.addr %s495, 2
      %s500 = sadd.s32 %s498, %s499
      %s501 = smul.addr %s500, 8
      %s502 = scalar_lea.vmem %s7, %s501
      %s503 = ssub.s32 0, %s23
      %p504 = scmp.eq.s32.totalorder %s23, 0
      // Predicated region
      $region49: #{vision_mamba_forward.28} parent=47 // pred_check
        %p505 = pneg %p504
      $region50: #{vision_mamba_forward.28} parent=47 // pred_check_branch
        %507 = sbr.rel (%p505) target = $region52
      $region51: #{vision_mamba_forward.28} parent=47 // pred_region
        %508 = vst [vmem:[#allocation2] sm:$0xff] 0.0
        %509 = vst [vmem:[#allocation2 + $0x8] sm:$0xff] 0.0
        %510 = vst [vmem:[#allocation2 + $0x10] sm:$0xff] 0.0
        %511 = vst [vmem:[#allocation2 + $0x18] sm:$0xff] 0.0
      $region52: #{vision_mamba_forward.28} parent=47 // pred_fallthru
        _
      %v512 = vld [vmem:[%s442] sm:$0xff]
      %v513 = vunpack.c.l.bf16 %v512
      %v514 = vunpack.c.h.bf16 %v512
      %v515 = vld [vmem:[%s453] sm:$0xff]
      %v516 = vld [vmem:[%s453 + $0x8] sm:$0xff]
      %v517 = vmin.f32 %v515, 20.0
      %v518 = vmin.f32 %v516, 20.0
      %vm519 = vcmp.gt.f32.partialorder %v515, 20.0
      %vm520 = vcmp.gt.f32.partialorder %v516, 20.0
      %v521 = vmul.f32 %v517, 1.442695
      %v522 = vpow.pop %v521
      %v523 = vmul.f32 %v518, 1.442695
      %v524 = vpow.pop %v523
      %v525 = vadd.f32 %v522, 1.0
      %v526 = vadd.f32 %v524, 1.0
      %v527 = vlog2.pop %v525
      %v528 = vmul.f32 %v527, 0.6931472
      %v529 = vlog2.pop %v526
      %v530 = vmul.f32 %v529, 0.6931472
      %v531 = vsel %vm519, %v515, %v528
      %v532 = vsel %vm520, %v516, %v530
      %v533 = vld [vmem:[%s5] sm:$0xff]
      %v534 = vld [vmem:[%s5 + $0x8] sm:$0xff]
      %v535 = vld [vmem:[%s5 + $0x10] sm:$0xff]
      %v536 = vld [vmem:[%s5 + $0x18] sm:$0xff]
      %v539 = vcombine.low %v531, %v532
      %v540 = vcombine.high %v531, %v532
      %v542 = vunpack.c.l.s4 1966171168
      %v543 = vunpack.c.0.s8 %v542
      %v544 = vlaneseq
      %v545 = vshrl.u32 %v544, 7
      %v546 = vsub.s32 %v543, %v545
      %v547 = vrot.slane %v539, %v546
      %v549 = vunpack.c.l.s4 1966171168
      %v550 = vunpack.c.0.s8 %v549
      %v551 = vlaneseq
      %v552 = vshrl.u32 %v551, 7
      %v553 = vsub.s32 %v550, %v552
      %v554 = vrot.slane %v540, %v553
      %v555 = vcombine.high %v547, %v547
      %v556 = vcombine.high %v554, %v554
      %v558 = vunpack.c.l.s4 1966171168
      %v559 = vunpack.c.0.s8 %v558
      %v560 = vlaneseq
      %v561 = vshrl.u32 %v560, 7
      %v562 = vsub.s32 %v559, %v561
      %v563 = vrot.slane %v547, %v562
      %v565 = vunpack.c.l.s4 1966171168
      %v566 = vunpack.c.0.s8 %v565
      %v567 = vlaneseq
      %v568 = vshrl.u32 %v567, 7
      %v569 = vsub.s32 %v566, %v568
      %v570 = vrot.slane %v554, %v569
      %v572 = vunpack.c.l.s4 1966171168
      %v573 = vunpack.c.0.s8 %v572
      %v574 = vlaneseq
      %v575 = vshrl.u32 %v574, 7
      %v576 = vsub.s32 %v573, %v575
      %v577 = vrot.slane %v555, %v576
      %v579 = vunpack.c.l.s4 1966171168
      %v580 = vunpack.c.0.s8 %v579
      %v581 = vlaneseq
      %v582 = vshrl.u32 %v581, 7
      %v583 = vsub.s32 %v580, %v582
      %v584 = vrot.slane %v556, %v583
      %v585 = vcombine.high %v563, %v563
      %v586 = vcombine.high %v570, %v570
      %v587 = vcombine.high %v577, %v577
      %v588 = vcombine.high %v584, %v584
      %v589 = vlaneseq
      %v590 = vshrl.u32 %v589, 7
      %v591 = vsub.s32 0, %v590
      %v592 = vrot.slane %v563, %v591
      %v593 = vlaneseq
      %v594 = vshrl.u32 %v593, 7
      %v595 = vsub.s32 1, %v594
      %v596 = vrot.slane %v563, %v595
      %v597 = vlaneseq
      %v598 = vshrl.u32 %v597, 7
      %v599 = vsub.s32 0, %v598
      %v600 = vrot.slane %v577, %v599
      %v601 = vlaneseq
      %v602 = vshrl.u32 %v601, 7
      %v603 = vsub.s32 1, %v602
      %v604 = vrot.slane %v577, %v603
      %v605 = vlaneseq
      %v606 = vshrl.u32 %v605, 7
      %v607 = vsub.s32 0, %v606
      %v608 = vrot.slane %v585, %v607
      %v609 = vlaneseq
      %v610 = vshrl.u32 %v609, 7
      %v611 = vsub.s32 1, %v610
      %v612 = vrot.slane %v585, %v611
      %v613 = vlaneseq
      %v614 = vshrl.u32 %v613, 7
      %v615 = vsub.s32 0, %v614
      %v616 = vrot.slane %v587, %v615
      %v617 = vlaneseq
      %v618 = vshrl.u32 %v617, 7
      %v619 = vsub.s32 1, %v618
      %v620 = vrot.slane %v587, %v619
      %v621 = vlaneseq
      %v622 = vshrl.u32 %v621, 7
      %v623 = vsub.s32 0, %v622
      %v624 = vrot.slane %v570, %v623
      %v625 = vlaneseq
      %v626 = vshrl.u32 %v625, 7
      %v627 = vsub.s32 1, %v626
      %v628 = vrot.slane %v570, %v627
      %v629 = vlaneseq
      %v630 = vshrl.u32 %v629, 7
      %v631 = vsub.s32 0, %v630
      %v632 = vrot.slane %v584, %v631
      %v633 = vlaneseq
      %v634 = vshrl.u32 %v633, 7
      %v635 = vsub.s32 1, %v634
      %v636 = vrot.slane %v584, %v635
      %v637 = vlaneseq
      %v638 = vshrl.u32 %v637, 7
      %v639 = vsub.s32 0, %v638
      %v640 = vrot.slane %v586, %v639
      %v641 = vlaneseq
      %v642 = vshrl.u32 %v641, 7
      %v643 = vsub.s32 1, %v642
      %v644 = vrot.slane %v586, %v643
      %v645 = vlaneseq
      %v646 = vshrl.u32 %v645, 7
      %v647 = vsub.s32 0, %v646
      %v648 = vrot.slane %v588, %v647
      %v649 = vlaneseq
      %v650 = vshrl.u32 %v649, 7
      %v651 = vsub.s32 1, %v650
      %v652 = vrot.slane %v588, %v651
      %v669 = vmul.f32 %v592, %v533
      %v670 = vmul.f32 %v596, %v534
      %v671 = vmul.f32 %v592, %v535
      %v672 = vmul.f32 %v596, %v536
      %v673 = vmul.f32 %v600, %v533
      %v674 = vmul.f32 %v604, %v534
      %v675 = vmul.f32 %v600, %v535
      %v676 = vmul.f32 %v604, %v536
      %v677 = vmul.f32 %v608, %v533
      %v678 = vmul.f32 %v612, %v534
      %v679 = vmul.f32 %v608, %v535
      %v680 = vmul.f32 %v612, %v536
      %v681 = vmul.f32 %v616, %v533
      %v682 = vmul.f32 %v620, %v534
      %v683 = vmul.f32 %v616, %v535
      %v684 = vmul.f32 %v620, %v536
      %v685 = vmul.f32 %v624, %v533
      %v686 = vmul.f32 %v628, %v534
      %v687 = vmul.f32 %v624, %v535
      %v688 = vmul.f32 %v628, %v536
      %v689 = vmul.f32 %v632, %v533
      %v690 = vmul.f32 %v636, %v534
      %v691 = vmul.f32 %v632, %v535
      %v692 = vmul.f32 %v636, %v536
      %v693 = vmul.f32 %v640, %v533
      %v694 = vmul.f32 %v644, %v534
      %v695 = vmul.f32 %v640, %v535
      %v696 = vmul.f32 %v644, %v536
      %v697 = vmul.f32 %v648, %v533
      %v698 = vmul.f32 %v652, %v534
      %v699 = vmul.f32 %v648, %v535
      %v700 = vmul.f32 %v652, %v536
      %v701 = vmul.f32 %v669, 1.442695
      %v702 = vpow.pop %v701
      %v703 = vmul.f32 %v670, 1.442695
      %v704 = vpow.pop %v703
      %v705 = vmul.f32 %v671, 1.442695
      %v706 = vpow.pop %v705
      %v707 = vmul.f32 %v672, 1.442695
      %v708 = vpow.pop %v707
      %v709 = vmul.f32 %v673, 1.442695
      %v710 = vpow.pop %v709
      %v711 = vmul.f32 %v674, 1.442695
      %v712 = vpow.pop %v711
      %v713 = vmul.f32 %v675, 1.442695
      %v714 = vpow.pop %v713
      %v715 = vmul.f32 %v676, 1.442695
      %v716 = vpow.pop %v715
      %v717 = vmul.f32 %v677, 1.442695
      %v718 = vpow.pop %v717
      %v719 = vmul.f32 %v678, 1.442695
      %v720 = vpow.pop %v719
      %v721 = vmul.f32 %v679, 1.442695
      %v722 = vpow.pop %v721
      %v723 = vmul.f32 %v680, 1.442695
      %v724 = vpow.pop %v723
      %v725 = vmul.f32 %v681, 1.442695
      %v726 = vpow.pop %v725
      %v727 = vmul.f32 %v682, 1.442695
      %v728 = vpow.pop %v727
      %v729 = vmul.f32 %v683, 1.442695
      %v730 = vpow.pop %v729
      %v731 = vmul.f32 %v684, 1.442695
      %v732 = vpow.pop %v731
      %v733 = vmul.f32 %v685, 1.442695
      %v734 = vpow.pop %v733
      %v735 = vmul.f32 %v686, 1.442695
      %v736 = vpow.pop %v735
      %v737 = vmul.f32 %v687, 1.442695
      %v738 = vpow.pop %v737
      %v739 = vmul.f32 %v688, 1.442695
      %v740 = vpow.pop %v739
      %v741 = vmul.f32 %v689, 1.442695
      %v742 = vpow.pop %v741
      %v743 = vmul.f32 %v690, 1.442695
      %v744 = vpow.pop %v743
      %v745 = vmul.f32 %v691, 1.442695
      %v746 = vpow.pop %v745
      %v747 = vmul.f32 %v692, 1.442695
      %v748 = vpow.pop %v747
      %v749 = vmul.f32 %v693, 1.442695
      %v750 = vpow.pop %v749
      %v751 = vmul.f32 %v694, 1.442695
      %v752 = vpow.pop %v751
      %v753 = vmul.f32 %v695, 1.442695
      %v754 = vpow.pop %v753
      %v755 = vmul.f32 %v696, 1.442695
      %v756 = vpow.pop %v755
      %v757 = vmul.f32 %v697, 1.442695
      %v758 = vpow.pop %v757
      %v759 = vmul.f32 %v698, 1.442695
      %v760 = vpow.pop %v759
      %v761 = vmul.f32 %v699, 1.442695
      %v762 = vpow.pop %v761
      %v763 = vmul.f32 %v700, 1.442695
      %v764 = vpow.pop %v763
      %765 = vst [vmem:[#allocation3] sm:$0xff] %v702
      %766 = vst [vmem:[#allocation3 + $0x8] sm:$0xff] %v704
      %767 = vst [vmem:[#allocation3 + $0x10] sm:$0xff] %v706
      %768 = vst [vmem:[#allocation3 + $0x18] sm:$0xff] %v708
      %769 = vst [vmem:[#allocation3 + $0x20] sm:$0xff] %v710
      %770 = vst [vmem:[#allocation3 + $0x28] sm:$0xff] %v712
      %771 = vst [vmem:[#allocation3 + $0x30] sm:$0xff] %v714
      %772 = vst [vmem:[#allocation3 + $0x38] sm:$0xff] %v716
      %773 = vst [vmem:[#allocation3 + $0x40] sm:$0xff] %v718
      %774 = vst [vmem:[#allocation3 + $0x48] sm:$0xff] %v720
      %775 = vst [vmem:[#allocation3 + $0x50] sm:$0xff] %v722
      %776 = vst [vmem:[#allocation3 + $0x58] sm:$0xff] %v724
      %777 = vst [vmem:[#allocation3 + $0x60] sm:$0xff] %v726
      %778 = vst [vmem:[#allocation3 + $0x68] sm:$0xff] %v728
      %779 = vst [vmem:[#allocation3 + $0x70] sm:$0xff] %v730
      %780 = vst [vmem:[#allocation3 + $0x78] sm:$0xff] %v732
      %781 = vst [vmem:[#allocation3 + $0x80] sm:$0xff] %v734
      %782 = vst [vmem:[#allocation3 + $0x88] sm:$0xff] %v736
      %783 = vst [vmem:[#allocation3 + $0x90] sm:$0xff] %v738
      %784 = vst [vmem:[#allocation3 + $0x98] sm:$0xff] %v740
      %785 = vst [vmem:[#allocation3 + $0xa0] sm:$0xff] %v742
      %786 = vst [vmem:[#allocation3 + $0xa8] sm:$0xff] %v744
      %787 = vst [vmem:[#allocation3 + $0xb0] sm:$0xff] %v746
      %788 = vst [vmem:[#allocation3 + $0xb8] sm:$0xff] %v748
      %789 = vst [vmem:[#allocation3 + $0xc0] sm:$0xff] %v750
      %790 = vst [vmem:[#allocation3 + $0xc8] sm:$0xff] %v752
      %791 = vst [vmem:[#allocation3 + $0xd0] sm:$0xff] %v754
      %792 = vst [vmem:[#allocation3 + $0xd8] sm:$0xff] %v756
      %793 = vst [vmem:[#allocation3 + $0xe0] sm:$0xff] %v758
      %794 = vst [vmem:[#allocation3 + $0xe8] sm:$0xff] %v760
      %795 = vst [vmem:[#allocation3 + $0xf0] sm:$0xff] %v762
      %796 = vst [vmem:[#allocation3 + $0xf8] sm:$0xff] %v764
      %v797 = vmul.f32 %v531, %v513
      %v798 = vmul.f32 %v532, %v514
      %v801 = vcombine.low %v797, %v798
      %v802 = vcombine.high %v797, %v798
      %v804 = vunpack.c.l.s4 1966171168
      %v805 = vunpack.c.0.s8 %v804
      %v806 = vlaneseq
      %v807 = vshrl.u32 %v806, 7
      %v808 = vsub.s32 %v805, %v807
      %v809 = vrot.slane %v801, %v808
      %v811 = vunpack.c.l.s4 1966171168
      %v812 = vunpack.c.0.s8 %v811
      %v813 = vlaneseq
      %v814 = vshrl.u32 %v813, 7
      %v815 = vsub.s32 %v812, %v814
      %v816 = vrot.slane %v802, %v815
      %v817 = vcombine.high %v809, %v809
      %v818 = vcombine.high %v816, %v816
      %v820 = vunpack.c.l.s4 1966171168
      %v821 = vunpack.c.0.s8 %v820
      %v822 = vlaneseq
      %v823 = vshrl.u32 %v822, 7
      %v824 = vsub.s32 %v821, %v823
      %v825 = vrot.slane %v809, %v824
      %v827 = vunpack.c.l.s4 1966171168
      %v828 = vunpack.c.0.s8 %v827
      %v829 = vlaneseq
      %v830 = vshrl.u32 %v829, 7
      %v831 = vsub.s32 %v828, %v830
      %v832 = vrot.slane %v816, %v831
      %v834 = vunpack.c.l.s4 1966171168
      %v835 = vunpack.c.0.s8 %v834
      %v836 = vlaneseq
      %v837 = vshrl.u32 %v836, 7
      %v838 = vsub.s32 %v835, %v837
      %v839 = vrot.slane %v817, %v838
      %v841 = vunpack.c.l.s4 1966171168
      %v842 = vunpack.c.0.s8 %v841
      %v843 = vlaneseq
      %v844 = vshrl.u32 %v843, 7
      %v845 = vsub.s32 %v842, %v844
      %v846 = vrot.slane %v818, %v845
      %v847 = vcombine.high %v825, %v825
      %v848 = vcombine.high %v832, %v832
      %v849 = vcombine.high %v839, %v839
      %v850 = vcombine.high %v846, %v846
      %v851 = vld [vmem:[%s465] sm:$0xff]
      %v852 = vld [vmem:[%s465 + $0x8] sm:$0xff]
      %v853 = vld [vmem:[%s465 + $0x10] sm:$0xff]
      %v854 = vld [vmem:[%s465 + $0x18] sm:$0xff]
      %v855 = vld [vmem:[%s465 + $0x20] sm:$0xff]
      %v856 = vld [vmem:[%s465 + $0x28] sm:$0xff]
      %v857 = vld [vmem:[%s465 + $0x30] sm:$0xff]
      %v858 = vld [vmem:[%s465 + $0x38] sm:$0xff]
      %v859 = vld [vmem:[%s465 + $0x40] sm:$0xff]
      %v860 = vld [vmem:[%s465 + $0x48] sm:$0xff]
      %v861 = vld [vmem:[%s465 + $0x50] sm:$0xff]
      %v862 = vld [vmem:[%s465 + $0x58] sm:$0xff]
      %v863 = vld [vmem:[%s465 + $0x60] sm:$0xff]
      %v864 = vld [vmem:[%s465 + $0x68] sm:$0xff]
      %v865 = vld [vmem:[%s465 + $0x70] sm:$0xff]
      %v866 = vld [vmem:[%s465 + $0x78] sm:$0xff]
      %v867 = vlaneseq
      %v868 = vshrl.u32 %v867, 7
      %v869 = vsub.s32 0, %v868
      %v870 = vrot.slane %v825, %v869
      %v871 = vlaneseq
      %v872 = vshrl.u32 %v871, 7
      %v873 = vsub.s32 1, %v872
      %v874 = vrot.slane %v825, %v873
      %v875 = vlaneseq
      %v876 = vshrl.u32 %v875, 7
      %v877 = vsub.s32 0, %v876
      %v878 = vrot.slane %v839, %v877
      %v879 = vlaneseq
      %v880 = vshrl.u32 %v879, 7
      %v881 = vsub.s32 1, %v880
      %v882 = vrot.slane %v839, %v881
      %v883 = vlaneseq
      %v884 = vshrl.u32 %v883, 7
      %v885 = vsub.s32 0, %v884
      %v886 = vrot.slane %v847, %v885
      %v887 = vlaneseq
      %v888 = vshrl.u32 %v887, 7
      %v889 = vsub.s32 1, %v888
      %v890 = vrot.slane %v847, %v889
      %v891 = vlaneseq
      %v892 = vshrl.u32 %v891, 7
      %v893 = vsub.s32 0, %v892
      %v894 = vrot.slane %v849, %v893
      %v895 = vlaneseq
      %v896 = vshrl.u32 %v895, 7
      %v897 = vsub.s32 1, %v896
      %v898 = vrot.slane %v849, %v897
      %v899 = vlaneseq
      %v900 = vshrl.u32 %v899, 7
      %v901 = vsub.s32 0, %v900
      %v902 = vrot.slane %v832, %v901
      %v903 = vlaneseq
      %v904 = vshrl.u32 %v903, 7
      %v905 = vsub.s32 1, %v904
      %v906 = vrot.slane %v832, %v905
      %v907 = vlaneseq
      %v908 = vshrl.u32 %v907, 7
      %v909 = vsub.s32 0, %v908
      %v910 = vrot.slane %v846, %v909
      %v911 = vlaneseq
      %v912 = vshrl.u32 %v911, 7
      %v913 = vsub.s32 1, %v912
      %v914 = vrot.slane %v846, %v913
      %v915 = vlaneseq
      %v916 = vshrl.u32 %v915, 7
      %v917 = vsub.s32 0, %v916
      %v918 = vrot.slane %v848, %v917
      %v919 = vlaneseq
      %v920 = vshrl.u32 %v919, 7
      %v921 = vsub.s32 1, %v920
      %v922 = vrot.slane %v848, %v921
      %v923 = vlaneseq
      %v924 = vshrl.u32 %v923, 7
      %v925 = vsub.s32 0, %v924
      %v926 = vrot.slane %v850, %v925
      %v927 = vlaneseq
      %v928 = vshrl.u32 %v927, 7
      %v929 = vsub.s32 1, %v928
      %v930 = vrot.slane %v850, %v929
      %948 = vset.pattern.permute.xlu0 0
      %949 = vperm.xlu0 %948, %v851
      %v950 = vpop.permute.xlu0 %949
      %953 = vset.pattern.permute.xlu0 0
      %954 = vperm.xlu0 %953, %v852
      %v955 = vpop.permute.xlu0 %954
      %958 = vset.pattern.permute.xlu0 0
      %959 = vperm.xlu0 %958, %v853
      %v960 = vpop.permute.xlu0 %959
      %963 = vset.pattern.permute.xlu0 0
      %964 = vperm.xlu0 %963, %v854
      %v965 = vpop.permute.xlu0 %964
      %968 = vset.pattern.permute.xlu0 0
      %969 = vperm.xlu0 %968, %v855
      %v970 = vpop.permute.xlu0 %969
      %973 = vset.pattern.permute.xlu0 0
      %974 = vperm.xlu0 %973, %v856
      %v975 = vpop.permute.xlu0 %974
      %978 = vset.pattern.permute.xlu0 0
      %979 = vperm.xlu0 %978, %v857
      %v980 = vpop.permute.xlu0 %979
      %983 = vset.pattern.permute.xlu0 0
      %984 = vperm.xlu0 %983, %v858
      %v985 = vpop.permute.xlu0 %984
      %988 = vset.pattern.permute.xlu0 0
      %989 = vperm.xlu0 %988, %v859
      %v990 = vpop.permute.xlu0 %989
      %993 = vset.pattern.permute.xlu0 0
      %994 = vperm.xlu0 %993, %v860
      %v995 = vpop.permute.xlu0 %994
      %998 = vset.pattern.permute.xlu0 0
      %999 = vperm.xlu0 %998, %v861
      %v1000 = vpop.permute.xlu0 %999
      %1003 = vset.pattern.permute.xlu0 0
      %1004 = vperm.xlu0 %1003, %v862
      %v1005 = vpop.permute.xlu0 %1004
      %1008 = vset.pattern.permute.xlu0 0
      %1009 = vperm.xlu0 %1008, %v863
      %v1010 = vpop.permute.xlu0 %1009
      %1013 = vset.pattern.permute.xlu0 0
      %1014 = vperm.xlu0 %1013, %v864
      %v1015 = vpop.permute.xlu0 %1014
      %1018 = vset.pattern.permute.xlu0 0
      %1019 = vperm.xlu0 %1018, %v865
      %v1020 = vpop.permute.xlu0 %1019
      %1023 = vset.pattern.permute.xlu0 0
      %1024 = vperm.xlu0 %1023, %v866
      %v1025 = vpop.permute.xlu0 %1024
      %v1027 = vmul.f32 %v870, %v950
      %v1028 = vmul.f32 %v874, %v950
      %v1029 = vmul.f32 %v870, %v955
      %v1030 = vmul.f32 %v874, %v955
      %v1031 = vmul.f32 %v878, %v960
      %v1032 = vmul.f32 %v882, %v960
      %v1033 = vmul.f32 %v878, %v965
      %v1034 = vmul.f32 %v882, %v965
      %v1035 = vmul.f32 %v886, %v970
      %v1036 = vmul.f32 %v890, %v970
      %v1037 = vmul.f32 %v886, %v975
      %v1038 = vmul.f32 %v890, %v975
      %v1039 = vmul.f32 %v894, %v980
      %v1040 = vmul.f32 %v898, %v980
      %v1041 = vmul.f32 %v894, %v985
      %v1042 = vmul.f32 %v898, %v985
      %v1043 = vmul.f32 %v902, %v990
      %v1044 = vmul.f32 %v906, %v990
      %v1045 = vmul.f32 %v902, %v995
      %v1046 = vmul.f32 %v906, %v995
      %v1047 = vmul.f32 %v910, %v1000
      %v1048 = vmul.f32 %v914, %v1000
      %v1049 = vmul.f32 %v910, %v1005
      %v1050 = vmul.f32 %v914, %v1005
      %v1051 = vmul.f32 %v918, %v1010
      %v1052 = vmul.f32 %v922, %v1010
      %v1053 = vmul.f32 %v918, %v1015
      %v1054 = vmul.f32 %v922, %v1015
      %v1055 = vmul.f32 %v926, %v1020
      %v1056 = vmul.f32 %v930, %v1020
      %v1057 = vmul.f32 %v926, %v1025
      %v1058 = vmul.f32 %v930, %v1025
      %1059 = vst [vmem:[#allocation4] sm:$0xff] %v1027
      %1060 = vst [vmem:[#allocation4 + $0x8] sm:$0xff] %v1028
      %1061 = vst [vmem:[#allocation4 + $0x10] sm:$0xff] %v1029
      %1062 = vst [vmem:[#allocation4 + $0x18] sm:$0xff] %v1030
      %1063 = vst [vmem:[#allocation4 + $0x20] sm:$0xff] %v1031
      %1064 = vst [vmem:[#allocation4 + $0x28] sm:$0xff] %v1032
      %1065 = vst [vmem:[#allocation4 + $0x30] sm:$0xff] %v1033
      %1066 = vst [vmem:[#allocation4 + $0x38] sm:$0xff] %v1034
      %1067 = vst [vmem:[#allocation4 + $0x40] sm:$0xff] %v1035
      %1068 = vst [vmem:[#allocation4 + $0x48] sm:$0xff] %v1036
      %1069 = vst [vmem:[#allocation4 + $0x50] sm:$0xff] %v1037
      %1070 = vst [vmem:[#allocation4 + $0x58] sm:$0xff] %v1038
      %1071 = vst [vmem:[#allocation4 + $0x60] sm:$0xff] %v1039
      %1072 = vst [vmem:[#allocation4 + $0x68] sm:$0xff] %v1040
      %1073 = vst [vmem:[#allocation4 + $0x70] sm:$0xff] %v1041
      %1074 = vst [vmem:[#allocation4 + $0x78] sm:$0xff] %v1042
      %1075 = vst [vmem:[#allocation4 + $0x80] sm:$0xff] %v1043
      %1076 = vst [vmem:[#allocation4 + $0x88] sm:$0xff] %v1044
      %1077 = vst [vmem:[#allocation4 + $0x90] sm:$0xff] %v1045
      %1078 = vst [vmem:[#allocation4 + $0x98] sm:$0xff] %v1046
      %1079 = vst [vmem:[#allocation4 + $0xa0] sm:$0xff] %v1047
      %1080 = vst [vmem:[#allocation4 + $0xa8] sm:$0xff] %v1048
      %1081 = vst [vmem:[#allocation4 + $0xb0] sm:$0xff] %v1049
      %1082 = vst [vmem:[#allocation4 + $0xb8] sm:$0xff] %v1050
      %1083 = vst [vmem:[#allocation4 + $0xc0] sm:$0xff] %v1051
      %1084 = vst [vmem:[#allocation4 + $0xc8] sm:$0xff] %v1052
      %1085 = vst [vmem:[#allocation4 + $0xd0] sm:$0xff] %v1053
      %1086 = vst [vmem:[#allocation4 + $0xd8] sm:$0xff] %v1054
      %1087 = vst [vmem:[#allocation4 + $0xe0] sm:$0xff] %v1055
      %1088 = vst [vmem:[#allocation4 + $0xe8] sm:$0xff] %v1056
      %1089 = vst [vmem:[#allocation4 + $0xf0] sm:$0xff] %v1057
      %1090 = vst [vmem:[#allocation4 + $0xf8] sm:$0xff] %v1058
      %v1091 = vld [vmem:[#allocation2] sm:$0xff]
      %v1092 = vld [vmem:[#allocation2 + $0x8] sm:$0xff]
      %v1093 = vld [vmem:[#allocation2 + $0x10] sm:$0xff]
      %v1094 = vld [vmem:[#allocation2 + $0x18] sm:$0xff]
      %s1095 = scalar_lea.vmem [#allocation3], 224
      %v1096 = vld [vmem:[%s1095] sm:$0xff]
      %v1097 = vld [vmem:[%s1095 + $0x8] sm:$0xff]
      %v1098 = vld [vmem:[%s1095 + $0x10] sm:$0xff]
      %v1099 = vld [vmem:[%s1095 + $0x18] sm:$0xff]
      %v1100 = vmul.f32 %v1096, %v1091
      %v1101 = vmul.f32 %v1097, %v1092
      %v1102 = vmul.f32 %v1098, %v1093
      %v1103 = vmul.f32 %v1099, %v1094
      %s1104 = scalar_lea.vmem [#allocation4], 224
      %v1105 = vld [vmem:[%s1104] sm:$0xff]
      %v1106 = vld [vmem:[%s1104 + $0x8] sm:$0xff]
      %v1107 = vld [vmem:[%s1104 + $0x10] sm:$0xff]
      %v1108 = vld [vmem:[%s1104 + $0x18] sm:$0xff]
      %v1109 = vadd.f32 %v1100, %v1105
      %v1110 = vadd.f32 %v1101, %v1106
      %v1111 = vadd.f32 %v1102, %v1107
      %v1112 = vadd.f32 %v1103, %v1108
      %1113 = vst [vmem:[%s1104] sm:$0xff] %v1109
      %1114 = vst [vmem:[%s1104 + $0x8] sm:$0xff] %v1110
      %1115 = vst [vmem:[%s1104 + $0x10] sm:$0xff] %v1111
      %1116 = vst [vmem:[%s1104 + $0x18] sm:$0xff] %v1112
      %s1117 = scalar_lea.vmem [#allocation3], 192
      %v1118 = vld [vmem:[%s1117] sm:$0xff]
      %v1119 = vld [vmem:[%s1117 + $0x8] sm:$0xff]
      %v1120 = vld [vmem:[%s1117 + $0x10] sm:$0xff]
      %v1121 = vld [vmem:[%s1117 + $0x18] sm:$0xff]
      %v1122 = vmul.f32 %v1118, %v1109
      %v1123 = vmul.f32 %v1119, %v1110
      %v1124 = vmul.f32 %v1120, %v1111
      %v1125 = vmul.f32 %v1121, %v1112
      %s1126 = scalar_lea.vmem [#allocation4], 192
      %v1127 = vld [vmem:[%s1126] sm:$0xff]
      %v1128 = vld [vmem:[%s1126 + $0x8] sm:$0xff]
      %v1129 = vld [vmem:[%s1126 + $0x10] sm:$0xff]
      %v1130 = vld [vmem:[%s1126 + $0x18] sm:$0xff]
      %v1131 = vadd.f32 %v1122, %v1127
      %v1132 = vadd.f32 %v1123, %v1128
      %v1133 = vadd.f32 %v1124, %v1129
      %v1134 = vadd.f32 %v1125, %v1130
      %1135 = vst [vmem:[%s1126] sm:$0xff] %v1131
      %1136 = vst [vmem:[%s1126 + $0x8] sm:$0xff] %v1132
      %1137 = vst [vmem:[%s1126 + $0x10] sm:$0xff] %v1133
      %1138 = vst [vmem:[%s1126 + $0x18] sm:$0xff] %v1134
      %s1139 = scalar_lea.vmem [#allocation3], 160
      %v1140 = vld [vmem:[%s1139] sm:$0xff]
      %v1141 = vld [vmem:[%s1139 + $0x8] sm:$0xff]
      %v1142 = vld [vmem:[%s1139 + $0x10] sm:$0xff]
      %v1143 = vld [vmem:[%s1139 + $0x18] sm:$0xff]
      %v1144 = vmul.f32 %v1140, %v1131
      %v1145 = vmul.f32 %v1141, %v1132
      %v1146 = vmul.f32 %v1142, %v1133
      %v1147 = vmul.f32 %v1143, %v1134
      %s1148 = scalar_lea.vmem [#allocation4], 160
      %v1149 = vld [vmem:[%s1148] sm:$0xff]
      %v1150 = vld [vmem:[%s1148 + $0x8] sm:$0xff]
      %v1151 = vld [vmem:[%s1148 + $0x10] sm:$0xff]
      %v1152 = vld [vmem:[%s1148 + $0x18] sm:$0xff]
      %v1153 = vadd.f32 %v1144, %v1149
      %v1154 = vadd.f32 %v1145, %v1150
      %v1155 = vadd.f32 %v1146, %v1151
      %v1156 = vadd.f32 %v1147, %v1152
      %1157 = vst [vmem:[%s1148] sm:$0xff] %v1153
      %1158 = vst [vmem:[%s1148 + $0x8] sm:$0xff] %v1154
      %1159 = vst [vmem:[%s1148 + $0x10] sm:$0xff] %v1155
      %1160 = vst [vmem:[%s1148 + $0x18] sm:$0xff] %v1156
      %s1161 = scalar_lea.vmem [#allocation3], 128
      %v1162 = vld [vmem:[%s1161] sm:$0xff]
      %v1163 = vld [vmem:[%s1161 + $0x8] sm:$0xff]
      %v1164 = vld [vmem:[%s1161 + $0x10] sm:$0xff]
      %v1165 = vld [vmem:[%s1161 + $0x18] sm:$0xff]
      %v1166 = vmul.f32 %v1162, %v1153
      %v1167 = vmul.f32 %v1163, %v1154
      %v1168 = vmul.f32 %v1164, %v1155
      %v1169 = vmul.f32 %v1165, %v1156
      %s1170 = scalar_lea.vmem [#allocation4], 128
      %v1171 = vld [vmem:[%s1170] sm:$0xff]
      %v1172 = vld [vmem:[%s1170 + $0x8] sm:$0xff]
      %v1173 = vld [vmem:[%s1170 + $0x10] sm:$0xff]
      %v1174 = vld [vmem:[%s1170 + $0x18] sm:$0xff]
      %v1175 = vadd.f32 %v1166, %v1171
      %v1176 = vadd.f32 %v1167, %v1172
      %v1177 = vadd.f32 %v1168, %v1173
      %v1178 = vadd.f32 %v1169, %v1174
      %1179 = vst [vmem:[%s1170] sm:$0xff] %v1175
      %1180 = vst [vmem:[%s1170 + $0x8] sm:$0xff] %v1176
      %1181 = vst [vmem:[%s1170 + $0x10] sm:$0xff] %v1177
      %1182 = vst [vmem:[%s1170 + $0x18] sm:$0xff] %v1178
      %s1183 = scalar_lea.vmem [#allocation3], 96
      %v1184 = vld [vmem:[%s1183] sm:$0xff]
      %v1185 = vld [vmem:[%s1183 + $0x8] sm:$0xff]
      %v1186 = vld [vmem:[%s1183 + $0x10] sm:$0xff]
      %v1187 = vld [vmem:[%s1183 + $0x18] sm:$0xff]
      %v1188 = vmul.f32 %v1184, %v1175
      %v1189 = vmul.f32 %v1185, %v1176
      %v1190 = vmul.f32 %v1186, %v1177
      %v1191 = vmul.f32 %v1187, %v1178
      %s1192 = scalar_lea.vmem [#allocation4], 96
      %v1193 = vld [vmem:[%s1192] sm:$0xff]
      %v1194 = vld [vmem:[%s1192 + $0x8] sm:$0xff]
      %v1195 = vld [vmem:[%s1192 + $0x10] sm:$0xff]
      %v1196 = vld [vmem:[%s1192 + $0x18] sm:$0xff]
      %v1197 = vadd.f32 %v1188, %v1193
      %v1198 = vadd.f32 %v1189, %v1194
      %v1199 = vadd.f32 %v1190, %v1195
      %v1200 = vadd.f32 %v1191, %v1196
      %1201 = vst [vmem:[%s1192] sm:$0xff] %v1197
      %1202 = vst [vmem:[%s1192 + $0x8] sm:$0xff] %v1198
      %1203 = vst [vmem:[%s1192 + $0x10] sm:$0xff] %v1199
      %1204 = vst [vmem:[%s1192 + $0x18] sm:$0xff] %v1200
      %s1205 = scalar_lea.vmem [#allocation3], 64
      %v1206 = vld [vmem:[%s1205] sm:$0xff]
      %v1207 = vld [vmem:[%s1205 + $0x8] sm:$0xff]
      %v1208 = vld [vmem:[%s1205 + $0x10] sm:$0xff]
      %v1209 = vld [vmem:[%s1205 + $0x18] sm:$0xff]
      %v1210 = vmul.f32 %v1206, %v1197
      %v1211 = vmul.f32 %v1207, %v1198
      %v1212 = vmul.f32 %v1208, %v1199
      %v1213 = vmul.f32 %v1209, %v1200
      %s1214 = scalar_lea.vmem [#allocation4], 64
      %v1215 = vld [vmem:[%s1214] sm:$0xff]
      %v1216 = vld [vmem:[%s1214 + $0x8] sm:$0xff]
      %v1217 = vld [vmem:[%s1214 + $0x10] sm:$0xff]
      %v1218 = vld [vmem:[%s1214 + $0x18] sm:$0xff]
      %v1219 = vadd.f32 %v1210, %v1215
      %v1220 = vadd.f32 %v1211, %v1216
      %v1221 = vadd.f32 %v1212, %v1217
      %v1222 = vadd.f32 %v1213, %v1218
      %1223 = vst [vmem:[%s1214] sm:$0xff] %v1219
      %1224 = vst [vmem:[%s1214 + $0x8] sm:$0xff] %v1220
      %1225 = vst [vmem:[%s1214 + $0x10] sm:$0xff] %v1221
      %1226 = vst [vmem:[%s1214 + $0x18] sm:$0xff] %v1222
      %s1227 = scalar_lea.vmem [#allocation3], 32
      %v1228 = vld [vmem:[%s1227] sm:$0xff]
      %v1229 = vld [vmem:[%s1227 + $0x8] sm:$0xff]
      %v1230 = vld [vmem:[%s1227 + $0x10] sm:$0xff]
      %v1231 = vld [vmem:[%s1227 + $0x18] sm:$0xff]
      %v1232 = vmul.f32 %v1228, %v1219
      %v1233 = vmul.f32 %v1229, %v1220
      %v1234 = vmul.f32 %v1230, %v1221
      %v1235 = vmul.f32 %v1231, %v1222
      %s1236 = scalar_lea.vmem [#allocation4], 32
      %v1237 = vld [vmem:[%s1236] sm:$0xff]
      %v1238 = vld [vmem:[%s1236 + $0x8] sm:$0xff]
      %v1239 = vld [vmem:[%s1236 + $0x10] sm:$0xff]
      %v1240 = vld [vmem:[%s1236 + $0x18] sm:$0xff]
      %v1241 = vadd.f32 %v1232, %v1237
      %v1242 = vadd.f32 %v1233, %v1238
      %v1243 = vadd.f32 %v1234, %v1239
      %v1244 = vadd.f32 %v1235, %v1240
      %1245 = vst [vmem:[%s1236] sm:$0xff] %v1241
      %1246 = vst [vmem:[%s1236 + $0x8] sm:$0xff] %v1242
      %1247 = vst [vmem:[%s1236 + $0x10] sm:$0xff] %v1243
      %1248 = vst [vmem:[%s1236 + $0x18] sm:$0xff] %v1244
      %v1249 = vld [vmem:[#allocation3] sm:$0xff]
      %v1250 = vld [vmem:[#allocation3 + $0x8] sm:$0xff]
      %v1251 = vld [vmem:[#allocation3 + $0x10] sm:$0xff]
      %v1252 = vld [vmem:[#allocation3 + $0x18] sm:$0xff]
      %v1253 = vmul.f32 %v1249, %v1241
      %v1254 = vmul.f32 %v1250, %v1242
      %v1255 = vmul.f32 %v1251, %v1243
      %v1256 = vmul.f32 %v1252, %v1244
      %v1257 = vld [vmem:[#allocation4] sm:$0xff]
      %v1258 = vld [vmem:[#allocation4 + $0x8] sm:$0xff]
      %v1259 = vld [vmem:[#allocation4 + $0x10] sm:$0xff]
      %v1260 = vld [vmem:[#allocation4 + $0x18] sm:$0xff]
      %v1261 = vadd.f32 %v1253, %v1257
      %v1262 = vadd.f32 %v1254, %v1258
      %v1263 = vadd.f32 %v1255, %v1259
      %v1264 = vadd.f32 %v1256, %v1260
      %1265 = vst [vmem:[#allocation4] sm:$0xff] %v1261
      %1266 = vst [vmem:[#allocation4 + $0x8] sm:$0xff] %v1262
      %1267 = vst [vmem:[#allocation4 + $0x10] sm:$0xff] %v1263
      %1268 = vst [vmem:[#allocation4 + $0x18] sm:$0xff] %v1264
      %1269 = vst [vmem:[#allocation2] sm:$0xff] %v1261
      %1270 = vst [vmem:[#allocation2 + $0x8] sm:$0xff] %v1262
      %1271 = vst [vmem:[#allocation2 + $0x10] sm:$0xff] %v1263
      %1272 = vst [vmem:[#allocation2 + $0x18] sm:$0xff] %v1264
      %v1273 = vld [vmem:[%s478] sm:$0xff]
      %v1274 = vld [vmem:[%s478 + $0x8] sm:$0xff]
      %v1275 = vld [vmem:[%s478 + $0x10] sm:$0xff]
      %v1276 = vld [vmem:[%s478 + $0x18] sm:$0xff]
      %v1277 = vld [vmem:[%s478 + $0x20] sm:$0xff]
      %v1278 = vld [vmem:[%s478 + $0x28] sm:$0xff]
      %v1279 = vld [vmem:[%s478 + $0x30] sm:$0xff]
      %v1280 = vld [vmem:[%s478 + $0x38] sm:$0xff]
      %v1281 = vld [vmem:[%s478 + $0x40] sm:$0xff]
      %v1282 = vld [vmem:[%s478 + $0x48] sm:$0xff]
      %v1283 = vld [vmem:[%s478 + $0x50] sm:$0xff]
      %v1284 = vld [vmem:[%s478 + $0x58] sm:$0xff]
      %v1285 = vld [vmem:[%s478 + $0x60] sm:$0xff]
      %v1286 = vld [vmem:[%s478 + $0x68] sm:$0xff]
      %v1287 = vld [vmem:[%s478 + $0x70] sm:$0xff]
      %v1288 = vld [vmem:[%s478 + $0x78] sm:$0xff]
      %v1289 = vld [vmem:[#allocation4] sm:$0xff]
      %v1290 = vld [vmem:[#allocation4 + $0x8] sm:$0xff]
      %v1291 = vld [vmem:[#allocation4 + $0x10] sm:$0xff]
      %v1292 = vld [vmem:[#allocation4 + $0x18] sm:$0xff]
      %v1293 = vld [vmem:[#allocation4 + $0x20] sm:$0xff]
      %v1294 = vld [vmem:[#allocation4 + $0x28] sm:$0xff]
      %v1295 = vld [vmem:[#allocation4 + $0x30] sm:$0xff]
      %v1296 = vld [vmem:[#allocation4 + $0x38] sm:$0xff]
      %v1297 = vld [vmem:[#allocation4 + $0x40] sm:$0xff]
      %v1298 = vld [vmem:[#allocation4 + $0x48] sm:$0xff]
      %v1299 = vld [vmem:[#allocation4 + $0x50] sm:$0xff]
      %v1300 = vld [vmem:[#allocation4 + $0x58] sm:$0xff]
      %v1301 = vld [vmem:[#allocation4 + $0x60] sm:$0xff]
      %v1302 = vld [vmem:[#allocation4 + $0x68] sm:$0xff]
      %v1303 = vld [vmem:[#allocation4 + $0x70] sm:$0xff]
      %v1304 = vld [vmem:[#allocation4 + $0x78] sm:$0xff]
      %v1305 = vld [vmem:[#allocation4 + $0x80] sm:$0xff]
      %v1306 = vld [vmem:[#allocation4 + $0x88] sm:$0xff]
      %v1307 = vld [vmem:[#allocation4 + $0x90] sm:$0xff]
      %v1308 = vld [vmem:[#allocation4 + $0x98] sm:$0xff]
      %v1309 = vld [vmem:[#allocation4 + $0xa0] sm:$0xff]
      %v1310 = vld [vmem:[#allocation4 + $0xa8] sm:$0xff]
      %v1311 = vld [vmem:[#allocation4 + $0xb0] sm:$0xff]
      %v1312 = vld [vmem:[#allocation4 + $0xb8] sm:$0xff]
      %v1313 = vld [vmem:[#allocation4 + $0xc0] sm:$0xff]
      %v1314 = vld [vmem:[#allocation4 + $0xc8] sm:$0xff]
      %v1315 = vld [vmem:[#allocation4 + $0xd0] sm:$0xff]
      %v1316 = vld [vmem:[#allocation4 + $0xd8] sm:$0xff]
      %v1317 = vld [vmem:[#allocation4 + $0xe0] sm:$0xff]
      %v1318 = vld [vmem:[#allocation4 + $0xe8] sm:$0xff]
      %v1319 = vld [vmem:[#allocation4 + $0xf0] sm:$0xff]
      %v1320 = vld [vmem:[#allocation4 + $0xf8] sm:$0xff]
      %1322 = vset.pattern.permute.xlu0 0
      %1323 = vperm.xlu0 %1322, %v1273
      %v1324 = vpop.permute.xlu0 %1323
      %1327 = vset.pattern.permute.xlu0 0
      %1328 = vperm.xlu0 %1327, %v1274
      %v1329 = vpop.permute.xlu0 %1328
      %1332 = vset.pattern.permute.xlu0 0
      %1333 = vperm.xlu0 %1332, %v1275
      %v1334 = vpop.permute.xlu0 %1333
      %1337 = vset.pattern.permute.xlu0 0
      %1338 = vperm.xlu0 %1337, %v1276
      %v1339 = vpop.permute.xlu0 %1338
      %1342 = vset.pattern.permute.xlu0 0
      %1343 = vperm.xlu0 %1342, %v1277
      %v1344 = vpop.permute.xlu0 %1343
      %1347 = vset.pattern.permute.xlu0 0
      %1348 = vperm.xlu0 %1347, %v1278
      %v1349 = vpop.permute.xlu0 %1348
      %1352 = vset.pattern.permute.xlu0 0
      %1353 = vperm.xlu0 %1352, %v1279
      %v1354 = vpop.permute.xlu0 %1353
      %1357 = vset.pattern.permute.xlu0 0
      %1358 = vperm.xlu0 %1357, %v1280
      %v1359 = vpop.permute.xlu0 %1358
      %1362 = vset.pattern.permute.xlu0 0
      %1363 = vperm.xlu0 %1362, %v1281
      %v1364 = vpop.permute.xlu0 %1363
      %1367 = vset.pattern.permute.xlu0 0
      %1368 = vperm.xlu0 %1367, %v1282
      %v1369 = vpop.permute.xlu0 %1368
      %1372 = vset.pattern.permute.xlu0 0
      %1373 = vperm.xlu0 %1372, %v1283
      %v1374 = vpop.permute.xlu0 %1373
      %1377 = vset.pattern.permute.xlu0 0
      %1378 = vperm.xlu0 %1377, %v1284
      %v1379 = vpop.permute.xlu0 %1378
      %1382 = vset.pattern.permute.xlu0 0
      %1383 = vperm.xlu0 %1382, %v1285
      %v1384 = vpop.permute.xlu0 %1383
      %1387 = vset.pattern.permute.xlu0 0
      %1388 = vperm.xlu0 %1387, %v1286
      %v1389 = vpop.permute.xlu0 %1388
      %1392 = vset.pattern.permute.xlu0 0
      %1393 = vperm.xlu0 %1392, %v1287
      %v1394 = vpop.permute.xlu0 %1393
      %1397 = vset.pattern.permute.xlu0 0
      %1398 = vperm.xlu0 %1397, %v1288
      %v1399 = vpop.permute.xlu0 %1398
      %v1401 = vmul.f32 %v1324, %v1289
      %v1402 = vmul.f32 %v1324, %v1290
      %v1403 = vmul.f32 %v1329, %v1291
      %v1404 = vmul.f32 %v1329, %v1292
      %v1405 = vmul.f32 %v1334, %v1293
      %v1406 = vmul.f32 %v1334, %v1294
      %v1407 = vmul.f32 %v1339, %v1295
      %v1408 = vmul.f32 %v1339, %v1296
      %v1409 = vmul.f32 %v1344, %v1297
      %v1410 = vmul.f32 %v1344, %v1298
      %v1411 = vmul.f32 %v1349, %v1299
      %v1412 = vmul.f32 %v1349, %v1300
      %v1413 = vmul.f32 %v1354, %v1301
      %v1414 = vmul.f32 %v1354, %v1302
      %v1415 = vmul.f32 %v1359, %v1303
      %v1416 = vmul.f32 %v1359, %v1304
      %v1417 = vmul.f32 %v1364, %v1305
      %v1418 = vmul.f32 %v1364, %v1306
      %v1419 = vmul.f32 %v1369, %v1307
      %v1420 = vmul.f32 %v1369, %v1308
      %v1421 = vmul.f32 %v1374, %v1309
      %v1422 = vmul.f32 %v1374, %v1310
      %v1423 = vmul.f32 %v1379, %v1311
      %v1424 = vmul.f32 %v1379, %v1312
      %v1425 = vmul.f32 %v1384, %v1313
      %v1426 = vmul.f32 %v1384, %v1314
      %v1427 = vmul.f32 %v1389, %v1315
      %v1428 = vmul.f32 %v1389, %v1316
      %v1429 = vmul.f32 %v1394, %v1317
      %v1430 = vmul.f32 %v1394, %v1318
      %v1431 = vmul.f32 %v1399, %v1319
      %v1432 = vmul.f32 %v1399, %v1320
      %v1433 = vadd.f32 %v1401, %v1403
      %v1434 = vrot.slane %v1433, 4
      %v1435 = vadd.f32 %v1433, %v1434
      %v1436 = vrot.slane %v1435, 2
      %v1437 = vadd.f32 %v1435, %v1436
      %v1438 = vrot.slane %v1437, 1
      %v1439 = vadd.f32 %v1437, %v1438
      %v1440 = vadd.f32 %v1402, %v1404
      %v1441 = vrot.slane %v1440, 4
      %v1442 = vadd.f32 %v1440, %v1441
      %v1443 = vrot.slane %v1442, 2
      %v1444 = vadd.f32 %v1442, %v1443
      %v1445 = vrot.slane %v1444, 1
      %v1446 = vadd.f32 %v1444, %v1445
      %v1447 = vadd.f32 %v1405, %v1407
      %v1448 = vrot.slane %v1447, 4
      %v1449 = vadd.f32 %v1447, %v1448
      %v1450 = vrot.slane %v1449, 2
      %v1451 = vadd.f32 %v1449, %v1450
      %v1452 = vrot.slane %v1451, 1
      %v1453 = vadd.f32 %v1451, %v1452
      %v1454 = vadd.f32 %v1406, %v1408
      %v1455 = vrot.slane %v1454, 4
      %v1456 = vadd.f32 %v1454, %v1455
      %v1457 = vrot.slane %v1456, 2
      %v1458 = vadd.f32 %v1456, %v1457
      %v1459 = vrot.slane %v1458, 1
      %v1460 = vadd.f32 %v1458, %v1459
      %v1461 = vadd.f32 %v1409, %v1411
      %v1462 = vrot.slane %v1461, 4
      %v1463 = vadd.f32 %v1461, %v1462
      %v1464 = vrot.slane %v1463, 2
      %v1465 = vadd.f32 %v1463, %v1464
      %v1466 = vrot.slane %v1465, 1
      %v1467 = vadd.f32 %v1465, %v1466
      %v1468 = vadd.f32 %v1410, %v1412
      %v1469 = vrot.slane %v1468, 4
      %v1470 = vadd.f32 %v1468, %v1469
      %v1471 = vrot.slane %v1470, 2
      %v1472 = vadd.f32 %v1470, %v1471
      %v1473 = vrot.slane %v1472, 1
      %v1474 = vadd.f32 %v1472, %v1473
      %v1475 = vadd.f32 %v1413, %v1415
      %v1476 = vrot.slane %v1475, 4
      %v1477 = vadd.f32 %v1475, %v1476
      %v1478 = vrot.slane %v1477, 2
      %v1479 = vadd.f32 %v1477, %v1478
      %v1480 = vrot.slane %v1479, 1
      %v1481 = vadd.f32 %v1479, %v1480
      %v1482 = vadd.f32 %v1414, %v1416
      %v1483 = vrot.slane %v1482, 4
      %v1484 = vadd.f32 %v1482, %v1483
      %v1485 = vrot.slane %v1484, 2
      %v1486 = vadd.f32 %v1484, %v1485
      %v1487 = vrot.slane %v1486, 1
      %v1488 = vadd.f32 %v1486, %v1487
      %v1489 = vadd.f32 %v1417, %v1419
      %v1490 = vrot.slane %v1489, 4
      %v1491 = vadd.f32 %v1489, %v1490
      %v1492 = vrot.slane %v1491, 2
      %v1493 = vadd.f32 %v1491, %v1492
      %v1494 = vrot.slane %v1493, 1
      %v1495 = vadd.f32 %v1493, %v1494
      %v1496 = vadd.f32 %v1418, %v1420
      %v1497 = vrot.slane %v1496, 4
      %v1498 = vadd.f32 %v1496, %v1497
      %v1499 = vrot.slane %v1498, 2
      %v1500 = vadd.f32 %v1498, %v1499
      %v1501 = vrot.slane %v1500, 1
      %v1502 = vadd.f32 %v1500, %v1501
      %v1503 = vadd.f32 %v1421, %v1423
      %v1504 = vrot.slane %v1503, 4
      %v1505 = vadd.f32 %v1503, %v1504
      %v1506 = vrot.slane %v1505, 2
      %v1507 = vadd.f32 %v1505, %v1506
      %v1508 = vrot.slane %v1507, 1
      %v1509 = vadd.f32 %v1507, %v1508
      %v1510 = vadd.f32 %v1422, %v1424
      %v1511 = vrot.slane %v1510, 4
      %v1512 = vadd.f32 %v1510, %v1511
      %v1513 = vrot.slane %v1512, 2
      %v1514 = vadd.f32 %v1512, %v1513
      %v1515 = vrot.slane %v1514, 1
      %v1516 = vadd.f32 %v1514, %v1515
      %v1517 = vadd.f32 %v1425, %v1427
      %v1518 = vrot.slane %v1517, 4
      %v1519 = vadd.f32 %v1517, %v1518
      %v1520 = vrot.slane %v1519, 2
      %v1521 = vadd.f32 %v1519, %v1520
      %v1522 = vrot.slane %v1521, 1
      %v1523 = vadd.f32 %v1521, %v1522
      %v1524 = vadd.f32 %v1426, %v1428
      %v1525 = vrot.slane %v1524, 4
      %v1526 = vadd.f32 %v1524, %v1525
      %v1527 = vrot.slane %v1526, 2
      %v1528 = vadd.f32 %v1526, %v1527
      %v1529 = vrot.slane %v1528, 1
      %v1530 = vadd.f32 %v1528, %v1529
      %v1531 = vadd.f32 %v1429, %v1431
      %v1532 = vrot.slane %v1531, 4
      %v1533 = vadd.f32 %v1531, %v1532
      %v1534 = vrot.slane %v1533, 2
      %v1535 = vadd.f32 %v1533, %v1534
      %v1536 = vrot.slane %v1535, 1
      %v1537 = vadd.f32 %v1535, %v1536
      %v1538 = vadd.f32 %v1430, %v1432
      %v1539 = vrot.slane %v1538, 4
      %v1540 = vadd.f32 %v1538, %v1539
      %v1541 = vrot.slane %v1540, 2
      %v1542 = vadd.f32 %v1540, %v1541
      %v1543 = vrot.slane %v1542, 1
      %v1544 = vadd.f32 %v1542, %v1543
      %v1545 = vld [vmem:[%s6] sm:$0x3]
      %v1547 = vlaneseq
      %v1548 = vshrl.u32 %v1547, 7
      %v1549 = vsub.s32 0, %v1548
      %v1550 = vrot.slane %v1545, %v1549
      %v1551 = vlaneseq
      %v1552 = vshrl.u32 %v1551, 7
      %v1553 = vsub.s32 1, %v1552
      %v1554 = vrot.slane %v1545, %v1553
      %v1557 = vmul.f32 %v1550, %v513
      %v1558 = vmul.f32 %v1554, %v514
      %v1561 = vrot.slane %v1557, 1
      %v1562 = vrot.slane %v1558, 1
      %v1563 = vrot.slane %v1557, 2
      %v1564 = vrot.slane %v1558, 2
      %v1565 = vrot.slane %v1557, 3
      %v1566 = vrot.slane %v1558, 3
      %v1567 = vrot.slane %v1557, 4
      %v1568 = vrot.slane %v1558, 4
      %v1569 = vrot.slane %v1557, 5
      %v1570 = vrot.slane %v1558, 5
      %v1571 = vrot.slane %v1557, 6
      %v1572 = vrot.slane %v1558, 6
      %v1573 = vrot.slane %v1557, 7
      %v1574 = vrot.slane %v1558, 7
      %v1591 = vadd.f32 %v1439, %v1557
      %v1592 = vadd.f32 %v1446, %v1558
      %v1593 = vadd.f32 %v1453, %v1561
      %v1594 = vadd.f32 %v1460, %v1562
      %v1595 = vadd.f32 %v1467, %v1563
      %v1596 = vadd.f32 %v1474, %v1564
      %v1597 = vadd.f32 %v1481, %v1565
      %v1598 = vadd.f32 %v1488, %v1566
      %v1599 = vadd.f32 %v1495, %v1567
      %v1600 = vadd.f32 %v1502, %v1568
      %v1601 = vadd.f32 %v1509, %v1569
      %v1602 = vadd.f32 %v1516, %v1570
      %v1603 = vadd.f32 %v1523, %v1571
      %v1604 = vadd.f32 %v1530, %v1572
      %v1605 = vadd.f32 %v1537, %v1573
      %v1606 = vadd.f32 %v1544, %v1574
      %v1607 = vld [vmem:[%s491] sm:$0xff]
      %v1608 = vld [vmem:[%s491 + $0x8] sm:$0xff]
      %v1609 = vsub.f32 0.0, %v1607
      %v1610 = vsub.f32 0.0, %v1608
      %v1611 = vmul.f32 %v1609, 1.442695
      %v1612 = vpow.pop %v1611
      %v1613 = vmul.f32 %v1610, 1.442695
      %v1614 = vpow.pop %v1613
      %v1615 = vadd.f32 %v1612, 1.0
      %v1616 = vadd.f32 %v1614, 1.0
      %v1617 = vrcp.pop %v1615
      %v1618 = vmul.f32 1.0, %v1617
      %v1619 = vrcp.pop %v1616
      %v1620 = vmul.f32 1.0, %v1619
      %v1621 = vmul.f32 %v1607, %v1618
      %v1622 = vmul.f32 %v1608, %v1620
      %v1625 = vrot.slane %v1621, 1
      %v1626 = vrot.slane %v1622, 1
      %v1627 = vrot.slane %v1621, 2
      %v1628 = vrot.slane %v1622, 2
      %v1629 = vrot.slane %v1621, 3
      %v1630 = vrot.slane %v1622, 3
      %v1631 = vrot.slane %v1621, 4
      %v1632 = vrot.slane %v1622, 4
      %v1633 = vrot.slane %v1621, 5
      %v1634 = vrot.slane %v1622, 5
      %v1635 = vrot.slane %v1621, 6
      %v1636 = vrot.slane %v1622, 6
      %v1637 = vrot.slane %v1621, 7
      %v1638 = vrot.slane %v1622, 7
      %v1655 = vmul.f32 %v1591, %v1621
      %v1656 = vmul.f32 %v1592, %v1622
      %v1657 = vmul.f32 %v1593, %v1625
      %v1658 = vmul.f32 %v1594, %v1626
      %v1659 = vmul.f32 %v1595, %v1627
      %v1660 = vmul.f32 %v1596, %v1628
      %v1661 = vmul.f32 %v1597, %v1629
      %v1662 = vmul.f32 %v1598, %v1630
      %v1663 = vmul.f32 %v1599, %v1631
      %v1664 = vmul.f32 %v1600, %v1632
      %v1665 = vmul.f32 %v1601, %v1633
      %v1666 = vmul.f32 %v1602, %v1634
      %v1667 = vmul.f32 %v1603, %v1635
      %v1668 = vmul.f32 %v1604, %v1636
      %v1669 = vmul.f32 %v1605, %v1637
      %v1670 = vmul.f32 %v1606, %v1638
      %v1687 = vrot.slane %v1657, 7
      %vm1688 = vcmask 1041409
      %v1689 = vsel %vm1688, %v1687, %v1655
      %v1690 = vrot.slane %v1659, 6
      %vm1691 = vcmask 1042434
      %v1692 = vsel %vm1691, %v1690, %v1689
      %v1693 = vrot.slane %v1661, 5
      %vm1694 = vcmask 1043459
      %v1695 = vsel %vm1694, %v1693, %v1692
      %v1696 = vrot.slane %v1663, 4
      %vm1697 = vcmask 1044484
      %v1698 = vsel %vm1697, %v1696, %v1695
      %v1699 = vrot.slane %v1665, 3
      %vm1700 = vcmask 1045509
      %v1701 = vsel %vm1700, %v1699, %v1698
      %v1702 = vrot.slane %v1667, 2
      %vm1703 = vcmask 1046534
      %v1704 = vsel %vm1703, %v1702, %v1701
      %v1705 = vrot.slane %v1669, 1
      %vm1706 = vcmask 1047559
      %v1707 = vsel %vm1706, %v1705, %v1704
      %v1708 = vrot.slane %v1658, 7
      %v1709 = vsel %vm1688, %v1708, %v1656
      %v1710 = vrot.slane %v1660, 6
      %v1711 = vsel %vm1691, %v1710, %v1709
      %v1712 = vrot.slane %v1662, 5
      %v1713 = vsel %vm1694, %v1712, %v1711
      %v1714 = vrot.slane %v1664, 4
      %v1715 = vsel %vm1697, %v1714, %v1713
      %v1716 = vrot.slane %v1666, 3
      %v1717 = vsel %vm1700, %v1716, %v1715
      %v1718 = vrot.slane %v1668, 2
      %v1719 = vsel %vm1703, %v1718, %v1717
      %v1720 = vrot.slane %v1670, 1
      %v1721 = vsel %vm1706, %v1720, %v1719
      %1724 = vst [vmem:[%s502] sm:$0xff] %v1707
      %1725 = vst [vmem:[%s502 + $0x8] sm:$0xff] %v1721
      %s1726 = ssub.s32 0, %s23
      %p1727 = scmp.lt.s32.totalorder %s22, 1
      %s1728 = scalar_select %p1727, %s22, 1
      %p1729 = scmp.lt.s32.totalorder %s1726, 0
      %s1730 = scalar_select %p1729, %s1726, 0
      %s1731 = smul.addr %s1730, 2
      %s1732 = smul.addr %s1728, 2
      %s1733 = sadd.s32 %s1731, %s1732
      %s1734 = smul.addr %s1733, 8
      %s1735 = scalar_lea.vmem %s7, %s1734
      // Predicated region
      $region53: #{vision_mamba_forward.28} parent=47 // pred_check
        %p1736 = pneg %p244
      $region54: #{vision_mamba_forward.28} parent=47 // pred_check_branch
        %1738 = sbr.rel (%p1736) target = $region56
      $region55: #{vision_mamba_forward.28} parent=47 // pred_region
        %s1739 = ssub.s32 0, %s23
      $region56: #{vision_mamba_forward.28} parent=47 // pred_fallthru
        _
    $region48: #{vision_mamba_forward.28} parent=5 // pred_fallthru
      _
    %p1740 = scmp.le.s32.totalorder 2, %s13
    // Predicated region
    $region57: #{vision_mamba_forward.28} parent=5 // pred_check
      %p1741 = pneg %p1740
    $region58: #{vision_mamba_forward.28} parent=5 // pred_check_branch
      %1743 = sbr.rel (%p1741) target = $region60
    $region59: #{vision_mamba_forward.28} parent=5 // pred_region
      %s1744 = ssub.s32 %s13, 2
      // Predicated region
      $region61: #{vision_mamba_forward.28} parent=59 // pred_check
        %p1745 = pneg %p250
      $region62: #{vision_mamba_forward.28} parent=59 // pred_check_branch
        %1747 = sbr.rel (%p1745) target = $region64
      $region63: #{vision_mamba_forward.28} parent=59 // pred_region
        %s1748 = ssub.s32 0, %s25
        %p1749 = scmp.lt.s32.totalorder %s24, 1
        %s1750 = scalar_select %p1749, %s24, 1
        %p1751 = scmp.lt.s32.totalorder %s1748, 0
        %s1752 = scalar_select %p1751, %s1748, 0
        %s1753 = smul.addr %s1752, 2
        %s1754 = smul.addr %s1750, 2
        %s1755 = sadd.s32 %s1753, %s1754
        %s1756 = smul.addr %s1755, 8
        %s1757 = scalar_lea.vmem %s7, %s1756
      $region64: #{vision_mamba_forward.28} parent=59 // pred_fallthru
        _
    $region60: #{vision_mamba_forward.28} parent=5 // pred_fallthru
      _
  $region6: #{vision_mamba_forward.28} parent=0 // loop_footer
    %s17 = sadd.s32 1, %s13
  $region7: #{vision_mamba_forward.28} parent=0 // loop_footer_branch
    %12 = sbr.rel target = $region3
  $region8: #{vision_mamba_forward.28} parent=0 // loop_exit
    _

// kernel: vision_mamba_forward.30
$region0: #{vision_mamba_forward.30}
  #allocation0 [shape = 'u32[]', space=smem, size = 0x4, offset = 0x4, fixed_abs, tag = 'smem constant byte address 0x4 - core index']
  #allocation1 [shape = 'u32[144,128]{1,0:T(1,128)}', space=vmem, size = 0x12000, scoped, tag = 'internal scratch']
  %s0 = inlined_call_operand.vmem [shape: f32[16,128], index: 0, kind: input, shape index: {}]
  %s1 = inlined_call_operand.vmem [shape: f32[16,128], index: 1, kind: input, shape index: {}]
  %s2 = inlined_call_operand.vmem [shape: f32[1,128], index: 2, kind: input, shape index: {}]
  %s3 = inlined_call_operand.vmem [shape: bf16[16,128], index: 3, kind: output, shape index: {0}]
  %s4 = inlined_call_operand.vmem [shape: f32[16,128], index: 4, kind: output, shape index: {1}]
  %5 = xla_tuple %s3, %s4
  %s6 = sld [smem:[#allocation0]]
  $region30: #{vision_mamba_forward.30} parent=0
    _
  %s8 = ssub.s32 1, %s6
  %s9 = scalar_select 0, %s8, %s6
  // Predicated region
  $region2: #{vision_mamba_forward.30} parent=0 // pred_check
    _
  $region3: #{vision_mamba_forward.30} parent=0 // pred_check_branch
    %11 = sbr.rel (0) target = $region5
  $region4: #{vision_mamba_forward.30} parent=0 // pred_region
    _
  $region5: #{vision_mamba_forward.30} parent=0 // pred_fallthru
    _
  // Predicated region
  $region6: #{vision_mamba_forward.30} parent=0 // pred_check
    _
  $region7: #{vision_mamba_forward.30} parent=0 // pred_check_branch
    %13 = sbr.rel (0) target = $region9
  $region8: #{vision_mamba_forward.30} parent=0 // pred_region
    _
  $region9: #{vision_mamba_forward.30} parent=0 // pred_fallthru
    _
  // Predicated region
  $region10: #{vision_mamba_forward.30} parent=0 // pred_check
    _
  $region11: #{vision_mamba_forward.30} parent=0 // pred_check_branch
    %15 = sbr.rel (0) target = $region13
  $region12: #{vision_mamba_forward.30} parent=0 // pred_region
    _
  $region13: #{vision_mamba_forward.30} parent=0 // pred_fallthru
    _
  %v16 = vld [vmem:[%s0] sm:$0xff]
  %v17 = vld [vmem:[%s0 + $0x8] sm:$0xff]
  %v18 = vld [vmem:[%s1] sm:$0xff]
  %v19 = vld [vmem:[%s1 + $0x8] sm:$0xff]
  %v20 = vadd.f32 %v16, %v18
  %v21 = vadd.f32 %v17, %v19
  %v22 = vmul.f32 %v20, %v20
  %v23 = vmul.f32 %v21, %v21
  %24 = vadd.xlane.f32.xlu0 %v22
  %v25 = vpop.xlane.xlu0 %24
  %26 = vadd.xlane.f32.xlu0 %v23
  %v27 = vpop.xlane.xlu0 %26
  %v28 = vrcp.pop 128.0
  %v29 = vmul.f32 %v25, %v28
  %v30 = vmul.f32 %v27, %v28
  %v31 = vadd.f32 %v29, 1e-05
  %v32 = vadd.f32 %v30, 1e-05
  %v33 = vrsqrt.pop %v31
  %v34 = vrsqrt.pop %v32
  %v35 = vmul.f32 %v20, %v33
  %v36 = vmul.f32 %v21, %v34
  %v37 = vld [vmem:[%s2] sm:$0x1]
  %v39 = vlaneseq
  %v40 = vshrl.u32 %v39, 7
  %v41 = vsub.s32 0, %v40
  %v42 = vrot.slane %v37, %v41
  %v44 = vmul.f32 %v35, %v42
  %v45 = vmul.f32 %v36, %v42
  %v46 = vpack.c.bf16 %v45, %v44
  %v48 = vunpack.c.l.b16 %v46
  %v49 = vunpack.c.h.b16 %v46
  %v50 = vpack.c.b16 %v48, %v48
  %v51 = vpack.c.b16 %v49, %v49
  %54 = vst [vmem:[%s3] sm:$0xf] %v50
  %55 = vst [vmem:[%s3 + $0x4] sm:$0xf] %v51
  %56 = vst [vmem:[%s4] sm:$0xff] %v20
  %57 = vst [vmem:[%s4 + $0x8] sm:$0xff] %v21
  // Predicated region
  $region14: #{vision_mamba_forward.30} parent=0 // pred_check
    _
  $region15: #{vision_mamba_forward.30} parent=0 // pred_check_branch
    %59 = sbr.rel (0) target = $region17
  $region16: #{vision_mamba_forward.30} parent=0 // pred_region
    _
  $region17: #{vision_mamba_forward.30} parent=0 // pred_fallthru
    _
  // Predicated region
  $region18: #{vision_mamba_forward.30} parent=0 // pred_check
    _
  $region19: #{vision_mamba_forward.30} parent=0 // pred_check_branch
    %61 = sbr.rel (0) target = $region21
  $region20: #{vision_mamba_forward.30} parent=0 // pred_region
    _
  $region21: #{vision_mamba_forward.30} parent=0 // pred_fallthru
    _
  // Predicated region
  $region22: #{vision_mamba_forward.30} parent=0 // pred_check
    _
  $region23: #{vision_mamba_forward.30} parent=0 // pred_check_branch
    %63 = sbr.rel (0) target = $region25
  $region24: #{vision_mamba_forward.30} parent=0 // pred_region
    _
  $region25: #{vision_mamba_forward.30} parent=0 // pred_fallthru
    _
  // Predicated region
  $region26: #{vision_mamba_forward.30} parent=0 // pred_check
    _
  $region27: #{vision_mamba_forward.30} parent=0 // pred_check_branch
    %65 = sbr.rel (0) target = $region29
  $region28: #{vision_mamba_forward.30} parent=0 // pred_region
    _
  $region29: #{vision_mamba_forward.30} parent=0 // pred_fallthru
    _

// kernel: vision_mamba_forward.25
$region0: #{vision_mamba_forward.25}
  #allocation0 [shape = 'u32[]', space=smem, size = 0x4, offset = 0x4, fixed_abs, tag = 'smem constant byte address 0x4 - core index']
  #allocation1 [shape = 'u32[144,128]{1,0:T(1,128)}', space=vmem, size = 0x12000, scoped, tag = 'internal scratch']
  #allocation2 [shape = 'f32[16,256]{1,0:T(8,128)}', space=vmem, size = 0x4000, scoped, tag = 'scratch operand']
  #allocation3 [shape = 'f32[8,16,256]{2,1,0:T(8,128)}', space=vmem, size = 0x20000, scoped, tag = 'scratch operand']
  #allocation4 [shape = 'f32[8,16,256]{2,1,0:T(8,128)}', space=vmem, size = 0x20000, scoped, tag = 'scratch operand']
  %s0 = inlined_call_operand.vmem [shape: bf16[2,8,256], index: 0, kind: input, shape index: {}]
  %s1 = inlined_call_operand.vmem [shape: f32[2,8,384], index: 1, kind: input, shape index: {}]
  %s2 = inlined_call_operand.vmem [shape: f32[2,8,16,1], index: 2, kind: input, shape index: {}]
  %s3 = inlined_call_operand.vmem [shape: f32[2,8,16,1], index: 3, kind: input, shape index: {}]
  %s4 = inlined_call_operand.vmem [shape: f32[2,8,512], index: 4, kind: input, shape index: {}]
  %s5 = inlined_call_operand.vmem [shape: f32[16,256], index: 5, kind: input, shape index: {}]
  %s6 = inlined_call_operand.vmem [shape: f32[1,256], index: 6, kind: input, shape index: {}]
  %s7 = inlined_call_operand.vmem [shape: f32[2,8,256], index: 7, kind: output, shape index: {}]
  %s8 = sld [smem:[#allocation0]]
  $region65: #{vision_mamba_forward.25} parent=0
    _
  %s10 = ssub.s32 1, %s8
  %s11 = scalar_select 0, %s10, %s8
  loop: start=0, step=1, limit=4
  $region2: #{vision_mamba_forward.25} parent=0 // loop_pre_header
    _
  $region3: #{vision_mamba_forward.25} parent=0 // loop_header
    %s13 = sphi 0, %s17
    %p14 = scmp.ge.s32.totalorder %s13, 4
    %s20 = sphi 0, %s32
    %s21 = sphi 0, %s28
    %s22 = sphi 0, %s20
    %s23 = sphi 0, %s21
    %s24 = sphi 0, %s22
    %s25 = sphi 0, %s23
    %s37 = sphi 0, %s39
    %s40 = sphi 0, %s37
    %s41 = sphi 0, %s40
    %s57 = sphi 0, %s41
    %s65 = sphi 0, %s67
    %s68 = sphi 0, %s65
    %s69 = sphi 0, %s68
    %s85 = sphi 0, %s69
    %s93 = sphi 0, %s95
    %s96 = sphi 0, %s93
    %s97 = sphi 0, %s96
    %s113 = sphi 0, %s97
    %s121 = sphi 0, %s123
    %s124 = sphi 0, %s121
    %s125 = sphi 0, %s124
    %s141 = sphi 0, %s125
    %s149 = sphi 0, %s151
    %s152 = sphi 0, %s149
    %s153 = sphi 0, %s152
    %s169 = sphi 0, %s153
    %s173 = sphi 0, %s173
    %s175 = sphi 0, %s173
    %s176 = sphi 0, %s175
    %s190 = sphi 0, %s176
    %s194 = sphi 0, %s194
    %s196 = sphi 0, %s194
    %s197 = sphi 0, %s196
    %s211 = sphi 0, %s197
    %s219 = sphi 0, %s221
    %s222 = sphi 0, %s219
    %s223 = sphi 0, %s222
    %s239 = sphi 0, %s223
  $region4: #{vision_mamba_forward.25} parent=0 // loop_header_branch
    %16 = sbr.rel (%p14) target = $region8
  $region5: #{vision_mamba_forward.25} parent=0 // loop_body
    %s18 = ssub.s32 %s13, 1
    %s19 = ssub.s32 %s13, 2
    %s26 = sadd.s32 1, %s21
    %p27 = scmp.ge.s32.totalorder %s26, 1
    %s28 = scalar_select %p27, 0, %s26
    %s29 = sadd.s32 1, %s20
    %s30 = scalar_select %p27, %s29, %s20
    %p31 = scmp.ge.s32.totalorder %s30, 2
    %s32 = scalar_select %p31, 0, %s30
    %s33 = ssub.s32 %s20, %s32
    %s34 = ssub.s32 %s21, %s28
    %s35 = sor.u32 %s33, %s34
    %p36 = scmp.eq.s32.totalorder %s35, 0
    %s38 = sadd.s32 %s37, 1
    %s39 = scalar_select %p36, %s37, %s38
    %p42 = pneg %p36
    %p43 = scmp.eq.s32.totalorder %s13, 1
    %p44 = por %p42, %p43
    %p45 = scmp.ne.s32.totalorder %s37, %s40
    %p46 = scmp.eq.s32.totalorder %s13, 0
    %p47 = por %p45, %p46
    %p48 = scmp.ne.s32.totalorder %s37, %s40
    %p49 = scmp.eq.s32.totalorder %s18, 1
    %p50 = por %p48, %p49
    %p51 = scmp.ne.s32.totalorder %s40, %s41
    %p52 = scmp.eq.s32.totalorder %s18, 0
    %p53 = por %p51, %p52
    %p54 = scmp.ne.s32.totalorder %s40, %s41
    %p55 = scmp.eq.s32.totalorder %s19, 1
    %p56 = por %p54, %p55
    %p58 = scmp.ne.s32.totalorder %s41, %s57
    %p59 = scmp.eq.s32.totalorder %s19, 0
    %p60 = por %p58, %p59
    %s61 = ssub.s32 %s20, %s32
    %s62 = ssub.s32 %s21, %s28
    %s63 = sor.u32 %s61, %s62
    %p64 = scmp.eq.s32.totalorder %s63, 0
    %s66 = sadd.s32 %s65, 1
    %s67 = scalar_select %p64, %s65, %s66
    %p70 = pneg %p64
    %p71 = scmp.eq.s32.totalorder %s13, 1
    %p72 = por %p70, %p71
    %p73 = scmp.ne.s32.totalorder %s65, %s68
    %p74 = scmp.eq.s32.totalorder %s13, 0
    %p75 = por %p73, %p74
    %p76 = scmp.ne.s32.totalorder %s65, %s68
    %p77 = scmp.eq.s32.totalorder %s18, 1
    %p78 = por %p76, %p77
    %p79 = scmp.ne.s32.totalorder %s68, %s69
    %p80 = scmp.eq.s32.totalorder %s18, 0
    %p81 = por %p79, %p80
    %p82 = scmp.ne.s32.totalorder %s68, %s69
    %p83 = scmp.eq.s32.totalorder %s19, 1
    %p84 = por %p82, %p83
    %p86 = scmp.ne.s32.totalorder %s69, %s85
    %p87 = scmp.eq.s32.totalorder %s19, 0
    %p88 = por %p86, %p87
    %s89 = ssub.s32 %s20, %s32
    %s90 = ssub.s32 %s21, %s28
    %s91 = sor.u32 %s89, %s90
    %p92 = scmp.eq.s32.totalorder %s91, 0
    %s94 = sadd.s32 %s93, 1
    %s95 = scalar_select %p92, %s93, %s94
    %p98 = pneg %p92
    %p99 = scmp.eq.s32.totalorder %s13, 1
    %p100 = por %p98, %p99
    %p101 = scmp.ne.s32.totalorder %s93, %s96
    %p102 = scmp.eq.s32.totalorder %s13, 0
    %p103 = por %p101, %p102
    %p104 = scmp.ne.s32.totalorder %s93, %s96
    %p105 = scmp.eq.s32.totalorder %s18, 1
    %p106 = por %p104, %p105
    %p107 = scmp.ne.s32.totalorder %s96, %s97
    %p108 = scmp.eq.s32.totalorder %s18, 0
    %p109 = por %p107, %p108
    %p110 = scmp.ne.s32.totalorder %s96, %s97
    %p111 = scmp.eq.s32.totalorder %s19, 1
    %p112 = por %p110, %p111
    %p114 = scmp.ne.s32.totalorder %s97, %s113
    %p115 = scmp.eq.s32.totalorder %s19, 0
    %p116 = por %p114, %p115
    %s117 = ssub.s32 %s20, %s32
    %s118 = ssub.s32 %s21, %s28
    %s119 = sor.u32 %s117, %s118
    %p120 = scmp.eq.s32.totalorder %s119, 0
    %s122 = sadd.s32 %s121, 1
    %s123 = scalar_select %p120, %s121, %s122
    %p126 = pneg %p120
    %p127 = scmp.eq.s32.totalorder %s13, 1
    %p128 = por %p126, %p127
    %p129 = scmp.ne.s32.totalorder %s121, %s124
    %p130 = scmp.eq.s32.totalorder %s13, 0
    %p131 = por %p129, %p130
    %p132 = scmp.ne.s32.totalorder %s121, %s124
    %p133 = scmp.eq.s32.totalorder %s18, 1
    %p134 = por %p132, %p133
    %p135 = scmp.ne.s32.totalorder %s124, %s125
    %p136 = scmp.eq.s32.totalorder %s18, 0
    %p137 = por %p135, %p136
    %p138 = scmp.ne.s32.totalorder %s124, %s125
    %p139 = scmp.eq.s32.totalorder %s19, 1
    %p140 = por %p138, %p139
    %p142 = scmp.ne.s32.totalorder %s125, %s141
    %p143 = scmp.eq.s32.totalorder %s19, 0
    %p144 = por %p142, %p143
    %s145 = ssub.s32 %s20, %s32
    %s146 = ssub.s32 %s21, %s28
    %s147 = sor.u32 %s145, %s146
    %p148 = scmp.eq.s32.totalorder %s147, 0
    %s150 = sadd.s32 %s149, 1
    %s151 = scalar_select %p148, %s149, %s150
    %p154 = pneg %p148
    %p155 = scmp.eq.s32.totalorder %s13, 1
    %p156 = por %p154, %p155
    %p157 = scmp.ne.s32.totalorder %s149, %s152
    %p158 = scmp.eq.s32.totalorder %s13, 0
    %p159 = por %p157, %p158
    %p160 = scmp.ne.s32.totalorder %s149, %s152
    %p161 = scmp.eq.s32.totalorder %s18, 1
    %p162 = por %p160, %p161
    %p163 = scmp.ne.s32.totalorder %s152, %s153
    %p164 = scmp.eq.s32.totalorder %s18, 0
    %p165 = por %p163, %p164
    %p166 = scmp.ne.s32.totalorder %s152, %s153
    %p167 = scmp.eq.s32.totalorder %s19, 1
    %p168 = por %p166, %p167
    %p170 = scmp.ne.s32.totalorder %s153, %s169
    %p171 = scmp.eq.s32.totalorder %s19, 0
    %p172 = por %p170, %p171
    %s174 = sadd.s32 %s173, 1
    %p177 = scmp.eq.s32.totalorder %s13, 1
    %p178 = scmp.ne.s32.totalorder %s173, %s175
    %p179 = scmp.eq.s32.totalorder %s13, 0
    %p180 = por %p178, %p179
    %p181 = scmp.ne.s32.totalorder %s173, %s175
    %p182 = scmp.eq.s32.totalorder %s18, 1
    %p183 = por %p181, %p182
    %p184 = scmp.ne.s32.totalorder %s175, %s176
    %p185 = scmp.eq.s32.totalorder %s18, 0
    %p186 = por %p184, %p185
    %p187 = scmp.ne.s32.totalorder %s175, %s176
    %p188 = scmp.eq.s32.totalorder %s19, 1
    %p189 = por %p187, %p188
    %p191 = scmp.ne.s32.totalorder %s176, %s190
    %p192 = scmp.eq.s32.totalorder %s19, 0
    %p193 = por %p191, %p192
    %s195 = sadd.s32 %s194, 1
    %p198 = scmp.eq.s32.totalorder %s13, 1
    %p199 = scmp.ne.s32.totalorder %s194, %s196
    %p200 = scmp.eq.s32.totalorder %s13, 0
    %p201 = por %p199, %p200
    %p202 = scmp.ne.s32.totalorder %s194, %s196
    %p203 = scmp.eq.s32.totalorder %s18, 1
    %p204 = por %p202, %p203
    %p205 = scmp.ne.s32.totalorder %s196, %s197
    %p206 = scmp.eq.s32.totalorder %s18, 0
    %p207 = por %p205, %p206
    %p208 = scmp.ne.s32.totalorder %s196, %s197
    %p209 = scmp.eq.s32.totalorder %s19, 1
    %p210 = por %p208, %p209
    %p212 = scmp.ne.s32.totalorder %s197, %s211
    %p213 = scmp.eq.s32.totalorder %s19, 0
    %p214 = por %p212, %p213
    %s215 = ssub.s32 %s20, %s32
    %s216 = ssub.s32 %s21, %s28
    %s217 = sor.u32 %s215, %s216
    %p218 = scmp.eq.s32.totalorder %s217, 0
    %s220 = sadd.s32 %s219, 1
    %s221 = scalar_select %p218, %s219, %s220
    %p224 = pneg %p218
    %p225 = scmp.eq.s32.totalorder %s13, 1
    %p226 = por %p224, %p225
    %p227 = scmp.ne.s32.totalorder %s219, %s222
    %p228 = scmp.eq.s32.totalorder %s13, 0
    %p229 = por %p227, %p228
    %p230 = scmp.ne.s32.totalorder %s219, %s222
    %p231 = scmp.eq.s32.totalorder %s18, 1
    %p232 = por %p230, %p231
    %p233 = scmp.ne.s32.totalorder %s222, %s223
    %p234 = scmp.eq.s32.totalorder %s18, 0
    %p235 = por %p233, %p234
    %p236 = scmp.ne.s32.totalorder %s222, %s223
    %p237 = scmp.eq.s32.totalorder %s19, 1
    %p238 = por %p236, %p237
    %p240 = scmp.ne.s32.totalorder %s223, %s239
    %p241 = scmp.eq.s32.totalorder %s19, 0
    %p242 = por %p240, %p241
    %p243 = scmp.le.s32.totalorder 1, %s13
    %p244 = scmp.lt.s32.totalorder %s13, 3
    %p245 = pnand %p243, %p244
    %p246 = pneg %p245
    // Predicated region
    $region9: #{vision_mamba_forward.25} parent=5 // pred_check
      _
    $region10: #{vision_mamba_forward.25} parent=5 // pred_check_branch
      %248 = sbr.rel (%p245) target = $region12
    $region11: #{vision_mamba_forward.25} parent=5 // pred_region
      %s249 = ssub.s32 %s13, 1
      // Predicated region
      $region13: #{vision_mamba_forward.25} parent=11 // pred_check
        %p250 = pneg %p186
      $region14: #{vision_mamba_forward.25} parent=11 // pred_check_branch
        %252 = sbr.rel (%p250) target = $region16
      $region15: #{vision_mamba_forward.25} parent=11 // pred_region
        _
      $region16: #{vision_mamba_forward.25} parent=11 // pred_fallthru
        _
      // Predicated region
      $region17: #{vision_mamba_forward.25} parent=11 // pred_check
        %p253 = pneg %p207
      $region18: #{vision_mamba_forward.25} parent=11 // pred_check_branch
        %255 = sbr.rel (%p253) target = $region20
      $region19: #{vision_mamba_forward.25} parent=11 // pred_region
        _
      $region20: #{vision_mamba_forward.25} parent=11 // pred_fallthru
        _
    $region12: #{vision_mamba_forward.25} parent=5 // pred_fallthru
      _
    %p256 = scmp.lt.s32.totalorder %s13, 2
    // Predicated region
    $region21: #{vision_mamba_forward.25} parent=5 // pred_check
      %p257 = pneg %p256
    $region22: #{vision_mamba_forward.25} parent=5 // pred_check_branch
      %259 = sbr.rel (%p257) target = $region24
    $region23: #{vision_mamba_forward.25} parent=5 // pred_region
      // Predicated region
      $region25: #{vision_mamba_forward.25} parent=23 // pred_check
        %p260 = pneg %p47
      $region26: #{vision_mamba_forward.25} parent=23 // pred_check_branch
        %262 = sbr.rel (%p260) target = $region28
      $region27: #{vision_mamba_forward.25} parent=23 // pred_region
        %p263 = scmp.lt.s32.totalorder %s20, 1
        %s264 = scalar_select %p263, %s20, 1
        %p265 = scmp.lt.s32.totalorder %s21, 0
        %s266 = scalar_select %p265, %s21, 0
        %s267 = smul.addr %s266, 2
        %s268 = smul.addr %s264, 2
        %s269 = sadd.s32 %s267, %s268
        %s270 = smul.addr %s269, 4
        %s271 = scalar_lea.vmem %s0, %s270
      $region28: #{vision_mamba_forward.25} parent=23 // pred_fallthru
        _
      // Predicated region
      $region29: #{vision_mamba_forward.25} parent=23 // pred_check
        %p272 = pneg %p75
      $region30: #{vision_mamba_forward.25} parent=23 // pred_check_branch
        %274 = sbr.rel (%p272) target = $region32
      $region31: #{vision_mamba_forward.25} parent=23 // pred_region
        %p275 = scmp.lt.s32.totalorder %s20, 1
        %s276 = scalar_select %p275, %s20, 1
        %p277 = scmp.lt.s32.totalorder %s21, 0
        %s278 = scalar_select %p277, %s21, 0
        %s279 = smul.addr %s278, 3
        %s280 = smul.addr %s276, 3
        %s281 = sadd.s32 %s279, %s280
        %s282 = smul.addr %s281, 8
        %s283 = scalar_lea.vmem %s1, %s282
      $region32: #{vision_mamba_forward.25} parent=23 // pred_fallthru
        _
      // Predicated region
      $region33: #{vision_mamba_forward.25} parent=23 // pred_check
        %p284 = pneg %p103
      $region34: #{vision_mamba_forward.25} parent=23 // pred_check_branch
        %286 = sbr.rel (%p284) target = $region36
      $region35: #{vision_mamba_forward.25} parent=23 // pred_region
        %s287 = smul.u32 8, %s21
        %p288 = scmp.lt.s32.totalorder %s20, 1
        %s289 = scalar_select %p288, %s20, 1
        %p290 = scmp.lt.s32.totalorder %s287, 7
        %s291 = scalar_select %p290, %s287, 7
        %s292 = smul.addr %s291, 2
        %s293 = smul.addr %s289, 16
        %s294 = sadd.s32 %s292, %s293
        %s295 = smul.addr %s294, 8
        %s296 = scalar_lea.vmem %s2, %s295
        %s297 = smul.u32 8, %s21
      $region36: #{vision_mamba_forward.25} parent=23 // pred_fallthru
        _
      // Predicated region
      $region37: #{vision_mamba_forward.25} parent=23 // pred_check
        %p298 = pneg %p131
      $region38: #{vision_mamba_forward.25} parent=23 // pred_check_branch
        %300 = sbr.rel (%p298) target = $region40
      $region39: #{vision_mamba_forward.25} parent=23 // pred_region
        %s301 = smul.u32 8, %s21
        %p302 = scmp.lt.s32.totalorder %s20, 1
        %s303 = scalar_select %p302, %s20, 1
        %p304 = scmp.lt.s32.totalorder %s301, 7
        %s305 = scalar_select %p304, %s301, 7
        %s306 = smul.addr %s305, 2
        %s307 = smul.addr %s303, 16
        %s308 = sadd.s32 %s306, %s307
        %s309 = smul.addr %s308, 8
        %s310 = scalar_lea.vmem %s3, %s309
        %s311 = smul.u32 8, %s21
      $region40: #{vision_mamba_forward.25} parent=23 // pred_fallthru
        _
      // Predicated region
      $region41: #{vision_mamba_forward.25} parent=23 // pred_check
        %p312 = pneg %p159
      $region42: #{vision_mamba_forward.25} parent=23 // pred_check_branch
        %314 = sbr.rel (%p312) target = $region44
      $region43: #{vision_mamba_forward.25} parent=23 // pred_region
        %p315 = scmp.lt.s32.totalorder %s20, 1
        %s316 = scalar_select %p315, %s20, 1
        %p317 = scmp.lt.s32.totalorder %s21, 0
        %s318 = scalar_select %p317, %s21, 0
        %s319 = smul.addr %s318, 4
        %s320 = sadd.s32 2, %s319
        %s321 = smul.addr %s316, 4
        %s322 = sadd.s32 %s320, %s321
        %s323 = smul.addr %s322, 8
        %s324 = scalar_lea.vmem %s4, %s323
      $region44: #{vision_mamba_forward.25} parent=23 // pred_fallthru
        _
    $region24: #{vision_mamba_forward.25} parent=5 // pred_fallthru
      _
    %p325 = scmp.le.s32.totalorder 1, %s13
    %p326 = scmp.lt.s32.totalorder %s13, 3
    %p327 = pnand %p325, %p326
    %p328 = pneg %p327
    // Predicated region
    $region45: #{vision_mamba_forward.25} parent=5 // pred_check
      _
    $region46: #{vision_mamba_forward.25} parent=5 // pred_check_branch
      %330 = sbr.rel (%p327) target = $region48
    $region47: #{vision_mamba_forward.25} parent=5 // pred_region
      %s331 = ssub.s32 %s13, 1
      %p332 = scmp.lt.s32.totalorder %s22, 1
      %s333 = scalar_select %p332, %s22, 1
      %p334 = scmp.lt.s32.totalorder %s23, 0
      %s335 = scalar_select %p334, %s23, 0
      %s336 = smul.addr %s335, 2
      %s337 = smul.addr %s333, 2
      %s338 = sadd.s32 %s336, %s337
      %s339 = smul.addr %s338, 4
      %s340 = scalar_lea.vmem %s0, %s339
      %p341 = pneg %p53
      %p342 = pneg %p50
      %p343 = scmp.lt.s32.totalorder %s22, 1
      %s344 = scalar_select %p343, %s22, 1
      %p345 = scmp.lt.s32.totalorder %s23, 0
      %s346 = scalar_select %p345, %s23, 0
      %s347 = smul.addr %s346, 3
      %s348 = smul.addr %s344, 3
      %s349 = sadd.s32 %s347, %s348
      %s350 = smul.addr %s349, 8
      %s351 = scalar_lea.vmem %s1, %s350
      %p352 = pneg %p81
      %p353 = pneg %p78
      %s354 = smul.u32 8, %s23
      %p355 = scmp.lt.s32.totalorder %s22, 1
      %s356 = scalar_select %p355, %s22, 1
      %p357 = scmp.lt.s32.totalorder %s354, 7
      %s358 = scalar_select %p357, %s354, 7
      %s359 = smul.addr %s358, 2
      %s360 = smul.addr %s356, 16
      %s361 = sadd.s32 %s359, %s360
      %s362 = smul.addr %s361, 8
      %s363 = scalar_lea.vmem %s2, %s362
      %p364 = pneg %p109
      %p365 = pneg %p106
      %s366 = smul.u32 8, %s23
      %p367 = scmp.lt.s32.totalorder %s22, 1
      %s368 = scalar_select %p367, %s22, 1
      %p369 = scmp.lt.s32.totalorder %s366, 7
      %s370 = scalar_select %p369, %s366, 7
      %s371 = smul.addr %s370, 2
      %s372 = smul.addr %s368, 16
      %s373 = sadd.s32 %s371, %s372
      %s374 = smul.addr %s373, 8
      %s375 = scalar_lea.vmem %s3, %s374
      %p376 = pneg %p137
      %p377 = pneg %p134
      %p378 = scmp.lt.s32.totalorder %s22, 1
      %s379 = scalar_select %p378, %s22, 1
      %p380 = scmp.lt.s32.totalorder %s23, 0
      %s381 = scalar_select %p380, %s23, 0
      %s382 = smul.addr %s381, 4
      %s383 = sadd.s32 2, %s382
      %s384 = smul.addr %s379, 4
      %s385 = sadd.s32 %s383, %s384
      %s386 = smul.addr %s385, 8
      %s387 = scalar_lea.vmem %s4, %s386
      %p388 = pneg %p165
      %p389 = pneg %p162
      %p390 = pneg %p186
      %p391 = pneg %p183
      %p392 = pneg %p207
      %p393 = pneg %p204
      %p394 = pneg %p235
      %p395 = pneg %p232
      %p396 = scmp.lt.s32.totalorder %s22, 1
      %s397 = scalar_select %p396, %s22, 1
      %p398 = scmp.lt.s32.totalorder %s23, 0
      %s399 = scalar_select %p398, %s23, 0
      %s400 = smul.addr %s399, 2
      %s401 = smul.addr %s397, 2
      %s402 = sadd.s32 %s400, %s401
      %s403 = smul.addr %s402, 8
      %s404 = scalar_lea.vmem %s7, %s403
      %p405 = scmp.lt.s32.totalorder %s22, 1
      %s406 = scalar_select %p405, %s22, 1
      %p407 = scmp.lt.s32.totalorder %s23, 0
      %s408 = scalar_select %p407, %s23, 0
      %s409 = smul.addr %s408, 2
      %s410 = smul.addr %s406, 2
      %s411 = sadd.s32 %s409, %s410
      %s412 = smul.addr %s411, 4
      %s413 = scalar_lea.vmem %s0, %s412
      %p414 = scmp.lt.s32.totalorder %s22, 1
      %s415 = scalar_select %p414, %s22, 1
      %p416 = scmp.lt.s32.totalorder %s23, 0
      %s417 = scalar_select %p416, %s23, 0
      %s418 = smul.addr %s417, 3
      %s419 = smul.addr %s415, 3
      %s420 = sadd.s32 %s418, %s419
      %s421 = smul.addr %s420, 8
      %s422 = scalar_lea.vmem %s1, %s421
      %s423 = smul.u32 8, %s23
      %p424 = scmp.lt.s32.totalorder %s22, 1
      %s425 = scalar_select %p424, %s22, 1
      %p426 = scmp.lt.s32.totalorder %s423, 7
      %s427 = scalar_select %p426, %s423, 7
      %s428 = smul.addr %s427, 2
      %s429 = smul.addr %s425, 16
      %s430 = sadd.s32 %s428, %s429
      %s431 = smul.addr %s430, 8
      %s432 = scalar_lea.vmem %s2, %s431
      %s433 = smul.u32 8, %s23
      %s434 = smul.u32 8, %s23
      %p435 = scmp.lt.s32.totalorder %s22, 1
      %s436 = scalar_select %p435, %s22, 1
      %p437 = scmp.lt.s32.totalorder %s434, 7
      %s438 = scalar_select %p437, %s434, 7
      %s439 = smul.addr %s438, 2
      %s440 = smul.addr %s436, 16
      %s441 = sadd.s32 %s439, %s440
      %s442 = smul.addr %s441, 8
      %s443 = scalar_lea.vmem %s3, %s442
      %s444 = smul.u32 8, %s23
      %p445 = scmp.lt.s32.totalorder %s22, 1
      %s446 = scalar_select %p445, %s22, 1
      %p447 = scmp.lt.s32.totalorder %s23, 0
      %s448 = scalar_select %p447, %s23, 0
      %s449 = smul.addr %s448, 4
      %s450 = sadd.s32 2, %s449
      %s451 = smul.addr %s446, 4
      %s452 = sadd.s32 %s450, %s451
      %s453 = smul.addr %s452, 8
      %s454 = scalar_lea.vmem %s4, %s453
      %p455 = scmp.lt.s32.totalorder %s22, 1
      %s456 = scalar_select %p455, %s22, 1
      %p457 = scmp.lt.s32.totalorder %s23, 0
      %s458 = scalar_select %p457, %s23, 0
      %s459 = smul.addr %s458, 2
      %s460 = smul.addr %s456, 2
      %s461 = sadd.s32 %s459, %s460
      %s462 = smul.addr %s461, 8
      %s463 = scalar_lea.vmem %s7, %s462
      %p464 = scmp.eq.s32.totalorder %s23, 0
      // Predicated region
      $region49: #{vision_mamba_forward.25} parent=47 // pred_check
        %p465 = pneg %p464
      $region50: #{vision_mamba_forward.25} parent=47 // pred_check_branch
        %467 = sbr.rel (%p465) target = $region52
      $region51: #{vision_mamba_forward.25} parent=47 // pred_region
        %468 = vst [vmem:[#allocation2] sm:$0xff] 0.0
        %469 = vst [vmem:[#allocation2 + $0x8] sm:$0xff] 0.0
        %470 = vst [vmem:[#allocation2 + $0x10] sm:$0xff] 0.0
        %471 = vst [vmem:[#allocation2 + $0x18] sm:$0xff] 0.0
      $region52: #{vision_mamba_forward.25} parent=47 // pred_fallthru
        _
      %v472 = vld [vmem:[%s413] sm:$0xff]
      %v473 = vunpack.c.l.bf16 %v472
      %v474 = vunpack.c.h.bf16 %v472
      %v475 = vld [vmem:[%s422] sm:$0xff]
      %v476 = vld [vmem:[%s422 + $0x8] sm:$0xff]
      %v477 = vmin.f32 %v475, 20.0
      %v478 = vmin.f32 %v476, 20.0
      %vm479 = vcmp.gt.f32.partialorder %v475, 20.0
      %vm480 = vcmp.gt.f32.partialorder %v476, 20.0
      %v481 = vmul.f32 %v477, 1.442695
      %v482 = vpow.pop %v481
      %v483 = vmul.f32 %v478, 1.442695
      %v484 = vpow.pop %v483
      %v485 = vadd.f32 %v482, 1.0
      %v486 = vadd.f32 %v484, 1.0
      %v487 = vlog2.pop %v485
      %v488 = vmul.f32 %v487, 0.6931472
      %v489 = vlog2.pop %v486
      %v490 = vmul.f32 %v489, 0.6931472
      %v491 = vsel %vm479, %v475, %v488
      %v492 = vsel %vm480, %v476, %v490
      %v493 = vld [vmem:[%s5] sm:$0xff]
      %v494 = vld [vmem:[%s5 + $0x8] sm:$0xff]
      %v495 = vld [vmem:[%s5 + $0x10] sm:$0xff]
      %v496 = vld [vmem:[%s5 + $0x18] sm:$0xff]
      %v499 = vcombine.low %v491, %v492
      %v500 = vcombine.high %v491, %v492
      %v502 = vunpack.c.l.s4 1966171168
      %v503 = vunpack.c.0.s8 %v502
      %v504 = vlaneseq
      %v505 = vshrl.u32 %v504, 7
      %v506 = vsub.s32 %v503, %v505
      %v507 = vrot.slane %v499, %v506
      %v509 = vunpack.c.l.s4 1966171168
      %v510 = vunpack.c.0.s8 %v509
      %v511 = vlaneseq
      %v512 = vshrl.u32 %v511, 7
      %v513 = vsub.s32 %v510, %v512
      %v514 = vrot.slane %v500, %v513
      %v515 = vcombine.high %v507, %v507
      %v516 = vcombine.high %v514, %v514
      %v518 = vunpack.c.l.s4 1966171168
      %v519 = vunpack.c.0.s8 %v518
      %v520 = vlaneseq
      %v521 = vshrl.u32 %v520, 7
      %v522 = vsub.s32 %v519, %v521
      %v523 = vrot.slane %v507, %v522
      %v525 = vunpack.c.l.s4 1966171168
      %v526 = vunpack.c.0.s8 %v525
      %v527 = vlaneseq
      %v528 = vshrl.u32 %v527, 7
      %v529 = vsub.s32 %v526, %v528
      %v530 = vrot.slane %v514, %v529
      %v532 = vunpack.c.l.s4 1966171168
      %v533 = vunpack.c.0.s8 %v532
      %v534 = vlaneseq
      %v535 = vshrl.u32 %v534, 7
      %v536 = vsub.s32 %v533, %v535
      %v537 = vrot.slane %v515, %v536
      %v539 = vunpack.c.l.s4 1966171168
      %v540 = vunpack.c.0.s8 %v539
      %v541 = vlaneseq
      %v542 = vshrl.u32 %v541, 7
      %v543 = vsub.s32 %v540, %v542
      %v544 = vrot.slane %v516, %v543
      %v545 = vcombine.high %v523, %v523
      %v546 = vcombine.high %v530, %v530
      %v547 = vcombine.high %v537, %v537
      %v548 = vcombine.high %v544, %v544
      %v549 = vlaneseq
      %v550 = vshrl.u32 %v549, 7
      %v551 = vsub.s32 0, %v550
      %v552 = vrot.slane %v523, %v551
      %v553 = vlaneseq
      %v554 = vshrl.u32 %v553, 7
      %v555 = vsub.s32 1, %v554
      %v556 = vrot.slane %v523, %v555
      %v557 = vlaneseq
      %v558 = vshrl.u32 %v557, 7
      %v559 = vsub.s32 0, %v558
      %v560 = vrot.slane %v537, %v559
      %v561 = vlaneseq
      %v562 = vshrl.u32 %v561, 7
      %v563 = vsub.s32 1, %v562
      %v564 = vrot.slane %v537, %v563
      %v565 = vlaneseq
      %v566 = vshrl.u32 %v565, 7
      %v567 = vsub.s32 0, %v566
      %v568 = vrot.slane %v545, %v567
      %v569 = vlaneseq
      %v570 = vshrl.u32 %v569, 7
      %v571 = vsub.s32 1, %v570
      %v572 = vrot.slane %v545, %v571
      %v573 = vlaneseq
      %v574 = vshrl.u32 %v573, 7
      %v575 = vsub.s32 0, %v574
      %v576 = vrot.slane %v547, %v575
      %v577 = vlaneseq
      %v578 = vshrl.u32 %v577, 7
      %v579 = vsub.s32 1, %v578
      %v580 = vrot.slane %v547, %v579
      %v581 = vlaneseq
      %v582 = vshrl.u32 %v581, 7
      %v583 = vsub.s32 0, %v582
      %v584 = vrot.slane %v530, %v583
      %v585 = vlaneseq
      %v586 = vshrl.u32 %v585, 7
      %v587 = vsub.s32 1, %v586
      %v588 = vrot.slane %v530, %v587
      %v589 = vlaneseq
      %v590 = vshrl.u32 %v589, 7
      %v591 = vsub.s32 0, %v590
      %v592 = vrot.slane %v544, %v591
      %v593 = vlaneseq
      %v594 = vshrl.u32 %v593, 7
      %v595 = vsub.s32 1, %v594
      %v596 = vrot.slane %v544, %v595
      %v597 = vlaneseq
      %v598 = vshrl.u32 %v597, 7
      %v599 = vsub.s32 0, %v598
      %v600 = vrot.slane %v546, %v599
      %v601 = vlaneseq
      %v602 = vshrl.u32 %v601, 7
      %v603 = vsub.s32 1, %v602
      %v604 = vrot.slane %v546, %v603
      %v605 = vlaneseq
      %v606 = vshrl.u32 %v605, 7
      %v607 = vsub.s32 0, %v606
      %v608 = vrot.slane %v548, %v607
      %v609 = vlaneseq
      %v610 = vshrl.u32 %v609, 7
      %v611 = vsub.s32 1, %v610
      %v612 = vrot.slane %v548, %v611
      %v629 = vmul.f32 %v552, %v493
      %v630 = vmul.f32 %v556, %v494
      %v631 = vmul.f32 %v552, %v495
      %v632 = vmul.f32 %v556, %v496
      %v633 = vmul.f32 %v560, %v493
      %v634 = vmul.f32 %v564, %v494
      %v635 = vmul.f32 %v560, %v495
      %v636 = vmul.f32 %v564, %v496
      %v637 = vmul.f32 %v568, %v493
      %v638 = vmul.f32 %v572, %v494
      %v639 = vmul.f32 %v568, %v495
      %v640 = vmul.f32 %v572, %v496
      %v641 = vmul.f32 %v576, %v493
      %v642 = vmul.f32 %v580, %v494
      %v643 = vmul.f32 %v576, %v495
      %v644 = vmul.f32 %v580, %v496
      %v645 = vmul.f32 %v584, %v493
      %v646 = vmul.f32 %v588, %v494
      %v647 = vmul.f32 %v584, %v495
      %v648 = vmul.f32 %v588, %v496
      %v649 = vmul.f32 %v592, %v493
      %v650 = vmul.f32 %v596, %v494
      %v651 = vmul.f32 %v592, %v495
      %v652 = vmul.f32 %v596, %v496
      %v653 = vmul.f32 %v600, %v493
      %v654 = vmul.f32 %v604, %v494
      %v655 = vmul.f32 %v600, %v495
      %v656 = vmul.f32 %v604, %v496
      %v657 = vmul.f32 %v608, %v493
      %v658 = vmul.f32 %v612, %v494
      %v659 = vmul.f32 %v608, %v495
      %v660 = vmul.f32 %v612, %v496
      %v661 = vmul.f32 %v629, 1.442695
      %v662 = vpow.pop %v661
      %v663 = vmul.f32 %v630, 1.442695
      %v664 = vpow.pop %v663
      %v665 = vmul.f32 %v631, 1.442695
      %v666 = vpow.pop %v665
      %v667 = vmul.f32 %v632, 1.442695
      %v668 = vpow.pop %v667
      %v669 = vmul.f32 %v633, 1.442695
      %v670 = vpow.pop %v669
      %v671 = vmul.f32 %v634, 1.442695
      %v672 = vpow.pop %v671
      %v673 = vmul.f32 %v635, 1.442695
      %v674 = vpow.pop %v673
      %v675 = vmul.f32 %v636, 1.442695
      %v676 = vpow.pop %v675
      %v677 = vmul.f32 %v637, 1.442695
      %v678 = vpow.pop %v677
      %v679 = vmul.f32 %v638, 1.442695
      %v680 = vpow.pop %v679
      %v681 = vmul.f32 %v639, 1.442695
      %v682 = vpow.pop %v681
      %v683 = vmul.f32 %v640, 1.442695
      %v684 = vpow.pop %v683
      %v685 = vmul.f32 %v641, 1.442695
      %v686 = vpow.pop %v685
      %v687 = vmul.f32 %v642, 1.442695
      %v688 = vpow.pop %v687
      %v689 = vmul.f32 %v643, 1.442695
      %v690 = vpow.pop %v689
      %v691 = vmul.f32 %v644, 1.442695
      %v692 = vpow.pop %v691
      %v693 = vmul.f32 %v645, 1.442695
      %v694 = vpow.pop %v693
      %v695 = vmul.f32 %v646, 1.442695
      %v696 = vpow.pop %v695
      %v697 = vmul.f32 %v647, 1.442695
      %v698 = vpow.pop %v697
      %v699 = vmul.f32 %v648, 1.442695
      %v700 = vpow.pop %v699
      %v701 = vmul.f32 %v649, 1.442695
      %v702 = vpow.pop %v701
      %v703 = vmul.f32 %v650, 1.442695
      %v704 = vpow.pop %v703
      %v705 = vmul.f32 %v651, 1.442695
      %v706 = vpow.pop %v705
      %v707 = vmul.f32 %v652, 1.442695
      %v708 = vpow.pop %v707
      %v709 = vmul.f32 %v653, 1.442695
      %v710 = vpow.pop %v709
      %v711 = vmul.f32 %v654, 1.442695
      %v712 = vpow.pop %v711
      %v713 = vmul.f32 %v655, 1.442695
      %v714 = vpow.pop %v713
      %v715 = vmul.f32 %v656, 1.442695
      %v716 = vpow.pop %v715
      %v717 = vmul.f32 %v657, 1.442695
      %v718 = vpow.pop %v717
      %v719 = vmul.f32 %v658, 1.442695
      %v720 = vpow.pop %v719
      %v721 = vmul.f32 %v659, 1.442695
      %v722 = vpow.pop %v721
      %v723 = vmul.f32 %v660, 1.442695
      %v724 = vpow.pop %v723
      %725 = vst [vmem:[#allocation3] sm:$0xff] %v662
      %726 = vst [vmem:[#allocation3 + $0x8] sm:$0xff] %v664
      %727 = vst [vmem:[#allocation3 + $0x10] sm:$0xff] %v666
      %728 = vst [vmem:[#allocation3 + $0x18] sm:$0xff] %v668
      %729 = vst [vmem:[#allocation3 + $0x20] sm:$0xff] %v670
      %730 = vst [vmem:[#allocation3 + $0x28] sm:$0xff] %v672
      %731 = vst [vmem:[#allocation3 + $0x30] sm:$0xff] %v674
      %732 = vst [vmem:[#allocation3 + $0x38] sm:$0xff] %v676
      %733 = vst [vmem:[#allocation3 + $0x40] sm:$0xff] %v678
      %734 = vst [vmem:[#allocation3 + $0x48] sm:$0xff] %v680
      %735 = vst [vmem:[#allocation3 + $0x50] sm:$0xff] %v682
      %736 = vst [vmem:[#allocation3 + $0x58] sm:$0xff] %v684
      %737 = vst [vmem:[#allocation3 + $0x60] sm:$0xff] %v686
      %738 = vst [vmem:[#allocation3 + $0x68] sm:$0xff] %v688
      %739 = vst [vmem:[#allocation3 + $0x70] sm:$0xff] %v690
      %740 = vst [vmem:[#allocation3 + $0x78] sm:$0xff] %v692
      %741 = vst [vmem:[#allocation3 + $0x80] sm:$0xff] %v694
      %742 = vst [vmem:[#allocation3 + $0x88] sm:$0xff] %v696
      %743 = vst [vmem:[#allocation3 + $0x90] sm:$0xff] %v698
      %744 = vst [vmem:[#allocation3 + $0x98] sm:$0xff] %v700
      %745 = vst [vmem:[#allocation3 + $0xa0] sm:$0xff] %v702
      %746 = vst [vmem:[#allocation3 + $0xa8] sm:$0xff] %v704
      %747 = vst [vmem:[#allocation3 + $0xb0] sm:$0xff] %v706
      %748 = vst [vmem:[#allocation3 + $0xb8] sm:$0xff] %v708
      %749 = vst [vmem:[#allocation3 + $0xc0] sm:$0xff] %v710
      %750 = vst [vmem:[#allocation3 + $0xc8] sm:$0xff] %v712
      %751 = vst [vmem:[#allocation3 + $0xd0] sm:$0xff] %v714
      %752 = vst [vmem:[#allocation3 + $0xd8] sm:$0xff] %v716
      %753 = vst [vmem:[#allocation3 + $0xe0] sm:$0xff] %v718
      %754 = vst [vmem:[#allocation3 + $0xe8] sm:$0xff] %v720
      %755 = vst [vmem:[#allocation3 + $0xf0] sm:$0xff] %v722
      %756 = vst [vmem:[#allocation3 + $0xf8] sm:$0xff] %v724
      %v757 = vmul.f32 %v491, %v473
      %v758 = vmul.f32 %v492, %v474
      %v761 = vcombine.low %v757, %v758
      %v762 = vcombine.high %v757, %v758
      %v764 = vunpack.c.l.s4 1966171168
      %v765 = vunpack.c.0.s8 %v764
      %v766 = vlaneseq
      %v767 = vshrl.u32 %v766, 7
      %v768 = vsub.s32 %v765, %v767
      %v769 = vrot.slane %v761, %v768
      %v771 = vunpack.c.l.s4 1966171168
      %v772 = vunpack.c.0.s8 %v771
      %v773 = vlaneseq
      %v774 = vshrl.u32 %v773, 7
      %v775 = vsub.s32 %v772, %v774
      %v776 = vrot.slane %v762, %v775
      %v777 = vcombine.high %v769, %v769
      %v778 = vcombine.high %v776, %v776
      %v780 = vunpack.c.l.s4 1966171168
      %v781 = vunpack.c.0.s8 %v780
      %v782 = vlaneseq
      %v783 = vshrl.u32 %v782, 7
      %v784 = vsub.s32 %v781, %v783
      %v785 = vrot.slane %v769, %v784
      %v787 = vunpack.c.l.s4 1966171168
      %v788 = vunpack.c.0.s8 %v787
      %v789 = vlaneseq
      %v790 = vshrl.u32 %v789, 7
      %v791 = vsub.s32 %v788, %v790
      %v792 = vrot.slane %v776, %v791
      %v794 = vunpack.c.l.s4 1966171168
      %v795 = vunpack.c.0.s8 %v794
      %v796 = vlaneseq
      %v797 = vshrl.u32 %v796, 7
      %v798 = vsub.s32 %v795, %v797
      %v799 = vrot.slane %v777, %v798
      %v801 = vunpack.c.l.s4 1966171168
      %v802 = vunpack.c.0.s8 %v801
      %v803 = vlaneseq
      %v804 = vshrl.u32 %v803, 7
      %v805 = vsub.s32 %v802, %v804
      %v806 = vrot.slane %v778, %v805
      %v807 = vcombine.high %v785, %v785
      %v808 = vcombine.high %v792, %v792
      %v809 = vcombine.high %v799, %v799
      %v810 = vcombine.high %v806, %v806
      %v811 = vld [vmem:[%s432] sm:$0xff]
      %v812 = vld [vmem:[%s432 + $0x8] sm:$0xff]
      %v813 = vld [vmem:[%s432 + $0x10] sm:$0xff]
      %v814 = vld [vmem:[%s432 + $0x18] sm:$0xff]
      %v815 = vld [vmem:[%s432 + $0x20] sm:$0xff]
      %v816 = vld [vmem:[%s432 + $0x28] sm:$0xff]
      %v817 = vld [vmem:[%s432 + $0x30] sm:$0xff]
      %v818 = vld [vmem:[%s432 + $0x38] sm:$0xff]
      %v819 = vld [vmem:[%s432 + $0x40] sm:$0xff]
      %v820 = vld [vmem:[%s432 + $0x48] sm:$0xff]
      %v821 = vld [vmem:[%s432 + $0x50] sm:$0xff]
      %v822 = vld [vmem:[%s432 + $0x58] sm:$0xff]
      %v823 = vld [vmem:[%s432 + $0x60] sm:$0xff]
      %v824 = vld [vmem:[%s432 + $0x68] sm:$0xff]
      %v825 = vld [vmem:[%s432 + $0x70] sm:$0xff]
      %v826 = vld [vmem:[%s432 + $0x78] sm:$0xff]
      %v827 = vlaneseq
      %v828 = vshrl.u32 %v827, 7
      %v829 = vsub.s32 0, %v828
      %v830 = vrot.slane %v785, %v829
      %v831 = vlaneseq
      %v832 = vshrl.u32 %v831, 7
      %v833 = vsub.s32 1, %v832
      %v834 = vrot.slane %v785, %v833
      %v835 = vlaneseq
      %v836 = vshrl.u32 %v835, 7
      %v837 = vsub.s32 0, %v836
      %v838 = vrot.slane %v799, %v837
      %v839 = vlaneseq
      %v840 = vshrl.u32 %v839, 7
      %v841 = vsub.s32 1, %v840
      %v842 = vrot.slane %v799, %v841
      %v843 = vlaneseq
      %v844 = vshrl.u32 %v843, 7
      %v845 = vsub.s32 0, %v844
      %v846 = vrot.slane %v807, %v845
      %v847 = vlaneseq
      %v848 = vshrl.u32 %v847, 7
      %v849 = vsub.s32 1, %v848
      %v850 = vrot.slane %v807, %v849
      %v851 = vlaneseq
      %v852 = vshrl.u32 %v851, 7
      %v853 = vsub.s32 0, %v852
      %v854 = vrot.slane %v809, %v853
      %v855 = vlaneseq
      %v856 = vshrl.u32 %v855, 7
      %v857 = vsub.s32 1, %v856
      %v858 = vrot.slane %v809, %v857
      %v859 = vlaneseq
      %v860 = vshrl.u32 %v859, 7
      %v861 = vsub.s32 0, %v860
      %v862 = vrot.slane %v792, %v861
      %v863 = vlaneseq
      %v864 = vshrl.u32 %v863, 7
      %v865 = vsub.s32 1, %v864
      %v866 = vrot.slane %v792, %v865
      %v867 = vlaneseq
      %v868 = vshrl.u32 %v867, 7
      %v869 = vsub.s32 0, %v868
      %v870 = vrot.slane %v806, %v869
      %v871 = vlaneseq
      %v872 = vshrl.u32 %v871, 7
      %v873 = vsub.s32 1, %v872
      %v874 = vrot.slane %v806, %v873
      %v875 = vlaneseq
      %v876 = vshrl.u32 %v875, 7
      %v877 = vsub.s32 0, %v876
      %v878 = vrot.slane %v808, %v877
      %v879 = vlaneseq
      %v880 = vshrl.u32 %v879, 7
      %v881 = vsub.s32 1, %v880
      %v882 = vrot.slane %v808, %v881
      %v883 = vlaneseq
      %v884 = vshrl.u32 %v883, 7
      %v885 = vsub.s32 0, %v884
      %v886 = vrot.slane %v810, %v885
      %v887 = vlaneseq
      %v888 = vshrl.u32 %v887, 7
      %v889 = vsub.s32 1, %v888
      %v890 = vrot.slane %v810, %v889
      %908 = vset.pattern.permute.xlu0 0
      %909 = vperm.xlu0 %908, %v811
      %v910 = vpop.permute.xlu0 %909
      %913 = vset.pattern.permute.xlu0 0
      %914 = vperm.xlu0 %913, %v812
      %v915 = vpop.permute.xlu0 %914
      %918 = vset.pattern.permute.xlu0 0
      %919 = vperm.xlu0 %918, %v813
      %v920 = vpop.permute.xlu0 %919
      %923 = vset.pattern.permute.xlu0 0
      %924 = vperm.xlu0 %923, %v814
      %v925 = vpop.permute.xlu0 %924
      %928 = vset.pattern.permute.xlu0 0
      %929 = vperm.xlu0 %928, %v815
      %v930 = vpop.permute.xlu0 %929
      %933 = vset.pattern.permute.xlu0 0
      %934 = vperm.xlu0 %933, %v816
      %v935 = vpop.permute.xlu0 %934
      %938 = vset.pattern.permute.xlu0 0
      %939 = vperm.xlu0 %938, %v817
      %v940 = vpop.permute.xlu0 %939
      %943 = vset.pattern.permute.xlu0 0
      %944 = vperm.xlu0 %943, %v818
      %v945 = vpop.permute.xlu0 %944
      %948 = vset.pattern.permute.xlu0 0
      %949 = vperm.xlu0 %948, %v819
      %v950 = vpop.permute.xlu0 %949
      %953 = vset.pattern.permute.xlu0 0
      %954 = vperm.xlu0 %953, %v820
      %v955 = vpop.permute.xlu0 %954
      %958 = vset.pattern.permute.xlu0 0
      %959 = vperm.xlu0 %958, %v821
      %v960 = vpop.permute.xlu0 %959
      %963 = vset.pattern.permute.xlu0 0
      %964 = vperm.xlu0 %963, %v822
      %v965 = vpop.permute.xlu0 %964
      %968 = vset.pattern.permute.xlu0 0
      %969 = vperm.xlu0 %968, %v823
      %v970 = vpop.permute.xlu0 %969
      %973 = vset.pattern.permute.xlu0 0
      %974 = vperm.xlu0 %973, %v824
      %v975 = vpop.permute.xlu0 %974
      %978 = vset.pattern.permute.xlu0 0
      %979 = vperm.xlu0 %978, %v825
      %v980 = vpop.permute.xlu0 %979
      %983 = vset.pattern.permute.xlu0 0
      %984 = vperm.xlu0 %983, %v826
      %v985 = vpop.permute.xlu0 %984
      %v987 = vmul.f32 %v830, %v910
      %v988 = vmul.f32 %v834, %v910
      %v989 = vmul.f32 %v830, %v915
      %v990 = vmul.f32 %v834, %v915
      %v991 = vmul.f32 %v838, %v920
      %v992 = vmul.f32 %v842, %v920
      %v993 = vmul.f32 %v838, %v925
      %v994 = vmul.f32 %v842, %v925
      %v995 = vmul.f32 %v846, %v930
      %v996 = vmul.f32 %v850, %v930
      %v997 = vmul.f32 %v846, %v935
      %v998 = vmul.f32 %v850, %v935
      %v999 = vmul.f32 %v854, %v940
      %v1000 = vmul.f32 %v858, %v940
      %v1001 = vmul.f32 %v854, %v945
      %v1002 = vmul.f32 %v858, %v945
      %v1003 = vmul.f32 %v862, %v950
      %v1004 = vmul.f32 %v866, %v950
      %v1005 = vmul.f32 %v862, %v955
      %v1006 = vmul.f32 %v866, %v955
      %v1007 = vmul.f32 %v870, %v960
      %v1008 = vmul.f32 %v874, %v960
      %v1009 = vmul.f32 %v870, %v965
      %v1010 = vmul.f32 %v874, %v965
      %v1011 = vmul.f32 %v878, %v970
      %v1012 = vmul.f32 %v882, %v970
      %v1013 = vmul.f32 %v878, %v975
      %v1014 = vmul.f32 %v882, %v975
      %v1015 = vmul.f32 %v886, %v980
      %v1016 = vmul.f32 %v890, %v980
      %v1017 = vmul.f32 %v886, %v985
      %v1018 = vmul.f32 %v890, %v985
      %1019 = vst [vmem:[#allocation4] sm:$0xff] %v987
      %1020 = vst [vmem:[#allocation4 + $0x8] sm:$0xff] %v988
      %1021 = vst [vmem:[#allocation4 + $0x10] sm:$0xff] %v989
      %1022 = vst [vmem:[#allocation4 + $0x18] sm:$0xff] %v990
      %1023 = vst [vmem:[#allocation4 + $0x20] sm:$0xff] %v991
      %1024 = vst [vmem:[#allocation4 + $0x28] sm:$0xff] %v992
      %1025 = vst [vmem:[#allocation4 + $0x30] sm:$0xff] %v993
      %1026 = vst [vmem:[#allocation4 + $0x38] sm:$0xff] %v994
      %1027 = vst [vmem:[#allocation4 + $0x40] sm:$0xff] %v995
      %1028 = vst [vmem:[#allocation4 + $0x48] sm:$0xff] %v996
      %1029 = vst [vmem:[#allocation4 + $0x50] sm:$0xff] %v997
      %1030 = vst [vmem:[#allocation4 + $0x58] sm:$0xff] %v998
      %1031 = vst [vmem:[#allocation4 + $0x60] sm:$0xff] %v999
      %1032 = vst [vmem:[#allocation4 + $0x68] sm:$0xff] %v1000
      %1033 = vst [vmem:[#allocation4 + $0x70] sm:$0xff] %v1001
      %1034 = vst [vmem:[#allocation4 + $0x78] sm:$0xff] %v1002
      %1035 = vst [vmem:[#allocation4 + $0x80] sm:$0xff] %v1003
      %1036 = vst [vmem:[#allocation4 + $0x88] sm:$0xff] %v1004
      %1037 = vst [vmem:[#allocation4 + $0x90] sm:$0xff] %v1005
      %1038 = vst [vmem:[#allocation4 + $0x98] sm:$0xff] %v1006
      %1039 = vst [vmem:[#allocation4 + $0xa0] sm:$0xff] %v1007
      %1040 = vst [vmem:[#allocation4 + $0xa8] sm:$0xff] %v1008
      %1041 = vst [vmem:[#allocation4 + $0xb0] sm:$0xff] %v1009
      %1042 = vst [vmem:[#allocation4 + $0xb8] sm:$0xff] %v1010
      %1043 = vst [vmem:[#allocation4 + $0xc0] sm:$0xff] %v1011
      %1044 = vst [vmem:[#allocation4 + $0xc8] sm:$0xff] %v1012
      %1045 = vst [vmem:[#allocation4 + $0xd0] sm:$0xff] %v1013
      %1046 = vst [vmem:[#allocation4 + $0xd8] sm:$0xff] %v1014
      %1047 = vst [vmem:[#allocation4 + $0xe0] sm:$0xff] %v1015
      %1048 = vst [vmem:[#allocation4 + $0xe8] sm:$0xff] %v1016
      %1049 = vst [vmem:[#allocation4 + $0xf0] sm:$0xff] %v1017
      %1050 = vst [vmem:[#allocation4 + $0xf8] sm:$0xff] %v1018
      %v1051 = vld [vmem:[#allocation2] sm:$0xff]
      %v1052 = vld [vmem:[#allocation2 + $0x8] sm:$0xff]
      %v1053 = vld [vmem:[#allocation2 + $0x10] sm:$0xff]
      %v1054 = vld [vmem:[#allocation2 + $0x18] sm:$0xff]
      %v1055 = vld [vmem:[#allocation3] sm:$0xff]
      %v1056 = vld [vmem:[#allocation3 + $0x8] sm:$0xff]
      %v1057 = vld [vmem:[#allocation3 + $0x10] sm:$0xff]
      %v1058 = vld [vmem:[#allocation3 + $0x18] sm:$0xff]
      %v1059 = vmul.f32 %v1055, %v1051
      %v1060 = vmul.f32 %v1056, %v1052
      %v1061 = vmul.f32 %v1057, %v1053
      %v1062 = vmul.f32 %v1058, %v1054
      %v1063 = vld [vmem:[#allocation4] sm:$0xff]
      %v1064 = vld [vmem:[#allocation4 + $0x8] sm:$0xff]
      %v1065 = vld [vmem:[#allocation4 + $0x10] sm:$0xff]
      %v1066 = vld [vmem:[#allocation4 + $0x18] sm:$0xff]
      %v1067 = vadd.f32 %v1059, %v1063
      %v1068 = vadd.f32 %v1060, %v1064
      %v1069 = vadd.f32 %v1061, %v1065
      %v1070 = vadd.f32 %v1062, %v1066
      %1071 = vst [vmem:[#allocation4] sm:$0xff] %v1067
      %1072 = vst [vmem:[#allocation4 + $0x8] sm:$0xff] %v1068
      %1073 = vst [vmem:[#allocation4 + $0x10] sm:$0xff] %v1069
      %1074 = vst [vmem:[#allocation4 + $0x18] sm:$0xff] %v1070
      %s1075 = scalar_lea.vmem [#allocation3], 32
      %v1076 = vld [vmem:[%s1075] sm:$0xff]
      %v1077 = vld [vmem:[%s1075 + $0x8] sm:$0xff]
      %v1078 = vld [vmem:[%s1075 + $0x10] sm:$0xff]
      %v1079 = vld [vmem:[%s1075 + $0x18] sm:$0xff]
      %v1080 = vmul.f32 %v1076, %v1067
      %v1081 = vmul.f32 %v1077, %v1068
      %v1082 = vmul.f32 %v1078, %v1069
      %v1083 = vmul.f32 %v1079, %v1070
      %s1084 = scalar_lea.vmem [#allocation4], 32
      %v1085 = vld [vmem:[%s1084] sm:$0xff]
      %v1086 = vld [vmem:[%s1084 + $0x8] sm:$0xff]
      %v1087 = vld [vmem:[%s1084 + $0x10] sm:$0xff]
      %v1088 = vld [vmem:[%s1084 + $0x18] sm:$0xff]
      %v1089 = vadd.f32 %v1080, %v1085
      %v1090 = vadd.f32 %v1081, %v1086
      %v1091 = vadd.f32 %v1082, %v1087
      %v1092 = vadd.f32 %v1083, %v1088
      %1093 = vst [vmem:[%s1084] sm:$0xff] %v1089
      %1094 = vst [vmem:[%s1084 + $0x8] sm:$0xff] %v1090
      %1095 = vst [vmem:[%s1084 + $0x10] sm:$0xff] %v1091
      %1096 = vst [vmem:[%s1084 + $0x18] sm:$0xff] %v1092
      %s1097 = scalar_lea.vmem [#allocation3], 64
      %v1098 = vld [vmem:[%s1097] sm:$0xff]
      %v1099 = vld [vmem:[%s1097 + $0x8] sm:$0xff]
      %v1100 = vld [vmem:[%s1097 + $0x10] sm:$0xff]
      %v1101 = vld [vmem:[%s1097 + $0x18] sm:$0xff]
      %v1102 = vmul.f32 %v1098, %v1089
      %v1103 = vmul.f32 %v1099, %v1090
      %v1104 = vmul.f32 %v1100, %v1091
      %v1105 = vmul.f32 %v1101, %v1092
      %s1106 = scalar_lea.vmem [#allocation4], 64
      %v1107 = vld [vmem:[%s1106] sm:$0xff]
      %v1108 = vld [vmem:[%s1106 + $0x8] sm:$0xff]
      %v1109 = vld [vmem:[%s1106 + $0x10] sm:$0xff]
      %v1110 = vld [vmem:[%s1106 + $0x18] sm:$0xff]
      %v1111 = vadd.f32 %v1102, %v1107
      %v1112 = vadd.f32 %v1103, %v1108
      %v1113 = vadd.f32 %v1104, %v1109
      %v1114 = vadd.f32 %v1105, %v1110
      %1115 = vst [vmem:[%s1106] sm:$0xff] %v1111
      %1116 = vst [vmem:[%s1106 + $0x8] sm:$0xff] %v1112
      %1117 = vst [vmem:[%s1106 + $0x10] sm:$0xff] %v1113
      %1118 = vst [vmem:[%s1106 + $0x18] sm:$0xff] %v1114
      %s1119 = scalar_lea.vmem [#allocation3], 96
      %v1120 = vld [vmem:[%s1119] sm:$0xff]
      %v1121 = vld [vmem:[%s1119 + $0x8] sm:$0xff]
      %v1122 = vld [vmem:[%s1119 + $0x10] sm:$0xff]
      %v1123 = vld [vmem:[%s1119 + $0x18] sm:$0xff]
      %v1124 = vmul.f32 %v1120, %v1111
      %v1125 = vmul.f32 %v1121, %v1112
      %v1126 = vmul.f32 %v1122, %v1113
      %v1127 = vmul.f32 %v1123, %v1114
      %s1128 = scalar_lea.vmem [#allocation4], 96
      %v1129 = vld [vmem:[%s1128] sm:$0xff]
      %v1130 = vld [vmem:[%s1128 + $0x8] sm:$0xff]
      %v1131 = vld [vmem:[%s1128 + $0x10] sm:$0xff]
      %v1132 = vld [vmem:[%s1128 + $0x18] sm:$0xff]
      %v1133 = vadd.f32 %v1124, %v1129
      %v1134 = vadd.f32 %v1125, %v1130
      %v1135 = vadd.f32 %v1126, %v1131
      %v1136 = vadd.f32 %v1127, %v1132
      %1137 = vst [vmem:[%s1128] sm:$0xff] %v1133
      %1138 = vst [vmem:[%s1128 + $0x8] sm:$0xff] %v1134
      %1139 = vst [vmem:[%s1128 + $0x10] sm:$0xff] %v1135
      %1140 = vst [vmem:[%s1128 + $0x18] sm:$0xff] %v1136
      %s1141 = scalar_lea.vmem [#allocation3], 128
      %v1142 = vld [vmem:[%s1141] sm:$0xff]
      %v1143 = vld [vmem:[%s1141 + $0x8] sm:$0xff]
      %v1144 = vld [vmem:[%s1141 + $0x10] sm:$0xff]
      %v1145 = vld [vmem:[%s1141 + $0x18] sm:$0xff]
      %v1146 = vmul.f32 %v1142, %v1133
      %v1147 = vmul.f32 %v1143, %v1134
      %v1148 = vmul.f32 %v1144, %v1135
      %v1149 = vmul.f32 %v1145, %v1136
      %s1150 = scalar_lea.vmem [#allocation4], 128
      %v1151 = vld [vmem:[%s1150] sm:$0xff]
      %v1152 = vld [vmem:[%s1150 + $0x8] sm:$0xff]
      %v1153 = vld [vmem:[%s1150 + $0x10] sm:$0xff]
      %v1154 = vld [vmem:[%s1150 + $0x18] sm:$0xff]
      %v1155 = vadd.f32 %v1146, %v1151
      %v1156 = vadd.f32 %v1147, %v1152
      %v1157 = vadd.f32 %v1148, %v1153
      %v1158 = vadd.f32 %v1149, %v1154
      %1159 = vst [vmem:[%s1150] sm:$0xff] %v1155
      %1160 = vst [vmem:[%s1150 + $0x8] sm:$0xff] %v1156
      %1161 = vst [vmem:[%s1150 + $0x10] sm:$0xff] %v1157
      %1162 = vst [vmem:[%s1150 + $0x18] sm:$0xff] %v1158
      %s1163 = scalar_lea.vmem [#allocation3], 160
      %v1164 = vld [vmem:[%s1163] sm:$0xff]
      %v1165 = vld [vmem:[%s1163 + $0x8] sm:$0xff]
      %v1166 = vld [vmem:[%s1163 + $0x10] sm:$0xff]
      %v1167 = vld [vmem:[%s1163 + $0x18] sm:$0xff]
      %v1168 = vmul.f32 %v1164, %v1155
      %v1169 = vmul.f32 %v1165, %v1156
      %v1170 = vmul.f32 %v1166, %v1157
      %v1171 = vmul.f32 %v1167, %v1158
      %s1172 = scalar_lea.vmem [#allocation4], 160
      %v1173 = vld [vmem:[%s1172] sm:$0xff]
      %v1174 = vld [vmem:[%s1172 + $0x8] sm:$0xff]
      %v1175 = vld [vmem:[%s1172 + $0x10] sm:$0xff]
      %v1176 = vld [vmem:[%s1172 + $0x18] sm:$0xff]
      %v1177 = vadd.f32 %v1168, %v1173
      %v1178 = vadd.f32 %v1169, %v1174
      %v1179 = vadd.f32 %v1170, %v1175
      %v1180 = vadd.f32 %v1171, %v1176
      %1181 = vst [vmem:[%s1172] sm:$0xff] %v1177
      %1182 = vst [vmem:[%s1172 + $0x8] sm:$0xff] %v1178
      %1183 = vst [vmem:[%s1172 + $0x10] sm:$0xff] %v1179
      %1184 = vst [vmem:[%s1172 + $0x18] sm:$0xff] %v1180
      %s1185 = scalar_lea.vmem [#allocation3], 192
      %v1186 = vld [vmem:[%s1185] sm:$0xff]
      %v1187 = vld [vmem:[%s1185 + $0x8] sm:$0xff]
      %v1188 = vld [vmem:[%s1185 + $0x10] sm:$0xff]
      %v1189 = vld [vmem:[%s1185 + $0x18] sm:$0xff]
      %v1190 = vmul.f32 %v1186, %v1177
      %v1191 = vmul.f32 %v1187, %v1178
      %v1192 = vmul.f32 %v1188, %v1179
      %v1193 = vmul.f32 %v1189, %v1180
      %s1194 = scalar_lea.vmem [#allocation4], 192
      %v1195 = vld [vmem:[%s1194] sm:$0xff]
      %v1196 = vld [vmem:[%s1194 + $0x8] sm:$0xff]
      %v1197 = vld [vmem:[%s1194 + $0x10] sm:$0xff]
      %v1198 = vld [vmem:[%s1194 + $0x18] sm:$0xff]
      %v1199 = vadd.f32 %v1190, %v1195
      %v1200 = vadd.f32 %v1191, %v1196
      %v1201 = vadd.f32 %v1192, %v1197
      %v1202 = vadd.f32 %v1193, %v1198
      %1203 = vst [vmem:[%s1194] sm:$0xff] %v1199
      %1204 = vst [vmem:[%s1194 + $0x8] sm:$0xff] %v1200
      %1205 = vst [vmem:[%s1194 + $0x10] sm:$0xff] %v1201
      %1206 = vst [vmem:[%s1194 + $0x18] sm:$0xff] %v1202
      %s1207 = scalar_lea.vmem [#allocation3], 224
      %v1208 = vld [vmem:[%s1207] sm:$0xff]
      %v1209 = vld [vmem:[%s1207 + $0x8] sm:$0xff]
      %v1210 = vld [vmem:[%s1207 + $0x10] sm:$0xff]
      %v1211 = vld [vmem:[%s1207 + $0x18] sm:$0xff]
      %v1212 = vmul.f32 %v1208, %v1199
      %v1213 = vmul.f32 %v1209, %v1200
      %v1214 = vmul.f32 %v1210, %v1201
      %v1215 = vmul.f32 %v1211, %v1202
      %s1216 = scalar_lea.vmem [#allocation4], 224
      %v1217 = vld [vmem:[%s1216] sm:$0xff]
      %v1218 = vld [vmem:[%s1216 + $0x8] sm:$0xff]
      %v1219 = vld [vmem:[%s1216 + $0x10] sm:$0xff]
      %v1220 = vld [vmem:[%s1216 + $0x18] sm:$0xff]
      %v1221 = vadd.f32 %v1212, %v1217
      %v1222 = vadd.f32 %v1213, %v1218
      %v1223 = vadd.f32 %v1214, %v1219
      %v1224 = vadd.f32 %v1215, %v1220
      %1225 = vst [vmem:[%s1216] sm:$0xff] %v1221
      %1226 = vst [vmem:[%s1216 + $0x8] sm:$0xff] %v1222
      %1227 = vst [vmem:[%s1216 + $0x10] sm:$0xff] %v1223
      %1228 = vst [vmem:[%s1216 + $0x18] sm:$0xff] %v1224
      %1229 = vst [vmem:[#allocation2] sm:$0xff] %v1221
      %1230 = vst [vmem:[#allocation2 + $0x8] sm:$0xff] %v1222
      %1231 = vst [vmem:[#allocation2 + $0x10] sm:$0xff] %v1223
      %1232 = vst [vmem:[#allocation2 + $0x18] sm:$0xff] %v1224
      %v1233 = vld [vmem:[%s443] sm:$0xff]
      %v1234 = vld [vmem:[%s443 + $0x8] sm:$0xff]
      %v1235 = vld [vmem:[%s443 + $0x10] sm:$0xff]
      %v1236 = vld [vmem:[%s443 + $0x18] sm:$0xff]
      %v1237 = vld [vmem:[%s443 + $0x20] sm:$0xff]
      %v1238 = vld [vmem:[%s443 + $0x28] sm:$0xff]
      %v1239 = vld [vmem:[%s443 + $0x30] sm:$0xff]
      %v1240 = vld [vmem:[%s443 + $0x38] sm:$0xff]
      %v1241 = vld [vmem:[%s443 + $0x40] sm:$0xff]
      %v1242 = vld [vmem:[%s443 + $0x48] sm:$0xff]
      %v1243 = vld [vmem:[%s443 + $0x50] sm:$0xff]
      %v1244 = vld [vmem:[%s443 + $0x58] sm:$0xff]
      %v1245 = vld [vmem:[%s443 + $0x60] sm:$0xff]
      %v1246 = vld [vmem:[%s443 + $0x68] sm:$0xff]
      %v1247 = vld [vmem:[%s443 + $0x70] sm:$0xff]
      %v1248 = vld [vmem:[%s443 + $0x78] sm:$0xff]
      %v1249 = vld [vmem:[#allocation4] sm:$0xff]
      %v1250 = vld [vmem:[#allocation4 + $0x8] sm:$0xff]
      %v1251 = vld [vmem:[#allocation4 + $0x10] sm:$0xff]
      %v1252 = vld [vmem:[#allocation4 + $0x18] sm:$0xff]
      %v1253 = vld [vmem:[#allocation4 + $0x20] sm:$0xff]
      %v1254 = vld [vmem:[#allocation4 + $0x28] sm:$0xff]
      %v1255 = vld [vmem:[#allocation4 + $0x30] sm:$0xff]
      %v1256 = vld [vmem:[#allocation4 + $0x38] sm:$0xff]
      %v1257 = vld [vmem:[#allocation4 + $0x40] sm:$0xff]
      %v1258 = vld [vmem:[#allocation4 + $0x48] sm:$0xff]
      %v1259 = vld [vmem:[#allocation4 + $0x50] sm:$0xff]
      %v1260 = vld [vmem:[#allocation4 + $0x58] sm:$0xff]
      %v1261 = vld [vmem:[#allocation4 + $0x60] sm:$0xff]
      %v1262 = vld [vmem:[#allocation4 + $0x68] sm:$0xff]
      %v1263 = vld [vmem:[#allocation4 + $0x70] sm:$0xff]
      %v1264 = vld [vmem:[#allocation4 + $0x78] sm:$0xff]
      %v1265 = vld [vmem:[#allocation4 + $0x80] sm:$0xff]
      %v1266 = vld [vmem:[#allocation4 + $0x88] sm:$0xff]
      %v1267 = vld [vmem:[#allocation4 + $0x90] sm:$0xff]
      %v1268 = vld [vmem:[#allocation4 + $0x98] sm:$0xff]
      %v1269 = vld [vmem:[#allocation4 + $0xa0] sm:$0xff]
      %v1270 = vld [vmem:[#allocation4 + $0xa8] sm:$0xff]
      %v1271 = vld [vmem:[#allocation4 + $0xb0] sm:$0xff]
      %v1272 = vld [vmem:[#allocation4 + $0xb8] sm:$0xff]
      %v1273 = vld [vmem:[#allocation4 + $0xc0] sm:$0xff]
      %v1274 = vld [vmem:[#allocation4 + $0xc8] sm:$0xff]
      %v1275 = vld [vmem:[#allocation4 + $0xd0] sm:$0xff]
      %v1276 = vld [vmem:[#allocation4 + $0xd8] sm:$0xff]
      %v1277 = vld [vmem:[#allocation4 + $0xe0] sm:$0xff]
      %v1278 = vld [vmem:[#allocation4 + $0xe8] sm:$0xff]
      %v1279 = vld [vmem:[#allocation4 + $0xf0] sm:$0xff]
      %v1280 = vld [vmem:[#allocation4 + $0xf8] sm:$0xff]
      %1282 = vset.pattern.permute.xlu0 0
      %1283 = vperm.xlu0 %1282, %v1233
      %v1284 = vpop.permute.xlu0 %1283
      %1287 = vset.pattern.permute.xlu0 0
      %1288 = vperm.xlu0 %1287, %v1234
      %v1289 = vpop.permute.xlu0 %1288
      %1292 = vset.pattern.permute.xlu0 0
      %1293 = vperm.xlu0 %1292, %v1235
      %v1294 = vpop.permute.xlu0 %1293
      %1297 = vset.pattern.permute.xlu0 0
      %1298 = vperm.xlu0 %1297, %v1236
      %v1299 = vpop.permute.xlu0 %1298
      %1302 = vset.pattern.permute.xlu0 0
      %1303 = vperm.xlu0 %1302, %v1237
      %v1304 = vpop.permute.xlu0 %1303
      %1307 = vset.pattern.permute.xlu0 0
      %1308 = vperm.xlu0 %1307, %v1238
      %v1309 = vpop.permute.xlu0 %1308
      %1312 = vset.pattern.permute.xlu0 0
      %1313 = vperm.xlu0 %1312, %v1239
      %v1314 = vpop.permute.xlu0 %1313
      %1317 = vset.pattern.permute.xlu0 0
      %1318 = vperm.xlu0 %1317, %v1240
      %v1319 = vpop.permute.xlu0 %1318
      %1322 = vset.pattern.permute.xlu0 0
      %1323 = vperm.xlu0 %1322, %v1241
      %v1324 = vpop.permute.xlu0 %1323
      %1327 = vset.pattern.permute.xlu0 0
      %1328 = vperm.xlu0 %1327, %v1242
      %v1329 = vpop.permute.xlu0 %1328
      %1332 = vset.pattern.permute.xlu0 0
      %1333 = vperm.xlu0 %1332, %v1243
      %v1334 = vpop.permute.xlu0 %1333
      %1337 = vset.pattern.permute.xlu0 0
      %1338 = vperm.xlu0 %1337, %v1244
      %v1339 = vpop.permute.xlu0 %1338
      %1342 = vset.pattern.permute.xlu0 0
      %1343 = vperm.xlu0 %1342, %v1245
      %v1344 = vpop.permute.xlu0 %1343
      %1347 = vset.pattern.permute.xlu0 0
      %1348 = vperm.xlu0 %1347, %v1246
      %v1349 = vpop.permute.xlu0 %1348
      %1352 = vset.pattern.permute.xlu0 0
      %1353 = vperm.xlu0 %1352, %v1247
      %v1354 = vpop.permute.xlu0 %1353
      %1357 = vset.pattern.permute.xlu0 0
      %1358 = vperm.xlu0 %1357, %v1248
      %v1359 = vpop.permute.xlu0 %1358
      %v1361 = vmul.f32 %v1284, %v1249
      %v1362 = vmul.f32 %v1284, %v1250
      %v1363 = vmul.f32 %v1289, %v1251
      %v1364 = vmul.f32 %v1289, %v1252
      %v1365 = vmul.f32 %v1294, %v1253
      %v1366 = vmul.f32 %v1294, %v1254
      %v1367 = vmul.f32 %v1299, %v1255
      %v1368 = vmul.f32 %v1299, %v1256
      %v1369 = vmul.f32 %v1304, %v1257
      %v1370 = vmul.f32 %v1304, %v1258
      %v1371 = vmul.f32 %v1309, %v1259
      %v1372 = vmul.f32 %v1309, %v1260
      %v1373 = vmul.f32 %v1314, %v1261
      %v1374 = vmul.f32 %v1314, %v1262
      %v1375 = vmul.f32 %v1319, %v1263
      %v1376 = vmul.f32 %v1319, %v1264
      %v1377 = vmul.f32 %v1324, %v1265
      %v1378 = vmul.f32 %v1324, %v1266
      %v1379 = vmul.f32 %v1329, %v1267
      %v1380 = vmul.f32 %v1329, %v1268
      %v1381 = vmul.f32 %v1334, %v1269
      %v1382 = vmul.f32 %v1334, %v1270
      %v1383 = vmul.f32 %v1339, %v1271
      %v1384 = vmul.f32 %v1339, %v1272
      %v1385 = vmul.f32 %v1344, %v1273
      %v1386 = vmul.f32 %v1344, %v1274
      %v1387 = vmul.f32 %v1349, %v1275
      %v1388 = vmul.f32 %v1349, %v1276
      %v1389 = vmul.f32 %v1354, %v1277
      %v1390 = vmul.f32 %v1354, %v1278
      %v1391 = vmul.f32 %v1359, %v1279
      %v1392 = vmul.f32 %v1359, %v1280
      %v1393 = vadd.f32 %v1361, %v1363
      %v1394 = vrot.slane %v1393, 4
      %v1395 = vadd.f32 %v1393, %v1394
      %v1396 = vrot.slane %v1395, 2
      %v1397 = vadd.f32 %v1395, %v1396
      %v1398 = vrot.slane %v1397, 1
      %v1399 = vadd.f32 %v1397, %v1398
      %v1400 = vadd.f32 %v1362, %v1364
      %v1401 = vrot.slane %v1400, 4
      %v1402 = vadd.f32 %v1400, %v1401
      %v1403 = vrot.slane %v1402, 2
      %v1404 = vadd.f32 %v1402, %v1403
      %v1405 = vrot.slane %v1404, 1
      %v1406 = vadd.f32 %v1404, %v1405
      %v1407 = vadd.f32 %v1365, %v1367
      %v1408 = vrot.slane %v1407, 4
      %v1409 = vadd.f32 %v1407, %v1408
      %v1410 = vrot.slane %v1409, 2
      %v1411 = vadd.f32 %v1409, %v1410
      %v1412 = vrot.slane %v1411, 1
      %v1413 = vadd.f32 %v1411, %v1412
      %v1414 = vadd.f32 %v1366, %v1368
      %v1415 = vrot.slane %v1414, 4
      %v1416 = vadd.f32 %v1414, %v1415
      %v1417 = vrot.slane %v1416, 2
      %v1418 = vadd.f32 %v1416, %v1417
      %v1419 = vrot.slane %v1418, 1
      %v1420 = vadd.f32 %v1418, %v1419
      %v1421 = vadd.f32 %v1369, %v1371
      %v1422 = vrot.slane %v1421, 4
      %v1423 = vadd.f32 %v1421, %v1422
      %v1424 = vrot.slane %v1423, 2
      %v1425 = vadd.f32 %v1423, %v1424
      %v1426 = vrot.slane %v1425, 1
      %v1427 = vadd.f32 %v1425, %v1426
      %v1428 = vadd.f32 %v1370, %v1372
      %v1429 = vrot.slane %v1428, 4
      %v1430 = vadd.f32 %v1428, %v1429
      %v1431 = vrot.slane %v1430, 2
      %v1432 = vadd.f32 %v1430, %v1431
      %v1433 = vrot.slane %v1432, 1
      %v1434 = vadd.f32 %v1432, %v1433
      %v1435 = vadd.f32 %v1373, %v1375
      %v1436 = vrot.slane %v1435, 4
      %v1437 = vadd.f32 %v1435, %v1436
      %v1438 = vrot.slane %v1437, 2
      %v1439 = vadd.f32 %v1437, %v1438
      %v1440 = vrot.slane %v1439, 1
      %v1441 = vadd.f32 %v1439, %v1440
      %v1442 = vadd.f32 %v1374, %v1376
      %v1443 = vrot.slane %v1442, 4
      %v1444 = vadd.f32 %v1442, %v1443
      %v1445 = vrot.slane %v1444, 2
      %v1446 = vadd.f32 %v1444, %v1445
      %v1447 = vrot.slane %v1446, 1
      %v1448 = vadd.f32 %v1446, %v1447
      %v1449 = vadd.f32 %v1377, %v1379
      %v1450 = vrot.slane %v1449, 4
      %v1451 = vadd.f32 %v1449, %v1450
      %v1452 = vrot.slane %v1451, 2
      %v1453 = vadd.f32 %v1451, %v1452
      %v1454 = vrot.slane %v1453, 1
      %v1455 = vadd.f32 %v1453, %v1454
      %v1456 = vadd.f32 %v1378, %v1380
      %v1457 = vrot.slane %v1456, 4
      %v1458 = vadd.f32 %v1456, %v1457
      %v1459 = vrot.slane %v1458, 2
      %v1460 = vadd.f32 %v1458, %v1459
      %v1461 = vrot.slane %v1460, 1
      %v1462 = vadd.f32 %v1460, %v1461
      %v1463 = vadd.f32 %v1381, %v1383
      %v1464 = vrot.slane %v1463, 4
      %v1465 = vadd.f32 %v1463, %v1464
      %v1466 = vrot.slane %v1465, 2
      %v1467 = vadd.f32 %v1465, %v1466
      %v1468 = vrot.slane %v1467, 1
      %v1469 = vadd.f32 %v1467, %v1468
      %v1470 = vadd.f32 %v1382, %v1384
      %v1471 = vrot.slane %v1470, 4
      %v1472 = vadd.f32 %v1470, %v1471
      %v1473 = vrot.slane %v1472, 2
      %v1474 = vadd.f32 %v1472, %v1473
      %v1475 = vrot.slane %v1474, 1
      %v1476 = vadd.f32 %v1474, %v1475
      %v1477 = vadd.f32 %v1385, %v1387
      %v1478 = vrot.slane %v1477, 4
      %v1479 = vadd.f32 %v1477, %v1478
      %v1480 = vrot.slane %v1479, 2
      %v1481 = vadd.f32 %v1479, %v1480
      %v1482 = vrot.slane %v1481, 1
      %v1483 = vadd.f32 %v1481, %v1482
      %v1484 = vadd.f32 %v1386, %v1388
      %v1485 = vrot.slane %v1484, 4
      %v1486 = vadd.f32 %v1484, %v1485
      %v1487 = vrot.slane %v1486, 2
      %v1488 = vadd.f32 %v1486, %v1487
      %v1489 = vrot.slane %v1488, 1
      %v1490 = vadd.f32 %v1488, %v1489
      %v1491 = vadd.f32 %v1389, %v1391
      %v1492 = vrot.slane %v1491, 4
      %v1493 = vadd.f32 %v1491, %v1492
      %v1494 = vrot.slane %v1493, 2
      %v1495 = vadd.f32 %v1493, %v1494
      %v1496 = vrot.slane %v1495, 1
      %v1497 = vadd.f32 %v1495, %v1496
      %v1498 = vadd.f32 %v1390, %v1392
      %v1499 = vrot.slane %v1498, 4
      %v1500 = vadd.f32 %v1498, %v1499
      %v1501 = vrot.slane %v1500, 2
      %v1502 = vadd.f32 %v1500, %v1501
      %v1503 = vrot.slane %v1502, 1
      %v1504 = vadd.f32 %v1502, %v1503
      %v1505 = vld [vmem:[%s6] sm:$0x3]
      %v1507 = vlaneseq
      %v1508 = vshrl.u32 %v1507, 7
      %v1509 = vsub.s32 0, %v1508
      %v1510 = vrot.slane %v1505, %v1509
      %v1511 = vlaneseq
      %v1512 = vshrl.u32 %v1511, 7
      %v1513 = vsub.s32 1, %v1512
      %v1514 = vrot.slane %v1505, %v1513
      %v1517 = vmul.f32 %v1510, %v473
      %v1518 = vmul.f32 %v1514, %v474
      %v1521 = vrot.slane %v1517, 1
      %v1522 = vrot.slane %v1518, 1
      %v1523 = vrot.slane %v1517, 2
      %v1524 = vrot.slane %v1518, 2
      %v1525 = vrot.slane %v1517, 3
      %v1526 = vrot.slane %v1518, 3
      %v1527 = vrot.slane %v1517, 4
      %v1528 = vrot.slane %v1518, 4
      %v1529 = vrot.slane %v1517, 5
      %v1530 = vrot.slane %v1518, 5
      %v1531 = vrot.slane %v1517, 6
      %v1532 = vrot.slane %v1518, 6
      %v1533 = vrot.slane %v1517, 7
      %v1534 = vrot.slane %v1518, 7
      %v1551 = vadd.f32 %v1399, %v1517
      %v1552 = vadd.f32 %v1406, %v1518
      %v1553 = vadd.f32 %v1413, %v1521
      %v1554 = vadd.f32 %v1420, %v1522
      %v1555 = vadd.f32 %v1427, %v1523
      %v1556 = vadd.f32 %v1434, %v1524
      %v1557 = vadd.f32 %v1441, %v1525
      %v1558 = vadd.f32 %v1448, %v1526
      %v1559 = vadd.f32 %v1455, %v1527
      %v1560 = vadd.f32 %v1462, %v1528
      %v1561 = vadd.f32 %v1469, %v1529
      %v1562 = vadd.f32 %v1476, %v1530
      %v1563 = vadd.f32 %v1483, %v1531
      %v1564 = vadd.f32 %v1490, %v1532
      %v1565 = vadd.f32 %v1497, %v1533
      %v1566 = vadd.f32 %v1504, %v1534
      %v1567 = vld [vmem:[%s454] sm:$0xff]
      %v1568 = vld [vmem:[%s454 + $0x8] sm:$0xff]
      %v1569 = vsub.f32 0.0, %v1567
      %v1570 = vsub.f32 0.0, %v1568
      %v1571 = vmul.f32 %v1569, 1.442695
      %v1572 = vpow.pop %v1571
      %v1573 = vmul.f32 %v1570, 1.442695
      %v1574 = vpow.pop %v1573
      %v1575 = vadd.f32 %v1572, 1.0
      %v1576 = vadd.f32 %v1574, 1.0
      %v1577 = vrcp.pop %v1575
      %v1578 = vmul.f32 1.0, %v1577
      %v1579 = vrcp.pop %v1576
      %v1580 = vmul.f32 1.0, %v1579
      %v1581 = vmul.f32 %v1567, %v1578
      %v1582 = vmul.f32 %v1568, %v1580
      %v1585 = vrot.slane %v1581, 1
      %v1586 = vrot.slane %v1582, 1
      %v1587 = vrot.slane %v1581, 2
      %v1588 = vrot.slane %v1582, 2
      %v1589 = vrot.slane %v1581, 3
      %v1590 = vrot.slane %v1582, 3
      %v1591 = vrot.slane %v1581, 4
      %v1592 = vrot.slane %v1582, 4
      %v1593 = vrot.slane %v1581, 5
      %v1594 = vrot.slane %v1582, 5
      %v1595 = vrot.slane %v1581, 6
      %v1596 = vrot.slane %v1582, 6
      %v1597 = vrot.slane %v1581, 7
      %v1598 = vrot.slane %v1582, 7
      %v1615 = vmul.f32 %v1551, %v1581
      %v1616 = vmul.f32 %v1552, %v1582
      %v1617 = vmul.f32 %v1553, %v1585
      %v1618 = vmul.f32 %v1554, %v1586
      %v1619 = vmul.f32 %v1555, %v1587
      %v1620 = vmul.f32 %v1556, %v1588
      %v1621 = vmul.f32 %v1557, %v1589
      %v1622 = vmul.f32 %v1558, %v1590
      %v1623 = vmul.f32 %v1559, %v1591
      %v1624 = vmul.f32 %v1560, %v1592
      %v1625 = vmul.f32 %v1561, %v1593
      %v1626 = vmul.f32 %v1562, %v1594
      %v1627 = vmul.f32 %v1563, %v1595
      %v1628 = vmul.f32 %v1564, %v1596
      %v1629 = vmul.f32 %v1565, %v1597
      %v1630 = vmul.f32 %v1566, %v1598
      %v1647 = vrot.slane %v1617, 7
      %vm1648 = vcmask 1041409
      %v1649 = vsel %vm1648, %v1647, %v1615
      %v1650 = vrot.slane %v1619, 6
      %vm1651 = vcmask 1042434
      %v1652 = vsel %vm1651, %v1650, %v1649
      %v1653 = vrot.slane %v1621, 5
      %vm1654 = vcmask 1043459
      %v1655 = vsel %vm1654, %v1653, %v1652
      %v1656 = vrot.slane %v1623, 4
      %vm1657 = vcmask 1044484
      %v1658 = vsel %vm1657, %v1656, %v1655
      %v1659 = vrot.slane %v1625, 3
      %vm1660 = vcmask 1045509
      %v1661 = vsel %vm1660, %v1659, %v1658
      %v1662 = vrot.slane %v1627, 2
      %vm1663 = vcmask 1046534
      %v1664 = vsel %vm1663, %v1662, %v1661
      %v1665 = vrot.slane %v1629, 1
      %vm1666 = vcmask 1047559
      %v1667 = vsel %vm1666, %v1665, %v1664
      %v1668 = vrot.slane %v1618, 7
      %v1669 = vsel %vm1648, %v1668, %v1616
      %v1670 = vrot.slane %v1620, 6
      %v1671 = vsel %vm1651, %v1670, %v1669
      %v1672 = vrot.slane %v1622, 5
      %v1673 = vsel %vm1654, %v1672, %v1671
      %v1674 = vrot.slane %v1624, 4
      %v1675 = vsel %vm1657, %v1674, %v1673
      %v1676 = vrot.slane %v1626, 3
      %v1677 = vsel %vm1660, %v1676, %v1675
      %v1678 = vrot.slane %v1628, 2
      %v1679 = vsel %vm1663, %v1678, %v1677
      %v1680 = vrot.slane %v1630, 1
      %v1681 = vsel %vm1666, %v1680, %v1679
      %1684 = vst [vmem:[%s463] sm:$0xff] %v1667
      %1685 = vst [vmem:[%s463 + $0x8] sm:$0xff] %v1681
      %p1686 = scmp.lt.s32.totalorder %s22, 1
      %s1687 = scalar_select %p1686, %s22, 1
      %p1688 = scmp.lt.s32.totalorder %s23, 0
      %s1689 = scalar_select %p1688, %s23, 0
      %s1690 = smul.addr %s1689, 2
      %s1691 = smul.addr %s1687, 2
      %s1692 = sadd.s32 %s1690, %s1691
      %s1693 = smul.addr %s1692, 8
      %s1694 = scalar_lea.vmem %s7, %s1693
      // Predicated region
      $region53: #{vision_mamba_forward.25} parent=47 // pred_check
        %p1695 = pneg %p232
      $region54: #{vision_mamba_forward.25} parent=47 // pred_check_branch
        %1697 = sbr.rel (%p1695) target = $region56
      $region55: #{vision_mamba_forward.25} parent=47 // pred_region
        _
      $region56: #{vision_mamba_forward.25} parent=47 // pred_fallthru
        _
    $region48: #{vision_mamba_forward.25} parent=5 // pred_fallthru
      _
    %p1698 = scmp.le.s32.totalorder 2, %s13
    // Predicated region
    $region57: #{vision_mamba_forward.25} parent=5 // pred_check
      %p1699 = pneg %p1698
    $region58: #{vision_mamba_forward.25} parent=5 // pred_check_branch
      %1701 = sbr.rel (%p1699) target = $region60
    $region59: #{vision_mamba_forward.25} parent=5 // pred_region
      %s1702 = ssub.s32 %s13, 2
      // Predicated region
      $region61: #{vision_mamba_forward.25} parent=59 // pred_check
        %p1703 = pneg %p238
      $region62: #{vision_mamba_forward.25} parent=59 // pred_check_branch
        %1705 = sbr.rel (%p1703) target = $region64
      $region63: #{vision_mamba_forward.25} parent=59 // pred_region
        %p1706 = scmp.lt.s32.totalorder %s24, 1
        %s1707 = scalar_select %p1706, %s24, 1
        %p1708 = scmp.lt.s32.totalorder %s25, 0
        %s1709 = scalar_select %p1708, %s25, 0
        %s1710 = smul.addr %s1709, 2
        %s1711 = smul.addr %s1707, 2
        %s1712 = sadd.s32 %s1710, %s1711
        %s1713 = smul.addr %s1712, 8
        %s1714 = scalar_lea.vmem %s7, %s1713
      $region64: #{vision_mamba_forward.25} parent=59 // pred_fallthru
        _
    $region60: #{vision_mamba_forward.25} parent=5 // pred_fallthru
      _
  $region6: #{vision_mamba_forward.25} parent=0 // loop_footer
    %s17 = sadd.s32 1, %s13
  $region7: #{vision_mamba_forward.25} parent=0 // loop_footer_branch
    %12 = sbr.rel target = $region3
  $region8: #{vision_mamba_forward.25} parent=0 // loop_exit
    _

// kernel: vision_mamba_forward.39
$region0: #{vision_mamba_forward.39}
  #allocation0 [shape = 'u32[]', space=smem, size = 0x4, offset = 0x4, fixed_abs, tag = 'smem constant byte address 0x4 - core index']
  #allocation1 [shape = 'u32[144,128]{1,0:T(1,128)}', space=vmem, size = 0x12000, scoped, tag = 'internal scratch']
  %s0 = inlined_call_operand.vmem [shape: f32[16,128], index: 0, kind: input, shape index: {}]
  %s1 = inlined_call_operand.vmem [shape: f32[16,128], index: 1, kind: input, shape index: {}]
  %s2 = inlined_call_operand.vmem [shape: f32[1,128], index: 2, kind: input, shape index: {}]
  %s3 = inlined_call_operand.hbm [shape: f32[16,128], index: 3, kind: output, shape index: {0}]
  %s4 = inlined_call_operand.hbm [shape: f32[16,128], index: 4, kind: output, shape index: {1}]
  %5 = xla_tuple %s3, %s4
  %s6 = sld [smem:[#allocation0]]
  $region30: #{vision_mamba_forward.39} parent=0
    _
  %s8 = ssub.s32 1, %s6
  %s9 = scalar_select 0, %s8, %s6
  $region1: #{vision_mamba_forward.39} parent=0
    #allocation2 [shape = 'u8[8192]{0}', space=vmem, size = 0x2000, scoped, tag = 'output window, operand 0, single buffered']
    #allocation3 [shape = 's32[1]{0}', space=sflag, size = 0x4, scoped, tag = 'scoped memory for vision_mamba_forward.39']
    #allocation4 [shape = 'u8[8192]{0}', space=vmem, size = 0x2000, scoped, tag = 'output window, operand 1, single buffered']
    #allocation5 [shape = 's32[1]{0}', space=sflag, size = 0x4, scoped, tag = 'scoped memory for vision_mamba_forward.39']
    %10 = vsyncpa [#allocation3], 0
    %11 = vsyncpa [#allocation5], 0
    // Predicated region
    $region2: #{vision_mamba_forward.39} parent=1 // pred_check
      _
    $region3: #{vision_mamba_forward.39} parent=1 // pred_check_branch
      %13 = sbr.rel (0) target = $region5
    $region4: #{vision_mamba_forward.39} parent=1 // pred_region
      _
    $region5: #{vision_mamba_forward.39} parent=1 // pred_fallthru
      _
    // Predicated region
    $region6: #{vision_mamba_forward.39} parent=1 // pred_check
      _
    $region7: #{vision_mamba_forward.39} parent=1 // pred_check_branch
      %15 = sbr.rel (0) target = $region9
    $region8: #{vision_mamba_forward.39} parent=1 // pred_region
      _
    $region9: #{vision_mamba_forward.39} parent=1 // pred_fallthru
      _
    // Predicated region
    $region10: #{vision_mamba_forward.39} parent=1 // pred_check
      _
    $region11: #{vision_mamba_forward.39} parent=1 // pred_check_branch
      %17 = sbr.rel (0) target = $region13
    $region12: #{vision_mamba_forward.39} parent=1 // pred_region
      _
    $region13: #{vision_mamba_forward.39} parent=1 // pred_fallthru
      _
    %v18 = vld [vmem:[%s0] sm:$0xff]
    %v19 = vld [vmem:[%s0 + $0x8] sm:$0xff]
    %v20 = vld [vmem:[%s1] sm:$0xff]
    %v21 = vld [vmem:[%s1 + $0x8] sm:$0xff]
    %v22 = vadd.f32 %v18, %v20
    %v23 = vadd.f32 %v19, %v21
    %v24 = vmul.f32 %v22, %v22
    %v25 = vmul.f32 %v23, %v23
    %26 = vadd.xlane.f32.xlu0 %v24
    %v27 = vpop.xlane.xlu0 %26
    %28 = vadd.xlane.f32.xlu0 %v25
    %v29 = vpop.xlane.xlu0 %28
    %v30 = vrcp.pop 128.0
    %v31 = vmul.f32 %v27, %v30
    %v32 = vmul.f32 %v29, %v30
    %v33 = vadd.f32 %v31, 1e-05
    %v34 = vadd.f32 %v32, 1e-05
    %v35 = vrsqrt.pop %v33
    %v36 = vrsqrt.pop %v34
    %v37 = vmul.f32 %v22, %v35
    %v38 = vmul.f32 %v23, %v36
    %v39 = vld [vmem:[%s2] sm:$0x1]
    %v41 = vlaneseq
    %v42 = vshrl.u32 %v41, 7
    %v43 = vsub.s32 0, %v42
    %v44 = vrot.slane %v39, %v43
    %v46 = vmul.f32 %v37, %v44
    %v47 = vmul.f32 %v38, %v44
    %48 = vst [vmem:[#allocation2] sm:$0xff] %v46
    %49 = vst [vmem:[#allocation2 + $0x8] sm:$0xff] %v47
    %50 = vst [vmem:[#allocation4] sm:$0xff] %v22
    %51 = vst [vmem:[#allocation4 + $0x8] sm:$0xff] %v23
    // Predicated region
    $region14: #{vision_mamba_forward.39} parent=1 // pred_check
      _
    $region15: #{vision_mamba_forward.39} parent=1 // pred_check_branch
      %53 = sbr.rel (0) target = $region17
    $region16: #{vision_mamba_forward.39} parent=1 // pred_region
      %s55 = ssub.s32 256, 256
      %56 = vsyncadd [#allocation3], %s55
      %s57 = sshll.u32 [#allocation2], 4
      %s58 = int_to_ptr.vmem [resolvable:$true] %s57
      %63 = dma.vmem_to_hbm [thread:$0]  %s58, 256, %s3, [#allocation3], 128, 128, 8
    $region17: #{vision_mamba_forward.39} parent=1 // pred_fallthru
      _
    // Predicated region
    $region18: #{vision_mamba_forward.39} parent=1 // pred_check
      _
    $region19: #{vision_mamba_forward.39} parent=1 // pred_check_branch
      %65 = sbr.rel (0) target = $region21
    $region20: #{vision_mamba_forward.39} parent=1 // pred_region
      %s67 = ssub.s32 256, 256
      %68 = vsyncadd [#allocation5], %s67
      %s69 = sshll.u32 [#allocation4], 4
      %s70 = int_to_ptr.vmem [resolvable:$true] %s69
      %75 = dma.vmem_to_hbm [thread:$0]  %s70, 256, %s4, [#allocation5], 128, 128, 8
    $region21: #{vision_mamba_forward.39} parent=1 // pred_fallthru
      _
    // Predicated region
    $region22: #{vision_mamba_forward.39} parent=1 // pred_check
      _
    $region23: #{vision_mamba_forward.39} parent=1 // pred_check_branch
      %77 = sbr.rel (0) target = $region25
    $region24: #{vision_mamba_forward.39} parent=1 // pred_region
      %78 = dma.done [#allocation3], 256
    $region25: #{vision_mamba_forward.39} parent=1 // pred_fallthru
      _
    // Predicated region
    $region26: #{vision_mamba_forward.39} parent=1 // pred_check
      _
    $region27: #{vision_mamba_forward.39} parent=1 // pred_check_branch
      %80 = sbr.rel (0) target = $region29
    $region28: #{vision_mamba_forward.39} parent=1 // pred_region
      %81 = dma.done [#allocation5], 256
    $region29: #{vision_mamba_forward.39} parent=1 // pred_fallthru
      _
    %82 = vsyncpa [#allocation3], 1
    %83 = vsyncpa [#allocation5], 1

</llo_original>
